<compile_context>
chip_gen: v7x
topology: tpu7x:2x2x1
jax: 0.10.0
libtpu: 0.0.40
codegen_flags: <defaults>
</compile_context>

<pallas_src>
import numpy as np
import jax
import jax.numpy as jnp
from jax import lax
from jax.experimental import pallas as pl
from jax.experimental.pallas import tpu as pltpu


_K1, _S1, _P1 = 5, 2, 1      # conv1 kernel / stride / pad
_K2, _S2 = 5, 2              # conv2 kernel / stride (no pad)


# ----------------------------- Pallas kernel ---------------------------------

def _make_catch_net_kernel(n_taps, n_spatial, b_pad, c1, c2):
    """conv1 -> relu -> conv2 -> relu -> lin1 -> relu -> head, fully fused.

    Row layout of the duplicated conv1 patch matrix (and of the h1 scratch):
        row = tap * (n_spatial * b_pad) + s * b_pad + b     (tap slow, batch fast)
    so every conv2 tap block and every lin1 spatial block is a contiguous,
    sublane-aligned window.
    """
    blk = n_spatial * b_pad                  # rows per conv2-tap block (16*8 = 128)

    def kernel(p1_ref, w1_ref, b1_ref, w2_ref, b2_ref,
               wl_ref, bl_ref, wh_ref, bh_ref, o_ref, h1_ref):
        # ---- conv1: ONE GEMM over all taps (M = n_taps*blk = 3200) -----------
        h1 = jnp.dot(p1_ref[...], w1_ref[...],
                     preferred_element_type=jnp.float32)
        h1 = jnp.maximum(h1 + b1_ref[...], 0.0)
        h1_ref[...] = h1.astype(h1_ref.dtype)              # bf16 VMEM scratch

        # ---- conv2: accumulate 25 contiguous 128-row blocks from the scratch.
        # Live set ~ acc2 (16 f32 vregs) + one (128,32) bf16 block + a (32,32)
        # weight slice: well under 64 vregs, so a value accumulator is fine.
        acc2 = jnp.zeros((blk, c2), jnp.float32)
        for j in range(n_taps):
            acc2 = acc2 + jnp.dot(h1_ref[j * blk:(j + 1) * blk, :],
                                  w2_ref[j * c1:(j + 1) * c1, :],
                                  preferred_element_type=jnp.float32)
        h2 = jnp.maximum(acc2 + b2_ref[...], 0.0)           # (blk, c2), rows (s, b)

        # ---- lin1 (torch flatten permutation already folded into wl) ---------
        # TODO(synk): single K=512 GEMM variant needs a (128,32)->(8,512)
        # lane-dense relayout that Mosaic may not lower; kept as 16 block GEMMs.
        hidden = wl_ref.shape[1]
        accl = jnp.zeros((b_pad, hidden), jnp.float32)
        for s in range(n_spatial):
            blk_s = h2[s * b_pad:(s + 1) * b_pad, :].astype(wl_ref.dtype)
            accl = accl + jnp.dot(blk_s, wl_ref[s * c2:(s + 1) * c2, :],
                                  preferred_element_type=jnp.float32)
        hl = jnp.maximum(accl + bl_ref[...], 0.0)            # (b_pad, hidden)

        # ---- head -------------------------------------------------------------
        out = jnp.dot(hl.astype(wh_ref.dtype), wh_ref[...],
                      preferred_element_type=jnp.float32) + bh_ref[...]
        o_ref[...] = out.astype(o_ref.dtype)

    return kernel


# ------------------------------ JAX glue --------------------------------------

def _dup_row_indices(b_pad, oh1, oh2):
    """Constant row indices gathering the duplicated conv1-patch matrix from the
    compact (b_pad*oh1*oh1, K1*K1*D) one.  Row order (tap, spatial, batch)."""
    kh2 = np.arange(_K2).repeat(_K2)              # (25,) tap -> kh2
    kw2 = np.tile(np.arange(_K2), _K2)            # (25,) tap -> kw2
    i2 = np.arange(oh2).repeat(oh2)               # (16,) spatial -> out-row
    j2 = np.tile(np.arange(oh2), oh2)             # (16,) spatial -> out-col
    i1 = i2[None, :] * _S2 + kh2[:, None]         # (25, 16) conv1-output row
    j1 = j2[None, :] * _S2 + kw2[:, None]         # (25, 16) conv1-output col
    sp = i1 * oh1 + j1                            # (25, 16)
    b = np.arange(b_pad) * (oh1 * oh1)            # (b_pad,)
    return (sp[:, :, None] + b[None, None, :]).reshape(-1).astype(np.int32)


def _build_dup_patches(x_nchw, b_pad, dtype=jnp.bfloat16):
    """(B, D, H, W) -> (K2*K2 * OH2*OW2 * b_pad, K1*K1*D) duplicated conv1
    patches, rows ordered (tap, spatial, batch), cols (kh1, kw1, cin)."""
    B, D, H, W = x_nchw.shape
    oh1 = (H + 2 * _P1 - _K1) // _S1 + 1                 # 11
    oh2 = (oh1 - _K2) // _S2 + 1                         # 4
    span = _S1 * (oh1 - 1) + 1

    x = jnp.transpose(x_nchw, (0, 2, 3, 1)).astype(dtype)   # NHWC, bf16 glue
    x = jnp.pad(x, ((0, b_pad - B), (_P1, _P1), (_P1, _P1), (0, 0)))

    # compact conv1 im2col (single small materialization), cols (kh1, kw1, cin)
    cols = [x[:, kh:kh + span:_S1, kw:kw + span:_S1, :]
            for kh in range(_K1) for kw in range(_K1)]
    p1 = jnp.concatenate(cols, axis=-1).reshape(b_pad * oh1 * oh1, _K1 * _K1 * D)

    # one precomputed-constant row gather builds the duplicated matrix
    idx = jnp.asarray(_dup_row_indices(b_pad, oh1, oh2))
    return jnp.take(p1, idx, axis=0), oh2


def prepare_params(params, dtype=jnp.bfloat16):
    """One-time permute/reshape/cast of torch-layout params into kernel layouts.
    Matmul weights -> bf16 (f32 accumulation stays in-kernel); biases stay f32."""
    w1, b1, w2, b2, wl, bl, wh, bh = params
    c1, c2 = w1.shape[0], w2.shape[0]
    hidden = wl.shape[1]
    oh2 = int(round((wl.shape[0] // c2) ** 0.5))                         # 4
    w1m = jnp.transpose(w1, (2, 3, 1, 0)).reshape(-1, c1).astype(dtype)  # (K1*K1*D, c1)
    w2m = jnp.transpose(w2, (2, 3, 1, 0)).reshape(-1, c2).astype(dtype)  # (K2*K2*c1, c2)
    # fold torch's NCHW flatten (c, oh, ow) into our (oh, ow, c) activation order
    wlp = (wl.reshape(c2, oh2, oh2, hidden)
             .transpose(1, 2, 0, 3)
             .reshape(oh2 * oh2 * c2, hidden)).astype(dtype)             # (512, hidden)
    return (w1m, b1.reshape(1, -1), w2m, b2.reshape(1, -1),
            wlp, bl.reshape(1, -1), wh.astype(dtype), bh.reshape(1, -1))


@jax.jit
def catch_net_forward(x_nchw, prepared):
    """Forward pass matching CatchNet.forward.  x_nchw: (B, D, 24, 24) f32."""
    w1m, b1, w2m, b2, wlp, bl, whp, bh = prepared
    B = x_nchw.shape[0]
    b_pad = max(8, ((B + 7) // 8) * 8)

    p1_dup, oh2 = _build_dup_patches(x_nchw, b_pad, dtype=w1m.dtype)
    c1, c2 = w1m.shape[1], w2m.shape[1]
    n_taps = w2m.shape[0] // c1                 # 25
    n_spatial = oh2 * oh2                       # 16
    blk = n_spatial * b_pad                     # 128
    action_no = whp.shape[1]

    kernel = _make_catch_net_kernel(n_taps, n_spatial, b_pad, c1, c2)
    vmem = pl.BlockSpec(memory_space=pltpu.MemorySpace.VMEM)
    # Gridless on purpose at tiny batch (per-grid-step overhead would dwarf the
    # ~0.6 MB patch DMA it could hide).  Scaling lever for B >~ 128: grid over
    # the tap/row dim marked "parallel" + pltpu.CompilerParams(vmem_limit_bytes).
    out = pl.pallas_call(
        kernel,
        out_shape=jax.ShapeDtypeStruct((b_pad, action_no), jnp.float32),
        in_specs=[vmem] * 9,
        out_specs=vmem,
        scratch_shapes=[pltpu.VMEM((n_taps * blk, c1), w1m.dtype)],   # h1 scratch
    )(p1_dup, w1m, b1, w2m, b2, wlp, bl, whp, bh)
    return out[:B]


# ------------------------------ reference -------------------------------------

def _bf16_round(a):
    return a.astype(jnp.bfloat16).astype(jnp.float32)


def reference_forward(x_nchw, params, cast=None):
    """Pure-XLA reference.  `cast` (bf16 round-trip) is applied exactly at the
    points where the kernel quantizes, so the tight check isolates layout bugs
    from bf16 rounding."""
    c = (lambda a: a) if cast is None else cast
    w1, b1, w2, b2, wl, bl, wh, bh = params
    y = lax.conv_general_dilated(c(x_nchw), c(w1), (_S1, _S1),
                                 [(_P1, _P1), (_P1, _P1)],
                                 dimension_numbers=("NCHW", "OIHW", "NCHW"))
    y = jnp.maximum(y + b1[None, :, None, None], 0.0)
    y = lax.conv_general_dilated(c(y), c(w2), (_S2, _S2), [(0, 0), (0, 0)],
                                 dimension_numbers=("NCHW", "OIHW", "NCHW"))
    y = jnp.maximum(y + b2[None, :, None, None], 0.0)
    y = y.reshape(y.shape[0], -1)
    y = jnp.maximum(c(y) @ c(wl) + bl, 0.0)
    return c(y) @ c(wh) + bh


# ------------------------------ main -------------------------------------------

if __name__ == "__main__":
    # CatchNet(input_channels=1, hist_len=4, action_no=3, hidden_size=32):
    # lin1 expects 512 = 32*4*4 features, which implies a 24x24 input board.
    input_channels, hist_len, action_no, hidden_size = 1, 4, 3, 32
    input_depth = hist_len * input_channels                 # 4
    B, H, W = 2, 24, 24

    key = jax.random.PRNGKey(0)
    kx, kp = jax.random.split(key)
    kws = jax.random.split(kp, 8)

    # Deterministic synthetic parameters (shapes follow the torch module).
    w1 = jax.random.normal(kws[0], (32, input_depth, 5, 5), jnp.float32) * 0.1
    b1 = jax.random.normal(kws[1], (32,), jnp.float32) * 0.01
    w2 = jax.random.normal(kws[2], (32, 32, 5, 5), jnp.float32) * 0.05
    b2 = jax.random.normal(kws[3], (32,), jnp.float32) * 0.01
    wl = jax.random.normal(kws[4], (512, hidden_size), jnp.float32) * 0.05  # lin1 (in, out)
    bl = jax.random.normal(kws[5], (hidden_size,), jnp.float32) * 0.01
    wh = jax.random.normal(kws[6], (hidden_size, action_no), jnp.float32) * 0.1  # head (in, out)
    bh = jax.random.normal(kws[7], (action_no,), jnp.float32) * 0.01
    params = (w1, b1, w2, b2, wl, bl, wh, bh)
    prepared = prepare_params(params)                        # one-time prep

    x = jax.random.normal(kx, (B, input_depth, H, W), jnp.float32)

    out = jax.block_until_ready(catch_net_forward(x, prepared))
    ref_q = jax.block_until_ready(reference_forward(x, params, cast=_bf16_round))
    ref_f = jax.block_until_ready(reference_forward(x, params))

    assert out.shape == (B, action_no), out.shape
    # Tight: reference with the kernel's exact bf16 rounding points (f32 accum).
    assert jnp.allclose(out, ref_q, atol=2e-3, rtol=2e-3), (out, ref_q)
    # Loose: against the plain f32 reference (bf16 inputs/weights end-to-end).
    assert jnp.allclose(out, ref_f, atol=5e-2, rtol=5e-2), (out, ref_f)
    print("KERNEL_OK")
</pallas_src>

<mosaic_0001>
module attributes {stable_mosaic.version = 11 : i64} {
  func.func @kernel(%arg0: memref<3200x100xbf16, #tpu.memory_space<vmem>>, %arg1: memref<100x32xbf16, #tpu.memory_space<vmem>>, %arg2: memref<1x32xf32, #tpu.memory_space<vmem>>, %arg3: memref<800x32xbf16, #tpu.memory_space<vmem>>, %arg4: memref<1x32xf32, #tpu.memory_space<vmem>>, %arg5: memref<512x32xbf16, #tpu.memory_space<vmem>>, %arg6: memref<1x32xf32, #tpu.memory_space<vmem>>, %arg7: memref<32x3xbf16, #tpu.memory_space<vmem>>, %arg8: memref<1x3xf32, #tpu.memory_space<vmem>>, %arg9: memref<8x3xf32, #tpu.memory_space<vmem>>, %arg10: memref<3200x32xbf16, #tpu.memory_space<vmem>>) attributes {dimension_semantics = [], scalar_prefetch = 0 : i64, scratch_operands = 1 : i64, tpu.core_type = #tpu.core_type<tc>} {
    %c0 = arith.constant 0 : index
    %c0_0 = arith.constant 0 : index
    %0 = vector.load %arg0[%c0, %c0_0] : memref<3200x100xbf16, #tpu.memory_space<vmem>>, vector<3200x100xbf16>
    %c0_1 = arith.constant 0 : index
    %c0_2 = arith.constant 0 : index
    %1 = vector.load %arg1[%c0_1, %c0_2] : memref<100x32xbf16, #tpu.memory_space<vmem>>, vector<100x32xbf16>
    %cst = arith.constant dense<0.000000e+00> : vector<3200x32xf32>
    %2 = tpu.matmul %0, %1, %cst {dimension_numbers = #tpu.dot_dimension_numbers<[1], [0], [0], [1], [0, 0, 1, 1], [], []>} : vector<3200x100xbf16>, vector<100x32xbf16>, vector<3200x32xf32> -> vector<3200x32xf32>
    %c0_3 = arith.constant 0 : index
    %c0_4 = arith.constant 0 : index
    %3 = vector.load %arg2[%c0_3, %c0_4] : memref<1x32xf32, #tpu.memory_space<vmem>>, vector<1x32xf32>
    %4 = vector.broadcast %3 : vector<1x32xf32> to vector<3200x32xf32>
    %5 = arith.addf %2, %4 : vector<3200x32xf32>
    %cst_5 = arith.constant 0.000000e+00 : f32
    %6 = vector.broadcast %cst_5 : f32 to vector<3200x32xf32>
    %7 = arith.maximumf %5, %6 : vector<3200x32xf32>
    %8 = arith.truncf %7 : vector<3200x32xf32> to vector<3200x32xbf16>
    %c0_6 = arith.constant 0 : index
    %c0_7 = arith.constant 0 : index
    %9 = vector.load %arg10[%c0_6, %c0_7] : memref<3200x32xbf16, #tpu.memory_space<vmem>>, vector<3200x32xbf16>
    tpu.vector_store %arg10[%c0_6, %c0_7], %8 {strides = array<i32>} : memref<3200x32xbf16, #tpu.memory_space<vmem>>, vector<3200x32xbf16>,
    %cst_8 = arith.constant 0.000000e+00 : f32
    %10 = vector.broadcast %cst_8 : f32 to vector<128x32xf32>
    %c0_9 = arith.constant 0 : index
    %c0_10 = arith.constant 0 : index
    %11 = vector.load %arg10[%c0_9, %c0_10] : memref<3200x32xbf16, #tpu.memory_space<vmem>>, vector<128x32xbf16>
    %c0_11 = arith.constant 0 : index
    %c0_12 = arith.constant 0 : index
    %12 = vector.load %arg3[%c0_11, %c0_12] : memref<800x32xbf16, #tpu.memory_space<vmem>>, vector<32x32xbf16>
    %cst_13 = arith.constant dense<0.000000e+00> : vector<128x32xf32>
    %13 = tpu.matmul %11, %12, %cst_13 {dimension_numbers = #tpu.dot_dimension_numbers<[1], [0], [0], [1], [0, 0, 1, 1], [], []>} : vector<128x32xbf16>, vector<32x32xbf16>, vector<128x32xf32> -> vector<128x32xf32>
    %14 = arith.addf %10, %13 : vector<128x32xf32>
    %c128 = arith.constant 128 : index
    %c0_14 = arith.constant 0 : index
    %15 = vector.load %arg10[%c128, %c0_14] : memref<3200x32xbf16, #tpu.memory_space<vmem>>, vector<128x32xbf16>
    %c32 = arith.constant 32 : index
    %c0_15 = arith.constant 0 : index
    %16 = vector.load %arg3[%c32, %c0_15] : memref<800x32xbf16, #tpu.memory_space<vmem>>, vector<32x32xbf16>
    %cst_16 = arith.constant dense<0.000000e+00> : vector<128x32xf32>
    %17 = tpu.matmul %15, %16, %cst_16 {dimension_numbers = #tpu.dot_dimension_numbers<[1], [0], [0], [1], [0, 0, 1, 1], [], []>} : vector<128x32xbf16>, vector<32x32xbf16>, vector<128x32xf32> -> vector<128x32xf32>
    %18 = arith.addf %14, %17 : vector<128x32xf32>
    %c256 = arith.constant 256 : index
    %c0_17 = arith.constant 0 : index
    %19 = vector.load %arg10[%c256, %c0_17] : memref<3200x32xbf16, #tpu.memory_space<vmem>>, vector<128x32xbf16>
    %c64 = arith.constant 64 : index
    %c0_18 = arith.constant 0 : index
    %20 = vector.load %arg3[%c64, %c0_18] : memref<800x32xbf16, #tpu.memory_space<vmem>>, vector<32x32xbf16>
    %cst_19 = arith.constant dense<0.000000e+00> : vector<128x32xf32>
    %21 = tpu.matmul %19, %20, %cst_19 {dimension_numbers = #tpu.dot_dimension_numbers<[1], [0], [0], [1], [0, 0, 1, 1], [], []>} : vector<128x32xbf16>, vector<32x32xbf16>, vector<128x32xf32> -> vector<128x32xf32>
    %22 = arith.addf %18, %21 : vector<128x32xf32>
    %c384 = arith.constant 384 : index
    %c0_20 = arith.constant 0 : index
    %23 = vector.load %arg10[%c384, %c0_20] : memref<3200x32xbf16, #tpu.memory_space<vmem>>, vector<128x32xbf16>
    %c96 = arith.constant 96 : index
    %c0_21 = arith.constant 0 : index
    %24 = vector.load %arg3[%c96, %c0_21] : memref<800x32xbf16, #tpu.memory_space<vmem>>, vector<32x32xbf16>
    %cst_22 = arith.constant dense<0.000000e+00> : vector<128x32xf32>
    %25 = tpu.matmul %23, %24, %cst_22 {dimension_numbers = #tpu.dot_dimension_numbers<[1], [0], [0], [1], [0, 0, 1, 1], [], []>} : vector<128x32xbf16>, vector<32x32xbf16>, vector<128x32xf32> -> vector<128x32xf32>
    %26 = arith.addf %22, %25 : vector<128x32xf32>
    %c512 = arith.constant 512 : index
    %c0_23 = arith.constant 0 : index
    %27 = vector.load %arg10[%c512, %c0_23] : memref<3200x32xbf16, #tpu.memory_space<vmem>>, vector<128x32xbf16>
    %c128_24 = arith.constant 128 : index
    %c0_25 = arith.constant 0 : index
    %28 = vector.load %arg3[%c128_24, %c0_25] : memref<800x32xbf16, #tpu.memory_space<vmem>>, vector<32x32xbf16>
    %cst_26 = arith.constant dense<0.000000e+00> : vector<128x32xf32>
    %29 = tpu.matmul %27, %28, %cst_26 {dimension_numbers = #tpu.dot_dimension_numbers<[1], [0], [0], [1], [0, 0, 1, 1], [], []>} : vector<128x32xbf16>, vector<32x32xbf16>, vector<128x32xf32> -> vector<128x32xf32>
    %30 = arith.addf %26, %29 : vector<128x32xf32>
    %c640 = arith.constant 640 : index
    %c0_27 = arith.constant 0 : index
    %31 = vector.load %arg10[%c640, %c0_27] : memref<3200x32xbf16, #tpu.memory_space<vmem>>, vector<128x32xbf16>
    %c160 = arith.constant 160 : index
    %c0_28 = arith.constant 0 : index
    %32 = vector.load %arg3[%c160, %c0_28] : memref<800x32xbf16, #tpu.memory_space<vmem>>, vector<32x32xbf16>
    %cst_29 = arith.constant dense<0.000000e+00> : vector<128x32xf32>
    %33 = tpu.matmul %31, %32, %cst_29 {dimension_numbers = #tpu.dot_dimension_numbers<[1], [0], [0], [1], [0, 0, 1, 1], [], []>} : vector<128x32xbf16>, vector<32x32xbf16>, vector<128x32xf32> -> vector<128x32xf32>
    %34 = arith.addf %30, %33 : vector<128x32xf32>
    %c768 = arith.constant 768 : index
    %c0_30 = arith.constant 0 : index
    %35 = vector.load %arg10[%c768, %c0_30] : memref<3200x32xbf16, #tpu.memory_space<vmem>>, vector<128x32xbf16>
    %c192 = arith.constant 192 : index
    %c0_31 = arith.constant 0 : index
    %36 = vector.load %arg3[%c192, %c0_31] : memref<800x32xbf16, #tpu.memory_space<vmem>>, vector<32x32xbf16>
    %cst_32 = arith.constant dense<0.000000e+00> : vector<128x32xf32>
    %37 = tpu.matmul %35, %36, %cst_32 {dimension_numbers = #tpu.dot_dimension_numbers<[1], [0], [0], [1], [0, 0, 1, 1], [], []>} : vector<128x32xbf16>, vector<32x32xbf16>, vector<128x32xf32> -> vector<128x32xf32>
    %38 = arith.addf %34, %37 : vector<128x32xf32>
    %c896 = arith.constant 896 : index
    %c0_33 = arith.constant 0 : index
    %39 = vector.load %arg10[%c896, %c0_33] : memref<3200x32xbf16, #tpu.memory_space<vmem>>, vector<128x32xbf16>
    %c224 = arith.constant 224 : index
    %c0_34 = arith.constant 0 : index
    %40 = vector.load %arg3[%c224, %c0_34] : memref<800x32xbf16, #tpu.memory_space<vmem>>, vector<32x32xbf16>
    %cst_35 = arith.constant dense<0.000000e+00> : vector<128x32xf32>
    %41 = tpu.matmul %39, %40, %cst_35 {dimension_numbers = #tpu.dot_dimension_numbers<[1], [0], [0], [1], [0, 0, 1, 1], [], []>} : vector<128x32xbf16>, vector<32x32xbf16>, vector<128x32xf32> -> vector<128x32xf32>
    %42 = arith.addf %38, %41 : vector<128x32xf32>
    %c1024 = arith.constant 1024 : index
    %c0_36 = arith.constant 0 : index
    %43 = vector.load %arg10[%c1024, %c0_36] : memref<3200x32xbf16, #tpu.memory_space<vmem>>, vector<128x32xbf16>
    %c256_37 = arith.constant 256 : index
    %c0_38 = arith.constant 0 : index
    %44 = vector.load %arg3[%c256_37, %c0_38] : memref<800x32xbf16, #tpu.memory_space<vmem>>, vector<32x32xbf16>
    %cst_39 = arith.constant dense<0.000000e+00> : vector<128x32xf32>
    %45 = tpu.matmul %43, %44, %cst_39 {dimension_numbers = #tpu.dot_dimension_numbers<[1], [0], [0], [1], [0, 0, 1, 1], [], []>} : vector<128x32xbf16>, vector<32x32xbf16>, vector<128x32xf32> -> vector<128x32xf32>
    %46 = arith.addf %42, %45 : vector<128x32xf32>
    %c1152 = arith.constant 1152 : index
    %c0_40 = arith.constant 0 : index
    %47 = vector.load %arg10[%c1152, %c0_40] : memref<3200x32xbf16, #tpu.memory_space<vmem>>, vector<128x32xbf16>
    %c288 = arith.constant 288 : index
    %c0_41 = arith.constant 0 : index
    %48 = vector.load %arg3[%c288, %c0_41] : memref<800x32xbf16, #tpu.memory_space<vmem>>, vector<32x32xbf16>
    %cst_42 = arith.constant dense<0.000000e+00> : vector<128x32xf32>
    %49 = tpu.matmul %47, %48, %cst_42 {dimension_numbers = #tpu.dot_dimension_numbers<[1], [0], [0], [1], [0, 0, 1, 1], [], []>} : vector<128x32xbf16>, vector<32x32xbf16>, vector<128x32xf32> -> vector<128x32xf32>
    %50 = arith.addf %46, %49 : vector<128x32xf32>
    %c1280 = arith.constant 1280 : index
    %c0_43 = arith.constant 0 : index
    %51 = vector.load %arg10[%c1280, %c0_43] : memref<3200x32xbf16, #tpu.memory_space<vmem>>, vector<128x32xbf16>
    %c320 = arith.constant 320 : index
    %c0_44 = arith.constant 0 : index
    %52 = vector.load %arg3[%c320, %c0_44] : memref<800x32xbf16, #tpu.memory_space<vmem>>, vector<32x32xbf16>
    %cst_45 = arith.constant dense<0.000000e+00> : vector<128x32xf32>
    %53 = tpu.matmul %51, %52, %cst_45 {dimension_numbers = #tpu.dot_dimension_numbers<[1], [0], [0], [1], [0, 0, 1, 1], [], []>} : vector<128x32xbf16>, vector<32x32xbf16>, vector<128x32xf32> -> vector<128x32xf32>
    %54 = arith.addf %50, %53 : vector<128x32xf32>
    %c1408 = arith.constant 1408 : index
    %c0_46 = arith.constant 0 : index
    %55 = vector.load %arg10[%c1408, %c0_46] : memref<3200x32xbf16, #tpu.memory_space<vmem>>, vector<128x32xbf16>
    %c352 = arith.constant 352 : index
    %c0_47 = arith.constant 0 : index
    %56 = vector.load %arg3[%c352, %c0_47] : memref<800x32xbf16, #tpu.memory_space<vmem>>, vector<32x32xbf16>
    %cst_48 = arith.constant dense<0.000000e+00> : vector<128x32xf32>
    %57 = tpu.matmul %55, %56, %cst_48 {dimension_numbers = #tpu.dot_dimension_numbers<[1], [0], [0], [1], [0, 0, 1, 1], [], []>} : vector<128x32xbf16>, vector<32x32xbf16>, vector<128x32xf32> -> vector<128x32xf32>
    %58 = arith.addf %54, %57 : vector<128x32xf32>
    %c1536 = arith.constant 1536 : index
    %c0_49 = arith.constant 0 : index
    %59 = vector.load %arg10[%c1536, %c0_49] : memref<3200x32xbf16, #tpu.memory_space<vmem>>, vector<128x32xbf16>
    %c384_50 = arith.constant 384 : index
    %c0_51 = arith.constant 0 : index
    %60 = vector.load %arg3[%c384_50, %c0_51] : memref<800x32xbf16, #tpu.memory_space<vmem>>, vector<32x32xbf16>
    %cst_52 = arith.constant dense<0.000000e+00> : vector<128x32xf32>
    %61 = tpu.matmul %59, %60, %cst_52 {dimension_numbers = #tpu.dot_dimension_numbers<[1], [0], [0], [1], [0, 0, 1, 1], [], []>} : vector<128x32xbf16>, vector<32x32xbf16>, vector<128x32xf32> -> vector<128x32xf32>
    %62 = arith.addf %58, %61 : vector<128x32xf32>
    %c1664 = arith.constant 1664 : index
    %c0_53 = arith.constant 0 : index
    %63 = vector.load %arg10[%c1664, %c0_53] : memref<3200x32xbf16, #tpu.memory_space<vmem>>, vector<128x32xbf16>
    %c416 = arith.constant 416 : index
    %c0_54 = arith.constant 0 : index
    %64 = vector.load %arg3[%c416, %c0_54] : memref<800x32xbf16, #tpu.memory_space<vmem>>, vector<32x32xbf16>
    %cst_55 = arith.constant dense<0.000000e+00> : vector<128x32xf32>
    %65 = tpu.matmul %63, %64, %cst_55 {dimension_numbers = #tpu.dot_dimension_numbers<[1], [0], [0], [1], [0, 0, 1, 1], [], []>} : vector<128x32xbf16>, vector<32x32xbf16>, vector<128x32xf32> -> vector<128x32xf32>
    %66 = arith.addf %62, %65 : vector<128x32xf32>
    %c1792 = arith.constant 1792 : index
    %c0_56 = arith.constant 0 : index
    %67 = vector.load %arg10[%c1792, %c0_56] : memref<3200x32xbf16, #tpu.memory_space<vmem>>, vector<128x32xbf16>
    %c448 = arith.constant 448 : index
    %c0_57 = arith.constant 0 : index
    %68 = vector.load %arg3[%c448, %c0_57] : memref<800x32xbf16, #tpu.memory_space<vmem>>, vector<32x32xbf16>
    %cst_58 = arith.constant dense<0.000000e+00> : vector<128x32xf32>
    %69 = tpu.matmul %67, %68, %cst_58 {dimension_numbers = #tpu.dot_dimension_numbers<[1], [0], [0], [1], [0, 0, 1, 1], [], []>} : vector<128x32xbf16>, vector<32x32xbf16>, vector<128x32xf32> -> vector<128x32xf32>
    %70 = arith.addf %66, %69 : vector<128x32xf32>
    %c1920 = arith.constant 1920 : index
    %c0_59 = arith.constant 0 : index
    %71 = vector.load %arg10[%c1920, %c0_59] : memref<3200x32xbf16, #tpu.memory_space<vmem>>, vector<128x32xbf16>
    %c480 = arith.constant 480 : index
    %c0_60 = arith.constant 0 : index
    %72 = vector.load %arg3[%c480, %c0_60] : memref<800x32xbf16, #tpu.memory_space<vmem>>, vector<32x32xbf16>
    %cst_61 = arith.constant dense<0.000000e+00> : vector<128x32xf32>
    %73 = tpu.matmul %71, %72, %cst_61 {dimension_numbers = #tpu.dot_dimension_numbers<[1], [0], [0], [1], [0, 0, 1, 1], [], []>} : vector<128x32xbf16>, vector<32x32xbf16>, vector<128x32xf32> -> vector<128x32xf32>
    %74 = arith.addf %70, %73 : vector<128x32xf32>
    %c2048 = arith.constant 2048 : index
    %c0_62 = arith.constant 0 : index
    %75 = vector.load %arg10[%c2048, %c0_62] : memref<3200x32xbf16, #tpu.memory_space<vmem>>, vector<128x32xbf16>
    %c512_63 = arith.constant 512 : index
    %c0_64 = arith.constant 0 : index
    %76 = vector.load %arg3[%c512_63, %c0_64] : memref<800x32xbf16, #tpu.memory_space<vmem>>, vector<32x32xbf16>
    %cst_65 = arith.constant dense<0.000000e+00> : vector<128x32xf32>
    %77 = tpu.matmul %75, %76, %cst_65 {dimension_numbers = #tpu.dot_dimension_numbers<[1], [0], [0], [1], [0, 0, 1, 1], [], []>} : vector<128x32xbf16>, vector<32x32xbf16>, vector<128x32xf32> -> vector<128x32xf32>
    %78 = arith.addf %74, %77 : vector<128x32xf32>
    %c2176 = arith.constant 2176 : index
    %c0_66 = arith.constant 0 : index
    %79 = vector.load %arg10[%c2176, %c0_66] : memref<3200x32xbf16, #tpu.memory_space<vmem>>, vector<128x32xbf16>
    %c544 = arith.constant 544 : index
    %c0_67 = arith.constant 0 : index
    %80 = vector.load %arg3[%c544, %c0_67] : memref<800x32xbf16, #tpu.memory_space<vmem>>, vector<32x32xbf16>
    %cst_68 = arith.constant dense<0.000000e+00> : vector<128x32xf32>
    %81 = tpu.matmul %79, %80, %cst_68 {dimension_numbers = #tpu.dot_dimension_numbers<[1], [0], [0], [1], [0, 0, 1, 1], [], []>} : vector<128x32xbf16>, vector<32x32xbf16>, vector<128x32xf32> -> vector<128x32xf32>
    %82 = arith.addf %78, %81 : vector<128x32xf32>
    %c2304 = arith.constant 2304 : index
    %c0_69 = arith.constant 0 : index
    %83 = vector.load %arg10[%c2304, %c0_69] : memref<3200x32xbf16, #tpu.memory_space<vmem>>, vector<128x32xbf16>
    %c576 = arith.constant 576 : index
    %c0_70 = arith.constant 0 : index
    %84 = vector.load %arg3[%c576, %c0_70] : memref<800x32xbf16, #tpu.memory_space<vmem>>, vector<32x32xbf16>
    %cst_71 = arith.constant dense<0.000000e+00> : vector<128x32xf32>
    %85 = tpu.matmul %83, %84, %cst_71 {dimension_numbers = #tpu.dot_dimension_numbers<[1], [0], [0], [1], [0, 0, 1, 1], [], []>} : vector<128x32xbf16>, vector<32x32xbf16>, vector<128x32xf32> -> vector<128x32xf32>
    %86 = arith.addf %82, %85 : vector<128x32xf32>
    %c2432 = arith.constant 2432 : index
    %c0_72 = arith.constant 0 : index
    %87 = vector.load %arg10[%c2432, %c0_72] : memref<3200x32xbf16, #tpu.memory_space<vmem>>, vector<128x32xbf16>
    %c608 = arith.constant 608 : index
    %c0_73 = arith.constant 0 : index
    %88 = vector.load %arg3[%c608, %c0_73] : memref<800x32xbf16, #tpu.memory_space<vmem>>, vector<32x32xbf16>
    %cst_74 = arith.constant dense<0.000000e+00> : vector<128x32xf32>
    %89 = tpu.matmul %87, %88, %cst_74 {dimension_numbers = #tpu.dot_dimension_numbers<[1], [0], [0], [1], [0, 0, 1, 1], [], []>} : vector<128x32xbf16>, vector<32x32xbf16>, vector<128x32xf32> -> vector<128x32xf32>
    %90 = arith.addf %86, %89 : vector<128x32xf32>
    %c2560 = arith.constant 2560 : index
    %c0_75 = arith.constant 0 : index
    %91 = vector.load %arg10[%c2560, %c0_75] : memref<3200x32xbf16, #tpu.memory_space<vmem>>, vector<128x32xbf16>
    %c640_76 = arith.constant 640 : index
    %c0_77 = arith.constant 0 : index
    %92 = vector.load %arg3[%c640_76, %c0_77] : memref<800x32xbf16, #tpu.memory_space<vmem>>, vector<32x32xbf16>
    %cst_78 = arith.constant dense<0.000000e+00> : vector<128x32xf32>
    %93 = tpu.matmul %91, %92, %cst_78 {dimension_numbers = #tpu.dot_dimension_numbers<[1], [0], [0], [1], [0, 0, 1, 1], [], []>} : vector<128x32xbf16>, vector<32x32xbf16>, vector<128x32xf32> -> vector<128x32xf32>
    %94 = arith.addf %90, %93 : vector<128x32xf32>
    %c2688 = arith.constant 2688 : index
    %c0_79 = arith.constant 0 : index
    %95 = vector.load %arg10[%c2688, %c0_79] : memref<3200x32xbf16, #tpu.memory_space<vmem>>, vector<128x32xbf16>
    %c672 = arith.constant 672 : index
    %c0_80 = arith.constant 0 : index
    %96 = vector.load %arg3[%c672, %c0_80] : memref<800x32xbf16, #tpu.memory_space<vmem>>, vector<32x32xbf16>
    %cst_81 = arith.constant dense<0.000000e+00> : vector<128x32xf32>
    %97 = tpu.matmul %95, %96, %cst_81 {dimension_numbers = #tpu.dot_dimension_numbers<[1], [0], [0], [1], [0, 0, 1, 1], [], []>} : vector<128x32xbf16>, vector<32x32xbf16>, vector<128x32xf32> -> vector<128x32xf32>
    %98 = arith.addf %94, %97 : vector<128x32xf32>
    %c2816 = arith.constant 2816 : index
    %c0_82 = arith.constant 0 : index
    %99 = vector.load %arg10[%c2816, %c0_82] : memref<3200x32xbf16, #tpu.memory_space<vmem>>, vector<128x32xbf16>
    %c704 = arith.constant 704 : index
    %c0_83 = arith.constant 0 : index
    %100 = vector.load %arg3[%c704, %c0_83] : memref<800x32xbf16, #tpu.memory_space<vmem>>, vector<32x32xbf16>
    %cst_84 = arith.constant dense<0.000000e+00> : vector<128x32xf32>
    %101 = tpu.matmul %99, %100, %cst_84 {dimension_numbers = #tpu.dot_dimension_numbers<[1], [0], [0], [1], [0, 0, 1, 1], [], []>} : vector<128x32xbf16>, vector<32x32xbf16>, vector<128x32xf32> -> vector<128x32xf32>
    %102 = arith.addf %98, %101 : vector<128x32xf32>
    %c2944 = arith.constant 2944 : index
    %c0_85 = arith.constant 0 : index
    %103 = vector.load %arg10[%c2944, %c0_85] : memref<3200x32xbf16, #tpu.memory_space<vmem>>, vector<128x32xbf16>
    %c736 = arith.constant 736 : index
    %c0_86 = arith.constant 0 : index
    %104 = vector.load %arg3[%c736, %c0_86] : memref<800x32xbf16, #tpu.memory_space<vmem>>, vector<32x32xbf16>
    %cst_87 = arith.constant dense<0.000000e+00> : vector<128x32xf32>
    %105 = tpu.matmul %103, %104, %cst_87 {dimension_numbers = #tpu.dot_dimension_numbers<[1], [0], [0], [1], [0, 0, 1, 1], [], []>} : vector<128x32xbf16>, vector<32x32xbf16>, vector<128x32xf32> -> vector<128x32xf32>
    %106 = arith.addf %102, %105 : vector<128x32xf32>
    %c3072 = arith.constant 3072 : index
    %c0_88 = arith.constant 0 : index
    %107 = vector.load %arg10[%c3072, %c0_88] : memref<3200x32xbf16, #tpu.memory_space<vmem>>, vector<128x32xbf16>
    %c768_89 = arith.constant 768 : index
    %c0_90 = arith.constant 0 : index
    %108 = vector.load %arg3[%c768_89, %c0_90] : memref<800x32xbf16, #tpu.memory_space<vmem>>, vector<32x32xbf16>
    %cst_91 = arith.constant dense<0.000000e+00> : vector<128x32xf32>
    %109 = tpu.matmul %107, %108, %cst_91 {dimension_numbers = #tpu.dot_dimension_numbers<[1], [0], [0], [1], [0, 0, 1, 1], [], []>} : vector<128x32xbf16>, vector<32x32xbf16>, vector<128x32xf32> -> vector<128x32xf32>
    %110 = arith.addf %106, %109 : vector<128x32xf32>
    %c0_92 = arith.constant 0 : index
    %c0_93 = arith.constant 0 : index
    %111 = vector.load %arg4[%c0_92, %c0_93] : memref<1x32xf32, #tpu.memory_space<vmem>>, vector<1x32xf32>
    %112 = vector.broadcast %111 : vector<1x32xf32> to vector<128x32xf32>
    %113 = arith.addf %110, %112 : vector<128x32xf32>
    %cst_94 = arith.constant 0.000000e+00 : f32
    %114 = vector.broadcast %cst_94 : f32 to vector<128x32xf32>
    %115 = arith.maximumf %113, %114 : vector<128x32xf32>
    %cst_95 = arith.constant 0.000000e+00 : f32
    %116 = vector.broadcast %cst_95 : f32 to vector<8x32xf32>
    %117 = vector.extract_strided_slice %115 {offsets = [0, 0], sizes = [8, 32], strides = [1, 1]} : vector<128x32xf32> to vector<8x32xf32>
    %118 = arith.truncf %117 : vector<8x32xf32> to vector<8x32xbf16>
    %c0_96 = arith.constant 0 : index
    %c0_97 = arith.constant 0 : index
    %119 = vector.load %arg5[%c0_96, %c0_97] : memref<512x32xbf16, #tpu.memory_space<vmem>>, vector<32x32xbf16>
    %cst_98 = arith.constant dense<0.000000e+00> : vector<8x32xf32>
    %120 = tpu.matmul %118, %119, %cst_98 {dimension_numbers = #tpu.dot_dimension_numbers<[1], [0], [0], [1], [0, 0, 1, 1], [], []>} : vector<8x32xbf16>, vector<32x32xbf16>, vector<8x32xf32> -> vector<8x32xf32>
    %121 = arith.addf %116, %120 : vector<8x32xf32>
    %122 = vector.extract_strided_slice %115 {offsets = [8, 0], sizes = [8, 32], strides = [1, 1]} : vector<128x32xf32> to vector<8x32xf32>
    %123 = arith.truncf %122 : vector<8x32xf32> to vector<8x32xbf16>
    %c32_99 = arith.constant 32 : index
    %c0_100 = arith.constant 0 : index
    %124 = vector.load %arg5[%c32_99, %c0_100] : memref<512x32xbf16, #tpu.memory_space<vmem>>, vector<32x32xbf16>
    %cst_101 = arith.constant dense<0.000000e+00> : vector<8x32xf32>
    %125 = tpu.matmul %123, %124, %cst_101 {dimension_numbers = #tpu.dot_dimension_numbers<[1], [0], [0], [1], [0, 0, 1, 1], [], []>} : vector<8x32xbf16>, vector<32x32xbf16>, vector<8x32xf32> -> vector<8x32xf32>
    %126 = arith.addf %121, %125 : vector<8x32xf32>
    %127 = vector.extract_strided_slice %115 {offsets = [16, 0], sizes = [8, 32], strides = [1, 1]} : vector<128x32xf32> to vector<8x32xf32>
    %128 = arith.truncf %127 : vector<8x32xf32> to vector<8x32xbf16>
    %c64_102 = arith.constant 64 : index
    %c0_103 = arith.constant 0 : index
    %129 = vector.load %arg5[%c64_102, %c0_103] : memref<512x32xbf16, #tpu.memory_space<vmem>>, vector<32x32xbf16>
    %cst_104 = arith.constant dense<0.000000e+00> : vector<8x32xf32>
    %130 = tpu.matmul %128, %129, %cst_104 {dimension_numbers = #tpu.dot_dimension_numbers<[1], [0], [0], [1], [0, 0, 1, 1], [], []>} : vector<8x32xbf16>, vector<32x32xbf16>, vector<8x32xf32> -> vector<8x32xf32>
    %131 = arith.addf %126, %130 : vector<8x32xf32>
    %132 = vector.extract_strided_slice %115 {offsets = [24, 0], sizes = [8, 32], strides = [1, 1]} : vector<128x32xf32> to vector<8x32xf32>
    %133 = arith.truncf %132 : vector<8x32xf32> to vector<8x32xbf16>
    %c96_105 = arith.constant 96 : index
    %c0_106 = arith.constant 0 : index
    %134 = vector.load %arg5[%c96_105, %c0_106] : memref<512x32xbf16, #tpu.memory_space<vmem>>, vector<32x32xbf16>
    %cst_107 = arith.constant dense<0.000000e+00> : vector<8x32xf32>
    %135 = tpu.matmul %133, %134, %cst_107 {dimension_numbers = #tpu.dot_dimension_numbers<[1], [0], [0], [1], [0, 0, 1, 1], [], []>} : vector<8x32xbf16>, vector<32x32xbf16>, vector<8x32xf32> -> vector<8x32xf32>
    %136 = arith.addf %131, %135 : vector<8x32xf32>
    %137 = vector.extract_strided_slice %115 {offsets = [32, 0], sizes = [8, 32], strides = [1, 1]} : vector<128x32xf32> to vector<8x32xf32>
    %138 = arith.truncf %137 : vector<8x32xf32> to vector<8x32xbf16>
    %c128_108 = arith.constant 128 : index
    %c0_109 = arith.constant 0 : index
    %139 = vector.load %arg5[%c128_108, %c0_109] : memref<512x32xbf16, #tpu.memory_space<vmem>>, vector<32x32xbf16>
    %cst_110 = arith.constant dense<0.000000e+00> : vector<8x32xf32>
    %140 = tpu.matmul %138, %139, %cst_110 {dimension_numbers = #tpu.dot_dimension_numbers<[1], [0], [0], [1], [0, 0, 1, 1], [], []>} : vector<8x32xbf16>, vector<32x32xbf16>, vector<8x32xf32> -> vector<8x32xf32>
    %141 = arith.addf %136, %140 : vector<8x32xf32>
    %142 = vector.extract_strided_slice %115 {offsets = [40, 0], sizes = [8, 32], strides = [1, 1]} : vector<128x32xf32> to vector<8x32xf32>
    %143 = arith.truncf %142 : vector<8x32xf32> to vector<8x32xbf16>
    %c160_111 = arith.constant 160 : index
    %c0_112 = arith.constant 0 : index
    %144 = vector.load %arg5[%c160_111, %c0_112] : memref<512x32xbf16, #tpu.memory_space<vmem>>, vector<32x32xbf16>
    %cst_113 = arith.constant dense<0.000000e+00> : vector<8x32xf32>
    %145 = tpu.matmul %143, %144, %cst_113 {dimension_numbers = #tpu.dot_dimension_numbers<[1], [0], [0], [1], [0, 0, 1, 1], [], []>} : vector<8x32xbf16>, vector<32x32xbf16>, vector<8x32xf32> -> vector<8x32xf32>
    %146 = arith.addf %141, %145 : vector<8x32xf32>
    %147 = vector.extract_strided_slice %115 {offsets = [48, 0], sizes = [8, 32], strides = [1, 1]} : vector<128x32xf32> to vector<8x32xf32>
    %148 = arith.truncf %147 : vector<8x32xf32> to vector<8x32xbf16>
    %c192_114 = arith.constant 192 : index
    %c0_115 = arith.constant 0 : index
    %149 = vector.load %arg5[%c192_114, %c0_115] : memref<512x32xbf16, #tpu.memory_space<vmem>>, vector<32x32xbf16>
    %cst_116 = arith.constant dense<0.000000e+00> : vector<8x32xf32>
    %150 = tpu.matmul %148, %149, %cst_116 {dimension_numbers = #tpu.dot_dimension_numbers<[1], [0], [0], [1], [0, 0, 1, 1], [], []>} : vector<8x32xbf16>, vector<32x32xbf16>, vector<8x32xf32> -> vector<8x32xf32>
    %151 = arith.addf %146, %150 : vector<8x32xf32>
    %152 = vector.extract_strided_slice %115 {offsets = [56, 0], sizes = [8, 32], strides = [1, 1]} : vector<128x32xf32> to vector<8x32xf32>
    %153 = arith.truncf %152 : vector<8x32xf32> to vector<8x32xbf16>
    %c224_117 = arith.constant 224 : index
    %c0_118 = arith.constant 0 : index
    %154 = vector.load %arg5[%c224_117, %c0_118] : memref<512x32xbf16, #tpu.memory_space<vmem>>, vector<32x32xbf16>
    %cst_119 = arith.constant dense<0.000000e+00> : vector<8x32xf32>
    %155 = tpu.matmul %153, %154, %cst_119 {dimension_numbers = #tpu.dot_dimension_numbers<[1], [0], [0], [1], [0, 0, 1, 1], [], []>} : vector<8x32xbf16>, vector<32x32xbf16>, vector<8x32xf32> -> vector<8x32xf32>
    %156 = arith.addf %151, %155 : vector<8x32xf32>
    %157 = vector.extract_strided_slice %115 {offsets = [64, 0], sizes = [8, 32], strides = [1, 1]} : vector<128x32xf32> to vector<8x32xf32>
    %158 = arith.truncf %157 : vector<8x32xf32> to vector<8x32xbf16>
    %c256_120 = arith.constant 256 : index
    %c0_121 = arith.constant 0 : index
    %159 = vector.load %arg5[%c256_120, %c0_121] : memref<512x32xbf16, #tpu.memory_space<vmem>>, vector<32x32xbf16>
    %cst_122 = arith.constant dense<0.000000e+00> : vector<8x32xf32>
    %160 = tpu.matmul %158, %159, %cst_122 {dimension_numbers = #tpu.dot_dimension_numbers<[1], [0], [0], [1], [0, 0, 1, 1], [], []>} : vector<8x32xbf16>, vector<32x32xbf16>, vector<8x32xf32> -> vector<8x32xf32>
    %161 = arith.addf %156, %160 : vector<8x32xf32>
    %162 = vector.extract_strided_slice %115 {offsets = [72, 0], sizes = [8, 32], strides = [1, 1]} : vector<128x32xf32> to vector<8x32xf32>
    %163 = arith.truncf %162 : vector<8x32xf32> to vector<8x32xbf16>
    %c288_123 = arith.constant 288 : index
    %c0_124 = arith.constant 0 : index
    %164 = vector.load %arg5[%c288_123, %c0_124] : memref<512x32xbf16, #tpu.memory_space<vmem>>, vector<32x32xbf16>
    %cst_125 = arith.constant dense<0.000000e+00> : vector<8x32xf32>
    %165 = tpu.matmul %163, %164, %cst_125 {dimension_numbers = #tpu.dot_dimension_numbers<[1], [0], [0], [1], [0, 0, 1, 1], [], []>} : vector<8x32xbf16>, vector<32x32xbf16>, vector<8x32xf32> -> vector<8x32xf32>
    %166 = arith.addf %161, %165 : vector<8x32xf32>
    %167 = vector.extract_strided_slice %115 {offsets = [80, 0], sizes = [8, 32], strides = [1, 1]} : vector<128x32xf32> to vector<8x32xf32>
    %168 = arith.truncf %167 : vector<8x32xf32> to vector<8x32xbf16>
    %c320_126 = arith.constant 320 : index
    %c0_127 = arith.constant 0 : index
    %169 = vector.load %arg5[%c320_126, %c0_127] : memref<512x32xbf16, #tpu.memory_space<vmem>>, vector<32x32xbf16>
    %cst_128 = arith.constant dense<0.000000e+00> : vector<8x32xf32>
    %170 = tpu.matmul %168, %169, %cst_128 {dimension_numbers = #tpu.dot_dimension_numbers<[1], [0], [0], [1], [0, 0, 1, 1], [], []>} : vector<8x32xbf16>, vector<32x32xbf16>, vector<8x32xf32> -> vector<8x32xf32>
    %171 = arith.addf %166, %170 : vector<8x32xf32>
    %172 = vector.extract_strided_slice %115 {offsets = [88, 0], sizes = [8, 32], strides = [1, 1]} : vector<128x32xf32> to vector<8x32xf32>
    %173 = arith.truncf %172 : vector<8x32xf32> to vector<8x32xbf16>
    %c352_129 = arith.constant 352 : index
    %c0_130 = arith.constant 0 : index
    %174 = vector.load %arg5[%c352_129, %c0_130] : memref<512x32xbf16, #tpu.memory_space<vmem>>, vector<32x32xbf16>
    %cst_131 = arith.constant dense<0.000000e+00> : vector<8x32xf32>
    %175 = tpu.matmul %173, %174, %cst_131 {dimension_numbers = #tpu.dot_dimension_numbers<[1], [0], [0], [1], [0, 0, 1, 1], [], []>} : vector<8x32xbf16>, vector<32x32xbf16>, vector<8x32xf32> -> vector<8x32xf32>
    %176 = arith.addf %171, %175 : vector<8x32xf32>
    %177 = vector.extract_strided_slice %115 {offsets = [96, 0], sizes = [8, 32], strides = [1, 1]} : vector<128x32xf32> to vector<8x32xf32>
    %178 = arith.truncf %177 : vector<8x32xf32> to vector<8x32xbf16>
    %c384_132 = arith.constant 384 : index
    %c0_133 = arith.constant 0 : index
    %179 = vector.load %arg5[%c384_132, %c0_133] : memref<512x32xbf16, #tpu.memory_space<vmem>>, vector<32x32xbf16>
    %cst_134 = arith.constant dense<0.000000e+00> : vector<8x32xf32>
    %180 = tpu.matmul %178, %179, %cst_134 {dimension_numbers = #tpu.dot_dimension_numbers<[1], [0], [0], [1], [0, 0, 1, 1], [], []>} : vector<8x32xbf16>, vector<32x32xbf16>, vector<8x32xf32> -> vector<8x32xf32>
    %181 = arith.addf %176, %180 : vector<8x32xf32>
    %182 = vector.extract_strided_slice %115 {offsets = [104, 0], sizes = [8, 32], strides = [1, 1]} : vector<128x32xf32> to vector<8x32xf32>
    %183 = arith.truncf %182 : vector<8x32xf32> to vector<8x32xbf16>
    %c416_135 = arith.constant 416 : index
    %c0_136 = arith.constant 0 : index
    %184 = vector.load %arg5[%c416_135, %c0_136] : memref<512x32xbf16, #tpu.memory_space<vmem>>, vector<32x32xbf16>
    %cst_137 = arith.constant dense<0.000000e+00> : vector<8x32xf32>
    %185 = tpu.matmul %183, %184, %cst_137 {dimension_numbers = #tpu.dot_dimension_numbers<[1], [0], [0], [1], [0, 0, 1, 1], [], []>} : vector<8x32xbf16>, vector<32x32xbf16>, vector<8x32xf32> -> vector<8x32xf32>
    %186 = arith.addf %181, %185 : vector<8x32xf32>
    %187 = vector.extract_strided_slice %115 {offsets = [112, 0], sizes = [8, 32], strides = [1, 1]} : vector<128x32xf32> to vector<8x32xf32>
    %188 = arith.truncf %187 : vector<8x32xf32> to vector<8x32xbf16>
    %c448_138 = arith.constant 448 : index
    %c0_139 = arith.constant 0 : index
    %189 = vector.load %arg5[%c448_138, %c0_139] : memref<512x32xbf16, #tpu.memory_space<vmem>>, vector<32x32xbf16>
    %cst_140 = arith.constant dense<0.000000e+00> : vector<8x32xf32>
    %190 = tpu.matmul %188, %189, %cst_140 {dimension_numbers = #tpu.dot_dimension_numbers<[1], [0], [0], [1], [0, 0, 1, 1], [], []>} : vector<8x32xbf16>, vector<32x32xbf16>, vector<8x32xf32> -> vector<8x32xf32>
    %191 = arith.addf %186, %190 : vector<8x32xf32>
    %192 = vector.extract_strided_slice %115 {offsets = [120, 0], sizes = [8, 32], strides = [1, 1]} : vector<128x32xf32> to vector<8x32xf32>
    %193 = arith.truncf %192 : vector<8x32xf32> to vector<8x32xbf16>
    %c480_141 = arith.constant 480 : index
    %c0_142 = arith.constant 0 : index
    %194 = vector.load %arg5[%c480_141, %c0_142] : memref<512x32xbf16, #tpu.memory_space<vmem>>, vector<32x32xbf16>
    %cst_143 = arith.constant dense<0.000000e+00> : vector<8x32xf32>
    %195 = tpu.matmul %193, %194, %cst_143 {dimension_numbers = #tpu.dot_dimension_numbers<[1], [0], [0], [1], [0, 0, 1, 1], [], []>} : vector<8x32xbf16>, vector<32x32xbf16>, vector<8x32xf32> -> vector<8x32xf32>
    %196 = arith.addf %191, %195 : vector<8x32xf32>
    %c0_144 = arith.constant 0 : index
    %c0_145 = arith.constant 0 : index
    %197 = vector.load %arg6[%c0_144, %c0_145] : memref<1x32xf32, #tpu.memory_space<vmem>>, vector<1x32xf32>
    %198 = vector.broadcast %197 : vector<1x32xf32> to vector<8x32xf32>
    %199 = arith.addf %196, %198 : vector<8x32xf32>
    %cst_146 = arith.constant 0.000000e+00 : f32
    %200 = vector.broadcast %cst_146 : f32 to vector<8x32xf32>
    %201 = arith.maximumf %199, %200 : vector<8x32xf32>
    %202 = arith.truncf %201 : vector<8x32xf32> to vector<8x32xbf16>
    %c0_147 = arith.constant 0 : index
    %c0_148 = arith.constant 0 : index
    %203 = vector.load %arg7[%c0_147, %c0_148] : memref<32x3xbf16, #tpu.memory_space<vmem>>, vector<32x3xbf16>
    %cst_149 = arith.constant dense<0.000000e+00> : vector<8x3xf32>
    %204 = tpu.matmul %202, %203, %cst_149 {dimension_numbers = #tpu.dot_dimension_numbers<[1], [0], [0], [1], [0, 0, 1, 1], [], []>} : vector<8x32xbf16>, vector<32x3xbf16>, vector<8x3xf32> -> vector<8x3xf32>
    %c0_150 = arith.constant 0 : index
    %c0_151 = arith.constant 0 : index
    %205 = vector.load %arg8[%c0_150, %c0_151] : memref<1x3xf32, #tpu.memory_space<vmem>>, vector<1x3xf32>
    %206 = vector.broadcast %205 : vector<1x3xf32> to vector<8x3xf32>
    %207 = arith.addf %204, %206 : vector<8x3xf32>
    %c0_152 = arith.constant 0 : index
    %c0_153 = arith.constant 0 : index
    %208 = vector.load %arg9[%c0_152, %c0_153] : memref<8x3xf32, #tpu.memory_space<vmem>>, vector<8x3xf32>
    tpu.vector_store %arg9[%c0_152, %c0_153], %207 {strides = array<i32>} : memref<8x3xf32, #tpu.memory_space<vmem>>, vector<8x3xf32>,
    return
  }
}

</mosaic_0001>

<llo_original>
// kernel: catch_net_forward.1
$region0: #{catch_net_forward.1}
  #allocation0 [shape = 'u32[]', space=smem, size = 0x4, offset = 0x4, fixed_abs, tag = 'smem constant byte address 0x4 - core index']
  #allocation1 [shape = 'u32[144,128]{1,0:T(1,128)}', space=vmem, size = 0x12000, scoped, tag = 'internal scratch']
  #allocation2 [shape = 'bf16[3200,32]{1,0:T(16,128)(2,1)}', space=vmem, size = 0xc8000, scoped, tag = 'scratch operand']
  %s0 = inlined_call_operand.vmem [shape: bf16[3200,100], index: 0, kind: input, shape index: {}]
  %s1 = inlined_call_operand.vmem [shape: bf16[100,32], index: 1, kind: input, shape index: {}]
  %s2 = inlined_call_operand.vmem [shape: f32[1,32], index: 2, kind: input, shape index: {}]
  %s3 = inlined_call_operand.vmem [shape: bf16[800,32], index: 3, kind: input, shape index: {}]
  %s4 = inlined_call_operand.vmem [shape: f32[1,32], index: 4, kind: input, shape index: {}]
  %s5 = inlined_call_operand.vmem [shape: bf16[512,32], index: 5, kind: input, shape index: {}]
  %s6 = inlined_call_operand.vmem [shape: f32[1,32], index: 6, kind: input, shape index: {}]
  %s7 = inlined_call_operand.vmem [shape: bf16[32,3], index: 7, kind: input, shape index: {}]
  %s8 = inlined_call_operand.vmem [shape: f32[1,3], index: 8, kind: input, shape index: {}]
  %s9 = inlined_call_operand.vmem [shape: f32[8,3], index: 9, kind: output, shape index: {}]
  %s10 = sld [smem:[#allocation0]]
  $region46: #{catch_net_forward.1} parent=0
    _
  %s12 = ssub.s32 1, %s10
  %s13 = scalar_select 0, %s12, %s10
  // Predicated region
  $region2: #{catch_net_forward.1} parent=0 // pred_check
    _
  $region3: #{catch_net_forward.1} parent=0 // pred_check_branch
    %15 = sbr.rel (0) target = $region5
  $region4: #{catch_net_forward.1} parent=0 // pred_region
    _
  $region5: #{catch_net_forward.1} parent=0 // pred_fallthru
    _
  // Predicated region
  $region6: #{catch_net_forward.1} parent=0 // pred_check
    _
  $region7: #{catch_net_forward.1} parent=0 // pred_check_branch
    %17 = sbr.rel (0) target = $region9
  $region8: #{catch_net_forward.1} parent=0 // pred_region
    _
  $region9: #{catch_net_forward.1} parent=0 // pred_fallthru
    _
  // Predicated region
  $region10: #{catch_net_forward.1} parent=0 // pred_check
    _
  $region11: #{catch_net_forward.1} parent=0 // pred_check_branch
    %19 = sbr.rel (0) target = $region13
  $region12: #{catch_net_forward.1} parent=0 // pred_region
    _
  $region13: #{catch_net_forward.1} parent=0 // pred_fallthru
    _
  // Predicated region
  $region14: #{catch_net_forward.1} parent=0 // pred_check
    _
  $region15: #{catch_net_forward.1} parent=0 // pred_check_branch
    %21 = sbr.rel (0) target = $region17
  $region16: #{catch_net_forward.1} parent=0 // pred_region
    _
  $region17: #{catch_net_forward.1} parent=0 // pred_fallthru
    _
  // Predicated region
  $region18: #{catch_net_forward.1} parent=0 // pred_check
    _
  $region19: #{catch_net_forward.1} parent=0 // pred_check_branch
    %23 = sbr.rel (0) target = $region21
  $region20: #{catch_net_forward.1} parent=0 // pred_region
    _
  $region21: #{catch_net_forward.1} parent=0 // pred_fallthru
    _
  // Predicated region
  $region22: #{catch_net_forward.1} parent=0 // pred_check
    _
  $region23: #{catch_net_forward.1} parent=0 // pred_check_branch
    %25 = sbr.rel (0) target = $region25
  $region24: #{catch_net_forward.1} parent=0 // pred_region
    _
  $region25: #{catch_net_forward.1} parent=0 // pred_fallthru
    _
  // Predicated region
  $region26: #{catch_net_forward.1} parent=0 // pred_check
    _
  $region27: #{catch_net_forward.1} parent=0 // pred_check_branch
    %27 = sbr.rel (0) target = $region29
  $region28: #{catch_net_forward.1} parent=0 // pred_region
    _
  $region29: #{catch_net_forward.1} parent=0 // pred_fallthru
    _
  // Predicated region
  $region30: #{catch_net_forward.1} parent=0 // pred_check
    _
  $region31: #{catch_net_forward.1} parent=0 // pred_check_branch
    %29 = sbr.rel (0) target = $region33
  $region32: #{catch_net_forward.1} parent=0 // pred_region
    _
  $region33: #{catch_net_forward.1} parent=0 // pred_fallthru
    _
  // Predicated region
  $region34: #{catch_net_forward.1} parent=0 // pred_check
    _
  $region35: #{catch_net_forward.1} parent=0 // pred_check_branch
    %31 = sbr.rel (0) target = $region37
  $region36: #{catch_net_forward.1} parent=0 // pred_region
    _
  $region37: #{catch_net_forward.1} parent=0 // pred_fallthru
    _
  %v33 = vld [vmem:[%s0] sm:$0xf]
  %v34 = vld [vmem:[%s0 + $0x4] sm:$0xf]
  %v35 = vld [vmem:[%s0 + $0x8] sm:$0xf]
  %v36 = vld [vmem:[%s0 + $0xc] sm:$0xf]
  %v37 = vld [vmem:[%s0 + $0x10] sm:$0xf]
  %v38 = vld [vmem:[%s0 + $0x14] sm:$0xf]
  %v39 = vld [vmem:[%s0 + $0x18] sm:$0xf]
  %v40 = vld [vmem:[%s0 + $0x1c] sm:$0xf]
  %v41 = vld [vmem:[%s0 + $0x20] sm:$0xf]
  %v42 = vld [vmem:[%s0 + $0x24] sm:$0xf]
  %v43 = vld [vmem:[%s0 + $0x28] sm:$0xf]
  %v44 = vld [vmem:[%s0 + $0x2c] sm:$0xf]
  %v45 = vld [vmem:[%s0 + $0x30] sm:$0xf]
  %v46 = vld [vmem:[%s0 + $0x34] sm:$0xf]
  %v47 = vld [vmem:[%s0 + $0x38] sm:$0xf]
  %v48 = vld [vmem:[%s0 + $0x3c] sm:$0xf]
  %v49 = vld [vmem:[%s0 + $0x40] sm:$0xf]
  %v50 = vld [vmem:[%s0 + $0x44] sm:$0xf]
  %v51 = vld [vmem:[%s0 + $0x48] sm:$0xf]
  %v52 = vld [vmem:[%s0 + $0x4c] sm:$0xf]
  %v53 = vld [vmem:[%s0 + $0x50] sm:$0xf]
  %v54 = vld [vmem:[%s0 + $0x54] sm:$0xf]
  %v55 = vld [vmem:[%s0 + $0x58] sm:$0xf]
  %v56 = vld [vmem:[%s0 + $0x5c] sm:$0xf]
  %v57 = vld [vmem:[%s0 + $0x60] sm:$0xf]
  %v58 = vld [vmem:[%s0 + $0x64] sm:$0xf]
  %v59 = vld [vmem:[%s0 + $0x68] sm:$0xf]
  %v60 = vld [vmem:[%s0 + $0x6c] sm:$0xf]
  %v61 = vld [vmem:[%s0 + $0x70] sm:$0xf]
  %v62 = vld [vmem:[%s0 + $0x74] sm:$0xf]
  %v63 = vld [vmem:[%s0 + $0x78] sm:$0xf]
  %v64 = vld [vmem:[%s0 + $0x7c] sm:$0xf]
  %v65 = vld [vmem:[%s0 + $0x80] sm:$0xf]
  %v66 = vld [vmem:[%s0 + $0x84] sm:$0xf]
  %v67 = vld [vmem:[%s0 + $0x88] sm:$0xf]
  %v68 = vld [vmem:[%s0 + $0x8c] sm:$0xf]
  %v69 = vld [vmem:[%s0 + $0x90] sm:$0xf]
  %v70 = vld [vmem:[%s0 + $0x94] sm:$0xf]
  %v71 = vld [vmem:[%s0 + $0x98] sm:$0xf]
  %v72 = vld [vmem:[%s0 + $0x9c] sm:$0xf]
  %v73 = vld [vmem:[%s0 + $0xa0] sm:$0xf]
  %v74 = vld [vmem:[%s0 + $0xa4] sm:$0xf]
  %v75 = vld [vmem:[%s0 + $0xa8] sm:$0xf]
  %v76 = vld [vmem:[%s0 + $0xac] sm:$0xf]
  %v77 = vld [vmem:[%s0 + $0xb0] sm:$0xf]
  %v78 = vld [vmem:[%s0 + $0xb4] sm:$0xf]
  %v79 = vld [vmem:[%s0 + $0xb8] sm:$0xf]
  %v80 = vld [vmem:[%s0 + $0xbc] sm:$0xf]
  %v81 = vld [vmem:[%s0 + $0xc0] sm:$0xf]
  %v82 = vld [vmem:[%s0 + $0xc4] sm:$0xf]
  %v83 = vld [vmem:[%s0 + $0xc8] sm:$0xf]
  %v84 = vld [vmem:[%s0 + $0xcc] sm:$0xf]
  %v85 = vld [vmem:[%s0 + $0xd0] sm:$0xf]
  %v86 = vld [vmem:[%s0 + $0xd4] sm:$0xf]
  %v87 = vld [vmem:[%s0 + $0xd8] sm:$0xf]
  %v88 = vld [vmem:[%s0 + $0xdc] sm:$0xf]
  %v89 = vld [vmem:[%s0 + $0xe0] sm:$0xf]
  %v90 = vld [vmem:[%s0 + $0xe4] sm:$0xf]
  %v91 = vld [vmem:[%s0 + $0xe8] sm:$0xf]
  %v92 = vld [vmem:[%s0 + $0xec] sm:$0xf]
  %v93 = vld [vmem:[%s0 + $0xf0] sm:$0xf]
  %v94 = vld [vmem:[%s0 + $0xf4] sm:$0xf]
  %v95 = vld [vmem:[%s0 + $0xf8] sm:$0xf]
  %v96 = vld [vmem:[%s0 + $0xfc] sm:$0xf]
  %v97 = vld [vmem:[%s0 + $0x100] sm:$0xf]
  %v98 = vld [vmem:[%s0 + $0x104] sm:$0xf]
  %v99 = vld [vmem:[%s0 + $0x108] sm:$0xf]
  %v100 = vld [vmem:[%s0 + $0x10c] sm:$0xf]
  %v101 = vld [vmem:[%s0 + $0x110] sm:$0xf]
  %v102 = vld [vmem:[%s0 + $0x114] sm:$0xf]
  %v103 = vld [vmem:[%s0 + $0x118] sm:$0xf]
  %v104 = vld [vmem:[%s0 + $0x11c] sm:$0xf]
  %v105 = vld [vmem:[%s0 + $0x120] sm:$0xf]
  %v106 = vld [vmem:[%s0 + $0x124] sm:$0xf]
  %v107 = vld [vmem:[%s0 + $0x128] sm:$0xf]
  %v108 = vld [vmem:[%s0 + $0x12c] sm:$0xf]
  %v109 = vld [vmem:[%s0 + $0x130] sm:$0xf]
  %v110 = vld [vmem:[%s0 + $0x134] sm:$0xf]
  %v111 = vld [vmem:[%s0 + $0x138] sm:$0xf]
  %v112 = vld [vmem:[%s0 + $0x13c] sm:$0xf]
  %v113 = vld [vmem:[%s0 + $0x140] sm:$0xf]
  %v114 = vld [vmem:[%s0 + $0x144] sm:$0xf]
  %v115 = vld [vmem:[%s0 + $0x148] sm:$0xf]
  %v116 = vld [vmem:[%s0 + $0x14c] sm:$0xf]
  %v117 = vld [vmem:[%s0 + $0x150] sm:$0xf]
  %v118 = vld [vmem:[%s0 + $0x154] sm:$0xf]
  %v119 = vld [vmem:[%s0 + $0x158] sm:$0xf]
  %v120 = vld [vmem:[%s0 + $0x15c] sm:$0xf]
  %v121 = vld [vmem:[%s0 + $0x160] sm:$0xf]
  %v122 = vld [vmem:[%s0 + $0x164] sm:$0xf]
  %v123 = vld [vmem:[%s0 + $0x168] sm:$0xf]
  %v124 = vld [vmem:[%s0 + $0x16c] sm:$0xf]
  %v125 = vld [vmem:[%s0 + $0x170] sm:$0xf]
  %v126 = vld [vmem:[%s0 + $0x174] sm:$0xf]
  %v127 = vld [vmem:[%s0 + $0x178] sm:$0xf]
  %v128 = vld [vmem:[%s0 + $0x17c] sm:$0xf]
  %v129 = vld [vmem:[%s0 + $0x180] sm:$0xf]
  %v130 = vld [vmem:[%s0 + $0x184] sm:$0xf]
  %v131 = vld [vmem:[%s0 + $0x188] sm:$0xf]
  %v132 = vld [vmem:[%s0 + $0x18c] sm:$0xf]
  %v133 = vld [vmem:[%s0 + $0x190] sm:$0xf]
  %v134 = vld [vmem:[%s0 + $0x194] sm:$0xf]
  %v135 = vld [vmem:[%s0 + $0x198] sm:$0xf]
  %v136 = vld [vmem:[%s0 + $0x19c] sm:$0xf]
  %v137 = vld [vmem:[%s0 + $0x1a0] sm:$0xf]
  %v138 = vld [vmem:[%s0 + $0x1a4] sm:$0xf]
  %v139 = vld [vmem:[%s0 + $0x1a8] sm:$0xf]
  %v140 = vld [vmem:[%s0 + $0x1ac] sm:$0xf]
  %v141 = vld [vmem:[%s0 + $0x1b0] sm:$0xf]
  %v142 = vld [vmem:[%s0 + $0x1b4] sm:$0xf]
  %v143 = vld [vmem:[%s0 + $0x1b8] sm:$0xf]
  %v144 = vld [vmem:[%s0 + $0x1bc] sm:$0xf]
  %v145 = vld [vmem:[%s0 + $0x1c0] sm:$0xf]
  %v146 = vld [vmem:[%s0 + $0x1c4] sm:$0xf]
  %v147 = vld [vmem:[%s0 + $0x1c8] sm:$0xf]
  %v148 = vld [vmem:[%s0 + $0x1cc] sm:$0xf]
  %v149 = vld [vmem:[%s0 + $0x1d0] sm:$0xf]
  %v150 = vld [vmem:[%s0 + $0x1d4] sm:$0xf]
  %v151 = vld [vmem:[%s0 + $0x1d8] sm:$0xf]
  %v152 = vld [vmem:[%s0 + $0x1dc] sm:$0xf]
  %v153 = vld [vmem:[%s0 + $0x1e0] sm:$0xf]
  %v154 = vld [vmem:[%s0 + $0x1e4] sm:$0xf]
  %v155 = vld [vmem:[%s0 + $0x1e8] sm:$0xf]
  %v156 = vld [vmem:[%s0 + $0x1ec] sm:$0xf]
  %v157 = vld [vmem:[%s0 + $0x1f0] sm:$0xf]
  %v158 = vld [vmem:[%s0 + $0x1f4] sm:$0xf]
  %v159 = vld [vmem:[%s0 + $0x1f8] sm:$0xf]
  %v160 = vld [vmem:[%s0 + $0x1fc] sm:$0xf]
  %v161 = vld [vmem:[%s0 + $0x200] sm:$0xf]
  %v162 = vld [vmem:[%s0 + $0x204] sm:$0xf]
  %v163 = vld [vmem:[%s0 + $0x208] sm:$0xf]
  %v164 = vld [vmem:[%s0 + $0x20c] sm:$0xf]
  %v165 = vld [vmem:[%s0 + $0x210] sm:$0xf]
  %v166 = vld [vmem:[%s0 + $0x214] sm:$0xf]
  %v167 = vld [vmem:[%s0 + $0x218] sm:$0xf]
  %v168 = vld [vmem:[%s0 + $0x21c] sm:$0xf]
  %v169 = vld [vmem:[%s0 + $0x220] sm:$0xf]
  %v170 = vld [vmem:[%s0 + $0x224] sm:$0xf]
  %v171 = vld [vmem:[%s0 + $0x228] sm:$0xf]
  %v172 = vld [vmem:[%s0 + $0x22c] sm:$0xf]
  %v173 = vld [vmem:[%s0 + $0x230] sm:$0xf]
  %v174 = vld [vmem:[%s0 + $0x234] sm:$0xf]
  %v175 = vld [vmem:[%s0 + $0x238] sm:$0xf]
  %v176 = vld [vmem:[%s0 + $0x23c] sm:$0xf]
  %v177 = vld [vmem:[%s0 + $0x240] sm:$0xf]
  %v178 = vld [vmem:[%s0 + $0x244] sm:$0xf]
  %v179 = vld [vmem:[%s0 + $0x248] sm:$0xf]
  %v180 = vld [vmem:[%s0 + $0x24c] sm:$0xf]
  %v181 = vld [vmem:[%s0 + $0x250] sm:$0xf]
  %v182 = vld [vmem:[%s0 + $0x254] sm:$0xf]
  %v183 = vld [vmem:[%s0 + $0x258] sm:$0xf]
  %v184 = vld [vmem:[%s0 + $0x25c] sm:$0xf]
  %v185 = vld [vmem:[%s0 + $0x260] sm:$0xf]
  %v186 = vld [vmem:[%s0 + $0x264] sm:$0xf]
  %v187 = vld [vmem:[%s0 + $0x268] sm:$0xf]
  %v188 = vld [vmem:[%s0 + $0x26c] sm:$0xf]
  %v189 = vld [vmem:[%s0 + $0x270] sm:$0xf]
  %v190 = vld [vmem:[%s0 + $0x274] sm:$0xf]
  %v191 = vld [vmem:[%s0 + $0x278] sm:$0xf]
  %v192 = vld [vmem:[%s0 + $0x27c] sm:$0xf]
  %v193 = vld [vmem:[%s0 + $0x280] sm:$0xf]
  %v194 = vld [vmem:[%s0 + $0x284] sm:$0xf]
  %v195 = vld [vmem:[%s0 + $0x288] sm:$0xf]
  %v196 = vld [vmem:[%s0 + $0x28c] sm:$0xf]
  %v197 = vld [vmem:[%s0 + $0x290] sm:$0xf]
  %v198 = vld [vmem:[%s0 + $0x294] sm:$0xf]
  %v199 = vld [vmem:[%s0 + $0x298] sm:$0xf]
  %v200 = vld [vmem:[%s0 + $0x29c] sm:$0xf]
  %v201 = vld [vmem:[%s0 + $0x2a0] sm:$0xf]
  %v202 = vld [vmem:[%s0 + $0x2a4] sm:$0xf]
  %v203 = vld [vmem:[%s0 + $0x2a8] sm:$0xf]
  %v204 = vld [vmem:[%s0 + $0x2ac] sm:$0xf]
  %v205 = vld [vmem:[%s0 + $0x2b0] sm:$0xf]
  %v206 = vld [vmem:[%s0 + $0x2b4] sm:$0xf]
  %v207 = vld [vmem:[%s0 + $0x2b8] sm:$0xf]
  %v208 = vld [vmem:[%s0 + $0x2bc] sm:$0xf]
  %v209 = vld [vmem:[%s0 + $0x2c0] sm:$0xf]
  %v210 = vld [vmem:[%s0 + $0x2c4] sm:$0xf]
  %v211 = vld [vmem:[%s0 + $0x2c8] sm:$0xf]
  %v212 = vld [vmem:[%s0 + $0x2cc] sm:$0xf]
  %v213 = vld [vmem:[%s0 + $0x2d0] sm:$0xf]
  %v214 = vld [vmem:[%s0 + $0x2d4] sm:$0xf]
  %v215 = vld [vmem:[%s0 + $0x2d8] sm:$0xf]
  %v216 = vld [vmem:[%s0 + $0x2dc] sm:$0xf]
  %v217 = vld [vmem:[%s0 + $0x2e0] sm:$0xf]
  %v218 = vld [vmem:[%s0 + $0x2e4] sm:$0xf]
  %v219 = vld [vmem:[%s0 + $0x2e8] sm:$0xf]
  %v220 = vld [vmem:[%s0 + $0x2ec] sm:$0xf]
  %v221 = vld [vmem:[%s0 + $0x2f0] sm:$0xf]
  %v222 = vld [vmem:[%s0 + $0x2f4] sm:$0xf]
  %v223 = vld [vmem:[%s0 + $0x2f8] sm:$0xf]
  %v224 = vld [vmem:[%s0 + $0x2fc] sm:$0xf]
  %v225 = vld [vmem:[%s0 + $0x300] sm:$0xf]
  %v226 = vld [vmem:[%s0 + $0x304] sm:$0xf]
  %v227 = vld [vmem:[%s0 + $0x308] sm:$0xf]
  %v228 = vld [vmem:[%s0 + $0x30c] sm:$0xf]
  %v229 = vld [vmem:[%s0 + $0x310] sm:$0xf]
  %v230 = vld [vmem:[%s0 + $0x314] sm:$0xf]
  %v231 = vld [vmem:[%s0 + $0x318] sm:$0xf]
  %v232 = vld [vmem:[%s0 + $0x31c] sm:$0xf]
  %v233 = vld [vmem:[%s0 + $0x320] sm:$0xf]
  %v234 = vld [vmem:[%s0 + $0x324] sm:$0xf]
  %v235 = vld [vmem:[%s0 + $0x328] sm:$0xf]
  %v236 = vld [vmem:[%s0 + $0x32c] sm:$0xf]
  %v237 = vld [vmem:[%s0 + $0x330] sm:$0xf]
  %v238 = vld [vmem:[%s0 + $0x334] sm:$0xf]
  %v239 = vld [vmem:[%s0 + $0x338] sm:$0xf]
  %v240 = vld [vmem:[%s0 + $0x33c] sm:$0xf]
  %v241 = vld [vmem:[%s0 + $0x340] sm:$0xf]
  %v242 = vld [vmem:[%s0 + $0x344] sm:$0xf]
  %v243 = vld [vmem:[%s0 + $0x348] sm:$0xf]
  %v244 = vld [vmem:[%s0 + $0x34c] sm:$0xf]
  %v245 = vld [vmem:[%s0 + $0x350] sm:$0xf]
  %v246 = vld [vmem:[%s0 + $0x354] sm:$0xf]
  %v247 = vld [vmem:[%s0 + $0x358] sm:$0xf]
  %v248 = vld [vmem:[%s0 + $0x35c] sm:$0xf]
  %v249 = vld [vmem:[%s0 + $0x360] sm:$0xf]
  %v250 = vld [vmem:[%s0 + $0x364] sm:$0xf]
  %v251 = vld [vmem:[%s0 + $0x368] sm:$0xf]
  %v252 = vld [vmem:[%s0 + $0x36c] sm:$0xf]
  %v253 = vld [vmem:[%s0 + $0x370] sm:$0xf]
  %v254 = vld [vmem:[%s0 + $0x374] sm:$0xf]
  %v255 = vld [vmem:[%s0 + $0x378] sm:$0xf]
  %v256 = vld [vmem:[%s0 + $0x37c] sm:$0xf]
  %v257 = vld [vmem:[%s0 + $0x380] sm:$0xf]
  %v258 = vld [vmem:[%s0 + $0x384] sm:$0xf]
  %v259 = vld [vmem:[%s0 + $0x388] sm:$0xf]
  %v260 = vld [vmem:[%s0 + $0x38c] sm:$0xf]
  %v261 = vld [vmem:[%s0 + $0x390] sm:$0xf]
  %v262 = vld [vmem:[%s0 + $0x394] sm:$0xf]
  %v263 = vld [vmem:[%s0 + $0x398] sm:$0xf]
  %v264 = vld [vmem:[%s0 + $0x39c] sm:$0xf]
  %v265 = vld [vmem:[%s0 + $0x3a0] sm:$0xf]
  %v266 = vld [vmem:[%s0 + $0x3a4] sm:$0xf]
  %v267 = vld [vmem:[%s0 + $0x3a8] sm:$0xf]
  %v268 = vld [vmem:[%s0 + $0x3ac] sm:$0xf]
  %v269 = vld [vmem:[%s0 + $0x3b0] sm:$0xf]
  %v270 = vld [vmem:[%s0 + $0x3b4] sm:$0xf]
  %v271 = vld [vmem:[%s0 + $0x3b8] sm:$0xf]
  %v272 = vld [vmem:[%s0 + $0x3bc] sm:$0xf]
  %v273 = vld [vmem:[%s0 + $0x3c0] sm:$0xf]
  %v274 = vld [vmem:[%s0 + $0x3c4] sm:$0xf]
  %v275 = vld [vmem:[%s0 + $0x3c8] sm:$0xf]
  %v276 = vld [vmem:[%s0 + $0x3cc] sm:$0xf]
  %v277 = vld [vmem:[%s0 + $0x3d0] sm:$0xf]
  %v278 = vld [vmem:[%s0 + $0x3d4] sm:$0xf]
  %v279 = vld [vmem:[%s0 + $0x3d8] sm:$0xf]
  %v280 = vld [vmem:[%s0 + $0x3dc] sm:$0xf]
  %v281 = vld [vmem:[%s0 + $0x3e0] sm:$0xf]
  %v282 = vld [vmem:[%s0 + $0x3e4] sm:$0xf]
  %v283 = vld [vmem:[%s0 + $0x3e8] sm:$0xf]
  %v284 = vld [vmem:[%s0 + $0x3ec] sm:$0xf]
  %v285 = vld [vmem:[%s0 + $0x3f0] sm:$0xf]
  %v286 = vld [vmem:[%s0 + $0x3f4] sm:$0xf]
  %v287 = vld [vmem:[%s0 + $0x3f8] sm:$0xf]
  %v288 = vld [vmem:[%s0 + $0x3fc] sm:$0xf]
  %v289 = vld [vmem:[%s0 + $0x400] sm:$0xf]
  %v290 = vld [vmem:[%s0 + $0x404] sm:$0xf]
  %v291 = vld [vmem:[%s0 + $0x408] sm:$0xf]
  %v292 = vld [vmem:[%s0 + $0x40c] sm:$0xf]
  %v293 = vld [vmem:[%s0 + $0x410] sm:$0xf]
  %v294 = vld [vmem:[%s0 + $0x414] sm:$0xf]
  %v295 = vld [vmem:[%s0 + $0x418] sm:$0xf]
  %v296 = vld [vmem:[%s0 + $0x41c] sm:$0xf]
  %v297 = vld [vmem:[%s0 + $0x420] sm:$0xf]
  %v298 = vld [vmem:[%s0 + $0x424] sm:$0xf]
  %v299 = vld [vmem:[%s0 + $0x428] sm:$0xf]
  %v300 = vld [vmem:[%s0 + $0x42c] sm:$0xf]
  %v301 = vld [vmem:[%s0 + $0x430] sm:$0xf]
  %v302 = vld [vmem:[%s0 + $0x434] sm:$0xf]
  %v303 = vld [vmem:[%s0 + $0x438] sm:$0xf]
  %v304 = vld [vmem:[%s0 + $0x43c] sm:$0xf]
  %v305 = vld [vmem:[%s0 + $0x440] sm:$0xf]
  %v306 = vld [vmem:[%s0 + $0x444] sm:$0xf]
  %v307 = vld [vmem:[%s0 + $0x448] sm:$0xf]
  %v308 = vld [vmem:[%s0 + $0x44c] sm:$0xf]
  %v309 = vld [vmem:[%s0 + $0x450] sm:$0xf]
  %v310 = vld [vmem:[%s0 + $0x454] sm:$0xf]
  %v311 = vld [vmem:[%s0 + $0x458] sm:$0xf]
  %v312 = vld [vmem:[%s0 + $0x45c] sm:$0xf]
  %v313 = vld [vmem:[%s0 + $0x460] sm:$0xf]
  %v314 = vld [vmem:[%s0 + $0x464] sm:$0xf]
  %v315 = vld [vmem:[%s0 + $0x468] sm:$0xf]
  %v316 = vld [vmem:[%s0 + $0x46c] sm:$0xf]
  %v317 = vld [vmem:[%s0 + $0x470] sm:$0xf]
  %v318 = vld [vmem:[%s0 + $0x474] sm:$0xf]
  %v319 = vld [vmem:[%s0 + $0x478] sm:$0xf]
  %v320 = vld [vmem:[%s0 + $0x47c] sm:$0xf]
  %v321 = vld [vmem:[%s0 + $0x480] sm:$0xf]
  %v322 = vld [vmem:[%s0 + $0x484] sm:$0xf]
  %v323 = vld [vmem:[%s0 + $0x488] sm:$0xf]
  %v324 = vld [vmem:[%s0 + $0x48c] sm:$0xf]
  %v325 = vld [vmem:[%s0 + $0x490] sm:$0xf]
  %v326 = vld [vmem:[%s0 + $0x494] sm:$0xf]
  %v327 = vld [vmem:[%s0 + $0x498] sm:$0xf]
  %v328 = vld [vmem:[%s0 + $0x49c] sm:$0xf]
  %v329 = vld [vmem:[%s0 + $0x4a0] sm:$0xf]
  %v330 = vld [vmem:[%s0 + $0x4a4] sm:$0xf]
  %v331 = vld [vmem:[%s0 + $0x4a8] sm:$0xf]
  %v332 = vld [vmem:[%s0 + $0x4ac] sm:$0xf]
  %v333 = vld [vmem:[%s0 + $0x4b0] sm:$0xf]
  %v334 = vld [vmem:[%s0 + $0x4b4] sm:$0xf]
  %v335 = vld [vmem:[%s0 + $0x4b8] sm:$0xf]
  %v336 = vld [vmem:[%s0 + $0x4bc] sm:$0xf]
  %v337 = vld [vmem:[%s0 + $0x4c0] sm:$0xf]
  %v338 = vld [vmem:[%s0 + $0x4c4] sm:$0xf]
  %v339 = vld [vmem:[%s0 + $0x4c8] sm:$0xf]
  %v340 = vld [vmem:[%s0 + $0x4cc] sm:$0xf]
  %v341 = vld [vmem:[%s0 + $0x4d0] sm:$0xf]
  %v342 = vld [vmem:[%s0 + $0x4d4] sm:$0xf]
  %v343 = vld [vmem:[%s0 + $0x4d8] sm:$0xf]
  %v344 = vld [vmem:[%s0 + $0x4dc] sm:$0xf]
  %v345 = vld [vmem:[%s0 + $0x4e0] sm:$0xf]
  %v346 = vld [vmem:[%s0 + $0x4e4] sm:$0xf]
  %v347 = vld [vmem:[%s0 + $0x4e8] sm:$0xf]
  %v348 = vld [vmem:[%s0 + $0x4ec] sm:$0xf]
  %v349 = vld [vmem:[%s0 + $0x4f0] sm:$0xf]
  %v350 = vld [vmem:[%s0 + $0x4f4] sm:$0xf]
  %v351 = vld [vmem:[%s0 + $0x4f8] sm:$0xf]
  %v352 = vld [vmem:[%s0 + $0x4fc] sm:$0xf]
  %v353 = vld [vmem:[%s0 + $0x500] sm:$0xf]
  %v354 = vld [vmem:[%s0 + $0x504] sm:$0xf]
  %v355 = vld [vmem:[%s0 + $0x508] sm:$0xf]
  %v356 = vld [vmem:[%s0 + $0x50c] sm:$0xf]
  %v357 = vld [vmem:[%s0 + $0x510] sm:$0xf]
  %v358 = vld [vmem:[%s0 + $0x514] sm:$0xf]
  %v359 = vld [vmem:[%s0 + $0x518] sm:$0xf]
  %v360 = vld [vmem:[%s0 + $0x51c] sm:$0xf]
  %v361 = vld [vmem:[%s0 + $0x520] sm:$0xf]
  %v362 = vld [vmem:[%s0 + $0x524] sm:$0xf]
  %v363 = vld [vmem:[%s0 + $0x528] sm:$0xf]
  %v364 = vld [vmem:[%s0 + $0x52c] sm:$0xf]
  %v365 = vld [vmem:[%s0 + $0x530] sm:$0xf]
  %v366 = vld [vmem:[%s0 + $0x534] sm:$0xf]
  %v367 = vld [vmem:[%s0 + $0x538] sm:$0xf]
  %v368 = vld [vmem:[%s0 + $0x53c] sm:$0xf]
  %v369 = vld [vmem:[%s0 + $0x540] sm:$0xf]
  %v370 = vld [vmem:[%s0 + $0x544] sm:$0xf]
  %v371 = vld [vmem:[%s0 + $0x548] sm:$0xf]
  %v372 = vld [vmem:[%s0 + $0x54c] sm:$0xf]
  %v373 = vld [vmem:[%s0 + $0x550] sm:$0xf]
  %v374 = vld [vmem:[%s0 + $0x554] sm:$0xf]
  %v375 = vld [vmem:[%s0 + $0x558] sm:$0xf]
  %v376 = vld [vmem:[%s0 + $0x55c] sm:$0xf]
  %v377 = vld [vmem:[%s0 + $0x560] sm:$0xf]
  %v378 = vld [vmem:[%s0 + $0x564] sm:$0xf]
  %v379 = vld [vmem:[%s0 + $0x568] sm:$0xf]
  %v380 = vld [vmem:[%s0 + $0x56c] sm:$0xf]
  %v381 = vld [vmem:[%s0 + $0x570] sm:$0xf]
  %v382 = vld [vmem:[%s0 + $0x574] sm:$0xf]
  %v383 = vld [vmem:[%s0 + $0x578] sm:$0xf]
  %v384 = vld [vmem:[%s0 + $0x57c] sm:$0xf]
  %v385 = vld [vmem:[%s0 + $0x580] sm:$0xf]
  %v386 = vld [vmem:[%s0 + $0x584] sm:$0xf]
  %v387 = vld [vmem:[%s0 + $0x588] sm:$0xf]
  %v388 = vld [vmem:[%s0 + $0x58c] sm:$0xf]
  %v389 = vld [vmem:[%s0 + $0x590] sm:$0xf]
  %v390 = vld [vmem:[%s0 + $0x594] sm:$0xf]
  %v391 = vld [vmem:[%s0 + $0x598] sm:$0xf]
  %v392 = vld [vmem:[%s0 + $0x59c] sm:$0xf]
  %v393 = vld [vmem:[%s0 + $0x5a0] sm:$0xf]
  %v394 = vld [vmem:[%s0 + $0x5a4] sm:$0xf]
  %v395 = vld [vmem:[%s0 + $0x5a8] sm:$0xf]
  %v396 = vld [vmem:[%s0 + $0x5ac] sm:$0xf]
  %v397 = vld [vmem:[%s0 + $0x5b0] sm:$0xf]
  %v398 = vld [vmem:[%s0 + $0x5b4] sm:$0xf]
  %v399 = vld [vmem:[%s0 + $0x5b8] sm:$0xf]
  %v400 = vld [vmem:[%s0 + $0x5bc] sm:$0xf]
  %v401 = vld [vmem:[%s0 + $0x5c0] sm:$0xf]
  %v402 = vld [vmem:[%s0 + $0x5c4] sm:$0xf]
  %v403 = vld [vmem:[%s0 + $0x5c8] sm:$0xf]
  %v404 = vld [vmem:[%s0 + $0x5cc] sm:$0xf]
  %v405 = vld [vmem:[%s0 + $0x5d0] sm:$0xf]
  %v406 = vld [vmem:[%s0 + $0x5d4] sm:$0xf]
  %v407 = vld [vmem:[%s0 + $0x5d8] sm:$0xf]
  %v408 = vld [vmem:[%s0 + $0x5dc] sm:$0xf]
  %v409 = vld [vmem:[%s0 + $0x5e0] sm:$0xf]
  %v410 = vld [vmem:[%s0 + $0x5e4] sm:$0xf]
  %v411 = vld [vmem:[%s0 + $0x5e8] sm:$0xf]
  %v412 = vld [vmem:[%s0 + $0x5ec] sm:$0xf]
  %v413 = vld [vmem:[%s0 + $0x5f0] sm:$0xf]
  %v414 = vld [vmem:[%s0 + $0x5f4] sm:$0xf]
  %v415 = vld [vmem:[%s0 + $0x5f8] sm:$0xf]
  %v416 = vld [vmem:[%s0 + $0x5fc] sm:$0xf]
  %v417 = vld [vmem:[%s0 + $0x600] sm:$0xf]
  %v418 = vld [vmem:[%s0 + $0x604] sm:$0xf]
  %v419 = vld [vmem:[%s0 + $0x608] sm:$0xf]
  %v420 = vld [vmem:[%s0 + $0x60c] sm:$0xf]
  %v421 = vld [vmem:[%s0 + $0x610] sm:$0xf]
  %v422 = vld [vmem:[%s0 + $0x614] sm:$0xf]
  %v423 = vld [vmem:[%s0 + $0x618] sm:$0xf]
  %v424 = vld [vmem:[%s0 + $0x61c] sm:$0xf]
  %v425 = vld [vmem:[%s0 + $0x620] sm:$0xf]
  %v426 = vld [vmem:[%s0 + $0x624] sm:$0xf]
  %v427 = vld [vmem:[%s0 + $0x628] sm:$0xf]
  %v428 = vld [vmem:[%s0 + $0x62c] sm:$0xf]
  %v429 = vld [vmem:[%s0 + $0x630] sm:$0xf]
  %v430 = vld [vmem:[%s0 + $0x634] sm:$0xf]
  %v431 = vld [vmem:[%s0 + $0x638] sm:$0xf]
  %v432 = vld [vmem:[%s0 + $0x63c] sm:$0xf]
  %v433 = vld [vmem:[%s1] sm:$0xf]
  %v434 = vld [vmem:[%s1 + $0x4] sm:$0xf]
  %v435 = vld [vmem:[%s1 + $0x8] sm:$0xf]
  %v436 = vld [vmem:[%s1 + $0xc] sm:$0xf]
  %v437 = vld [vmem:[%s1 + $0x10] sm:$0xf]
  %v438 = vld [vmem:[%s1 + $0x14] sm:$0xf]
  %v439 = vld [vmem:[%s1 + $0x18] sm:$0xf]
  %v440 = vld [vmem:[%s1 + $0x1c] sm:$0xf]
  %v441 = vld [vmem:[%s1 + $0x20] sm:$0xf]
  %v442 = vld [vmem:[%s1 + $0x24] sm:$0xf]
  %v443 = vld [vmem:[%s1 + $0x28] sm:$0xf]
  %v444 = vld [vmem:[%s1 + $0x2c] sm:$0xf]
  %v445 = vld [vmem:[%s1 + $0x30] sm:$0x3]
  %v446 = vld [vmem:[%s2] sm:$0x1]
  %v448 = vlaneseq
  %v449 = vshrl.u32 %v448, 7
  %v450 = vsub.s32 0, %v449
  %v451 = vrot.slane %v446, %v450
  %v853 = vunpack.c.l.b16 %v33
  %v854 = vunpack.c.l.b16 %v34
  %v855 = vunpack.c.l.b16 %v35
  %v856 = vunpack.c.l.b16 %v36
  %v857 = vunpack.c.l.b16 %v37
  %v858 = vunpack.c.l.b16 %v38
  %v859 = vunpack.c.l.b16 %v39
  %v860 = vunpack.c.l.b16 %v40
  %v861 = vunpack.c.l.b16 %v41
  %v862 = vunpack.c.l.b16 %v42
  %v863 = vunpack.c.l.b16 %v43
  %v864 = vunpack.c.l.b16 %v44
  %v865 = vunpack.c.l.b16 %v45
  %v866 = vunpack.c.l.b16 %v46
  %v867 = vunpack.c.l.b16 %v47
  %v868 = vunpack.c.l.b16 %v48
  %v869 = vunpack.c.l.b16 %v49
  %v870 = vunpack.c.l.b16 %v50
  %v871 = vunpack.c.l.b16 %v51
  %v872 = vunpack.c.l.b16 %v52
  %v873 = vunpack.c.l.b16 %v53
  %v874 = vunpack.c.l.b16 %v54
  %v875 = vunpack.c.l.b16 %v55
  %v876 = vunpack.c.l.b16 %v56
  %v877 = vunpack.c.l.b16 %v57
  %v878 = vunpack.c.l.b16 %v58
  %v879 = vunpack.c.l.b16 %v59
  %v880 = vunpack.c.l.b16 %v60
  %v881 = vunpack.c.l.b16 %v61
  %v882 = vunpack.c.l.b16 %v62
  %v883 = vunpack.c.l.b16 %v63
  %v884 = vunpack.c.l.b16 %v64
  %v885 = vunpack.c.l.b16 %v65
  %v886 = vunpack.c.l.b16 %v66
  %v887 = vunpack.c.l.b16 %v67
  %v888 = vunpack.c.l.b16 %v68
  %v889 = vunpack.c.l.b16 %v69
  %v890 = vunpack.c.l.b16 %v70
  %v891 = vunpack.c.l.b16 %v71
  %v892 = vunpack.c.l.b16 %v72
  %v893 = vunpack.c.l.b16 %v73
  %v894 = vunpack.c.l.b16 %v74
  %v895 = vunpack.c.l.b16 %v75
  %v896 = vunpack.c.l.b16 %v76
  %v897 = vunpack.c.l.b16 %v77
  %v898 = vunpack.c.l.b16 %v78
  %v899 = vunpack.c.l.b16 %v79
  %v900 = vunpack.c.l.b16 %v80
  %v901 = vunpack.c.l.b16 %v81
  %v902 = vunpack.c.l.b16 %v82
  %v903 = vunpack.c.l.b16 %v83
  %v904 = vunpack.c.l.b16 %v84
  %v905 = vunpack.c.l.b16 %v85
  %v906 = vunpack.c.l.b16 %v86
  %v907 = vunpack.c.l.b16 %v87
  %v908 = vunpack.c.l.b16 %v88
  %v909 = vunpack.c.l.b16 %v89
  %v910 = vunpack.c.l.b16 %v90
  %v911 = vunpack.c.l.b16 %v91
  %v912 = vunpack.c.l.b16 %v92
  %v913 = vunpack.c.l.b16 %v93
  %v914 = vunpack.c.l.b16 %v94
  %v915 = vunpack.c.l.b16 %v95
  %v916 = vunpack.c.l.b16 %v96
  %v917 = vunpack.c.l.b16 %v97
  %v918 = vunpack.c.l.b16 %v98
  %v919 = vunpack.c.l.b16 %v99
  %v920 = vunpack.c.l.b16 %v100
  %v921 = vunpack.c.l.b16 %v101
  %v922 = vunpack.c.l.b16 %v102
  %v923 = vunpack.c.l.b16 %v103
  %v924 = vunpack.c.l.b16 %v104
  %v925 = vunpack.c.l.b16 %v105
  %v926 = vunpack.c.l.b16 %v106
  %v927 = vunpack.c.l.b16 %v107
  %v928 = vunpack.c.l.b16 %v108
  %v929 = vunpack.c.l.b16 %v109
  %v930 = vunpack.c.l.b16 %v110
  %v931 = vunpack.c.l.b16 %v111
  %v932 = vunpack.c.l.b16 %v112
  %v933 = vunpack.c.l.b16 %v113
  %v934 = vunpack.c.l.b16 %v114
  %v935 = vunpack.c.l.b16 %v115
  %v936 = vunpack.c.l.b16 %v116
  %v937 = vunpack.c.l.b16 %v117
  %v938 = vunpack.c.l.b16 %v118
  %v939 = vunpack.c.l.b16 %v119
  %v940 = vunpack.c.l.b16 %v120
  %v941 = vunpack.c.l.b16 %v121
  %v942 = vunpack.c.l.b16 %v122
  %v943 = vunpack.c.l.b16 %v123
  %v944 = vunpack.c.l.b16 %v124
  %v945 = vunpack.c.l.b16 %v125
  %v946 = vunpack.c.l.b16 %v126
  %v947 = vunpack.c.l.b16 %v127
  %v948 = vunpack.c.l.b16 %v128
  %v949 = vunpack.c.l.b16 %v129
  %v950 = vunpack.c.l.b16 %v130
  %v951 = vunpack.c.l.b16 %v131
  %v952 = vunpack.c.l.b16 %v132
  %v953 = vunpack.c.l.b16 %v133
  %v954 = vunpack.c.l.b16 %v134
  %v955 = vunpack.c.l.b16 %v135
  %v956 = vunpack.c.l.b16 %v136
  %v957 = vunpack.c.l.b16 %v137
  %v958 = vunpack.c.l.b16 %v138
  %v959 = vunpack.c.l.b16 %v139
  %v960 = vunpack.c.l.b16 %v140
  %v961 = vunpack.c.l.b16 %v141
  %v962 = vunpack.c.l.b16 %v142
  %v963 = vunpack.c.l.b16 %v143
  %v964 = vunpack.c.l.b16 %v144
  %v965 = vunpack.c.l.b16 %v145
  %v966 = vunpack.c.l.b16 %v146
  %v967 = vunpack.c.l.b16 %v147
  %v968 = vunpack.c.l.b16 %v148
  %v969 = vunpack.c.l.b16 %v149
  %v970 = vunpack.c.l.b16 %v150
  %v971 = vunpack.c.l.b16 %v151
  %v972 = vunpack.c.l.b16 %v152
  %v973 = vunpack.c.l.b16 %v153
  %v974 = vunpack.c.l.b16 %v154
  %v975 = vunpack.c.l.b16 %v155
  %v976 = vunpack.c.l.b16 %v156
  %v977 = vunpack.c.l.b16 %v157
  %v978 = vunpack.c.l.b16 %v158
  %v979 = vunpack.c.l.b16 %v159
  %v980 = vunpack.c.l.b16 %v160
  %v981 = vunpack.c.l.b16 %v161
  %v982 = vunpack.c.l.b16 %v162
  %v983 = vunpack.c.l.b16 %v163
  %v984 = vunpack.c.l.b16 %v164
  %v985 = vunpack.c.l.b16 %v165
  %v986 = vunpack.c.l.b16 %v166
  %v987 = vunpack.c.l.b16 %v167
  %v988 = vunpack.c.l.b16 %v168
  %v989 = vunpack.c.l.b16 %v169
  %v990 = vunpack.c.l.b16 %v170
  %v991 = vunpack.c.l.b16 %v171
  %v992 = vunpack.c.l.b16 %v172
  %v993 = vunpack.c.l.b16 %v173
  %v994 = vunpack.c.l.b16 %v174
  %v995 = vunpack.c.l.b16 %v175
  %v996 = vunpack.c.l.b16 %v176
  %v997 = vunpack.c.l.b16 %v177
  %v998 = vunpack.c.l.b16 %v178
  %v999 = vunpack.c.l.b16 %v179
  %v1000 = vunpack.c.l.b16 %v180
  %v1001 = vunpack.c.l.b16 %v181
  %v1002 = vunpack.c.l.b16 %v182
  %v1003 = vunpack.c.l.b16 %v183
  %v1004 = vunpack.c.l.b16 %v184
  %v1005 = vunpack.c.l.b16 %v185
  %v1006 = vunpack.c.l.b16 %v186
  %v1007 = vunpack.c.l.b16 %v187
  %v1008 = vunpack.c.l.b16 %v188
  %v1009 = vunpack.c.l.b16 %v189
  %v1010 = vunpack.c.l.b16 %v190
  %v1011 = vunpack.c.l.b16 %v191
  %v1012 = vunpack.c.l.b16 %v192
  %v1013 = vunpack.c.l.b16 %v193
  %v1014 = vunpack.c.l.b16 %v194
  %v1015 = vunpack.c.l.b16 %v195
  %v1016 = vunpack.c.l.b16 %v196
  %v1017 = vunpack.c.l.b16 %v197
  %v1018 = vunpack.c.l.b16 %v198
  %v1019 = vunpack.c.l.b16 %v199
  %v1020 = vunpack.c.l.b16 %v200
  %v1021 = vunpack.c.l.b16 %v201
  %v1022 = vunpack.c.l.b16 %v202
  %v1023 = vunpack.c.l.b16 %v203
  %v1024 = vunpack.c.l.b16 %v204
  %v1025 = vunpack.c.l.b16 %v205
  %v1026 = vunpack.c.l.b16 %v206
  %v1027 = vunpack.c.l.b16 %v207
  %v1028 = vunpack.c.l.b16 %v208
  %v1029 = vunpack.c.l.b16 %v209
  %v1030 = vunpack.c.l.b16 %v210
  %v1031 = vunpack.c.l.b16 %v211
  %v1032 = vunpack.c.l.b16 %v212
  %v1033 = vunpack.c.l.b16 %v213
  %v1034 = vunpack.c.l.b16 %v214
  %v1035 = vunpack.c.l.b16 %v215
  %v1036 = vunpack.c.l.b16 %v216
  %v1037 = vunpack.c.l.b16 %v217
  %v1038 = vunpack.c.l.b16 %v218
  %v1039 = vunpack.c.l.b16 %v219
  %v1040 = vunpack.c.l.b16 %v220
  %v1041 = vunpack.c.l.b16 %v221
  %v1042 = vunpack.c.l.b16 %v222
  %v1043 = vunpack.c.l.b16 %v223
  %v1044 = vunpack.c.l.b16 %v224
  %v1045 = vunpack.c.l.b16 %v225
  %v1046 = vunpack.c.l.b16 %v226
  %v1047 = vunpack.c.l.b16 %v227
  %v1048 = vunpack.c.l.b16 %v228
  %v1049 = vunpack.c.l.b16 %v229
  %v1050 = vunpack.c.l.b16 %v230
  %v1051 = vunpack.c.l.b16 %v231
  %v1052 = vunpack.c.l.b16 %v232
  %v1053 = vunpack.c.l.b16 %v233
  %v1054 = vunpack.c.l.b16 %v234
  %v1055 = vunpack.c.l.b16 %v235
  %v1056 = vunpack.c.l.b16 %v236
  %v1057 = vunpack.c.l.b16 %v237
  %v1058 = vunpack.c.l.b16 %v238
  %v1059 = vunpack.c.l.b16 %v239
  %v1060 = vunpack.c.l.b16 %v240
  %v1061 = vunpack.c.l.b16 %v241
  %v1062 = vunpack.c.l.b16 %v242
  %v1063 = vunpack.c.l.b16 %v243
  %v1064 = vunpack.c.l.b16 %v244
  %v1065 = vunpack.c.l.b16 %v245
  %v1066 = vunpack.c.l.b16 %v246
  %v1067 = vunpack.c.l.b16 %v247
  %v1068 = vunpack.c.l.b16 %v248
  %v1069 = vunpack.c.l.b16 %v249
  %v1070 = vunpack.c.l.b16 %v250
  %v1071 = vunpack.c.l.b16 %v251
  %v1072 = vunpack.c.l.b16 %v252
  %v1073 = vunpack.c.l.b16 %v253
  %v1074 = vunpack.c.l.b16 %v254
  %v1075 = vunpack.c.l.b16 %v255
  %v1076 = vunpack.c.l.b16 %v256
  %v1077 = vunpack.c.l.b16 %v257
  %v1078 = vunpack.c.l.b16 %v258
  %v1079 = vunpack.c.l.b16 %v259
  %v1080 = vunpack.c.l.b16 %v260
  %v1081 = vunpack.c.l.b16 %v261
  %v1082 = vunpack.c.l.b16 %v262
  %v1083 = vunpack.c.l.b16 %v263
  %v1084 = vunpack.c.l.b16 %v264
  %v1085 = vunpack.c.l.b16 %v265
  %v1086 = vunpack.c.l.b16 %v266
  %v1087 = vunpack.c.l.b16 %v267
  %v1088 = vunpack.c.l.b16 %v268
  %v1089 = vunpack.c.l.b16 %v269
  %v1090 = vunpack.c.l.b16 %v270
  %v1091 = vunpack.c.l.b16 %v271
  %v1092 = vunpack.c.l.b16 %v272
  %v1093 = vunpack.c.l.b16 %v273
  %v1094 = vunpack.c.l.b16 %v274
  %v1095 = vunpack.c.l.b16 %v275
  %v1096 = vunpack.c.l.b16 %v276
  %v1097 = vunpack.c.l.b16 %v277
  %v1098 = vunpack.c.l.b16 %v278
  %v1099 = vunpack.c.l.b16 %v279
  %v1100 = vunpack.c.l.b16 %v280
  %v1101 = vunpack.c.l.b16 %v281
  %v1102 = vunpack.c.l.b16 %v282
  %v1103 = vunpack.c.l.b16 %v283
  %v1104 = vunpack.c.l.b16 %v284
  %v1105 = vunpack.c.l.b16 %v285
  %v1106 = vunpack.c.l.b16 %v286
  %v1107 = vunpack.c.l.b16 %v287
  %v1108 = vunpack.c.l.b16 %v288
  %v1109 = vunpack.c.l.b16 %v289
  %v1110 = vunpack.c.l.b16 %v290
  %v1111 = vunpack.c.l.b16 %v291
  %v1112 = vunpack.c.l.b16 %v292
  %v1113 = vunpack.c.l.b16 %v293
  %v1114 = vunpack.c.l.b16 %v294
  %v1115 = vunpack.c.l.b16 %v295
  %v1116 = vunpack.c.l.b16 %v296
  %v1117 = vunpack.c.l.b16 %v297
  %v1118 = vunpack.c.l.b16 %v298
  %v1119 = vunpack.c.l.b16 %v299
  %v1120 = vunpack.c.l.b16 %v300
  %v1121 = vunpack.c.l.b16 %v301
  %v1122 = vunpack.c.l.b16 %v302
  %v1123 = vunpack.c.l.b16 %v303
  %v1124 = vunpack.c.l.b16 %v304
  %v1125 = vunpack.c.l.b16 %v305
  %v1126 = vunpack.c.l.b16 %v306
  %v1127 = vunpack.c.l.b16 %v307
  %v1128 = vunpack.c.l.b16 %v308
  %v1129 = vunpack.c.l.b16 %v309
  %v1130 = vunpack.c.l.b16 %v310
  %v1131 = vunpack.c.l.b16 %v311
  %v1132 = vunpack.c.l.b16 %v312
  %v1133 = vunpack.c.l.b16 %v313
  %v1134 = vunpack.c.l.b16 %v314
  %v1135 = vunpack.c.l.b16 %v315
  %v1136 = vunpack.c.l.b16 %v316
  %v1137 = vunpack.c.l.b16 %v317
  %v1138 = vunpack.c.l.b16 %v318
  %v1139 = vunpack.c.l.b16 %v319
  %v1140 = vunpack.c.l.b16 %v320
  %v1141 = vunpack.c.l.b16 %v321
  %v1142 = vunpack.c.l.b16 %v322
  %v1143 = vunpack.c.l.b16 %v323
  %v1144 = vunpack.c.l.b16 %v324
  %v1145 = vunpack.c.l.b16 %v325
  %v1146 = vunpack.c.l.b16 %v326
  %v1147 = vunpack.c.l.b16 %v327
  %v1148 = vunpack.c.l.b16 %v328
  %v1149 = vunpack.c.l.b16 %v329
  %v1150 = vunpack.c.l.b16 %v330
  %v1151 = vunpack.c.l.b16 %v331
  %v1152 = vunpack.c.l.b16 %v332
  %v1153 = vunpack.c.l.b16 %v333
  %v1154 = vunpack.c.l.b16 %v334
  %v1155 = vunpack.c.l.b16 %v335
  %v1156 = vunpack.c.l.b16 %v336
  %v1157 = vunpack.c.l.b16 %v337
  %v1158 = vunpack.c.l.b16 %v338
  %v1159 = vunpack.c.l.b16 %v339
  %v1160 = vunpack.c.l.b16 %v340
  %v1161 = vunpack.c.l.b16 %v341
  %v1162 = vunpack.c.l.b16 %v342
  %v1163 = vunpack.c.l.b16 %v343
  %v1164 = vunpack.c.l.b16 %v344
  %v1165 = vunpack.c.l.b16 %v345
  %v1166 = vunpack.c.l.b16 %v346
  %v1167 = vunpack.c.l.b16 %v347
  %v1168 = vunpack.c.l.b16 %v348
  %v1169 = vunpack.c.l.b16 %v349
  %v1170 = vunpack.c.l.b16 %v350
  %v1171 = vunpack.c.l.b16 %v351
  %v1172 = vunpack.c.l.b16 %v352
  %v1173 = vunpack.c.l.b16 %v353
  %v1174 = vunpack.c.l.b16 %v354
  %v1175 = vunpack.c.l.b16 %v355
  %v1176 = vunpack.c.l.b16 %v356
  %v1177 = vunpack.c.l.b16 %v357
  %v1178 = vunpack.c.l.b16 %v358
  %v1179 = vunpack.c.l.b16 %v359
  %v1180 = vunpack.c.l.b16 %v360
  %v1181 = vunpack.c.l.b16 %v361
  %v1182 = vunpack.c.l.b16 %v362
  %v1183 = vunpack.c.l.b16 %v363
  %v1184 = vunpack.c.l.b16 %v364
  %v1185 = vunpack.c.l.b16 %v365
  %v1186 = vunpack.c.l.b16 %v366
  %v1187 = vunpack.c.l.b16 %v367
  %v1188 = vunpack.c.l.b16 %v368
  %v1189 = vunpack.c.l.b16 %v369
  %v1190 = vunpack.c.l.b16 %v370
  %v1191 = vunpack.c.l.b16 %v371
  %v1192 = vunpack.c.l.b16 %v372
  %v1193 = vunpack.c.l.b16 %v373
  %v1194 = vunpack.c.l.b16 %v374
  %v1195 = vunpack.c.l.b16 %v375
  %v1196 = vunpack.c.l.b16 %v376
  %v1197 = vunpack.c.l.b16 %v377
  %v1198 = vunpack.c.l.b16 %v378
  %v1199 = vunpack.c.l.b16 %v379
  %v1200 = vunpack.c.l.b16 %v380
  %v1201 = vunpack.c.l.b16 %v381
  %v1202 = vunpack.c.l.b16 %v382
  %v1203 = vunpack.c.l.b16 %v383
  %v1204 = vunpack.c.l.b16 %v384
  %v1205 = vunpack.c.l.b16 %v385
  %v1206 = vunpack.c.l.b16 %v386
  %v1207 = vunpack.c.l.b16 %v387
  %v1208 = vunpack.c.l.b16 %v388
  %v1209 = vunpack.c.l.b16 %v389
  %v1210 = vunpack.c.l.b16 %v390
  %v1211 = vunpack.c.l.b16 %v391
  %v1212 = vunpack.c.l.b16 %v392
  %v1213 = vunpack.c.l.b16 %v393
  %v1214 = vunpack.c.l.b16 %v394
  %v1215 = vunpack.c.l.b16 %v395
  %v1216 = vunpack.c.l.b16 %v396
  %v1217 = vunpack.c.l.b16 %v397
  %v1218 = vunpack.c.l.b16 %v398
  %v1219 = vunpack.c.l.b16 %v399
  %v1220 = vunpack.c.l.b16 %v400
  %v1221 = vunpack.c.l.b16 %v401
  %v1222 = vunpack.c.l.b16 %v402
  %v1223 = vunpack.c.l.b16 %v403
  %v1224 = vunpack.c.l.b16 %v404
  %v1225 = vunpack.c.l.b16 %v405
  %v1226 = vunpack.c.l.b16 %v406
  %v1227 = vunpack.c.l.b16 %v407
  %v1228 = vunpack.c.l.b16 %v408
  %v1229 = vunpack.c.l.b16 %v409
  %v1230 = vunpack.c.l.b16 %v410
  %v1231 = vunpack.c.l.b16 %v411
  %v1232 = vunpack.c.l.b16 %v412
  %v1233 = vunpack.c.l.b16 %v413
  %v1234 = vunpack.c.l.b16 %v414
  %v1235 = vunpack.c.l.b16 %v415
  %v1236 = vunpack.c.l.b16 %v416
  %v1237 = vunpack.c.l.b16 %v417
  %v1238 = vunpack.c.l.b16 %v418
  %v1239 = vunpack.c.l.b16 %v419
  %v1240 = vunpack.c.l.b16 %v420
  %v1241 = vunpack.c.l.b16 %v421
  %v1242 = vunpack.c.l.b16 %v422
  %v1243 = vunpack.c.l.b16 %v423
  %v1244 = vunpack.c.l.b16 %v424
  %v1245 = vunpack.c.l.b16 %v425
  %v1246 = vunpack.c.l.b16 %v426
  %v1247 = vunpack.c.l.b16 %v427
  %v1248 = vunpack.c.l.b16 %v428
  %v1249 = vunpack.c.l.b16 %v429
  %v1250 = vunpack.c.l.b16 %v430
  %v1251 = vunpack.c.l.b16 %v431
  %v1252 = vunpack.c.l.b16 %v432
  %v1253 = vpack.c.b16 %v854, %v853
  %v1254 = vpack.c.b16 %v856, %v855
  %v1255 = vpack.c.b16 %v858, %v857
  %v1256 = vpack.c.b16 %v860, %v859
  %v1257 = vpack.c.b16 %v862, %v861
  %v1258 = vpack.c.b16 %v864, %v863
  %v1259 = vpack.c.b16 %v866, %v865
  %v1260 = vpack.c.b16 %v868, %v867
  %v1261 = vpack.c.b16 %v870, %v869
  %v1262 = vpack.c.b16 %v872, %v871
  %v1263 = vpack.c.b16 %v874, %v873
  %v1264 = vpack.c.b16 %v876, %v875
  %v1265 = vpack.c.b16 %v878, %v877
  %v1266 = vpack.c.b16 %v880, %v879
  %v1267 = vpack.c.b16 %v882, %v881
  %v1268 = vpack.c.b16 %v884, %v883
  %v1269 = vpack.c.b16 %v886, %v885
  %v1270 = vpack.c.b16 %v888, %v887
  %v1271 = vpack.c.b16 %v890, %v889
  %v1272 = vpack.c.b16 %v892, %v891
  %v1273 = vpack.c.b16 %v894, %v893
  %v1274 = vpack.c.b16 %v896, %v895
  %v1275 = vpack.c.b16 %v898, %v897
  %v1276 = vpack.c.b16 %v900, %v899
  %v1277 = vpack.c.b16 %v902, %v901
  %v1278 = vpack.c.b16 %v904, %v903
  %v1279 = vpack.c.b16 %v906, %v905
  %v1280 = vpack.c.b16 %v908, %v907
  %v1281 = vpack.c.b16 %v910, %v909
  %v1282 = vpack.c.b16 %v912, %v911
  %v1283 = vpack.c.b16 %v914, %v913
  %v1284 = vpack.c.b16 %v916, %v915
  %v1285 = vpack.c.b16 %v918, %v917
  %v1286 = vpack.c.b16 %v920, %v919
  %v1287 = vpack.c.b16 %v922, %v921
  %v1288 = vpack.c.b16 %v924, %v923
  %v1289 = vpack.c.b16 %v926, %v925
  %v1290 = vpack.c.b16 %v928, %v927
  %v1291 = vpack.c.b16 %v930, %v929
  %v1292 = vpack.c.b16 %v932, %v931
  %v1293 = vpack.c.b16 %v934, %v933
  %v1294 = vpack.c.b16 %v936, %v935
  %v1295 = vpack.c.b16 %v938, %v937
  %v1296 = vpack.c.b16 %v940, %v939
  %v1297 = vpack.c.b16 %v942, %v941
  %v1298 = vpack.c.b16 %v944, %v943
  %v1299 = vpack.c.b16 %v946, %v945
  %v1300 = vpack.c.b16 %v948, %v947
  %v1301 = vpack.c.b16 %v950, %v949
  %v1302 = vpack.c.b16 %v952, %v951
  %v1303 = vpack.c.b16 %v954, %v953
  %v1304 = vpack.c.b16 %v956, %v955
  %v1305 = vpack.c.b16 %v958, %v957
  %v1306 = vpack.c.b16 %v960, %v959
  %v1307 = vpack.c.b16 %v962, %v961
  %v1308 = vpack.c.b16 %v964, %v963
  %v1309 = vpack.c.b16 %v966, %v965
  %v1310 = vpack.c.b16 %v968, %v967
  %v1311 = vpack.c.b16 %v970, %v969
  %v1312 = vpack.c.b16 %v972, %v971
  %v1313 = vpack.c.b16 %v974, %v973
  %v1314 = vpack.c.b16 %v976, %v975
  %v1315 = vpack.c.b16 %v978, %v977
  %v1316 = vpack.c.b16 %v980, %v979
  %v1317 = vpack.c.b16 %v982, %v981
  %v1318 = vpack.c.b16 %v984, %v983
  %v1319 = vpack.c.b16 %v986, %v985
  %v1320 = vpack.c.b16 %v988, %v987
  %v1321 = vpack.c.b16 %v990, %v989
  %v1322 = vpack.c.b16 %v992, %v991
  %v1323 = vpack.c.b16 %v994, %v993
  %v1324 = vpack.c.b16 %v996, %v995
  %v1325 = vpack.c.b16 %v998, %v997
  %v1326 = vpack.c.b16 %v1000, %v999
  %v1327 = vpack.c.b16 %v1002, %v1001
  %v1328 = vpack.c.b16 %v1004, %v1003
  %v1329 = vpack.c.b16 %v1006, %v1005
  %v1330 = vpack.c.b16 %v1008, %v1007
  %v1331 = vpack.c.b16 %v1010, %v1009
  %v1332 = vpack.c.b16 %v1012, %v1011
  %v1333 = vpack.c.b16 %v1014, %v1013
  %v1334 = vpack.c.b16 %v1016, %v1015
  %v1335 = vpack.c.b16 %v1018, %v1017
  %v1336 = vpack.c.b16 %v1020, %v1019
  %v1337 = vpack.c.b16 %v1022, %v1021
  %v1338 = vpack.c.b16 %v1024, %v1023
  %v1339 = vpack.c.b16 %v1026, %v1025
  %v1340 = vpack.c.b16 %v1028, %v1027
  %v1341 = vpack.c.b16 %v1030, %v1029
  %v1342 = vpack.c.b16 %v1032, %v1031
  %v1343 = vpack.c.b16 %v1034, %v1033
  %v1344 = vpack.c.b16 %v1036, %v1035
  %v1345 = vpack.c.b16 %v1038, %v1037
  %v1346 = vpack.c.b16 %v1040, %v1039
  %v1347 = vpack.c.b16 %v1042, %v1041
  %v1348 = vpack.c.b16 %v1044, %v1043
  %v1349 = vpack.c.b16 %v1046, %v1045
  %v1350 = vpack.c.b16 %v1048, %v1047
  %v1351 = vpack.c.b16 %v1050, %v1049
  %v1352 = vpack.c.b16 %v1052, %v1051
  %v1353 = vpack.c.b16 %v1054, %v1053
  %v1354 = vpack.c.b16 %v1056, %v1055
  %v1355 = vpack.c.b16 %v1058, %v1057
  %v1356 = vpack.c.b16 %v1060, %v1059
  %v1357 = vpack.c.b16 %v1062, %v1061
  %v1358 = vpack.c.b16 %v1064, %v1063
  %v1359 = vpack.c.b16 %v1066, %v1065
  %v1360 = vpack.c.b16 %v1068, %v1067
  %v1361 = vpack.c.b16 %v1070, %v1069
  %v1362 = vpack.c.b16 %v1072, %v1071
  %v1363 = vpack.c.b16 %v1074, %v1073
  %v1364 = vpack.c.b16 %v1076, %v1075
  %v1365 = vpack.c.b16 %v1078, %v1077
  %v1366 = vpack.c.b16 %v1080, %v1079
  %v1367 = vpack.c.b16 %v1082, %v1081
  %v1368 = vpack.c.b16 %v1084, %v1083
  %v1369 = vpack.c.b16 %v1086, %v1085
  %v1370 = vpack.c.b16 %v1088, %v1087
  %v1371 = vpack.c.b16 %v1090, %v1089
  %v1372 = vpack.c.b16 %v1092, %v1091
  %v1373 = vpack.c.b16 %v1094, %v1093
  %v1374 = vpack.c.b16 %v1096, %v1095
  %v1375 = vpack.c.b16 %v1098, %v1097
  %v1376 = vpack.c.b16 %v1100, %v1099
  %v1377 = vpack.c.b16 %v1102, %v1101
  %v1378 = vpack.c.b16 %v1104, %v1103
  %v1379 = vpack.c.b16 %v1106, %v1105
  %v1380 = vpack.c.b16 %v1108, %v1107
  %v1381 = vpack.c.b16 %v1110, %v1109
  %v1382 = vpack.c.b16 %v1112, %v1111
  %v1383 = vpack.c.b16 %v1114, %v1113
  %v1384 = vpack.c.b16 %v1116, %v1115
  %v1385 = vpack.c.b16 %v1118, %v1117
  %v1386 = vpack.c.b16 %v1120, %v1119
  %v1387 = vpack.c.b16 %v1122, %v1121
  %v1388 = vpack.c.b16 %v1124, %v1123
  %v1389 = vpack.c.b16 %v1126, %v1125
  %v1390 = vpack.c.b16 %v1128, %v1127
  %v1391 = vpack.c.b16 %v1130, %v1129
  %v1392 = vpack.c.b16 %v1132, %v1131
  %v1393 = vpack.c.b16 %v1134, %v1133
  %v1394 = vpack.c.b16 %v1136, %v1135
  %v1395 = vpack.c.b16 %v1138, %v1137
  %v1396 = vpack.c.b16 %v1140, %v1139
  %v1397 = vpack.c.b16 %v1142, %v1141
  %v1398 = vpack.c.b16 %v1144, %v1143
  %v1399 = vpack.c.b16 %v1146, %v1145
  %v1400 = vpack.c.b16 %v1148, %v1147
  %v1401 = vpack.c.b16 %v1150, %v1149
  %v1402 = vpack.c.b16 %v1152, %v1151
  %v1403 = vpack.c.b16 %v1154, %v1153
  %v1404 = vpack.c.b16 %v1156, %v1155
  %v1405 = vpack.c.b16 %v1158, %v1157
  %v1406 = vpack.c.b16 %v1160, %v1159
  %v1407 = vpack.c.b16 %v1162, %v1161
  %v1408 = vpack.c.b16 %v1164, %v1163
  %v1409 = vpack.c.b16 %v1166, %v1165
  %v1410 = vpack.c.b16 %v1168, %v1167
  %v1411 = vpack.c.b16 %v1170, %v1169
  %v1412 = vpack.c.b16 %v1172, %v1171
  %v1413 = vpack.c.b16 %v1174, %v1173
  %v1414 = vpack.c.b16 %v1176, %v1175
  %v1415 = vpack.c.b16 %v1178, %v1177
  %v1416 = vpack.c.b16 %v1180, %v1179
  %v1417 = vpack.c.b16 %v1182, %v1181
  %v1418 = vpack.c.b16 %v1184, %v1183
  %v1419 = vpack.c.b16 %v1186, %v1185
  %v1420 = vpack.c.b16 %v1188, %v1187
  %v1421 = vpack.c.b16 %v1190, %v1189
  %v1422 = vpack.c.b16 %v1192, %v1191
  %v1423 = vpack.c.b16 %v1194, %v1193
  %v1424 = vpack.c.b16 %v1196, %v1195
  %v1425 = vpack.c.b16 %v1198, %v1197
  %v1426 = vpack.c.b16 %v1200, %v1199
  %v1427 = vpack.c.b16 %v1202, %v1201
  %v1428 = vpack.c.b16 %v1204, %v1203
  %v1429 = vpack.c.b16 %v1206, %v1205
  %v1430 = vpack.c.b16 %v1208, %v1207
  %v1431 = vpack.c.b16 %v1210, %v1209
  %v1432 = vpack.c.b16 %v1212, %v1211
  %v1433 = vpack.c.b16 %v1214, %v1213
  %v1434 = vpack.c.b16 %v1216, %v1215
  %v1435 = vpack.c.b16 %v1218, %v1217
  %v1436 = vpack.c.b16 %v1220, %v1219
  %v1437 = vpack.c.b16 %v1222, %v1221
  %v1438 = vpack.c.b16 %v1224, %v1223
  %v1439 = vpack.c.b16 %v1226, %v1225
  %v1440 = vpack.c.b16 %v1228, %v1227
  %v1441 = vpack.c.b16 %v1230, %v1229
  %v1442 = vpack.c.b16 %v1232, %v1231
  %v1443 = vpack.c.b16 %v1234, %v1233
  %v1444 = vpack.c.b16 %v1236, %v1235
  %v1445 = vpack.c.b16 %v1238, %v1237
  %v1446 = vpack.c.b16 %v1240, %v1239
  %v1447 = vpack.c.b16 %v1242, %v1241
  %v1448 = vpack.c.b16 %v1244, %v1243
  %v1449 = vpack.c.b16 %v1246, %v1245
  %v1450 = vpack.c.b16 %v1248, %v1247
  %v1451 = vpack.c.b16 %v1250, %v1249
  %v1452 = vpack.c.b16 %v1252, %v1251
  %v1466 = vunpack.c.l.b16 %v433
  %v1467 = vunpack.c.l.b16 %v434
  %v1468 = vunpack.c.l.b16 %v435
  %v1469 = vunpack.c.l.b16 %v436
  %v1470 = vunpack.c.l.b16 %v437
  %v1471 = vunpack.c.l.b16 %v438
  %v1472 = vunpack.c.l.b16 %v439
  %v1473 = vunpack.c.l.b16 %v440
  %v1474 = vunpack.c.l.b16 %v441
  %v1475 = vunpack.c.l.b16 %v442
  %v1476 = vunpack.c.l.b16 %v443
  %v1477 = vunpack.c.l.b16 %v444
  %v1478 = vunpack.c.l.b16 %v445
  %v1479 = vpack.c.b16 %v1467, %v1466
  %v1480 = vpack.c.b16 %v1469, %v1468
  %v1481 = vpack.c.b16 %v1471, %v1470
  %v1482 = vpack.c.b16 %v1473, %v1472
  %v1483 = vpack.c.b16 %v1475, %v1474
  %v1484 = vpack.c.b16 %v1477, %v1476
  %v1485 = vpack.c.b16 %v1478, %v1478
  %vm1492 = vcmask 818176
  %v1494 = vsel %vm1492, %v1253, 0
  %v1497 = vsel %vm1492, %v1254, 0
  %v1500 = vsel %vm1492, %v1255, 0
  %v1503 = vsel %vm1492, %v1256, 0
  %v1506 = vsel %vm1492, %v1257, 0
  %v1509 = vsel %vm1492, %v1258, 0
  %v1512 = vsel %vm1492, %v1259, 0
  %v1515 = vsel %vm1492, %v1260, 0
  %v1518 = vsel %vm1492, %v1261, 0
  %v1521 = vsel %vm1492, %v1262, 0
  %v1524 = vsel %vm1492, %v1263, 0
  %v1527 = vsel %vm1492, %v1264, 0
  %v1530 = vsel %vm1492, %v1265, 0
  %v1533 = vsel %vm1492, %v1266, 0
  %v1536 = vsel %vm1492, %v1267, 0
  %v1539 = vsel %vm1492, %v1268, 0
  %v1542 = vsel %vm1492, %v1269, 0
  %v1545 = vsel %vm1492, %v1270, 0
  %v1548 = vsel %vm1492, %v1271, 0
  %v1551 = vsel %vm1492, %v1272, 0
  %v1554 = vsel %vm1492, %v1273, 0
  %v1557 = vsel %vm1492, %v1274, 0
  %v1560 = vsel %vm1492, %v1275, 0
  %v1563 = vsel %vm1492, %v1276, 0
  %v1566 = vsel %vm1492, %v1277, 0
  %v1569 = vsel %vm1492, %v1278, 0
  %v1572 = vsel %vm1492, %v1279, 0
  %v1575 = vsel %vm1492, %v1280, 0
  %v1578 = vsel %vm1492, %v1281, 0
  %v1581 = vsel %vm1492, %v1282, 0
  %v1584 = vsel %vm1492, %v1283, 0
  %v1587 = vsel %vm1492, %v1284, 0
  %v1590 = vsel %vm1492, %v1285, 0
  %v1593 = vsel %vm1492, %v1286, 0
  %v1596 = vsel %vm1492, %v1287, 0
  %v1599 = vsel %vm1492, %v1288, 0
  %v1602 = vsel %vm1492, %v1289, 0
  %v1605 = vsel %vm1492, %v1290, 0
  %v1608 = vsel %vm1492, %v1291, 0
  %v1611 = vsel %vm1492, %v1292, 0
  %v1614 = vsel %vm1492, %v1293, 0
  %v1617 = vsel %vm1492, %v1294, 0
  %v1620 = vsel %vm1492, %v1295, 0
  %v1623 = vsel %vm1492, %v1296, 0
  %v1626 = vsel %vm1492, %v1297, 0
  %v1629 = vsel %vm1492, %v1298, 0
  %v1632 = vsel %vm1492, %v1299, 0
  %v1635 = vsel %vm1492, %v1300, 0
  %v1638 = vsel %vm1492, %v1301, 0
  %v1641 = vsel %vm1492, %v1302, 0
  %v1644 = vsel %vm1492, %v1303, 0
  %v1647 = vsel %vm1492, %v1304, 0
  %v1650 = vsel %vm1492, %v1305, 0
  %v1653 = vsel %vm1492, %v1306, 0
  %v1656 = vsel %vm1492, %v1307, 0
  %v1659 = vsel %vm1492, %v1308, 0
  %v1662 = vsel %vm1492, %v1309, 0
  %v1665 = vsel %vm1492, %v1310, 0
  %v1668 = vsel %vm1492, %v1311, 0
  %v1671 = vsel %vm1492, %v1312, 0
  %v1674 = vsel %vm1492, %v1313, 0
  %v1677 = vsel %vm1492, %v1314, 0
  %v1680 = vsel %vm1492, %v1315, 0
  %v1683 = vsel %vm1492, %v1316, 0
  %v1686 = vsel %vm1492, %v1317, 0
  %v1689 = vsel %vm1492, %v1318, 0
  %v1692 = vsel %vm1492, %v1319, 0
  %v1695 = vsel %vm1492, %v1320, 0
  %v1698 = vsel %vm1492, %v1321, 0
  %v1701 = vsel %vm1492, %v1322, 0
  %v1704 = vsel %vm1492, %v1323, 0
  %v1707 = vsel %vm1492, %v1324, 0
  %v1710 = vsel %vm1492, %v1325, 0
  %v1713 = vsel %vm1492, %v1326, 0
  %v1716 = vsel %vm1492, %v1327, 0
  %v1719 = vsel %vm1492, %v1328, 0
  %v1722 = vsel %vm1492, %v1329, 0
  %v1725 = vsel %vm1492, %v1330, 0
  %v1728 = vsel %vm1492, %v1331, 0
  %v1731 = vsel %vm1492, %v1332, 0
  %v1734 = vsel %vm1492, %v1333, 0
  %v1737 = vsel %vm1492, %v1334, 0
  %v1740 = vsel %vm1492, %v1335, 0
  %v1743 = vsel %vm1492, %v1336, 0
  %v1746 = vsel %vm1492, %v1337, 0
  %v1749 = vsel %vm1492, %v1338, 0
  %v1752 = vsel %vm1492, %v1339, 0
  %v1755 = vsel %vm1492, %v1340, 0
  %v1758 = vsel %vm1492, %v1341, 0
  %v1761 = vsel %vm1492, %v1342, 0
  %v1764 = vsel %vm1492, %v1343, 0
  %v1767 = vsel %vm1492, %v1344, 0
  %v1770 = vsel %vm1492, %v1345, 0
  %v1773 = vsel %vm1492, %v1346, 0
  %v1776 = vsel %vm1492, %v1347, 0
  %v1779 = vsel %vm1492, %v1348, 0
  %v1782 = vsel %vm1492, %v1349, 0
  %v1785 = vsel %vm1492, %v1350, 0
  %v1788 = vsel %vm1492, %v1351, 0
  %v1791 = vsel %vm1492, %v1352, 0
  %v1794 = vsel %vm1492, %v1353, 0
  %v1797 = vsel %vm1492, %v1354, 0
  %v1800 = vsel %vm1492, %v1355, 0
  %v1803 = vsel %vm1492, %v1356, 0
  %v1806 = vsel %vm1492, %v1357, 0
  %v1809 = vsel %vm1492, %v1358, 0
  %v1812 = vsel %vm1492, %v1359, 0
  %v1815 = vsel %vm1492, %v1360, 0
  %v1818 = vsel %vm1492, %v1361, 0
  %v1821 = vsel %vm1492, %v1362, 0
  %v1824 = vsel %vm1492, %v1363, 0
  %v1827 = vsel %vm1492, %v1364, 0
  %v1830 = vsel %vm1492, %v1365, 0
  %v1833 = vsel %vm1492, %v1366, 0
  %v1836 = vsel %vm1492, %v1367, 0
  %v1839 = vsel %vm1492, %v1368, 0
  %v1842 = vsel %vm1492, %v1369, 0
  %v1845 = vsel %vm1492, %v1370, 0
  %v1848 = vsel %vm1492, %v1371, 0
  %v1851 = vsel %vm1492, %v1372, 0
  %v1854 = vsel %vm1492, %v1373, 0
  %v1857 = vsel %vm1492, %v1374, 0
  %v1860 = vsel %vm1492, %v1375, 0
  %v1863 = vsel %vm1492, %v1376, 0
  %v1866 = vsel %vm1492, %v1377, 0
  %v1869 = vsel %vm1492, %v1378, 0
  %v1872 = vsel %vm1492, %v1379, 0
  %v1875 = vsel %vm1492, %v1380, 0
  %v1878 = vsel %vm1492, %v1381, 0
  %v1881 = vsel %vm1492, %v1382, 0
  %v1884 = vsel %vm1492, %v1383, 0
  %v1887 = vsel %vm1492, %v1384, 0
  %v1890 = vsel %vm1492, %v1385, 0
  %v1893 = vsel %vm1492, %v1386, 0
  %v1896 = vsel %vm1492, %v1387, 0
  %v1899 = vsel %vm1492, %v1388, 0
  %v1902 = vsel %vm1492, %v1389, 0
  %v1905 = vsel %vm1492, %v1390, 0
  %v1908 = vsel %vm1492, %v1391, 0
  %v1911 = vsel %vm1492, %v1392, 0
  %v1914 = vsel %vm1492, %v1393, 0
  %v1917 = vsel %vm1492, %v1394, 0
  %v1920 = vsel %vm1492, %v1395, 0
  %v1923 = vsel %vm1492, %v1396, 0
  %v1926 = vsel %vm1492, %v1397, 0
  %v1929 = vsel %vm1492, %v1398, 0
  %v1932 = vsel %vm1492, %v1399, 0
  %v1935 = vsel %vm1492, %v1400, 0
  %v1938 = vsel %vm1492, %v1401, 0
  %v1941 = vsel %vm1492, %v1402, 0
  %v1944 = vsel %vm1492, %v1403, 0
  %v1947 = vsel %vm1492, %v1404, 0
  %v1950 = vsel %vm1492, %v1405, 0
  %v1953 = vsel %vm1492, %v1406, 0
  %v1956 = vsel %vm1492, %v1407, 0
  %v1959 = vsel %vm1492, %v1408, 0
  %v1962 = vsel %vm1492, %v1409, 0
  %v1965 = vsel %vm1492, %v1410, 0
  %v1968 = vsel %vm1492, %v1411, 0
  %v1971 = vsel %vm1492, %v1412, 0
  %v1974 = vsel %vm1492, %v1413, 0
  %v1977 = vsel %vm1492, %v1414, 0
  %v1980 = vsel %vm1492, %v1415, 0
  %v1983 = vsel %vm1492, %v1416, 0
  %v1986 = vsel %vm1492, %v1417, 0
  %v1989 = vsel %vm1492, %v1418, 0
  %v1992 = vsel %vm1492, %v1419, 0
  %v1995 = vsel %vm1492, %v1420, 0
  %v1998 = vsel %vm1492, %v1421, 0
  %v2001 = vsel %vm1492, %v1422, 0
  %v2004 = vsel %vm1492, %v1423, 0
  %v2007 = vsel %vm1492, %v1424, 0
  %v2010 = vsel %vm1492, %v1425, 0
  %v2013 = vsel %vm1492, %v1426, 0
  %v2016 = vsel %vm1492, %v1427, 0
  %v2019 = vsel %vm1492, %v1428, 0
  %v2022 = vsel %vm1492, %v1429, 0
  %v2025 = vsel %vm1492, %v1430, 0
  %v2028 = vsel %vm1492, %v1431, 0
  %v2031 = vsel %vm1492, %v1432, 0
  %v2034 = vsel %vm1492, %v1433, 0
  %v2037 = vsel %vm1492, %v1434, 0
  %v2040 = vsel %vm1492, %v1435, 0
  %v2043 = vsel %vm1492, %v1436, 0
  %v2046 = vsel %vm1492, %v1437, 0
  %v2049 = vsel %vm1492, %v1438, 0
  %v2052 = vsel %vm1492, %v1439, 0
  %v2055 = vsel %vm1492, %v1440, 0
  %v2058 = vsel %vm1492, %v1441, 0
  %v2061 = vsel %vm1492, %v1442, 0
  %v2064 = vsel %vm1492, %v1443, 0
  %v2067 = vsel %vm1492, %v1444, 0
  %v2070 = vsel %vm1492, %v1445, 0
  %v2073 = vsel %vm1492, %v1446, 0
  %v2076 = vsel %vm1492, %v1447, 0
  %v2079 = vsel %vm1492, %v1448, 0
  %v2082 = vsel %vm1492, %v1449, 0
  %v2085 = vsel %vm1492, %v1450, 0
  %v2088 = vsel %vm1492, %v1451, 0
  %v2091 = vsel %vm1492, %v1452, 0
  %vm2093 = vcmask 1041408
  %v2095 = vsel %vm2093, %v1485, 0
  %2097 = vmatprep.subr.bf16.mxu0 0
  %2098 = vmatpush1.bf16.msra.mxu0 %v1479
  %2099 = vmatprep.subr.bf16.mxu0 0
  %2100 = vmatpush1.bf16.msra.mxu0 %v1480
  %2101 = vmatprep.subr.bf16.mxu0 0
  %2102 = vmatpush1.bf16.msra.mxu0 %v1481
  %2103 = vmatprep.subr.bf16.mxu0 0
  %2104 = vmatpush1.bf16.msra.mxu0 %v1482
  %2105 = vmatprep.subr.bf16.mxu0 0
  %2106 = vmatpush1.bf16.msra.mxu0 %v1483
  %2107 = vmatprep.subr.bf16.mxu0 0
  %2108 = vmatpush1.bf16.msra.mxu0 %v1484
  %2109 = vmatprep.subr.bf16.mxu0 0
  %2110 = vmatpush1.bf16.msra.mxu0 %v2095
  %2111 = vmatprep.subr.bf16.mxu0 0
  %2112 = vmatpush1.bf16.msra.mxu0 0
  %2113 = vmatprep.subr.bf16.mxu0 0
  %2114 = vmatpush1.bf16.msra.mxu0 0
  %2115 = vmatprep.subr.bf16.mxu0 0
  %2116 = vmatpush1.bf16.msra.mxu0 0
  %2117 = vmatprep.subr.bf16.mxu0 0
  %2118 = vmatpush1.bf16.msra.mxu0 0
  %2119 = vmatprep.subr.bf16.mxu0 0
  %2120 = vmatpush1.bf16.msra.mxu0 0
  %2121 = vmatprep.subr.bf16.mxu0 0
  %2122 = vmatpush1.bf16.msra.mxu0 0
  %2123 = vmatprep.subr.bf16.mxu0 0
  %2124 = vmatpush1.bf16.msra.mxu0 0
  %2125 = vmatprep.subr.bf16.mxu0 0
  %2126 = vmatpush1.bf16.msra.mxu0 0
  %2127 = vmatprep.subr.bf16.mxu0 0
  %2128 = vmatpush1.bf16.msra.mxu0 0
  %2129 = vmatprep.mubr.bf16.mxu0 0
  %2130 = vmatmul.mubr.bf16.gmra.mrb[0].mxu0 %v1494
  %v2131 = vpop.f32.mrb[0].mxu0
  %v2132 = vadd.f32 %v451, %v2131
  %v2133 = vpop.f32.mrb[0].mxu0
  %v2134 = vpop.f32.mrb[0].mxu0
  %v2135 = vadd.f32 %v451, %v2134
  %v2136 = vpop.f32.mrb[0].mxu0
  %2137 = vmatprep.mubr.bf16.mxu0 0
  %2138 = vmatmul.mubr.bf16.gmra.mrb[0].mxu0 %v1497
  %v2139 = vpop.f32.mrb[0].mxu0
  %v2140 = vadd.f32 %v451, %v2139
  %v2141 = vpop.f32.mrb[0].mxu0
  %v2142 = vpop.f32.mrb[0].mxu0
  %v2143 = vadd.f32 %v451, %v2142
  %v2144 = vpop.f32.mrb[0].mxu0
  %2145 = vmatprep.mubr.bf16.mxu0 0
  %2146 = vmatmul.mubr.bf16.gmra.mrb[0].mxu0 %v1500
  %v2147 = vpop.f32.mrb[0].mxu0
  %v2148 = vadd.f32 %v451, %v2147
  %v2149 = vpop.f32.mrb[0].mxu0
  %v2150 = vpop.f32.mrb[0].mxu0
  %v2151 = vadd.f32 %v451, %v2150
  %v2152 = vpop.f32.mrb[0].mxu0
  %2153 = vmatprep.mubr.bf16.mxu0 0
  %2154 = vmatmul.mubr.bf16.gmra.mrb[0].mxu0 %v1503
  %v2155 = vpop.f32.mrb[0].mxu0
  %v2156 = vadd.f32 %v451, %v2155
  %v2157 = vpop.f32.mrb[0].mxu0
  %v2158 = vpop.f32.mrb[0].mxu0
  %v2159 = vadd.f32 %v451, %v2158
  %v2160 = vpop.f32.mrb[0].mxu0
  %2161 = vmatprep.mubr.bf16.mxu0 0
  %2162 = vmatmul.mubr.bf16.gmra.mrb[0].mxu0 %v1506
  %v2163 = vpop.f32.mrb[0].mxu0
  %v2164 = vadd.f32 %v451, %v2163
  %v2165 = vpop.f32.mrb[0].mxu0
  %v2166 = vpop.f32.mrb[0].mxu0
  %v2167 = vadd.f32 %v451, %v2166
  %v2168 = vpop.f32.mrb[0].mxu0
  %2169 = vmatprep.mubr.bf16.mxu0 0
  %2170 = vmatmul.mubr.bf16.gmra.mrb[0].mxu0 %v1509
  %v2171 = vpop.f32.mrb[0].mxu0
  %v2172 = vadd.f32 %v451, %v2171
  %v2173 = vpop.f32.mrb[0].mxu0
  %v2174 = vpop.f32.mrb[0].mxu0
  %v2175 = vadd.f32 %v451, %v2174
  %v2176 = vpop.f32.mrb[0].mxu0
  %2177 = vmatprep.mubr.bf16.mxu0 0
  %2178 = vmatmul.mubr.bf16.gmra.mrb[0].mxu0 %v1512
  %v2179 = vpop.f32.mrb[0].mxu0
  %v2180 = vadd.f32 %v451, %v2179
  %v2181 = vpop.f32.mrb[0].mxu0
  %v2182 = vpop.f32.mrb[0].mxu0
  %v2183 = vadd.f32 %v451, %v2182
  %v2184 = vpop.f32.mrb[0].mxu0
  %2185 = vmatprep.mubr.bf16.mxu0 0
  %2186 = vmatmul.mubr.bf16.gmra.mrb[0].mxu0 %v1515
  %v2187 = vpop.f32.mrb[0].mxu0
  %v2188 = vadd.f32 %v451, %v2187
  %v2189 = vpop.f32.mrb[0].mxu0
  %v2190 = vpop.f32.mrb[0].mxu0
  %v2191 = vadd.f32 %v451, %v2190
  %v2192 = vpop.f32.mrb[0].mxu0
  %2193 = vmatprep.mubr.bf16.mxu0 0
  %2194 = vmatmul.mubr.bf16.gmra.mrb[0].mxu0 %v1518
  %v2195 = vpop.f32.mrb[0].mxu0
  %v2196 = vadd.f32 %v451, %v2195
  %v2197 = vpop.f32.mrb[0].mxu0
  %v2198 = vpop.f32.mrb[0].mxu0
  %v2199 = vadd.f32 %v451, %v2198
  %v2200 = vpop.f32.mrb[0].mxu0
  %2201 = vmatprep.mubr.bf16.mxu0 0
  %2202 = vmatmul.mubr.bf16.gmra.mrb[0].mxu0 %v1521
  %v2203 = vpop.f32.mrb[0].mxu0
  %v2204 = vadd.f32 %v451, %v2203
  %v2205 = vpop.f32.mrb[0].mxu0
  %v2206 = vpop.f32.mrb[0].mxu0
  %v2207 = vadd.f32 %v451, %v2206
  %v2208 = vpop.f32.mrb[0].mxu0
  %2209 = vmatprep.mubr.bf16.mxu0 0
  %2210 = vmatmul.mubr.bf16.gmra.mrb[0].mxu0 %v1524
  %v2211 = vpop.f32.mrb[0].mxu0
  %v2212 = vadd.f32 %v451, %v2211
  %v2213 = vpop.f32.mrb[0].mxu0
  %v2214 = vpop.f32.mrb[0].mxu0
  %v2215 = vadd.f32 %v451, %v2214
  %v2216 = vpop.f32.mrb[0].mxu0
  %2217 = vmatprep.mubr.bf16.mxu0 0
  %2218 = vmatmul.mubr.bf16.gmra.mrb[0].mxu0 %v1527
  %v2219 = vpop.f32.mrb[0].mxu0
  %v2220 = vadd.f32 %v451, %v2219
  %v2221 = vpop.f32.mrb[0].mxu0
  %v2222 = vpop.f32.mrb[0].mxu0
  %v2223 = vadd.f32 %v451, %v2222
  %v2224 = vpop.f32.mrb[0].mxu0
  %2225 = vmatprep.mubr.bf16.mxu0 0
  %2226 = vmatmul.mubr.bf16.gmra.mrb[0].mxu0 %v1530
  %v2227 = vpop.f32.mrb[0].mxu0
  %v2228 = vadd.f32 %v451, %v2227
  %v2229 = vpop.f32.mrb[0].mxu0
  %v2230 = vpop.f32.mrb[0].mxu0
  %v2231 = vadd.f32 %v451, %v2230
  %v2232 = vpop.f32.mrb[0].mxu0
  %2233 = vmatprep.mubr.bf16.mxu0 0
  %2234 = vmatmul.mubr.bf16.gmra.mrb[0].mxu0 %v1533
  %v2235 = vpop.f32.mrb[0].mxu0
  %v2236 = vadd.f32 %v451, %v2235
  %v2237 = vpop.f32.mrb[0].mxu0
  %v2238 = vpop.f32.mrb[0].mxu0
  %v2239 = vadd.f32 %v451, %v2238
  %v2240 = vpop.f32.mrb[0].mxu0
  %2241 = vmatprep.mubr.bf16.mxu0 0
  %2242 = vmatmul.mubr.bf16.gmra.mrb[0].mxu0 %v1536
  %v2243 = vpop.f32.mrb[0].mxu0
  %v2244 = vadd.f32 %v451, %v2243
  %v2245 = vpop.f32.mrb[0].mxu0
  %v2246 = vpop.f32.mrb[0].mxu0
  %v2247 = vadd.f32 %v451, %v2246
  %v2248 = vpop.f32.mrb[0].mxu0
  %2249 = vmatprep.mubr.bf16.mxu0 0
  %2250 = vmatmul.mubr.bf16.gmra.mrb[0].mxu0 %v1539
  %v2251 = vpop.f32.mrb[0].mxu0
  %v2252 = vadd.f32 %v451, %v2251
  %v2253 = vpop.f32.mrb[0].mxu0
  %v2254 = vpop.f32.mrb[0].mxu0
  %v2255 = vadd.f32 %v451, %v2254
  %v2256 = vpop.f32.mrb[0].mxu0
  %2257 = vmatprep.mubr.bf16.mxu0 0
  %2258 = vmatmul.mubr.bf16.gmra.mrb[0].mxu0 %v1542
  %v2259 = vpop.f32.mrb[0].mxu0
  %v2260 = vadd.f32 %v451, %v2259
  %v2261 = vpop.f32.mrb[0].mxu0
  %v2262 = vpop.f32.mrb[0].mxu0
  %v2263 = vadd.f32 %v451, %v2262
  %v2264 = vpop.f32.mrb[0].mxu0
  %2265 = vmatprep.mubr.bf16.mxu0 0
  %2266 = vmatmul.mubr.bf16.gmra.mrb[0].mxu0 %v1545
  %v2267 = vpop.f32.mrb[0].mxu0
  %v2268 = vadd.f32 %v451, %v2267
  %v2269 = vpop.f32.mrb[0].mxu0
  %v2270 = vpop.f32.mrb[0].mxu0
  %v2271 = vadd.f32 %v451, %v2270
  %v2272 = vpop.f32.mrb[0].mxu0
  %2273 = vmatprep.mubr.bf16.mxu0 0
  %2274 = vmatmul.mubr.bf16.gmra.mrb[0].mxu0 %v1548
  %v2275 = vpop.f32.mrb[0].mxu0
  %v2276 = vadd.f32 %v451, %v2275
  %v2277 = vpop.f32.mrb[0].mxu0
  %v2278 = vpop.f32.mrb[0].mxu0
  %v2279 = vadd.f32 %v451, %v2278
  %v2280 = vpop.f32.mrb[0].mxu0
  %2281 = vmatprep.mubr.bf16.mxu0 0
  %2282 = vmatmul.mubr.bf16.gmra.mrb[0].mxu0 %v1551
  %v2283 = vpop.f32.mrb[0].mxu0
  %v2284 = vadd.f32 %v451, %v2283
  %v2285 = vpop.f32.mrb[0].mxu0
  %v2286 = vpop.f32.mrb[0].mxu0
  %v2287 = vadd.f32 %v451, %v2286
  %v2288 = vpop.f32.mrb[0].mxu0
  %2289 = vmatprep.mubr.bf16.mxu0 0
  %2290 = vmatmul.mubr.bf16.gmra.mrb[0].mxu0 %v1554
  %v2291 = vpop.f32.mrb[0].mxu0
  %v2292 = vadd.f32 %v451, %v2291
  %v2293 = vpop.f32.mrb[0].mxu0
  %v2294 = vpop.f32.mrb[0].mxu0
  %v2295 = vadd.f32 %v451, %v2294
  %v2296 = vpop.f32.mrb[0].mxu0
  %2297 = vmatprep.mubr.bf16.mxu0 0
  %2298 = vmatmul.mubr.bf16.gmra.mrb[0].mxu0 %v1557
  %v2299 = vpop.f32.mrb[0].mxu0
  %v2300 = vadd.f32 %v451, %v2299
  %v2301 = vpop.f32.mrb[0].mxu0
  %v2302 = vpop.f32.mrb[0].mxu0
  %v2303 = vadd.f32 %v451, %v2302
  %v2304 = vpop.f32.mrb[0].mxu0
  %2305 = vmatprep.mubr.bf16.mxu0 0
  %2306 = vmatmul.mubr.bf16.gmra.mrb[0].mxu0 %v1560
  %v2307 = vpop.f32.mrb[0].mxu0
  %v2308 = vadd.f32 %v451, %v2307
  %v2309 = vpop.f32.mrb[0].mxu0
  %v2310 = vpop.f32.mrb[0].mxu0
  %v2311 = vadd.f32 %v451, %v2310
  %v2312 = vpop.f32.mrb[0].mxu0
  %2313 = vmatprep.mubr.bf16.mxu0 0
  %2314 = vmatmul.mubr.bf16.gmra.mrb[0].mxu0 %v1563
  %v2315 = vpop.f32.mrb[0].mxu0
  %v2316 = vadd.f32 %v451, %v2315
  %v2317 = vpop.f32.mrb[0].mxu0
  %v2318 = vpop.f32.mrb[0].mxu0
  %v2319 = vadd.f32 %v451, %v2318
  %v2320 = vpop.f32.mrb[0].mxu0
  %2321 = vmatprep.mubr.bf16.mxu0 0
  %2322 = vmatmul.mubr.bf16.gmra.mrb[0].mxu0 %v1566
  %v2323 = vpop.f32.mrb[0].mxu0
  %v2324 = vadd.f32 %v451, %v2323
  %v2325 = vpop.f32.mrb[0].mxu0
  %v2326 = vpop.f32.mrb[0].mxu0
  %v2327 = vadd.f32 %v451, %v2326
  %v2328 = vpop.f32.mrb[0].mxu0
  %2329 = vmatprep.mubr.bf16.mxu0 0
  %2330 = vmatmul.mubr.bf16.gmra.mrb[0].mxu0 %v1569
  %v2331 = vpop.f32.mrb[0].mxu0
  %v2332 = vadd.f32 %v451, %v2331
  %v2333 = vpop.f32.mrb[0].mxu0
  %v2334 = vpop.f32.mrb[0].mxu0
  %v2335 = vadd.f32 %v451, %v2334
  %v2336 = vpop.f32.mrb[0].mxu0
  %2337 = vmatprep.mubr.bf16.mxu0 0
  %2338 = vmatmul.mubr.bf16.gmra.mrb[0].mxu0 %v1572
  %v2339 = vpop.f32.mrb[0].mxu0
  %v2340 = vadd.f32 %v451, %v2339
  %v2341 = vpop.f32.mrb[0].mxu0
  %v2342 = vpop.f32.mrb[0].mxu0
  %v2343 = vadd.f32 %v451, %v2342
  %v2344 = vpop.f32.mrb[0].mxu0
  %2345 = vmatprep.mubr.bf16.mxu0 0
  %2346 = vmatmul.mubr.bf16.gmra.mrb[0].mxu0 %v1575
  %v2347 = vpop.f32.mrb[0].mxu0
  %v2348 = vadd.f32 %v451, %v2347
  %v2349 = vpop.f32.mrb[0].mxu0
  %v2350 = vpop.f32.mrb[0].mxu0
  %v2351 = vadd.f32 %v451, %v2350
  %v2352 = vpop.f32.mrb[0].mxu0
  %2353 = vmatprep.mubr.bf16.mxu0 0
  %2354 = vmatmul.mubr.bf16.gmra.mrb[0].mxu0 %v1578
  %v2355 = vpop.f32.mrb[0].mxu0
  %v2356 = vadd.f32 %v451, %v2355
  %v2357 = vpop.f32.mrb[0].mxu0
  %v2358 = vpop.f32.mrb[0].mxu0
  %v2359 = vadd.f32 %v451, %v2358
  %v2360 = vpop.f32.mrb[0].mxu0
  %2361 = vmatprep.mubr.bf16.mxu0 0
  %2362 = vmatmul.mubr.bf16.gmra.mrb[0].mxu0 %v1581
  %v2363 = vpop.f32.mrb[0].mxu0
  %v2364 = vadd.f32 %v451, %v2363
  %v2365 = vpop.f32.mrb[0].mxu0
  %v2366 = vpop.f32.mrb[0].mxu0
  %v2367 = vadd.f32 %v451, %v2366
  %v2368 = vpop.f32.mrb[0].mxu0
  %2369 = vmatprep.mubr.bf16.mxu0 0
  %2370 = vmatmul.mubr.bf16.gmra.mrb[0].mxu0 %v1584
  %v2371 = vpop.f32.mrb[0].mxu0
  %v2372 = vadd.f32 %v451, %v2371
  %v2373 = vpop.f32.mrb[0].mxu0
  %v2374 = vpop.f32.mrb[0].mxu0
  %v2375 = vadd.f32 %v451, %v2374
  %v2376 = vpop.f32.mrb[0].mxu0
  %2377 = vmatprep.mubr.bf16.mxu0 0
  %2378 = vmatmul.mubr.bf16.gmra.mrb[0].mxu0 %v1587
  %v2379 = vpop.f32.mrb[0].mxu0
  %v2380 = vadd.f32 %v451, %v2379
  %v2381 = vpop.f32.mrb[0].mxu0
  %v2382 = vpop.f32.mrb[0].mxu0
  %v2383 = vadd.f32 %v451, %v2382
  %v2384 = vpop.f32.mrb[0].mxu0
  %2385 = vmatprep.mubr.bf16.mxu0 0
  %2386 = vmatmul.mubr.bf16.gmra.mrb[0].mxu0 %v1590
  %v2387 = vpop.f32.mrb[0].mxu0
  %v2388 = vadd.f32 %v451, %v2387
  %v2389 = vpop.f32.mrb[0].mxu0
  %v2390 = vpop.f32.mrb[0].mxu0
  %v2391 = vadd.f32 %v451, %v2390
  %v2392 = vpop.f32.mrb[0].mxu0
  %2393 = vmatprep.mubr.bf16.mxu0 0
  %2394 = vmatmul.mubr.bf16.gmra.mrb[0].mxu0 %v1593
  %v2395 = vpop.f32.mrb[0].mxu0
  %v2396 = vadd.f32 %v451, %v2395
  %v2397 = vpop.f32.mrb[0].mxu0
  %v2398 = vpop.f32.mrb[0].mxu0
  %v2399 = vadd.f32 %v451, %v2398
  %v2400 = vpop.f32.mrb[0].mxu0
  %2401 = vmatprep.mubr.bf16.mxu0 0
  %2402 = vmatmul.mubr.bf16.gmra.mrb[0].mxu0 %v1596
  %v2403 = vpop.f32.mrb[0].mxu0
  %v2404 = vadd.f32 %v451, %v2403
  %v2405 = vpop.f32.mrb[0].mxu0
  %v2406 = vpop.f32.mrb[0].mxu0
  %v2407 = vadd.f32 %v451, %v2406
  %v2408 = vpop.f32.mrb[0].mxu0
  %2409 = vmatprep.mubr.bf16.mxu0 0
  %2410 = vmatmul.mubr.bf16.gmra.mrb[0].mxu0 %v1599
  %v2411 = vpop.f32.mrb[0].mxu0
  %v2412 = vadd.f32 %v451, %v2411
  %v2413 = vpop.f32.mrb[0].mxu0
  %v2414 = vpop.f32.mrb[0].mxu0
  %v2415 = vadd.f32 %v451, %v2414
  %v2416 = vpop.f32.mrb[0].mxu0
  %2417 = vmatprep.mubr.bf16.mxu0 0
  %2418 = vmatmul.mubr.bf16.gmra.mrb[0].mxu0 %v1602
  %v2419 = vpop.f32.mrb[0].mxu0
  %v2420 = vadd.f32 %v451, %v2419
  %v2421 = vpop.f32.mrb[0].mxu0
  %v2422 = vpop.f32.mrb[0].mxu0
  %v2423 = vadd.f32 %v451, %v2422
  %v2424 = vpop.f32.mrb[0].mxu0
  %2425 = vmatprep.mubr.bf16.mxu0 0
  %2426 = vmatmul.mubr.bf16.gmra.mrb[0].mxu0 %v1605
  %v2427 = vpop.f32.mrb[0].mxu0
  %v2428 = vadd.f32 %v451, %v2427
  %v2429 = vpop.f32.mrb[0].mxu0
  %v2430 = vpop.f32.mrb[0].mxu0
  %v2431 = vadd.f32 %v451, %v2430
  %v2432 = vpop.f32.mrb[0].mxu0
  %2433 = vmatprep.mubr.bf16.mxu0 0
  %2434 = vmatmul.mubr.bf16.gmra.mrb[0].mxu0 %v1608
  %v2435 = vpop.f32.mrb[0].mxu0
  %v2436 = vadd.f32 %v451, %v2435
  %v2437 = vpop.f32.mrb[0].mxu0
  %v2438 = vpop.f32.mrb[0].mxu0
  %v2439 = vadd.f32 %v451, %v2438
  %v2440 = vpop.f32.mrb[0].mxu0
  %2441 = vmatprep.mubr.bf16.mxu0 0
  %2442 = vmatmul.mubr.bf16.gmra.mrb[0].mxu0 %v1611
  %v2443 = vpop.f32.mrb[0].mxu0
  %v2444 = vadd.f32 %v451, %v2443
  %v2445 = vpop.f32.mrb[0].mxu0
  %v2446 = vpop.f32.mrb[0].mxu0
  %v2447 = vadd.f32 %v451, %v2446
  %v2448 = vpop.f32.mrb[0].mxu0
  %2449 = vmatprep.mubr.bf16.mxu0 0
  %2450 = vmatmul.mubr.bf16.gmra.mrb[0].mxu0 %v1614
  %v2451 = vpop.f32.mrb[0].mxu0
  %v2452 = vadd.f32 %v451, %v2451
  %v2453 = vpop.f32.mrb[0].mxu0
  %v2454 = vpop.f32.mrb[0].mxu0
  %v2455 = vadd.f32 %v451, %v2454
  %v2456 = vpop.f32.mrb[0].mxu0
  %2457 = vmatprep.mubr.bf16.mxu0 0
  %2458 = vmatmul.mubr.bf16.gmra.mrb[0].mxu0 %v1617
  %v2459 = vpop.f32.mrb[0].mxu0
  %v2460 = vadd.f32 %v451, %v2459
  %v2461 = vpop.f32.mrb[0].mxu0
  %v2462 = vpop.f32.mrb[0].mxu0
  %v2463 = vadd.f32 %v451, %v2462
  %v2464 = vpop.f32.mrb[0].mxu0
  %2465 = vmatprep.mubr.bf16.mxu0 0
  %2466 = vmatmul.mubr.bf16.gmra.mrb[0].mxu0 %v1620
  %v2467 = vpop.f32.mrb[0].mxu0
  %v2468 = vadd.f32 %v451, %v2467
  %v2469 = vpop.f32.mrb[0].mxu0
  %v2470 = vpop.f32.mrb[0].mxu0
  %v2471 = vadd.f32 %v451, %v2470
  %v2472 = vpop.f32.mrb[0].mxu0
  %2473 = vmatprep.mubr.bf16.mxu0 0
  %2474 = vmatmul.mubr.bf16.gmra.mrb[0].mxu0 %v1623
  %v2475 = vpop.f32.mrb[0].mxu0
  %v2476 = vadd.f32 %v451, %v2475
  %v2477 = vpop.f32.mrb[0].mxu0
  %v2478 = vpop.f32.mrb[0].mxu0
  %v2479 = vadd.f32 %v451, %v2478
  %v2480 = vpop.f32.mrb[0].mxu0
  %2481 = vmatprep.mubr.bf16.mxu0 0
  %2482 = vmatmul.mubr.bf16.gmra.mrb[0].mxu0 %v1626
  %v2483 = vpop.f32.mrb[0].mxu0
  %v2484 = vadd.f32 %v451, %v2483
  %v2485 = vpop.f32.mrb[0].mxu0
  %v2486 = vpop.f32.mrb[0].mxu0
  %v2487 = vadd.f32 %v451, %v2486
  %v2488 = vpop.f32.mrb[0].mxu0
  %2489 = vmatprep.mubr.bf16.mxu0 0
  %2490 = vmatmul.mubr.bf16.gmra.mrb[0].mxu0 %v1629
  %v2491 = vpop.f32.mrb[0].mxu0
  %v2492 = vadd.f32 %v451, %v2491
  %v2493 = vpop.f32.mrb[0].mxu0
  %v2494 = vpop.f32.mrb[0].mxu0
  %v2495 = vadd.f32 %v451, %v2494
  %v2496 = vpop.f32.mrb[0].mxu0
  %2497 = vmatprep.mubr.bf16.mxu0 0
  %2498 = vmatmul.mubr.bf16.gmra.mrb[0].mxu0 %v1632
  %v2499 = vpop.f32.mrb[0].mxu0
  %v2500 = vadd.f32 %v451, %v2499
  %v2501 = vpop.f32.mrb[0].mxu0
  %v2502 = vpop.f32.mrb[0].mxu0
  %v2503 = vadd.f32 %v451, %v2502
  %v2504 = vpop.f32.mrb[0].mxu0
  %2505 = vmatprep.mubr.bf16.mxu0 0
  %2506 = vmatmul.mubr.bf16.gmra.mrb[0].mxu0 %v1635
  %v2507 = vpop.f32.mrb[0].mxu0
  %v2508 = vadd.f32 %v451, %v2507
  %v2509 = vpop.f32.mrb[0].mxu0
  %v2510 = vpop.f32.mrb[0].mxu0
  %v2511 = vadd.f32 %v451, %v2510
  %v2512 = vpop.f32.mrb[0].mxu0
  %2513 = vmatprep.mubr.bf16.mxu0 0
  %2514 = vmatmul.mubr.bf16.gmra.mrb[0].mxu0 %v1638
  %v2515 = vpop.f32.mrb[0].mxu0
  %v2516 = vadd.f32 %v451, %v2515
  %v2517 = vpop.f32.mrb[0].mxu0
  %v2518 = vpop.f32.mrb[0].mxu0
  %v2519 = vadd.f32 %v451, %v2518
  %v2520 = vpop.f32.mrb[0].mxu0
  %2521 = vmatprep.mubr.bf16.mxu0 0
  %2522 = vmatmul.mubr.bf16.gmra.mrb[0].mxu0 %v1641
  %v2523 = vpop.f32.mrb[0].mxu0
  %v2524 = vadd.f32 %v451, %v2523
  %v2525 = vpop.f32.mrb[0].mxu0
  %v2526 = vpop.f32.mrb[0].mxu0
  %v2527 = vadd.f32 %v451, %v2526
  %v2528 = vpop.f32.mrb[0].mxu0
  %2529 = vmatprep.mubr.bf16.mxu0 0
  %2530 = vmatmul.mubr.bf16.gmra.mrb[0].mxu0 %v1644
  %v2531 = vpop.f32.mrb[0].mxu0
  %v2532 = vadd.f32 %v451, %v2531
  %v2533 = vpop.f32.mrb[0].mxu0
  %v2534 = vpop.f32.mrb[0].mxu0
  %v2535 = vadd.f32 %v451, %v2534
  %v2536 = vpop.f32.mrb[0].mxu0
  %2537 = vmatprep.mubr.bf16.mxu0 0
  %2538 = vmatmul.mubr.bf16.gmra.mrb[0].mxu0 %v1647
  %v2539 = vpop.f32.mrb[0].mxu0
  %v2540 = vadd.f32 %v451, %v2539
  %v2541 = vpop.f32.mrb[0].mxu0
  %v2542 = vpop.f32.mrb[0].mxu0
  %v2543 = vadd.f32 %v451, %v2542
  %v2544 = vpop.f32.mrb[0].mxu0
  %2545 = vmatprep.mubr.bf16.mxu0 0
  %2546 = vmatmul.mubr.bf16.gmra.mrb[0].mxu0 %v1650
  %v2547 = vpop.f32.mrb[0].mxu0
  %v2548 = vadd.f32 %v451, %v2547
  %v2549 = vpop.f32.mrb[0].mxu0
  %v2550 = vpop.f32.mrb[0].mxu0
  %v2551 = vadd.f32 %v451, %v2550
  %v2552 = vpop.f32.mrb[0].mxu0
  %2553 = vmatprep.mubr.bf16.mxu0 0
  %2554 = vmatmul.mubr.bf16.gmra.mrb[0].mxu0 %v1653
  %v2555 = vpop.f32.mrb[0].mxu0
  %v2556 = vadd.f32 %v451, %v2555
  %v2557 = vpop.f32.mrb[0].mxu0
  %v2558 = vpop.f32.mrb[0].mxu0
  %v2559 = vadd.f32 %v451, %v2558
  %v2560 = vpop.f32.mrb[0].mxu0
  %2561 = vmatprep.mubr.bf16.mxu0 0
  %2562 = vmatmul.mubr.bf16.gmra.mrb[0].mxu0 %v1656
  %v2563 = vpop.f32.mrb[0].mxu0
  %v2564 = vadd.f32 %v451, %v2563
  %v2565 = vpop.f32.mrb[0].mxu0
  %v2566 = vpop.f32.mrb[0].mxu0
  %v2567 = vadd.f32 %v451, %v2566
  %v2568 = vpop.f32.mrb[0].mxu0
  %2569 = vmatprep.mubr.bf16.mxu0 0
  %2570 = vmatmul.mubr.bf16.gmra.mrb[0].mxu0 %v1659
  %v2571 = vpop.f32.mrb[0].mxu0
  %v2572 = vadd.f32 %v451, %v2571
  %v2573 = vpop.f32.mrb[0].mxu0
  %v2574 = vpop.f32.mrb[0].mxu0
  %v2575 = vadd.f32 %v451, %v2574
  %v2576 = vpop.f32.mrb[0].mxu0
  %2577 = vmatprep.mubr.bf16.mxu0 0
  %2578 = vmatmul.mubr.bf16.gmra.mrb[0].mxu0 %v1662
  %v2579 = vpop.f32.mrb[0].mxu0
  %v2580 = vadd.f32 %v451, %v2579
  %v2581 = vpop.f32.mrb[0].mxu0
  %v2582 = vpop.f32.mrb[0].mxu0
  %v2583 = vadd.f32 %v451, %v2582
  %v2584 = vpop.f32.mrb[0].mxu0
  %2585 = vmatprep.mubr.bf16.mxu0 0
  %2586 = vmatmul.mubr.bf16.gmra.mrb[0].mxu0 %v1665
  %v2587 = vpop.f32.mrb[0].mxu0
  %v2588 = vadd.f32 %v451, %v2587
  %v2589 = vpop.f32.mrb[0].mxu0
  %v2590 = vpop.f32.mrb[0].mxu0
  %v2591 = vadd.f32 %v451, %v2590
  %v2592 = vpop.f32.mrb[0].mxu0
  %2593 = vmatprep.mubr.bf16.mxu0 0
  %2594 = vmatmul.mubr.bf16.gmra.mrb[0].mxu0 %v1668
  %v2595 = vpop.f32.mrb[0].mxu0
  %v2596 = vadd.f32 %v451, %v2595
  %v2597 = vpop.f32.mrb[0].mxu0
  %v2598 = vpop.f32.mrb[0].mxu0
  %v2599 = vadd.f32 %v451, %v2598
  %v2600 = vpop.f32.mrb[0].mxu0
  %2601 = vmatprep.mubr.bf16.mxu0 0
  %2602 = vmatmul.mubr.bf16.gmra.mrb[0].mxu0 %v1671
  %v2603 = vpop.f32.mrb[0].mxu0
  %v2604 = vadd.f32 %v451, %v2603
  %v2605 = vpop.f32.mrb[0].mxu0
  %v2606 = vpop.f32.mrb[0].mxu0
  %v2607 = vadd.f32 %v451, %v2606
  %v2608 = vpop.f32.mrb[0].mxu0
  %2609 = vmatprep.mubr.bf16.mxu0 0
  %2610 = vmatmul.mubr.bf16.gmra.mrb[0].mxu0 %v1674
  %v2611 = vpop.f32.mrb[0].mxu0
  %v2612 = vadd.f32 %v451, %v2611
  %v2613 = vpop.f32.mrb[0].mxu0
  %v2614 = vpop.f32.mrb[0].mxu0
  %v2615 = vadd.f32 %v451, %v2614
  %v2616 = vpop.f32.mrb[0].mxu0
  %2617 = vmatprep.mubr.bf16.mxu0 0
  %2618 = vmatmul.mubr.bf16.gmra.mrb[0].mxu0 %v1677
  %v2619 = vpop.f32.mrb[0].mxu0
  %v2620 = vadd.f32 %v451, %v2619
  %v2621 = vpop.f32.mrb[0].mxu0
  %v2622 = vpop.f32.mrb[0].mxu0
  %v2623 = vadd.f32 %v451, %v2622
  %v2624 = vpop.f32.mrb[0].mxu0
  %2625 = vmatprep.mubr.bf16.mxu0 0
  %2626 = vmatmul.mubr.bf16.gmra.mrb[0].mxu0 %v1680
  %v2627 = vpop.f32.mrb[0].mxu0
  %v2628 = vadd.f32 %v451, %v2627
  %v2629 = vpop.f32.mrb[0].mxu0
  %v2630 = vpop.f32.mrb[0].mxu0
  %v2631 = vadd.f32 %v451, %v2630
  %v2632 = vpop.f32.mrb[0].mxu0
  %2633 = vmatprep.mubr.bf16.mxu0 0
  %2634 = vmatmul.mubr.bf16.gmra.mrb[0].mxu0 %v1683
  %v2635 = vpop.f32.mrb[0].mxu0
  %v2636 = vadd.f32 %v451, %v2635
  %v2637 = vpop.f32.mrb[0].mxu0
  %v2638 = vpop.f32.mrb[0].mxu0
  %v2639 = vadd.f32 %v451, %v2638
  %v2640 = vpop.f32.mrb[0].mxu0
  %2641 = vmatprep.mubr.bf16.mxu0 0
  %2642 = vmatmul.mubr.bf16.gmra.mrb[0].mxu0 %v1686
  %v2643 = vpop.f32.mrb[0].mxu0
  %v2644 = vadd.f32 %v451, %v2643
  %v2645 = vpop.f32.mrb[0].mxu0
  %v2646 = vpop.f32.mrb[0].mxu0
  %v2647 = vadd.f32 %v451, %v2646
  %v2648 = vpop.f32.mrb[0].mxu0
  %2649 = vmatprep.mubr.bf16.mxu0 0
  %2650 = vmatmul.mubr.bf16.gmra.mrb[0].mxu0 %v1689
  %v2651 = vpop.f32.mrb[0].mxu0
  %v2652 = vadd.f32 %v451, %v2651
  %v2653 = vpop.f32.mrb[0].mxu0
  %v2654 = vpop.f32.mrb[0].mxu0
  %v2655 = vadd.f32 %v451, %v2654
  %v2656 = vpop.f32.mrb[0].mxu0
  %2657 = vmatprep.mubr.bf16.mxu0 0
  %2658 = vmatmul.mubr.bf16.gmra.mrb[0].mxu0 %v1692
  %v2659 = vpop.f32.mrb[0].mxu0
  %v2660 = vadd.f32 %v451, %v2659
  %v2661 = vpop.f32.mrb[0].mxu0
  %v2662 = vpop.f32.mrb[0].mxu0
  %v2663 = vadd.f32 %v451, %v2662
  %v2664 = vpop.f32.mrb[0].mxu0
  %2665 = vmatprep.mubr.bf16.mxu0 0
  %2666 = vmatmul.mubr.bf16.gmra.mrb[0].mxu0 %v1695
  %v2667 = vpop.f32.mrb[0].mxu0
  %v2668 = vadd.f32 %v451, %v2667
  %v2669 = vpop.f32.mrb[0].mxu0
  %v2670 = vpop.f32.mrb[0].mxu0
  %v2671 = vadd.f32 %v451, %v2670
  %v2672 = vpop.f32.mrb[0].mxu0
  %2673 = vmatprep.mubr.bf16.mxu0 0
  %2674 = vmatmul.mubr.bf16.gmra.mrb[0].mxu0 %v1698
  %v2675 = vpop.f32.mrb[0].mxu0
  %v2676 = vadd.f32 %v451, %v2675
  %v2677 = vpop.f32.mrb[0].mxu0
  %v2678 = vpop.f32.mrb[0].mxu0
  %v2679 = vadd.f32 %v451, %v2678
  %v2680 = vpop.f32.mrb[0].mxu0
  %2681 = vmatprep.mubr.bf16.mxu0 0
  %2682 = vmatmul.mubr.bf16.gmra.mrb[0].mxu0 %v1701
  %v2683 = vpop.f32.mrb[0].mxu0
  %v2684 = vadd.f32 %v451, %v2683
  %v2685 = vpop.f32.mrb[0].mxu0
  %v2686 = vpop.f32.mrb[0].mxu0
  %v2687 = vadd.f32 %v451, %v2686
  %v2688 = vpop.f32.mrb[0].mxu0
  %2689 = vmatprep.mubr.bf16.mxu0 0
  %2690 = vmatmul.mubr.bf16.gmra.mrb[0].mxu0 %v1704
  %v2691 = vpop.f32.mrb[0].mxu0
  %v2692 = vadd.f32 %v451, %v2691
  %v2693 = vpop.f32.mrb[0].mxu0
  %v2694 = vpop.f32.mrb[0].mxu0
  %v2695 = vadd.f32 %v451, %v2694
  %v2696 = vpop.f32.mrb[0].mxu0
  %2697 = vmatprep.mubr.bf16.mxu0 0
  %2698 = vmatmul.mubr.bf16.gmra.mrb[0].mxu0 %v1707
  %v2699 = vpop.f32.mrb[0].mxu0
  %v2700 = vadd.f32 %v451, %v2699
  %v2701 = vpop.f32.mrb[0].mxu0
  %v2702 = vpop.f32.mrb[0].mxu0
  %v2703 = vadd.f32 %v451, %v2702
  %v2704 = vpop.f32.mrb[0].mxu0
  %2705 = vmatprep.mubr.bf16.mxu0 0
  %2706 = vmatmul.mubr.bf16.gmra.mrb[0].mxu0 %v1710
  %v2707 = vpop.f32.mrb[0].mxu0
  %v2708 = vadd.f32 %v451, %v2707
  %v2709 = vpop.f32.mrb[0].mxu0
  %v2710 = vpop.f32.mrb[0].mxu0
  %v2711 = vadd.f32 %v451, %v2710
  %v2712 = vpop.f32.mrb[0].mxu0
  %2713 = vmatprep.mubr.bf16.mxu0 0
  %2714 = vmatmul.mubr.bf16.gmra.mrb[0].mxu0 %v1713
  %v2715 = vpop.f32.mrb[0].mxu0
  %v2716 = vadd.f32 %v451, %v2715
  %v2717 = vpop.f32.mrb[0].mxu0
  %v2718 = vpop.f32.mrb[0].mxu0
  %v2719 = vadd.f32 %v451, %v2718
  %v2720 = vpop.f32.mrb[0].mxu0
  %2721 = vmatprep.mubr.bf16.mxu0 0
  %2722 = vmatmul.mubr.bf16.gmra.mrb[0].mxu0 %v1716
  %v2723 = vpop.f32.mrb[0].mxu0
  %v2724 = vadd.f32 %v451, %v2723
  %v2725 = vpop.f32.mrb[0].mxu0
  %v2726 = vpop.f32.mrb[0].mxu0
  %v2727 = vadd.f32 %v451, %v2726
  %v2728 = vpop.f32.mrb[0].mxu0
  %2729 = vmatprep.mubr.bf16.mxu0 0
  %2730 = vmatmul.mubr.bf16.gmra.mrb[0].mxu0 %v1719
  %v2731 = vpop.f32.mrb[0].mxu0
  %v2732 = vadd.f32 %v451, %v2731
  %v2733 = vpop.f32.mrb[0].mxu0
  %v2734 = vpop.f32.mrb[0].mxu0
  %v2735 = vadd.f32 %v451, %v2734
  %v2736 = vpop.f32.mrb[0].mxu0
  %2737 = vmatprep.mubr.bf16.mxu0 0
  %2738 = vmatmul.mubr.bf16.gmra.mrb[0].mxu0 %v1722
  %v2739 = vpop.f32.mrb[0].mxu0
  %v2740 = vadd.f32 %v451, %v2739
  %v2741 = vpop.f32.mrb[0].mxu0
  %v2742 = vpop.f32.mrb[0].mxu0
  %v2743 = vadd.f32 %v451, %v2742
  %v2744 = vpop.f32.mrb[0].mxu0
  %2745 = vmatprep.mubr.bf16.mxu0 0
  %2746 = vmatmul.mubr.bf16.gmra.mrb[0].mxu0 %v1725
  %v2747 = vpop.f32.mrb[0].mxu0
  %v2748 = vadd.f32 %v451, %v2747
  %v2749 = vpop.f32.mrb[0].mxu0
  %v2750 = vpop.f32.mrb[0].mxu0
  %v2751 = vadd.f32 %v451, %v2750
  %v2752 = vpop.f32.mrb[0].mxu0
  %2753 = vmatprep.mubr.bf16.mxu0 0
  %2754 = vmatmul.mubr.bf16.gmra.mrb[0].mxu0 %v1728
  %v2755 = vpop.f32.mrb[0].mxu0
  %v2756 = vadd.f32 %v451, %v2755
  %v2757 = vpop.f32.mrb[0].mxu0
  %v2758 = vpop.f32.mrb[0].mxu0
  %v2759 = vadd.f32 %v451, %v2758
  %v2760 = vpop.f32.mrb[0].mxu0
  %2761 = vmatprep.mubr.bf16.mxu0 0
  %2762 = vmatmul.mubr.bf16.gmra.mrb[0].mxu0 %v1731
  %v2763 = vpop.f32.mrb[0].mxu0
  %v2764 = vadd.f32 %v451, %v2763
  %v2765 = vpop.f32.mrb[0].mxu0
  %v2766 = vpop.f32.mrb[0].mxu0
  %v2767 = vadd.f32 %v451, %v2766
  %v2768 = vpop.f32.mrb[0].mxu0
  %2769 = vmatprep.mubr.bf16.mxu0 0
  %2770 = vmatmul.mubr.bf16.gmra.mrb[0].mxu0 %v1734
  %v2771 = vpop.f32.mrb[0].mxu0
  %v2772 = vadd.f32 %v451, %v2771
  %v2773 = vpop.f32.mrb[0].mxu0
  %v2774 = vpop.f32.mrb[0].mxu0
  %v2775 = vadd.f32 %v451, %v2774
  %v2776 = vpop.f32.mrb[0].mxu0
  %2777 = vmatprep.mubr.bf16.mxu0 0
  %2778 = vmatmul.mubr.bf16.gmra.mrb[0].mxu0 %v1737
  %v2779 = vpop.f32.mrb[0].mxu0
  %v2780 = vadd.f32 %v451, %v2779
  %v2781 = vpop.f32.mrb[0].mxu0
  %v2782 = vpop.f32.mrb[0].mxu0
  %v2783 = vadd.f32 %v451, %v2782
  %v2784 = vpop.f32.mrb[0].mxu0
  %2785 = vmatprep.mubr.bf16.mxu0 0
  %2786 = vmatmul.mubr.bf16.gmra.mrb[0].mxu0 %v1740
  %v2787 = vpop.f32.mrb[0].mxu0
  %v2788 = vadd.f32 %v451, %v2787
  %v2789 = vpop.f32.mrb[0].mxu0
  %v2790 = vpop.f32.mrb[0].mxu0
  %v2791 = vadd.f32 %v451, %v2790
  %v2792 = vpop.f32.mrb[0].mxu0
  %2793 = vmatprep.mubr.bf16.mxu0 0
  %2794 = vmatmul.mubr.bf16.gmra.mrb[0].mxu0 %v1743
  %v2795 = vpop.f32.mrb[0].mxu0
  %v2796 = vadd.f32 %v451, %v2795
  %v2797 = vpop.f32.mrb[0].mxu0
  %v2798 = vpop.f32.mrb[0].mxu0
  %v2799 = vadd.f32 %v451, %v2798
  %v2800 = vpop.f32.mrb[0].mxu0
  %2801 = vmatprep.mubr.bf16.mxu0 0
  %2802 = vmatmul.mubr.bf16.gmra.mrb[0].mxu0 %v1746
  %v2803 = vpop.f32.mrb[0].mxu0
  %v2804 = vadd.f32 %v451, %v2803
  %v2805 = vpop.f32.mrb[0].mxu0
  %v2806 = vpop.f32.mrb[0].mxu0
  %v2807 = vadd.f32 %v451, %v2806
  %v2808 = vpop.f32.mrb[0].mxu0
  %2809 = vmatprep.mubr.bf16.mxu0 0
  %2810 = vmatmul.mubr.bf16.gmra.mrb[0].mxu0 %v1749
  %v2811 = vpop.f32.mrb[0].mxu0
  %v2812 = vadd.f32 %v451, %v2811
  %v2813 = vpop.f32.mrb[0].mxu0
  %v2814 = vpop.f32.mrb[0].mxu0
  %v2815 = vadd.f32 %v451, %v2814
  %v2816 = vpop.f32.mrb[0].mxu0
  %2817 = vmatprep.mubr.bf16.mxu0 0
  %2818 = vmatmul.mubr.bf16.gmra.mrb[0].mxu0 %v1752
  %v2819 = vpop.f32.mrb[0].mxu0
  %v2820 = vadd.f32 %v451, %v2819
  %v2821 = vpop.f32.mrb[0].mxu0
  %v2822 = vpop.f32.mrb[0].mxu0
  %v2823 = vadd.f32 %v451, %v2822
  %v2824 = vpop.f32.mrb[0].mxu0
  %2825 = vmatprep.mubr.bf16.mxu0 0
  %2826 = vmatmul.mubr.bf16.gmra.mrb[0].mxu0 %v1755
  %v2827 = vpop.f32.mrb[0].mxu0
  %v2828 = vadd.f32 %v451, %v2827
  %v2829 = vpop.f32.mrb[0].mxu0
  %v2830 = vpop.f32.mrb[0].mxu0
  %v2831 = vadd.f32 %v451, %v2830
  %v2832 = vpop.f32.mrb[0].mxu0
  %2833 = vmatprep.mubr.bf16.mxu0 0
  %2834 = vmatmul.mubr.bf16.gmra.mrb[0].mxu0 %v1758
  %v2835 = vpop.f32.mrb[0].mxu0
  %v2836 = vadd.f32 %v451, %v2835
  %v2837 = vpop.f32.mrb[0].mxu0
  %v2838 = vpop.f32.mrb[0].mxu0
  %v2839 = vadd.f32 %v451, %v2838
  %v2840 = vpop.f32.mrb[0].mxu0
  %2841 = vmatprep.mubr.bf16.mxu0 0
  %2842 = vmatmul.mubr.bf16.gmra.mrb[0].mxu0 %v1761
  %v2843 = vpop.f32.mrb[0].mxu0
  %v2844 = vadd.f32 %v451, %v2843
  %v2845 = vpop.f32.mrb[0].mxu0
  %v2846 = vpop.f32.mrb[0].mxu0
  %v2847 = vadd.f32 %v451, %v2846
  %v2848 = vpop.f32.mrb[0].mxu0
  %2849 = vmatprep.mubr.bf16.mxu0 0
  %2850 = vmatmul.mubr.bf16.gmra.mrb[0].mxu0 %v1764
  %v2851 = vpop.f32.mrb[0].mxu0
  %v2852 = vadd.f32 %v451, %v2851
  %v2853 = vpop.f32.mrb[0].mxu0
  %v2854 = vpop.f32.mrb[0].mxu0
  %v2855 = vadd.f32 %v451, %v2854
  %v2856 = vpop.f32.mrb[0].mxu0
  %2857 = vmatprep.mubr.bf16.mxu0 0
  %2858 = vmatmul.mubr.bf16.gmra.mrb[0].mxu0 %v1767
  %v2859 = vpop.f32.mrb[0].mxu0
  %v2860 = vadd.f32 %v451, %v2859
  %v2861 = vpop.f32.mrb[0].mxu0
  %v2862 = vpop.f32.mrb[0].mxu0
  %v2863 = vadd.f32 %v451, %v2862
  %v2864 = vpop.f32.mrb[0].mxu0
  %2865 = vmatprep.mubr.bf16.mxu0 0
  %2866 = vmatmul.mubr.bf16.gmra.mrb[0].mxu0 %v1770
  %v2867 = vpop.f32.mrb[0].mxu0
  %v2868 = vadd.f32 %v451, %v2867
  %v2869 = vpop.f32.mrb[0].mxu0
  %v2870 = vpop.f32.mrb[0].mxu0
  %v2871 = vadd.f32 %v451, %v2870
  %v2872 = vpop.f32.mrb[0].mxu0
  %2873 = vmatprep.mubr.bf16.mxu0 0
  %2874 = vmatmul.mubr.bf16.gmra.mrb[0].mxu0 %v1773
  %v2875 = vpop.f32.mrb[0].mxu0
  %v2876 = vadd.f32 %v451, %v2875
  %v2877 = vpop.f32.mrb[0].mxu0
  %v2878 = vpop.f32.mrb[0].mxu0
  %v2879 = vadd.f32 %v451, %v2878
  %v2880 = vpop.f32.mrb[0].mxu0
  %2881 = vmatprep.mubr.bf16.mxu0 0
  %2882 = vmatmul.mubr.bf16.gmra.mrb[0].mxu0 %v1776
  %v2883 = vpop.f32.mrb[0].mxu0
  %v2884 = vadd.f32 %v451, %v2883
  %v2885 = vpop.f32.mrb[0].mxu0
  %v2886 = vpop.f32.mrb[0].mxu0
  %v2887 = vadd.f32 %v451, %v2886
  %v2888 = vpop.f32.mrb[0].mxu0
  %2889 = vmatprep.mubr.bf16.mxu0 0
  %2890 = vmatmul.mubr.bf16.gmra.mrb[0].mxu0 %v1779
  %v2891 = vpop.f32.mrb[0].mxu0
  %v2892 = vadd.f32 %v451, %v2891
  %v2893 = vpop.f32.mrb[0].mxu0
  %v2894 = vpop.f32.mrb[0].mxu0
  %v2895 = vadd.f32 %v451, %v2894
  %v2896 = vpop.f32.mrb[0].mxu0
  %2897 = vmatprep.mubr.bf16.mxu0 0
  %2898 = vmatmul.mubr.bf16.gmra.mrb[0].mxu0 %v1782
  %v2899 = vpop.f32.mrb[0].mxu0
  %v2900 = vadd.f32 %v451, %v2899
  %v2901 = vpop.f32.mrb[0].mxu0
  %v2902 = vpop.f32.mrb[0].mxu0
  %v2903 = vadd.f32 %v451, %v2902
  %v2904 = vpop.f32.mrb[0].mxu0
  %2905 = vmatprep.mubr.bf16.mxu0 0
  %2906 = vmatmul.mubr.bf16.gmra.mrb[0].mxu0 %v1785
  %v2907 = vpop.f32.mrb[0].mxu0
  %v2908 = vadd.f32 %v451, %v2907
  %v2909 = vpop.f32.mrb[0].mxu0
  %v2910 = vpop.f32.mrb[0].mxu0
  %v2911 = vadd.f32 %v451, %v2910
  %v2912 = vpop.f32.mrb[0].mxu0
  %2913 = vmatprep.mubr.bf16.mxu0 0
  %2914 = vmatmul.mubr.bf16.gmra.mrb[0].mxu0 %v1788
  %v2915 = vpop.f32.mrb[0].mxu0
  %v2916 = vadd.f32 %v451, %v2915
  %v2917 = vpop.f32.mrb[0].mxu0
  %v2918 = vpop.f32.mrb[0].mxu0
  %v2919 = vadd.f32 %v451, %v2918
  %v2920 = vpop.f32.mrb[0].mxu0
  %2921 = vmatprep.mubr.bf16.mxu0 0
  %2922 = vmatmul.mubr.bf16.gmra.mrb[0].mxu0 %v1791
  %v2923 = vpop.f32.mrb[0].mxu0
  %v2924 = vadd.f32 %v451, %v2923
  %v2925 = vpop.f32.mrb[0].mxu0
  %v2926 = vpop.f32.mrb[0].mxu0
  %v2927 = vadd.f32 %v451, %v2926
  %v2928 = vpop.f32.mrb[0].mxu0
  %2929 = vmatprep.mubr.bf16.mxu0 0
  %2930 = vmatmul.mubr.bf16.gmra.mrb[0].mxu0 %v1794
  %v2931 = vpop.f32.mrb[0].mxu0
  %v2932 = vadd.f32 %v451, %v2931
  %v2933 = vpop.f32.mrb[0].mxu0
  %v2934 = vpop.f32.mrb[0].mxu0
  %v2935 = vadd.f32 %v451, %v2934
  %v2936 = vpop.f32.mrb[0].mxu0
  %2937 = vmatprep.mubr.bf16.mxu0 0
  %2938 = vmatmul.mubr.bf16.gmra.mrb[0].mxu0 %v1797
  %v2939 = vpop.f32.mrb[0].mxu0
  %v2940 = vadd.f32 %v451, %v2939
  %v2941 = vpop.f32.mrb[0].mxu0
  %v2942 = vpop.f32.mrb[0].mxu0
  %v2943 = vadd.f32 %v451, %v2942
  %v2944 = vpop.f32.mrb[0].mxu0
  %2945 = vmatprep.mubr.bf16.mxu0 0
  %2946 = vmatmul.mubr.bf16.gmra.mrb[0].mxu0 %v1800
  %v2947 = vpop.f32.mrb[0].mxu0
  %v2948 = vadd.f32 %v451, %v2947
  %v2949 = vpop.f32.mrb[0].mxu0
  %v2950 = vpop.f32.mrb[0].mxu0
  %v2951 = vadd.f32 %v451, %v2950
  %v2952 = vpop.f32.mrb[0].mxu0
  %2953 = vmatprep.mubr.bf16.mxu0 0
  %2954 = vmatmul.mubr.bf16.gmra.mrb[0].mxu0 %v1803
  %v2955 = vpop.f32.mrb[0].mxu0
  %v2956 = vadd.f32 %v451, %v2955
  %v2957 = vpop.f32.mrb[0].mxu0
  %v2958 = vpop.f32.mrb[0].mxu0
  %v2959 = vadd.f32 %v451, %v2958
  %v2960 = vpop.f32.mrb[0].mxu0
  %2961 = vmatprep.mubr.bf16.mxu0 0
  %2962 = vmatmul.mubr.bf16.gmra.mrb[0].mxu0 %v1806
  %v2963 = vpop.f32.mrb[0].mxu0
  %v2964 = vadd.f32 %v451, %v2963
  %v2965 = vpop.f32.mrb[0].mxu0
  %v2966 = vpop.f32.mrb[0].mxu0
  %v2967 = vadd.f32 %v451, %v2966
  %v2968 = vpop.f32.mrb[0].mxu0
  %2969 = vmatprep.mubr.bf16.mxu0 0
  %2970 = vmatmul.mubr.bf16.gmra.mrb[0].mxu0 %v1809
  %v2971 = vpop.f32.mrb[0].mxu0
  %v2972 = vadd.f32 %v451, %v2971
  %v2973 = vpop.f32.mrb[0].mxu0
  %v2974 = vpop.f32.mrb[0].mxu0
  %v2975 = vadd.f32 %v451, %v2974
  %v2976 = vpop.f32.mrb[0].mxu0
  %2977 = vmatprep.mubr.bf16.mxu0 0
  %2978 = vmatmul.mubr.bf16.gmra.mrb[0].mxu0 %v1812
  %v2979 = vpop.f32.mrb[0].mxu0
  %v2980 = vadd.f32 %v451, %v2979
  %v2981 = vpop.f32.mrb[0].mxu0
  %v2982 = vpop.f32.mrb[0].mxu0
  %v2983 = vadd.f32 %v451, %v2982
  %v2984 = vpop.f32.mrb[0].mxu0
  %2985 = vmatprep.mubr.bf16.mxu0 0
  %2986 = vmatmul.mubr.bf16.gmra.mrb[0].mxu0 %v1815
  %v2987 = vpop.f32.mrb[0].mxu0
  %v2988 = vadd.f32 %v451, %v2987
  %v2989 = vpop.f32.mrb[0].mxu0
  %v2990 = vpop.f32.mrb[0].mxu0
  %v2991 = vadd.f32 %v451, %v2990
  %v2992 = vpop.f32.mrb[0].mxu0
  %2993 = vmatprep.mubr.bf16.mxu0 0
  %2994 = vmatmul.mubr.bf16.gmra.mrb[0].mxu0 %v1818
  %v2995 = vpop.f32.mrb[0].mxu0
  %v2996 = vadd.f32 %v451, %v2995
  %v2997 = vpop.f32.mrb[0].mxu0
  %v2998 = vpop.f32.mrb[0].mxu0
  %v2999 = vadd.f32 %v451, %v2998
  %v3000 = vpop.f32.mrb[0].mxu0
  %3001 = vmatprep.mubr.bf16.mxu0 0
  %3002 = vmatmul.mubr.bf16.gmra.mrb[0].mxu0 %v1821
  %v3003 = vpop.f32.mrb[0].mxu0
  %v3004 = vadd.f32 %v451, %v3003
  %v3005 = vpop.f32.mrb[0].mxu0
  %v3006 = vpop.f32.mrb[0].mxu0
  %v3007 = vadd.f32 %v451, %v3006
  %v3008 = vpop.f32.mrb[0].mxu0
  %3009 = vmatprep.mubr.bf16.mxu0 0
  %3010 = vmatmul.mubr.bf16.gmra.mrb[0].mxu0 %v1824
  %v3011 = vpop.f32.mrb[0].mxu0
  %v3012 = vadd.f32 %v451, %v3011
  %v3013 = vpop.f32.mrb[0].mxu0
  %v3014 = vpop.f32.mrb[0].mxu0
  %v3015 = vadd.f32 %v451, %v3014
  %v3016 = vpop.f32.mrb[0].mxu0
  %3017 = vmatprep.mubr.bf16.mxu0 0
  %3018 = vmatmul.mubr.bf16.gmra.mrb[0].mxu0 %v1827
  %v3019 = vpop.f32.mrb[0].mxu0
  %v3020 = vadd.f32 %v451, %v3019
  %v3021 = vpop.f32.mrb[0].mxu0
  %v3022 = vpop.f32.mrb[0].mxu0
  %v3023 = vadd.f32 %v451, %v3022
  %v3024 = vpop.f32.mrb[0].mxu0
  %3025 = vmatprep.mubr.bf16.mxu0 0
  %3026 = vmatmul.mubr.bf16.gmra.mrb[0].mxu0 %v1830
  %v3027 = vpop.f32.mrb[0].mxu0
  %v3028 = vadd.f32 %v451, %v3027
  %v3029 = vpop.f32.mrb[0].mxu0
  %v3030 = vpop.f32.mrb[0].mxu0
  %v3031 = vadd.f32 %v451, %v3030
  %v3032 = vpop.f32.mrb[0].mxu0
  %3033 = vmatprep.mubr.bf16.mxu0 0
  %3034 = vmatmul.mubr.bf16.gmra.mrb[0].mxu0 %v1833
  %v3035 = vpop.f32.mrb[0].mxu0
  %v3036 = vadd.f32 %v451, %v3035
  %v3037 = vpop.f32.mrb[0].mxu0
  %v3038 = vpop.f32.mrb[0].mxu0
  %v3039 = vadd.f32 %v451, %v3038
  %v3040 = vpop.f32.mrb[0].mxu0
  %3041 = vmatprep.mubr.bf16.mxu0 0
  %3042 = vmatmul.mubr.bf16.gmra.mrb[0].mxu0 %v1836
  %v3043 = vpop.f32.mrb[0].mxu0
  %v3044 = vadd.f32 %v451, %v3043
  %v3045 = vpop.f32.mrb[0].mxu0
  %v3046 = vpop.f32.mrb[0].mxu0
  %v3047 = vadd.f32 %v451, %v3046
  %v3048 = vpop.f32.mrb[0].mxu0
  %3049 = vmatprep.mubr.bf16.mxu0 0
  %3050 = vmatmul.mubr.bf16.gmra.mrb[0].mxu0 %v1839
  %v3051 = vpop.f32.mrb[0].mxu0
  %v3052 = vadd.f32 %v451, %v3051
  %v3053 = vpop.f32.mrb[0].mxu0
  %v3054 = vpop.f32.mrb[0].mxu0
  %v3055 = vadd.f32 %v451, %v3054
  %v3056 = vpop.f32.mrb[0].mxu0
  %3057 = vmatprep.mubr.bf16.mxu0 0
  %3058 = vmatmul.mubr.bf16.gmra.mrb[0].mxu0 %v1842
  %v3059 = vpop.f32.mrb[0].mxu0
  %v3060 = vadd.f32 %v451, %v3059
  %v3061 = vpop.f32.mrb[0].mxu0
  %v3062 = vpop.f32.mrb[0].mxu0
  %v3063 = vadd.f32 %v451, %v3062
  %v3064 = vpop.f32.mrb[0].mxu0
  %3065 = vmatprep.mubr.bf16.mxu0 0
  %3066 = vmatmul.mubr.bf16.gmra.mrb[0].mxu0 %v1845
  %v3067 = vpop.f32.mrb[0].mxu0
  %v3068 = vadd.f32 %v451, %v3067
  %v3069 = vpop.f32.mrb[0].mxu0
  %v3070 = vpop.f32.mrb[0].mxu0
  %v3071 = vadd.f32 %v451, %v3070
  %v3072 = vpop.f32.mrb[0].mxu0
  %3073 = vmatprep.mubr.bf16.mxu0 0
  %3074 = vmatmul.mubr.bf16.gmra.mrb[0].mxu0 %v1848
  %v3075 = vpop.f32.mrb[0].mxu0
  %v3076 = vadd.f32 %v451, %v3075
  %v3077 = vpop.f32.mrb[0].mxu0
  %v3078 = vpop.f32.mrb[0].mxu0
  %v3079 = vadd.f32 %v451, %v3078
  %v3080 = vpop.f32.mrb[0].mxu0
  %3081 = vmatprep.mubr.bf16.mxu0 0
  %3082 = vmatmul.mubr.bf16.gmra.mrb[0].mxu0 %v1851
  %v3083 = vpop.f32.mrb[0].mxu0
  %v3084 = vadd.f32 %v451, %v3083
  %v3085 = vpop.f32.mrb[0].mxu0
  %v3086 = vpop.f32.mrb[0].mxu0
  %v3087 = vadd.f32 %v451, %v3086
  %v3088 = vpop.f32.mrb[0].mxu0
  %3089 = vmatprep.mubr.bf16.mxu0 0
  %3090 = vmatmul.mubr.bf16.gmra.mrb[0].mxu0 %v1854
  %v3091 = vpop.f32.mrb[0].mxu0
  %v3092 = vadd.f32 %v451, %v3091
  %v3093 = vpop.f32.mrb[0].mxu0
  %v3094 = vpop.f32.mrb[0].mxu0
  %v3095 = vadd.f32 %v451, %v3094
  %v3096 = vpop.f32.mrb[0].mxu0
  %3097 = vmatprep.mubr.bf16.mxu0 0
  %3098 = vmatmul.mubr.bf16.gmra.mrb[0].mxu0 %v1857
  %v3099 = vpop.f32.mrb[0].mxu0
  %v3100 = vadd.f32 %v451, %v3099
  %v3101 = vpop.f32.mrb[0].mxu0
  %v3102 = vpop.f32.mrb[0].mxu0
  %v3103 = vadd.f32 %v451, %v3102
  %v3104 = vpop.f32.mrb[0].mxu0
  %3105 = vmatprep.mubr.bf16.mxu0 0
  %3106 = vmatmul.mubr.bf16.gmra.mrb[0].mxu0 %v1860
  %v3107 = vpop.f32.mrb[0].mxu0
  %v3108 = vadd.f32 %v451, %v3107
  %v3109 = vpop.f32.mrb[0].mxu0
  %v3110 = vpop.f32.mrb[0].mxu0
  %v3111 = vadd.f32 %v451, %v3110
  %v3112 = vpop.f32.mrb[0].mxu0
  %3113 = vmatprep.mubr.bf16.mxu0 0
  %3114 = vmatmul.mubr.bf16.gmra.mrb[0].mxu0 %v1863
  %v3115 = vpop.f32.mrb[0].mxu0
  %v3116 = vadd.f32 %v451, %v3115
  %v3117 = vpop.f32.mrb[0].mxu0
  %v3118 = vpop.f32.mrb[0].mxu0
  %v3119 = vadd.f32 %v451, %v3118
  %v3120 = vpop.f32.mrb[0].mxu0
  %3121 = vmatprep.mubr.bf16.mxu0 0
  %3122 = vmatmul.mubr.bf16.gmra.mrb[0].mxu0 %v1866
  %v3123 = vpop.f32.mrb[0].mxu0
  %v3124 = vadd.f32 %v451, %v3123
  %v3125 = vpop.f32.mrb[0].mxu0
  %v3126 = vpop.f32.mrb[0].mxu0
  %v3127 = vadd.f32 %v451, %v3126
  %v3128 = vpop.f32.mrb[0].mxu0
  %3129 = vmatprep.mubr.bf16.mxu0 0
  %3130 = vmatmul.mubr.bf16.gmra.mrb[0].mxu0 %v1869
  %v3131 = vpop.f32.mrb[0].mxu0
  %v3132 = vadd.f32 %v451, %v3131
  %v3133 = vpop.f32.mrb[0].mxu0
  %v3134 = vpop.f32.mrb[0].mxu0
  %v3135 = vadd.f32 %v451, %v3134
  %v3136 = vpop.f32.mrb[0].mxu0
  %3137 = vmatprep.mubr.bf16.mxu0 0
  %3138 = vmatmul.mubr.bf16.gmra.mrb[0].mxu0 %v1872
  %v3139 = vpop.f32.mrb[0].mxu0
  %v3140 = vadd.f32 %v451, %v3139
  %v3141 = vpop.f32.mrb[0].mxu0
  %v3142 = vpop.f32.mrb[0].mxu0
  %v3143 = vadd.f32 %v451, %v3142
  %v3144 = vpop.f32.mrb[0].mxu0
  %3145 = vmatprep.mubr.bf16.mxu0 0
  %3146 = vmatmul.mubr.bf16.gmra.mrb[0].mxu0 %v1875
  %v3147 = vpop.f32.mrb[0].mxu0
  %v3148 = vadd.f32 %v451, %v3147
  %v3149 = vpop.f32.mrb[0].mxu0
  %v3150 = vpop.f32.mrb[0].mxu0
  %v3151 = vadd.f32 %v451, %v3150
  %v3152 = vpop.f32.mrb[0].mxu0
  %3153 = vmatprep.mubr.bf16.mxu0 0
  %3154 = vmatmul.mubr.bf16.gmra.mrb[0].mxu0 %v1878
  %v3155 = vpop.f32.mrb[0].mxu0
  %v3156 = vadd.f32 %v451, %v3155
  %v3157 = vpop.f32.mrb[0].mxu0
  %v3158 = vpop.f32.mrb[0].mxu0
  %v3159 = vadd.f32 %v451, %v3158
  %v3160 = vpop.f32.mrb[0].mxu0
  %3161 = vmatprep.mubr.bf16.mxu0 0
  %3162 = vmatmul.mubr.bf16.gmra.mrb[0].mxu0 %v1881
  %v3163 = vpop.f32.mrb[0].mxu0
  %v3164 = vadd.f32 %v451, %v3163
  %v3165 = vpop.f32.mrb[0].mxu0
  %v3166 = vpop.f32.mrb[0].mxu0
  %v3167 = vadd.f32 %v451, %v3166
  %v3168 = vpop.f32.mrb[0].mxu0
  %3169 = vmatprep.mubr.bf16.mxu0 0
  %3170 = vmatmul.mubr.bf16.gmra.mrb[0].mxu0 %v1884
  %v3171 = vpop.f32.mrb[0].mxu0
  %v3172 = vadd.f32 %v451, %v3171
  %v3173 = vpop.f32.mrb[0].mxu0
  %v3174 = vpop.f32.mrb[0].mxu0
  %v3175 = vadd.f32 %v451, %v3174
  %v3176 = vpop.f32.mrb[0].mxu0
  %3177 = vmatprep.mubr.bf16.mxu0 0
  %3178 = vmatmul.mubr.bf16.gmra.mrb[0].mxu0 %v1887
  %v3179 = vpop.f32.mrb[0].mxu0
  %v3180 = vadd.f32 %v451, %v3179
  %v3181 = vpop.f32.mrb[0].mxu0
  %v3182 = vpop.f32.mrb[0].mxu0
  %v3183 = vadd.f32 %v451, %v3182
  %v3184 = vpop.f32.mrb[0].mxu0
  %3185 = vmatprep.mubr.bf16.mxu0 0
  %3186 = vmatmul.mubr.bf16.gmra.mrb[0].mxu0 %v1890
  %v3187 = vpop.f32.mrb[0].mxu0
  %v3188 = vadd.f32 %v451, %v3187
  %v3189 = vpop.f32.mrb[0].mxu0
  %v3190 = vpop.f32.mrb[0].mxu0
  %v3191 = vadd.f32 %v451, %v3190
  %v3192 = vpop.f32.mrb[0].mxu0
  %3193 = vmatprep.mubr.bf16.mxu0 0
  %3194 = vmatmul.mubr.bf16.gmra.mrb[0].mxu0 %v1893
  %v3195 = vpop.f32.mrb[0].mxu0
  %v3196 = vadd.f32 %v451, %v3195
  %v3197 = vpop.f32.mrb[0].mxu0
  %v3198 = vpop.f32.mrb[0].mxu0
  %v3199 = vadd.f32 %v451, %v3198
  %v3200 = vpop.f32.mrb[0].mxu0
  %3201 = vmatprep.mubr.bf16.mxu0 0
  %3202 = vmatmul.mubr.bf16.gmra.mrb[0].mxu0 %v1896
  %v3203 = vpop.f32.mrb[0].mxu0
  %v3204 = vadd.f32 %v451, %v3203
  %v3205 = vpop.f32.mrb[0].mxu0
  %v3206 = vpop.f32.mrb[0].mxu0
  %v3207 = vadd.f32 %v451, %v3206
  %v3208 = vpop.f32.mrb[0].mxu0
  %3209 = vmatprep.mubr.bf16.mxu0 0
  %3210 = vmatmul.mubr.bf16.gmra.mrb[0].mxu0 %v1899
  %v3211 = vpop.f32.mrb[0].mxu0
  %v3212 = vadd.f32 %v451, %v3211
  %v3213 = vpop.f32.mrb[0].mxu0
  %v3214 = vpop.f32.mrb[0].mxu0
  %v3215 = vadd.f32 %v451, %v3214
  %v3216 = vpop.f32.mrb[0].mxu0
  %3217 = vmatprep.mubr.bf16.mxu0 0
  %3218 = vmatmul.mubr.bf16.gmra.mrb[0].mxu0 %v1902
  %v3219 = vpop.f32.mrb[0].mxu0
  %v3220 = vadd.f32 %v451, %v3219
  %v3221 = vpop.f32.mrb[0].mxu0
  %v3222 = vpop.f32.mrb[0].mxu0
  %v3223 = vadd.f32 %v451, %v3222
  %v3224 = vpop.f32.mrb[0].mxu0
  %3225 = vmatprep.mubr.bf16.mxu0 0
  %3226 = vmatmul.mubr.bf16.gmra.mrb[0].mxu0 %v1905
  %v3227 = vpop.f32.mrb[0].mxu0
  %v3228 = vadd.f32 %v451, %v3227
  %v3229 = vpop.f32.mrb[0].mxu0
  %v3230 = vpop.f32.mrb[0].mxu0
  %v3231 = vadd.f32 %v451, %v3230
  %v3232 = vpop.f32.mrb[0].mxu0
  %3233 = vmatprep.mubr.bf16.mxu0 0
  %3234 = vmatmul.mubr.bf16.gmra.mrb[0].mxu0 %v1908
  %v3235 = vpop.f32.mrb[0].mxu0
  %v3236 = vadd.f32 %v451, %v3235
  %v3237 = vpop.f32.mrb[0].mxu0
  %v3238 = vpop.f32.mrb[0].mxu0
  %v3239 = vadd.f32 %v451, %v3238
  %v3240 = vpop.f32.mrb[0].mxu0
  %3241 = vmatprep.mubr.bf16.mxu0 0
  %3242 = vmatmul.mubr.bf16.gmra.mrb[0].mxu0 %v1911
  %v3243 = vpop.f32.mrb[0].mxu0
  %v3244 = vadd.f32 %v451, %v3243
  %v3245 = vpop.f32.mrb[0].mxu0
  %v3246 = vpop.f32.mrb[0].mxu0
  %v3247 = vadd.f32 %v451, %v3246
  %v3248 = vpop.f32.mrb[0].mxu0
  %3249 = vmatprep.mubr.bf16.mxu0 0
  %3250 = vmatmul.mubr.bf16.gmra.mrb[0].mxu0 %v1914
  %v3251 = vpop.f32.mrb[0].mxu0
  %v3252 = vadd.f32 %v451, %v3251
  %v3253 = vpop.f32.mrb[0].mxu0
  %v3254 = vpop.f32.mrb[0].mxu0
  %v3255 = vadd.f32 %v451, %v3254
  %v3256 = vpop.f32.mrb[0].mxu0
  %3257 = vmatprep.mubr.bf16.mxu0 0
  %3258 = vmatmul.mubr.bf16.gmra.mrb[0].mxu0 %v1917
  %v3259 = vpop.f32.mrb[0].mxu0
  %v3260 = vadd.f32 %v451, %v3259
  %v3261 = vpop.f32.mrb[0].mxu0
  %v3262 = vpop.f32.mrb[0].mxu0
  %v3263 = vadd.f32 %v451, %v3262
  %v3264 = vpop.f32.mrb[0].mxu0
  %3265 = vmatprep.mubr.bf16.mxu0 0
  %3266 = vmatmul.mubr.bf16.gmra.mrb[0].mxu0 %v1920
  %v3267 = vpop.f32.mrb[0].mxu0
  %v3268 = vadd.f32 %v451, %v3267
  %v3269 = vpop.f32.mrb[0].mxu0
  %v3270 = vpop.f32.mrb[0].mxu0
  %v3271 = vadd.f32 %v451, %v3270
  %v3272 = vpop.f32.mrb[0].mxu0
  %3273 = vmatprep.mubr.bf16.mxu0 0
  %3274 = vmatmul.mubr.bf16.gmra.mrb[0].mxu0 %v1923
  %v3275 = vpop.f32.mrb[0].mxu0
  %v3276 = vadd.f32 %v451, %v3275
  %v3277 = vpop.f32.mrb[0].mxu0
  %v3278 = vpop.f32.mrb[0].mxu0
  %v3279 = vadd.f32 %v451, %v3278
  %v3280 = vpop.f32.mrb[0].mxu0
  %3281 = vmatprep.mubr.bf16.mxu0 0
  %3282 = vmatmul.mubr.bf16.gmra.mrb[0].mxu0 %v1926
  %v3283 = vpop.f32.mrb[0].mxu0
  %v3284 = vadd.f32 %v451, %v3283
  %v3285 = vpop.f32.mrb[0].mxu0
  %v3286 = vpop.f32.mrb[0].mxu0
  %v3287 = vadd.f32 %v451, %v3286
  %v3288 = vpop.f32.mrb[0].mxu0
  %3289 = vmatprep.mubr.bf16.mxu0 0
  %3290 = vmatmul.mubr.bf16.gmra.mrb[0].mxu0 %v1929
  %v3291 = vpop.f32.mrb[0].mxu0
  %v3292 = vadd.f32 %v451, %v3291
  %v3293 = vpop.f32.mrb[0].mxu0
  %v3294 = vpop.f32.mrb[0].mxu0
  %v3295 = vadd.f32 %v451, %v3294
  %v3296 = vpop.f32.mrb[0].mxu0
  %3297 = vmatprep.mubr.bf16.mxu0 0
  %3298 = vmatmul.mubr.bf16.gmra.mrb[0].mxu0 %v1932
  %v3299 = vpop.f32.mrb[0].mxu0
  %v3300 = vadd.f32 %v451, %v3299
  %v3301 = vpop.f32.mrb[0].mxu0
  %v3302 = vpop.f32.mrb[0].mxu0
  %v3303 = vadd.f32 %v451, %v3302
  %v3304 = vpop.f32.mrb[0].mxu0
  %3305 = vmatprep.mubr.bf16.mxu0 0
  %3306 = vmatmul.mubr.bf16.gmra.mrb[0].mxu0 %v1935
  %v3307 = vpop.f32.mrb[0].mxu0
  %v3308 = vadd.f32 %v451, %v3307
  %v3309 = vpop.f32.mrb[0].mxu0
  %v3310 = vpop.f32.mrb[0].mxu0
  %v3311 = vadd.f32 %v451, %v3310
  %v3312 = vpop.f32.mrb[0].mxu0
  %3313 = vmatprep.mubr.bf16.mxu0 0
  %3314 = vmatmul.mubr.bf16.gmra.mrb[0].mxu0 %v1938
  %v3315 = vpop.f32.mrb[0].mxu0
  %v3316 = vadd.f32 %v451, %v3315
  %v3317 = vpop.f32.mrb[0].mxu0
  %v3318 = vpop.f32.mrb[0].mxu0
  %v3319 = vadd.f32 %v451, %v3318
  %v3320 = vpop.f32.mrb[0].mxu0
  %3321 = vmatprep.mubr.bf16.mxu0 0
  %3322 = vmatmul.mubr.bf16.gmra.mrb[0].mxu0 %v1941
  %v3323 = vpop.f32.mrb[0].mxu0
  %v3324 = vadd.f32 %v451, %v3323
  %v3325 = vpop.f32.mrb[0].mxu0
  %v3326 = vpop.f32.mrb[0].mxu0
  %v3327 = vadd.f32 %v451, %v3326
  %v3328 = vpop.f32.mrb[0].mxu0
  %3329 = vmatprep.mubr.bf16.mxu0 0
  %3330 = vmatmul.mubr.bf16.gmra.mrb[0].mxu0 %v1944
  %v3331 = vpop.f32.mrb[0].mxu0
  %v3332 = vadd.f32 %v451, %v3331
  %v3333 = vpop.f32.mrb[0].mxu0
  %v3334 = vpop.f32.mrb[0].mxu0
  %v3335 = vadd.f32 %v451, %v3334
  %v3336 = vpop.f32.mrb[0].mxu0
  %3337 = vmatprep.mubr.bf16.mxu0 0
  %3338 = vmatmul.mubr.bf16.gmra.mrb[0].mxu0 %v1947
  %v3339 = vpop.f32.mrb[0].mxu0
  %v3340 = vadd.f32 %v451, %v3339
  %v3341 = vpop.f32.mrb[0].mxu0
  %v3342 = vpop.f32.mrb[0].mxu0
  %v3343 = vadd.f32 %v451, %v3342
  %v3344 = vpop.f32.mrb[0].mxu0
  %3345 = vmatprep.mubr.bf16.mxu0 0
  %3346 = vmatmul.mubr.bf16.gmra.mrb[0].mxu0 %v1950
  %v3347 = vpop.f32.mrb[0].mxu0
  %v3348 = vadd.f32 %v451, %v3347
  %v3349 = vpop.f32.mrb[0].mxu0
  %v3350 = vpop.f32.mrb[0].mxu0
  %v3351 = vadd.f32 %v451, %v3350
  %v3352 = vpop.f32.mrb[0].mxu0
  %3353 = vmatprep.mubr.bf16.mxu0 0
  %3354 = vmatmul.mubr.bf16.gmra.mrb[0].mxu0 %v1953
  %v3355 = vpop.f32.mrb[0].mxu0
  %v3356 = vadd.f32 %v451, %v3355
  %v3357 = vpop.f32.mrb[0].mxu0
  %v3358 = vpop.f32.mrb[0].mxu0
  %v3359 = vadd.f32 %v451, %v3358
  %v3360 = vpop.f32.mrb[0].mxu0
  %3361 = vmatprep.mubr.bf16.mxu0 0
  %3362 = vmatmul.mubr.bf16.gmra.mrb[0].mxu0 %v1956
  %v3363 = vpop.f32.mrb[0].mxu0
  %v3364 = vadd.f32 %v451, %v3363
  %v3365 = vpop.f32.mrb[0].mxu0
  %v3366 = vpop.f32.mrb[0].mxu0
  %v3367 = vadd.f32 %v451, %v3366
  %v3368 = vpop.f32.mrb[0].mxu0
  %3369 = vmatprep.mubr.bf16.mxu0 0
  %3370 = vmatmul.mubr.bf16.gmra.mrb[0].mxu0 %v1959
  %v3371 = vpop.f32.mrb[0].mxu0
  %v3372 = vadd.f32 %v451, %v3371
  %v3373 = vpop.f32.mrb[0].mxu0
  %v3374 = vpop.f32.mrb[0].mxu0
  %v3375 = vadd.f32 %v451, %v3374
  %v3376 = vpop.f32.mrb[0].mxu0
  %3377 = vmatprep.mubr.bf16.mxu0 0
  %3378 = vmatmul.mubr.bf16.gmra.mrb[0].mxu0 %v1962
  %v3379 = vpop.f32.mrb[0].mxu0
  %v3380 = vadd.f32 %v451, %v3379
  %v3381 = vpop.f32.mrb[0].mxu0
  %v3382 = vpop.f32.mrb[0].mxu0
  %v3383 = vadd.f32 %v451, %v3382
  %v3384 = vpop.f32.mrb[0].mxu0
  %3385 = vmatprep.mubr.bf16.mxu0 0
  %3386 = vmatmul.mubr.bf16.gmra.mrb[0].mxu0 %v1965
  %v3387 = vpop.f32.mrb[0].mxu0
  %v3388 = vadd.f32 %v451, %v3387
  %v3389 = vpop.f32.mrb[0].mxu0
  %v3390 = vpop.f32.mrb[0].mxu0
  %v3391 = vadd.f32 %v451, %v3390
  %v3392 = vpop.f32.mrb[0].mxu0
  %3393 = vmatprep.mubr.bf16.mxu0 0
  %3394 = vmatmul.mubr.bf16.gmra.mrb[0].mxu0 %v1968
  %v3395 = vpop.f32.mrb[0].mxu0
  %v3396 = vadd.f32 %v451, %v3395
  %v3397 = vpop.f32.mrb[0].mxu0
  %v3398 = vpop.f32.mrb[0].mxu0
  %v3399 = vadd.f32 %v451, %v3398
  %v3400 = vpop.f32.mrb[0].mxu0
  %3401 = vmatprep.mubr.bf16.mxu0 0
  %3402 = vmatmul.mubr.bf16.gmra.mrb[0].mxu0 %v1971
  %v3403 = vpop.f32.mrb[0].mxu0
  %v3404 = vadd.f32 %v451, %v3403
  %v3405 = vpop.f32.mrb[0].mxu0
  %v3406 = vpop.f32.mrb[0].mxu0
  %v3407 = vadd.f32 %v451, %v3406
  %v3408 = vpop.f32.mrb[0].mxu0
  %3409 = vmatprep.mubr.bf16.mxu0 0
  %3410 = vmatmul.mubr.bf16.gmra.mrb[0].mxu0 %v1974
  %v3411 = vpop.f32.mrb[0].mxu0
  %v3412 = vadd.f32 %v451, %v3411
  %v3413 = vpop.f32.mrb[0].mxu0
  %v3414 = vpop.f32.mrb[0].mxu0
  %v3415 = vadd.f32 %v451, %v3414
  %v3416 = vpop.f32.mrb[0].mxu0
  %3417 = vmatprep.mubr.bf16.mxu0 0
  %3418 = vmatmul.mubr.bf16.gmra.mrb[0].mxu0 %v1977
  %v3419 = vpop.f32.mrb[0].mxu0
  %v3420 = vadd.f32 %v451, %v3419
  %v3421 = vpop.f32.mrb[0].mxu0
  %v3422 = vpop.f32.mrb[0].mxu0
  %v3423 = vadd.f32 %v451, %v3422
  %v3424 = vpop.f32.mrb[0].mxu0
  %3425 = vmatprep.mubr.bf16.mxu0 0
  %3426 = vmatmul.mubr.bf16.gmra.mrb[0].mxu0 %v1980
  %v3427 = vpop.f32.mrb[0].mxu0
  %v3428 = vadd.f32 %v451, %v3427
  %v3429 = vpop.f32.mrb[0].mxu0
  %v3430 = vpop.f32.mrb[0].mxu0
  %v3431 = vadd.f32 %v451, %v3430
  %v3432 = vpop.f32.mrb[0].mxu0
  %3433 = vmatprep.mubr.bf16.mxu0 0
  %3434 = vmatmul.mubr.bf16.gmra.mrb[0].mxu0 %v1983
  %v3435 = vpop.f32.mrb[0].mxu0
  %v3436 = vadd.f32 %v451, %v3435
  %v3437 = vpop.f32.mrb[0].mxu0
  %v3438 = vpop.f32.mrb[0].mxu0
  %v3439 = vadd.f32 %v451, %v3438
  %v3440 = vpop.f32.mrb[0].mxu0
  %3441 = vmatprep.mubr.bf16.mxu0 0
  %3442 = vmatmul.mubr.bf16.gmra.mrb[0].mxu0 %v1986
  %v3443 = vpop.f32.mrb[0].mxu0
  %v3444 = vadd.f32 %v451, %v3443
  %v3445 = vpop.f32.mrb[0].mxu0
  %v3446 = vpop.f32.mrb[0].mxu0
  %v3447 = vadd.f32 %v451, %v3446
  %v3448 = vpop.f32.mrb[0].mxu0
  %3449 = vmatprep.mubr.bf16.mxu0 0
  %3450 = vmatmul.mubr.bf16.gmra.mrb[0].mxu0 %v1989
  %v3451 = vpop.f32.mrb[0].mxu0
  %v3452 = vadd.f32 %v451, %v3451
  %v3453 = vpop.f32.mrb[0].mxu0
  %v3454 = vpop.f32.mrb[0].mxu0
  %v3455 = vadd.f32 %v451, %v3454
  %v3456 = vpop.f32.mrb[0].mxu0
  %3457 = vmatprep.mubr.bf16.mxu0 0
  %3458 = vmatmul.mubr.bf16.gmra.mrb[0].mxu0 %v1992
  %v3459 = vpop.f32.mrb[0].mxu0
  %v3460 = vadd.f32 %v451, %v3459
  %v3461 = vpop.f32.mrb[0].mxu0
  %v3462 = vpop.f32.mrb[0].mxu0
  %v3463 = vadd.f32 %v451, %v3462
  %v3464 = vpop.f32.mrb[0].mxu0
  %3465 = vmatprep.mubr.bf16.mxu0 0
  %3466 = vmatmul.mubr.bf16.gmra.mrb[0].mxu0 %v1995
  %v3467 = vpop.f32.mrb[0].mxu0
  %v3468 = vadd.f32 %v451, %v3467
  %v3469 = vpop.f32.mrb[0].mxu0
  %v3470 = vpop.f32.mrb[0].mxu0
  %v3471 = vadd.f32 %v451, %v3470
  %v3472 = vpop.f32.mrb[0].mxu0
  %3473 = vmatprep.mubr.bf16.mxu0 0
  %3474 = vmatmul.mubr.bf16.gmra.mrb[0].mxu0 %v1998
  %v3475 = vpop.f32.mrb[0].mxu0
  %v3476 = vadd.f32 %v451, %v3475
  %v3477 = vpop.f32.mrb[0].mxu0
  %v3478 = vpop.f32.mrb[0].mxu0
  %v3479 = vadd.f32 %v451, %v3478
  %v3480 = vpop.f32.mrb[0].mxu0
  %3481 = vmatprep.mubr.bf16.mxu0 0
  %3482 = vmatmul.mubr.bf16.gmra.mrb[0].mxu0 %v2001
  %v3483 = vpop.f32.mrb[0].mxu0
  %v3484 = vadd.f32 %v451, %v3483
  %v3485 = vpop.f32.mrb[0].mxu0
  %v3486 = vpop.f32.mrb[0].mxu0
  %v3487 = vadd.f32 %v451, %v3486
  %v3488 = vpop.f32.mrb[0].mxu0
  %3489 = vmatprep.mubr.bf16.mxu0 0
  %3490 = vmatmul.mubr.bf16.gmra.mrb[0].mxu0 %v2004
  %v3491 = vpop.f32.mrb[0].mxu0
  %v3492 = vadd.f32 %v451, %v3491
  %v3493 = vpop.f32.mrb[0].mxu0
  %v3494 = vpop.f32.mrb[0].mxu0
  %v3495 = vadd.f32 %v451, %v3494
  %v3496 = vpop.f32.mrb[0].mxu0
  %3497 = vmatprep.mubr.bf16.mxu0 0
  %3498 = vmatmul.mubr.bf16.gmra.mrb[0].mxu0 %v2007
  %v3499 = vpop.f32.mrb[0].mxu0
  %v3500 = vadd.f32 %v451, %v3499
  %v3501 = vpop.f32.mrb[0].mxu0
  %v3502 = vpop.f32.mrb[0].mxu0
  %v3503 = vadd.f32 %v451, %v3502
  %v3504 = vpop.f32.mrb[0].mxu0
  %3505 = vmatprep.mubr.bf16.mxu0 0
  %3506 = vmatmul.mubr.bf16.gmra.mrb[0].mxu0 %v2010
  %v3507 = vpop.f32.mrb[0].mxu0
  %v3508 = vadd.f32 %v451, %v3507
  %v3509 = vpop.f32.mrb[0].mxu0
  %v3510 = vpop.f32.mrb[0].mxu0
  %v3511 = vadd.f32 %v451, %v3510
  %v3512 = vpop.f32.mrb[0].mxu0
  %3513 = vmatprep.mubr.bf16.mxu0 0
  %3514 = vmatmul.mubr.bf16.gmra.mrb[0].mxu0 %v2013
  %v3515 = vpop.f32.mrb[0].mxu0
  %v3516 = vadd.f32 %v451, %v3515
  %v3517 = vpop.f32.mrb[0].mxu0
  %v3518 = vpop.f32.mrb[0].mxu0
  %v3519 = vadd.f32 %v451, %v3518
  %v3520 = vpop.f32.mrb[0].mxu0
  %3521 = vmatprep.mubr.bf16.mxu0 0
  %3522 = vmatmul.mubr.bf16.gmra.mrb[0].mxu0 %v2016
  %v3523 = vpop.f32.mrb[0].mxu0
  %v3524 = vadd.f32 %v451, %v3523
  %v3525 = vpop.f32.mrb[0].mxu0
  %v3526 = vpop.f32.mrb[0].mxu0
  %v3527 = vadd.f32 %v451, %v3526
  %v3528 = vpop.f32.mrb[0].mxu0
  %3529 = vmatprep.mubr.bf16.mxu0 0
  %3530 = vmatmul.mubr.bf16.gmra.mrb[0].mxu0 %v2019
  %v3531 = vpop.f32.mrb[0].mxu0
  %v3532 = vadd.f32 %v451, %v3531
  %v3533 = vpop.f32.mrb[0].mxu0
  %v3534 = vpop.f32.mrb[0].mxu0
  %v3535 = vadd.f32 %v451, %v3534
  %v3536 = vpop.f32.mrb[0].mxu0
  %3537 = vmatprep.mubr.bf16.mxu0 0
  %3538 = vmatmul.mubr.bf16.gmra.mrb[0].mxu0 %v2022
  %v3539 = vpop.f32.mrb[0].mxu0
  %v3540 = vadd.f32 %v451, %v3539
  %v3541 = vpop.f32.mrb[0].mxu0
  %v3542 = vpop.f32.mrb[0].mxu0
  %v3543 = vadd.f32 %v451, %v3542
  %v3544 = vpop.f32.mrb[0].mxu0
  %3545 = vmatprep.mubr.bf16.mxu0 0
  %3546 = vmatmul.mubr.bf16.gmra.mrb[0].mxu0 %v2025
  %v3547 = vpop.f32.mrb[0].mxu0
  %v3548 = vadd.f32 %v451, %v3547
  %v3549 = vpop.f32.mrb[0].mxu0
  %v3550 = vpop.f32.mrb[0].mxu0
  %v3551 = vadd.f32 %v451, %v3550
  %v3552 = vpop.f32.mrb[0].mxu0
  %3553 = vmatprep.mubr.bf16.mxu0 0
  %3554 = vmatmul.mubr.bf16.gmra.mrb[0].mxu0 %v2028
  %v3555 = vpop.f32.mrb[0].mxu0
  %v3556 = vadd.f32 %v451, %v3555
  %v3557 = vpop.f32.mrb[0].mxu0
  %v3558 = vpop.f32.mrb[0].mxu0
  %v3559 = vadd.f32 %v451, %v3558
  %v3560 = vpop.f32.mrb[0].mxu0
  %3561 = vmatprep.mubr.bf16.mxu0 0
  %3562 = vmatmul.mubr.bf16.gmra.mrb[0].mxu0 %v2031
  %v3563 = vpop.f32.mrb[0].mxu0
  %v3564 = vadd.f32 %v451, %v3563
  %v3565 = vpop.f32.mrb[0].mxu0
  %v3566 = vpop.f32.mrb[0].mxu0
  %v3567 = vadd.f32 %v451, %v3566
  %v3568 = vpop.f32.mrb[0].mxu0
  %3569 = vmatprep.mubr.bf16.mxu0 0
  %3570 = vmatmul.mubr.bf16.gmra.mrb[0].mxu0 %v2034
  %v3571 = vpop.f32.mrb[0].mxu0
  %v3572 = vadd.f32 %v451, %v3571
  %v3573 = vpop.f32.mrb[0].mxu0
  %v3574 = vpop.f32.mrb[0].mxu0
  %v3575 = vadd.f32 %v451, %v3574
  %v3576 = vpop.f32.mrb[0].mxu0
  %3577 = vmatprep.mubr.bf16.mxu0 0
  %3578 = vmatmul.mubr.bf16.gmra.mrb[0].mxu0 %v2037
  %v3579 = vpop.f32.mrb[0].mxu0
  %v3580 = vadd.f32 %v451, %v3579
  %v3581 = vpop.f32.mrb[0].mxu0
  %v3582 = vpop.f32.mrb[0].mxu0
  %v3583 = vadd.f32 %v451, %v3582
  %v3584 = vpop.f32.mrb[0].mxu0
  %3585 = vmatprep.mubr.bf16.mxu0 0
  %3586 = vmatmul.mubr.bf16.gmra.mrb[0].mxu0 %v2040
  %v3587 = vpop.f32.mrb[0].mxu0
  %v3588 = vadd.f32 %v451, %v3587
  %v3589 = vpop.f32.mrb[0].mxu0
  %v3590 = vpop.f32.mrb[0].mxu0
  %v3591 = vadd.f32 %v451, %v3590
  %v3592 = vpop.f32.mrb[0].mxu0
  %3593 = vmatprep.mubr.bf16.mxu0 0
  %3594 = vmatmul.mubr.bf16.gmra.mrb[0].mxu0 %v2043
  %v3595 = vpop.f32.mrb[0].mxu0
  %v3596 = vadd.f32 %v451, %v3595
  %v3597 = vpop.f32.mrb[0].mxu0
  %v3598 = vpop.f32.mrb[0].mxu0
  %v3599 = vadd.f32 %v451, %v3598
  %v3600 = vpop.f32.mrb[0].mxu0
  %3601 = vmatprep.mubr.bf16.mxu0 0
  %3602 = vmatmul.mubr.bf16.gmra.mrb[0].mxu0 %v2046
  %v3603 = vpop.f32.mrb[0].mxu0
  %v3604 = vadd.f32 %v451, %v3603
  %v3605 = vpop.f32.mrb[0].mxu0
  %v3606 = vpop.f32.mrb[0].mxu0
  %v3607 = vadd.f32 %v451, %v3606
  %v3608 = vpop.f32.mrb[0].mxu0
  %3609 = vmatprep.mubr.bf16.mxu0 0
  %3610 = vmatmul.mubr.bf16.gmra.mrb[0].mxu0 %v2049
  %v3611 = vpop.f32.mrb[0].mxu0
  %v3612 = vadd.f32 %v451, %v3611
  %v3613 = vpop.f32.mrb[0].mxu0
  %v3614 = vpop.f32.mrb[0].mxu0
  %v3615 = vadd.f32 %v451, %v3614
  %v3616 = vpop.f32.mrb[0].mxu0
  %3617 = vmatprep.mubr.bf16.mxu0 0
  %3618 = vmatmul.mubr.bf16.gmra.mrb[0].mxu0 %v2052
  %v3619 = vpop.f32.mrb[0].mxu0
  %v3620 = vadd.f32 %v451, %v3619
  %v3621 = vpop.f32.mrb[0].mxu0
  %v3622 = vpop.f32.mrb[0].mxu0
  %v3623 = vadd.f32 %v451, %v3622
  %v3624 = vpop.f32.mrb[0].mxu0
  %3625 = vmatprep.mubr.bf16.mxu0 0
  %3626 = vmatmul.mubr.bf16.gmra.mrb[0].mxu0 %v2055
  %v3627 = vpop.f32.mrb[0].mxu0
  %v3628 = vadd.f32 %v451, %v3627
  %v3629 = vpop.f32.mrb[0].mxu0
  %v3630 = vpop.f32.mrb[0].mxu0
  %v3631 = vadd.f32 %v451, %v3630
  %v3632 = vpop.f32.mrb[0].mxu0
  %3633 = vmatprep.mubr.bf16.mxu0 0
  %3634 = vmatmul.mubr.bf16.gmra.mrb[0].mxu0 %v2058
  %v3635 = vpop.f32.mrb[0].mxu0
  %v3636 = vadd.f32 %v451, %v3635
  %v3637 = vpop.f32.mrb[0].mxu0
  %v3638 = vpop.f32.mrb[0].mxu0
  %v3639 = vadd.f32 %v451, %v3638
  %v3640 = vpop.f32.mrb[0].mxu0
  %3641 = vmatprep.mubr.bf16.mxu0 0
  %3642 = vmatmul.mubr.bf16.gmra.mrb[0].mxu0 %v2061
  %v3643 = vpop.f32.mrb[0].mxu0
  %v3644 = vadd.f32 %v451, %v3643
  %v3645 = vpop.f32.mrb[0].mxu0
  %v3646 = vpop.f32.mrb[0].mxu0
  %v3647 = vadd.f32 %v451, %v3646
  %v3648 = vpop.f32.mrb[0].mxu0
  %3649 = vmatprep.mubr.bf16.mxu0 0
  %3650 = vmatmul.mubr.bf16.gmra.mrb[0].mxu0 %v2064
  %v3651 = vpop.f32.mrb[0].mxu0
  %v3652 = vadd.f32 %v451, %v3651
  %v3653 = vpop.f32.mrb[0].mxu0
  %v3654 = vpop.f32.mrb[0].mxu0
  %v3655 = vadd.f32 %v451, %v3654
  %v3656 = vpop.f32.mrb[0].mxu0
  %3657 = vmatprep.mubr.bf16.mxu0 0
  %3658 = vmatmul.mubr.bf16.gmra.mrb[0].mxu0 %v2067
  %v3659 = vpop.f32.mrb[0].mxu0
  %v3660 = vadd.f32 %v451, %v3659
  %v3661 = vpop.f32.mrb[0].mxu0
  %v3662 = vpop.f32.mrb[0].mxu0
  %v3663 = vadd.f32 %v451, %v3662
  %v3664 = vpop.f32.mrb[0].mxu0
  %3665 = vmatprep.mubr.bf16.mxu0 0
  %3666 = vmatmul.mubr.bf16.gmra.mrb[0].mxu0 %v2070
  %v3667 = vpop.f32.mrb[0].mxu0
  %v3668 = vadd.f32 %v451, %v3667
  %v3669 = vpop.f32.mrb[0].mxu0
  %v3670 = vpop.f32.mrb[0].mxu0
  %v3671 = vadd.f32 %v451, %v3670
  %v3672 = vpop.f32.mrb[0].mxu0
  %3673 = vmatprep.mubr.bf16.mxu0 0
  %3674 = vmatmul.mubr.bf16.gmra.mrb[0].mxu0 %v2073
  %v3675 = vpop.f32.mrb[0].mxu0
  %v3676 = vadd.f32 %v451, %v3675
  %v3677 = vpop.f32.mrb[0].mxu0
  %v3678 = vpop.f32.mrb[0].mxu0
  %v3679 = vadd.f32 %v451, %v3678
  %v3680 = vpop.f32.mrb[0].mxu0
  %3681 = vmatprep.mubr.bf16.mxu0 0
  %3682 = vmatmul.mubr.bf16.gmra.mrb[0].mxu0 %v2076
  %v3683 = vpop.f32.mrb[0].mxu0
  %v3684 = vadd.f32 %v451, %v3683
  %v3685 = vpop.f32.mrb[0].mxu0
  %v3686 = vpop.f32.mrb[0].mxu0
  %v3687 = vadd.f32 %v451, %v3686
  %v3688 = vpop.f32.mrb[0].mxu0
  %3689 = vmatprep.mubr.bf16.mxu0 0
  %3690 = vmatmul.mubr.bf16.gmra.mrb[0].mxu0 %v2079
  %v3691 = vpop.f32.mrb[0].mxu0
  %v3692 = vadd.f32 %v451, %v3691
  %v3693 = vpop.f32.mrb[0].mxu0
  %v3694 = vpop.f32.mrb[0].mxu0
  %v3695 = vadd.f32 %v451, %v3694
  %v3696 = vpop.f32.mrb[0].mxu0
  %3697 = vmatprep.mubr.bf16.mxu0 0
  %3698 = vmatmul.mubr.bf16.gmra.mrb[0].mxu0 %v2082
  %v3699 = vpop.f32.mrb[0].mxu0
  %v3700 = vadd.f32 %v451, %v3699
  %v3701 = vpop.f32.mrb[0].mxu0
  %v3702 = vpop.f32.mrb[0].mxu0
  %v3703 = vadd.f32 %v451, %v3702
  %v3704 = vpop.f32.mrb[0].mxu0
  %3705 = vmatprep.mubr.bf16.mxu0 0
  %3706 = vmatmul.mubr.bf16.gmra.mrb[0].mxu0 %v2085
  %v3707 = vpop.f32.mrb[0].mxu0
  %v3708 = vadd.f32 %v451, %v3707
  %v3709 = vpop.f32.mrb[0].mxu0
  %v3710 = vpop.f32.mrb[0].mxu0
  %v3711 = vadd.f32 %v451, %v3710
  %v3712 = vpop.f32.mrb[0].mxu0
  %3713 = vmatprep.mubr.bf16.mxu0 0
  %3714 = vmatmul.mubr.bf16.gmra.mrb[0].mxu0 %v2088
  %v3715 = vpop.f32.mrb[0].mxu0
  %v3716 = vadd.f32 %v451, %v3715
  %v3717 = vpop.f32.mrb[0].mxu0
  %v3718 = vpop.f32.mrb[0].mxu0
  %v3719 = vadd.f32 %v451, %v3718
  %v3720 = vpop.f32.mrb[0].mxu0
  %3721 = vmatprep.mubr.bf16.mxu0 0
  %3722 = vmatmul.mubr.bf16.gmra.mrb[0].mxu0 %v2091
  %v3723 = vpop.f32.mrb[0].mxu0
  %v3724 = vadd.f32 %v451, %v3723
  %v3725 = vpop.f32.mrb[0].mxu0
  %v3726 = vpop.f32.mrb[0].mxu0
  %v3727 = vadd.f32 %v451, %v3726
  %v3728 = vpop.f32.mrb[0].mxu0
  %3729 = vdwg.mxu0
  %v3730 = vmax.f32 %v2132, 0.0
  %v3731 = vmax.f32 %v2135, 0.0
  %v3732 = vmax.f32 %v2140, 0.0
  %v3733 = vmax.f32 %v2143, 0.0
  %v3734 = vmax.f32 %v2148, 0.0
  %v3735 = vmax.f32 %v2151, 0.0
  %v3736 = vmax.f32 %v2156, 0.0
  %v3737 = vmax.f32 %v2159, 0.0
  %v3738 = vmax.f32 %v2164, 0.0
  %v3739 = vmax.f32 %v2167, 0.0
  %v3740 = vmax.f32 %v2172, 0.0
  %v3741 = vmax.f32 %v2175, 0.0
  %v3742 = vmax.f32 %v2180, 0.0
  %v3743 = vmax.f32 %v2183, 0.0
  %v3744 = vmax.f32 %v2188, 0.0
  %v3745 = vmax.f32 %v2191, 0.0
  %v3746 = vmax.f32 %v2196, 0.0
  %v3747 = vmax.f32 %v2199, 0.0
  %v3748 = vmax.f32 %v2204, 0.0
  %v3749 = vmax.f32 %v2207, 0.0
  %v3750 = vmax.f32 %v2212, 0.0
  %v3751 = vmax.f32 %v2215, 0.0
  %v3752 = vmax.f32 %v2220, 0.0
  %v3753 = vmax.f32 %v2223, 0.0
  %v3754 = vmax.f32 %v2228, 0.0
  %v3755 = vmax.f32 %v2231, 0.0
  %v3756 = vmax.f32 %v2236, 0.0
  %v3757 = vmax.f32 %v2239, 0.0
  %v3758 = vmax.f32 %v2244, 0.0
  %v3759 = vmax.f32 %v2247, 0.0
  %v3760 = vmax.f32 %v2252, 0.0
  %v3761 = vmax.f32 %v2255, 0.0
  %v3762 = vmax.f32 %v2260, 0.0
  %v3763 = vmax.f32 %v2263, 0.0
  %v3764 = vmax.f32 %v2268, 0.0
  %v3765 = vmax.f32 %v2271, 0.0
  %v3766 = vmax.f32 %v2276, 0.0
  %v3767 = vmax.f32 %v2279, 0.0
  %v3768 = vmax.f32 %v2284, 0.0
  %v3769 = vmax.f32 %v2287, 0.0
  %v3770 = vmax.f32 %v2292, 0.0
  %v3771 = vmax.f32 %v2295, 0.0
  %v3772 = vmax.f32 %v2300, 0.0
  %v3773 = vmax.f32 %v2303, 0.0
  %v3774 = vmax.f32 %v2308, 0.0
  %v3775 = vmax.f32 %v2311, 0.0
  %v3776 = vmax.f32 %v2316, 0.0
  %v3777 = vmax.f32 %v2319, 0.0
  %v3778 = vmax.f32 %v2324, 0.0
  %v3779 = vmax.f32 %v2327, 0.0
  %v3780 = vmax.f32 %v2332, 0.0
  %v3781 = vmax.f32 %v2335, 0.0
  %v3782 = vmax.f32 %v2340, 0.0
  %v3783 = vmax.f32 %v2343, 0.0
  %v3784 = vmax.f32 %v2348, 0.0
  %v3785 = vmax.f32 %v2351, 0.0
  %v3786 = vmax.f32 %v2356, 0.0
  %v3787 = vmax.f32 %v2359, 0.0
  %v3788 = vmax.f32 %v2364, 0.0
  %v3789 = vmax.f32 %v2367, 0.0
  %v3790 = vmax.f32 %v2372, 0.0
  %v3791 = vmax.f32 %v2375, 0.0
  %v3792 = vmax.f32 %v2380, 0.0
  %v3793 = vmax.f32 %v2383, 0.0
  %v3794 = vmax.f32 %v2388, 0.0
  %v3795 = vmax.f32 %v2391, 0.0
  %v3796 = vmax.f32 %v2396, 0.0
  %v3797 = vmax.f32 %v2399, 0.0
  %v3798 = vmax.f32 %v2404, 0.0
  %v3799 = vmax.f32 %v2407, 0.0
  %v3800 = vmax.f32 %v2412, 0.0
  %v3801 = vmax.f32 %v2415, 0.0
  %v3802 = vmax.f32 %v2420, 0.0
  %v3803 = vmax.f32 %v2423, 0.0
  %v3804 = vmax.f32 %v2428, 0.0
  %v3805 = vmax.f32 %v2431, 0.0
  %v3806 = vmax.f32 %v2436, 0.0
  %v3807 = vmax.f32 %v2439, 0.0
  %v3808 = vmax.f32 %v2444, 0.0
  %v3809 = vmax.f32 %v2447, 0.0
  %v3810 = vmax.f32 %v2452, 0.0
  %v3811 = vmax.f32 %v2455, 0.0
  %v3812 = vmax.f32 %v2460, 0.0
  %v3813 = vmax.f32 %v2463, 0.0
  %v3814 = vmax.f32 %v2468, 0.0
  %v3815 = vmax.f32 %v2471, 0.0
  %v3816 = vmax.f32 %v2476, 0.0
  %v3817 = vmax.f32 %v2479, 0.0
  %v3818 = vmax.f32 %v2484, 0.0
  %v3819 = vmax.f32 %v2487, 0.0
  %v3820 = vmax.f32 %v2492, 0.0
  %v3821 = vmax.f32 %v2495, 0.0
  %v3822 = vmax.f32 %v2500, 0.0
  %v3823 = vmax.f32 %v2503, 0.0
  %v3824 = vmax.f32 %v2508, 0.0
  %v3825 = vmax.f32 %v2511, 0.0
  %v3826 = vmax.f32 %v2516, 0.0
  %v3827 = vmax.f32 %v2519, 0.0
  %v3828 = vmax.f32 %v2524, 0.0
  %v3829 = vmax.f32 %v2527, 0.0
  %v3830 = vmax.f32 %v2532, 0.0
  %v3831 = vmax.f32 %v2535, 0.0
  %v3832 = vmax.f32 %v2540, 0.0
  %v3833 = vmax.f32 %v2543, 0.0
  %v3834 = vmax.f32 %v2548, 0.0
  %v3835 = vmax.f32 %v2551, 0.0
  %v3836 = vmax.f32 %v2556, 0.0
  %v3837 = vmax.f32 %v2559, 0.0
  %v3838 = vmax.f32 %v2564, 0.0
  %v3839 = vmax.f32 %v2567, 0.0
  %v3840 = vmax.f32 %v2572, 0.0
  %v3841 = vmax.f32 %v2575, 0.0
  %v3842 = vmax.f32 %v2580, 0.0
  %v3843 = vmax.f32 %v2583, 0.0
  %v3844 = vmax.f32 %v2588, 0.0
  %v3845 = vmax.f32 %v2591, 0.0
  %v3846 = vmax.f32 %v2596, 0.0
  %v3847 = vmax.f32 %v2599, 0.0
  %v3848 = vmax.f32 %v2604, 0.0
  %v3849 = vmax.f32 %v2607, 0.0
  %v3850 = vmax.f32 %v2612, 0.0
  %v3851 = vmax.f32 %v2615, 0.0
  %v3852 = vmax.f32 %v2620, 0.0
  %v3853 = vmax.f32 %v2623, 0.0
  %v3854 = vmax.f32 %v2628, 0.0
  %v3855 = vmax.f32 %v2631, 0.0
  %v3856 = vmax.f32 %v2636, 0.0
  %v3857 = vmax.f32 %v2639, 0.0
  %v3858 = vmax.f32 %v2644, 0.0
  %v3859 = vmax.f32 %v2647, 0.0
  %v3860 = vmax.f32 %v2652, 0.0
  %v3861 = vmax.f32 %v2655, 0.0
  %v3862 = vmax.f32 %v2660, 0.0
  %v3863 = vmax.f32 %v2663, 0.0
  %v3864 = vmax.f32 %v2668, 0.0
  %v3865 = vmax.f32 %v2671, 0.0
  %v3866 = vmax.f32 %v2676, 0.0
  %v3867 = vmax.f32 %v2679, 0.0
  %v3868 = vmax.f32 %v2684, 0.0
  %v3869 = vmax.f32 %v2687, 0.0
  %v3870 = vmax.f32 %v2692, 0.0
  %v3871 = vmax.f32 %v2695, 0.0
  %v3872 = vmax.f32 %v2700, 0.0
  %v3873 = vmax.f32 %v2703, 0.0
  %v3874 = vmax.f32 %v2708, 0.0
  %v3875 = vmax.f32 %v2711, 0.0
  %v3876 = vmax.f32 %v2716, 0.0
  %v3877 = vmax.f32 %v2719, 0.0
  %v3878 = vmax.f32 %v2724, 0.0
  %v3879 = vmax.f32 %v2727, 0.0
  %v3880 = vmax.f32 %v2732, 0.0
  %v3881 = vmax.f32 %v2735, 0.0
  %v3882 = vmax.f32 %v2740, 0.0
  %v3883 = vmax.f32 %v2743, 0.0
  %v3884 = vmax.f32 %v2748, 0.0
  %v3885 = vmax.f32 %v2751, 0.0
  %v3886 = vmax.f32 %v2756, 0.0
  %v3887 = vmax.f32 %v2759, 0.0
  %v3888 = vmax.f32 %v2764, 0.0
  %v3889 = vmax.f32 %v2767, 0.0
  %v3890 = vmax.f32 %v2772, 0.0
  %v3891 = vmax.f32 %v2775, 0.0
  %v3892 = vmax.f32 %v2780, 0.0
  %v3893 = vmax.f32 %v2783, 0.0
  %v3894 = vmax.f32 %v2788, 0.0
  %v3895 = vmax.f32 %v2791, 0.0
  %v3896 = vmax.f32 %v2796, 0.0
  %v3897 = vmax.f32 %v2799, 0.0
  %v3898 = vmax.f32 %v2804, 0.0
  %v3899 = vmax.f32 %v2807, 0.0
  %v3900 = vmax.f32 %v2812, 0.0
  %v3901 = vmax.f32 %v2815, 0.0
  %v3902 = vmax.f32 %v2820, 0.0
  %v3903 = vmax.f32 %v2823, 0.0
  %v3904 = vmax.f32 %v2828, 0.0
  %v3905 = vmax.f32 %v2831, 0.0
  %v3906 = vmax.f32 %v2836, 0.0
  %v3907 = vmax.f32 %v2839, 0.0
  %v3908 = vmax.f32 %v2844, 0.0
  %v3909 = vmax.f32 %v2847, 0.0
  %v3910 = vmax.f32 %v2852, 0.0
  %v3911 = vmax.f32 %v2855, 0.0
  %v3912 = vmax.f32 %v2860, 0.0
  %v3913 = vmax.f32 %v2863, 0.0
  %v3914 = vmax.f32 %v2868, 0.0
  %v3915 = vmax.f32 %v2871, 0.0
  %v3916 = vmax.f32 %v2876, 0.0
  %v3917 = vmax.f32 %v2879, 0.0
  %v3918 = vmax.f32 %v2884, 0.0
  %v3919 = vmax.f32 %v2887, 0.0
  %v3920 = vmax.f32 %v2892, 0.0
  %v3921 = vmax.f32 %v2895, 0.0
  %v3922 = vmax.f32 %v2900, 0.0
  %v3923 = vmax.f32 %v2903, 0.0
  %v3924 = vmax.f32 %v2908, 0.0
  %v3925 = vmax.f32 %v2911, 0.0
  %v3926 = vmax.f32 %v2916, 0.0
  %v3927 = vmax.f32 %v2919, 0.0
  %v3928 = vmax.f32 %v2924, 0.0
  %v3929 = vmax.f32 %v2927, 0.0
  %v3930 = vmax.f32 %v2932, 0.0
  %v3931 = vmax.f32 %v2935, 0.0
  %v3932 = vmax.f32 %v2940, 0.0
  %v3933 = vmax.f32 %v2943, 0.0
  %v3934 = vmax.f32 %v2948, 0.0
  %v3935 = vmax.f32 %v2951, 0.0
  %v3936 = vmax.f32 %v2956, 0.0
  %v3937 = vmax.f32 %v2959, 0.0
  %v3938 = vmax.f32 %v2964, 0.0
  %v3939 = vmax.f32 %v2967, 0.0
  %v3940 = vmax.f32 %v2972, 0.0
  %v3941 = vmax.f32 %v2975, 0.0
  %v3942 = vmax.f32 %v2980, 0.0
  %v3943 = vmax.f32 %v2983, 0.0
  %v3944 = vmax.f32 %v2988, 0.0
  %v3945 = vmax.f32 %v2991, 0.0
  %v3946 = vmax.f32 %v2996, 0.0
  %v3947 = vmax.f32 %v2999, 0.0
  %v3948 = vmax.f32 %v3004, 0.0
  %v3949 = vmax.f32 %v3007, 0.0
  %v3950 = vmax.f32 %v3012, 0.0
  %v3951 = vmax.f32 %v3015, 0.0
  %v3952 = vmax.f32 %v3020, 0.0
  %v3953 = vmax.f32 %v3023, 0.0
  %v3954 = vmax.f32 %v3028, 0.0
  %v3955 = vmax.f32 %v3031, 0.0
  %v3956 = vmax.f32 %v3036, 0.0
  %v3957 = vmax.f32 %v3039, 0.0
  %v3958 = vmax.f32 %v3044, 0.0
  %v3959 = vmax.f32 %v3047, 0.0
  %v3960 = vmax.f32 %v3052, 0.0
  %v3961 = vmax.f32 %v3055, 0.0
  %v3962 = vmax.f32 %v3060, 0.0
  %v3963 = vmax.f32 %v3063, 0.0
  %v3964 = vmax.f32 %v3068, 0.0
  %v3965 = vmax.f32 %v3071, 0.0
  %v3966 = vmax.f32 %v3076, 0.0
  %v3967 = vmax.f32 %v3079, 0.0
  %v3968 = vmax.f32 %v3084, 0.0
  %v3969 = vmax.f32 %v3087, 0.0
  %v3970 = vmax.f32 %v3092, 0.0
  %v3971 = vmax.f32 %v3095, 0.0
  %v3972 = vmax.f32 %v3100, 0.0
  %v3973 = vmax.f32 %v3103, 0.0
  %v3974 = vmax.f32 %v3108, 0.0
  %v3975 = vmax.f32 %v3111, 0.0
  %v3976 = vmax.f32 %v3116, 0.0
  %v3977 = vmax.f32 %v3119, 0.0
  %v3978 = vmax.f32 %v3124, 0.0
  %v3979 = vmax.f32 %v3127, 0.0
  %v3980 = vmax.f32 %v3132, 0.0
  %v3981 = vmax.f32 %v3135, 0.0
  %v3982 = vmax.f32 %v3140, 0.0
  %v3983 = vmax.f32 %v3143, 0.0
  %v3984 = vmax.f32 %v3148, 0.0
  %v3985 = vmax.f32 %v3151, 0.0
  %v3986 = vmax.f32 %v3156, 0.0
  %v3987 = vmax.f32 %v3159, 0.0
  %v3988 = vmax.f32 %v3164, 0.0
  %v3989 = vmax.f32 %v3167, 0.0
  %v3990 = vmax.f32 %v3172, 0.0
  %v3991 = vmax.f32 %v3175, 0.0
  %v3992 = vmax.f32 %v3180, 0.0
  %v3993 = vmax.f32 %v3183, 0.0
  %v3994 = vmax.f32 %v3188, 0.0
  %v3995 = vmax.f32 %v3191, 0.0
  %v3996 = vmax.f32 %v3196, 0.0
  %v3997 = vmax.f32 %v3199, 0.0
  %v3998 = vmax.f32 %v3204, 0.0
  %v3999 = vmax.f32 %v3207, 0.0
  %v4000 = vmax.f32 %v3212, 0.0
  %v4001 = vmax.f32 %v3215, 0.0
  %v4002 = vmax.f32 %v3220, 0.0
  %v4003 = vmax.f32 %v3223, 0.0
  %v4004 = vmax.f32 %v3228, 0.0
  %v4005 = vmax.f32 %v3231, 0.0
  %v4006 = vmax.f32 %v3236, 0.0
  %v4007 = vmax.f32 %v3239, 0.0
  %v4008 = vmax.f32 %v3244, 0.0
  %v4009 = vmax.f32 %v3247, 0.0
  %v4010 = vmax.f32 %v3252, 0.0
  %v4011 = vmax.f32 %v3255, 0.0
  %v4012 = vmax.f32 %v3260, 0.0
  %v4013 = vmax.f32 %v3263, 0.0
  %v4014 = vmax.f32 %v3268, 0.0
  %v4015 = vmax.f32 %v3271, 0.0
  %v4016 = vmax.f32 %v3276, 0.0
  %v4017 = vmax.f32 %v3279, 0.0
  %v4018 = vmax.f32 %v3284, 0.0
  %v4019 = vmax.f32 %v3287, 0.0
  %v4020 = vmax.f32 %v3292, 0.0
  %v4021 = vmax.f32 %v3295, 0.0
  %v4022 = vmax.f32 %v3300, 0.0
  %v4023 = vmax.f32 %v3303, 0.0
  %v4024 = vmax.f32 %v3308, 0.0
  %v4025 = vmax.f32 %v3311, 0.0
  %v4026 = vmax.f32 %v3316, 0.0
  %v4027 = vmax.f32 %v3319, 0.0
  %v4028 = vmax.f32 %v3324, 0.0
  %v4029 = vmax.f32 %v3327, 0.0
  %v4030 = vmax.f32 %v3332, 0.0
  %v4031 = vmax.f32 %v3335, 0.0
  %v4032 = vmax.f32 %v3340, 0.0
  %v4033 = vmax.f32 %v3343, 0.0
  %v4034 = vmax.f32 %v3348, 0.0
  %v4035 = vmax.f32 %v3351, 0.0
  %v4036 = vmax.f32 %v3356, 0.0
  %v4037 = vmax.f32 %v3359, 0.0
  %v4038 = vmax.f32 %v3364, 0.0
  %v4039 = vmax.f32 %v3367, 0.0
  %v4040 = vmax.f32 %v3372, 0.0
  %v4041 = vmax.f32 %v3375, 0.0
  %v4042 = vmax.f32 %v3380, 0.0
  %v4043 = vmax.f32 %v3383, 0.0
  %v4044 = vmax.f32 %v3388, 0.0
  %v4045 = vmax.f32 %v3391, 0.0
  %v4046 = vmax.f32 %v3396, 0.0
  %v4047 = vmax.f32 %v3399, 0.0
  %v4048 = vmax.f32 %v3404, 0.0
  %v4049 = vmax.f32 %v3407, 0.0
  %v4050 = vmax.f32 %v3412, 0.0
  %v4051 = vmax.f32 %v3415, 0.0
  %v4052 = vmax.f32 %v3420, 0.0
  %v4053 = vmax.f32 %v3423, 0.0
  %v4054 = vmax.f32 %v3428, 0.0
  %v4055 = vmax.f32 %v3431, 0.0
  %v4056 = vmax.f32 %v3436, 0.0
  %v4057 = vmax.f32 %v3439, 0.0
  %v4058 = vmax.f32 %v3444, 0.0
  %v4059 = vmax.f32 %v3447, 0.0
  %v4060 = vmax.f32 %v3452, 0.0
  %v4061 = vmax.f32 %v3455, 0.0
  %v4062 = vmax.f32 %v3460, 0.0
  %v4063 = vmax.f32 %v3463, 0.0
  %v4064 = vmax.f32 %v3468, 0.0
  %v4065 = vmax.f32 %v3471, 0.0
  %v4066 = vmax.f32 %v3476, 0.0
  %v4067 = vmax.f32 %v3479, 0.0
  %v4068 = vmax.f32 %v3484, 0.0
  %v4069 = vmax.f32 %v3487, 0.0
  %v4070 = vmax.f32 %v3492, 0.0
  %v4071 = vmax.f32 %v3495, 0.0
  %v4072 = vmax.f32 %v3500, 0.0
  %v4073 = vmax.f32 %v3503, 0.0
  %v4074 = vmax.f32 %v3508, 0.0
  %v4075 = vmax.f32 %v3511, 0.0
  %v4076 = vmax.f32 %v3516, 0.0
  %v4077 = vmax.f32 %v3519, 0.0
  %v4078 = vmax.f32 %v3524, 0.0
  %v4079 = vmax.f32 %v3527, 0.0
  %v4080 = vmax.f32 %v3532, 0.0
  %v4081 = vmax.f32 %v3535, 0.0
  %v4082 = vmax.f32 %v3540, 0.0
  %v4083 = vmax.f32 %v3543, 0.0
  %v4084 = vmax.f32 %v3548, 0.0
  %v4085 = vmax.f32 %v3551, 0.0
  %v4086 = vmax.f32 %v3556, 0.0
  %v4087 = vmax.f32 %v3559, 0.0
  %v4088 = vmax.f32 %v3564, 0.0
  %v4089 = vmax.f32 %v3567, 0.0
  %v4090 = vmax.f32 %v3572, 0.0
  %v4091 = vmax.f32 %v3575, 0.0
  %v4092 = vmax.f32 %v3580, 0.0
  %v4093 = vmax.f32 %v3583, 0.0
  %v4094 = vmax.f32 %v3588, 0.0
  %v4095 = vmax.f32 %v3591, 0.0
  %v4096 = vmax.f32 %v3596, 0.0
  %v4097 = vmax.f32 %v3599, 0.0
  %v4098 = vmax.f32 %v3604, 0.0
  %v4099 = vmax.f32 %v3607, 0.0
  %v4100 = vmax.f32 %v3612, 0.0
  %v4101 = vmax.f32 %v3615, 0.0
  %v4102 = vmax.f32 %v3620, 0.0
  %v4103 = vmax.f32 %v3623, 0.0
  %v4104 = vmax.f32 %v3628, 0.0
  %v4105 = vmax.f32 %v3631, 0.0
  %v4106 = vmax.f32 %v3636, 0.0
  %v4107 = vmax.f32 %v3639, 0.0
  %v4108 = vmax.f32 %v3644, 0.0
  %v4109 = vmax.f32 %v3647, 0.0
  %v4110 = vmax.f32 %v3652, 0.0
  %v4111 = vmax.f32 %v3655, 0.0
  %v4112 = vmax.f32 %v3660, 0.0
  %v4113 = vmax.f32 %v3663, 0.0
  %v4114 = vmax.f32 %v3668, 0.0
  %v4115 = vmax.f32 %v3671, 0.0
  %v4116 = vmax.f32 %v3676, 0.0
  %v4117 = vmax.f32 %v3679, 0.0
  %v4118 = vmax.f32 %v3684, 0.0
  %v4119 = vmax.f32 %v3687, 0.0
  %v4120 = vmax.f32 %v3692, 0.0
  %v4121 = vmax.f32 %v3695, 0.0
  %v4122 = vmax.f32 %v3700, 0.0
  %v4123 = vmax.f32 %v3703, 0.0
  %v4124 = vmax.f32 %v3708, 0.0
  %v4125 = vmax.f32 %v3711, 0.0
  %v4126 = vmax.f32 %v3716, 0.0
  %v4127 = vmax.f32 %v3719, 0.0
  %v4128 = vmax.f32 %v3724, 0.0
  %v4129 = vmax.f32 %v3727, 0.0
  %v4130 = vpack.c.bf16 %v3731, %v3730
  %v4131 = vpack.c.bf16 %v3733, %v3732
  %v4132 = vpack.c.bf16 %v3735, %v3734
  %v4133 = vpack.c.bf16 %v3737, %v3736
  %v4134 = vpack.c.bf16 %v3739, %v3738
  %v4135 = vpack.c.bf16 %v3741, %v3740
  %v4136 = vpack.c.bf16 %v3743, %v3742
  %v4137 = vpack.c.bf16 %v3745, %v3744
  %v4138 = vpack.c.bf16 %v3747, %v3746
  %v4139 = vpack.c.bf16 %v3749, %v3748
  %v4140 = vpack.c.bf16 %v3751, %v3750
  %v4141 = vpack.c.bf16 %v3753, %v3752
  %v4142 = vpack.c.bf16 %v3755, %v3754
  %v4143 = vpack.c.bf16 %v3757, %v3756
  %v4144 = vpack.c.bf16 %v3759, %v3758
  %v4145 = vpack.c.bf16 %v3761, %v3760
  %v4146 = vpack.c.bf16 %v3763, %v3762
  %v4147 = vpack.c.bf16 %v3765, %v3764
  %v4148 = vpack.c.bf16 %v3767, %v3766
  %v4149 = vpack.c.bf16 %v3769, %v3768
  %v4150 = vpack.c.bf16 %v3771, %v3770
  %v4151 = vpack.c.bf16 %v3773, %v3772
  %v4152 = vpack.c.bf16 %v3775, %v3774
  %v4153 = vpack.c.bf16 %v3777, %v3776
  %v4154 = vpack.c.bf16 %v3779, %v3778
  %v4155 = vpack.c.bf16 %v3781, %v3780
  %v4156 = vpack.c.bf16 %v3783, %v3782
  %v4157 = vpack.c.bf16 %v3785, %v3784
  %v4158 = vpack.c.bf16 %v3787, %v3786
  %v4159 = vpack.c.bf16 %v3789, %v3788
  %v4160 = vpack.c.bf16 %v3791, %v3790
  %v4161 = vpack.c.bf16 %v3793, %v3792
  %v4162 = vpack.c.bf16 %v3795, %v3794
  %v4163 = vpack.c.bf16 %v3797, %v3796
  %v4164 = vpack.c.bf16 %v3799, %v3798
  %v4165 = vpack.c.bf16 %v3801, %v3800
  %v4166 = vpack.c.bf16 %v3803, %v3802
  %v4167 = vpack.c.bf16 %v3805, %v3804
  %v4168 = vpack.c.bf16 %v3807, %v3806
  %v4169 = vpack.c.bf16 %v3809, %v3808
  %v4170 = vpack.c.bf16 %v3811, %v3810
  %v4171 = vpack.c.bf16 %v3813, %v3812
  %v4172 = vpack.c.bf16 %v3815, %v3814
  %v4173 = vpack.c.bf16 %v3817, %v3816
  %v4174 = vpack.c.bf16 %v3819, %v3818
  %v4175 = vpack.c.bf16 %v3821, %v3820
  %v4176 = vpack.c.bf16 %v3823, %v3822
  %v4177 = vpack.c.bf16 %v3825, %v3824
  %v4178 = vpack.c.bf16 %v3827, %v3826
  %v4179 = vpack.c.bf16 %v3829, %v3828
  %v4180 = vpack.c.bf16 %v3831, %v3830
  %v4181 = vpack.c.bf16 %v3833, %v3832
  %v4182 = vpack.c.bf16 %v3835, %v3834
  %v4183 = vpack.c.bf16 %v3837, %v3836
  %v4184 = vpack.c.bf16 %v3839, %v3838
  %v4185 = vpack.c.bf16 %v3841, %v3840
  %v4186 = vpack.c.bf16 %v3843, %v3842
  %v4187 = vpack.c.bf16 %v3845, %v3844
  %v4188 = vpack.c.bf16 %v3847, %v3846
  %v4189 = vpack.c.bf16 %v3849, %v3848
  %v4190 = vpack.c.bf16 %v3851, %v3850
  %v4191 = vpack.c.bf16 %v3853, %v3852
  %v4192 = vpack.c.bf16 %v3855, %v3854
  %v4193 = vpack.c.bf16 %v3857, %v3856
  %v4194 = vpack.c.bf16 %v3859, %v3858
  %v4195 = vpack.c.bf16 %v3861, %v3860
  %v4196 = vpack.c.bf16 %v3863, %v3862
  %v4197 = vpack.c.bf16 %v3865, %v3864
  %v4198 = vpack.c.bf16 %v3867, %v3866
  %v4199 = vpack.c.bf16 %v3869, %v3868
  %v4200 = vpack.c.bf16 %v3871, %v3870
  %v4201 = vpack.c.bf16 %v3873, %v3872
  %v4202 = vpack.c.bf16 %v3875, %v3874
  %v4203 = vpack.c.bf16 %v3877, %v3876
  %v4204 = vpack.c.bf16 %v3879, %v3878
  %v4205 = vpack.c.bf16 %v3881, %v3880
  %v4206 = vpack.c.bf16 %v3883, %v3882
  %v4207 = vpack.c.bf16 %v3885, %v3884
  %v4208 = vpack.c.bf16 %v3887, %v3886
  %v4209 = vpack.c.bf16 %v3889, %v3888
  %v4210 = vpack.c.bf16 %v3891, %v3890
  %v4211 = vpack.c.bf16 %v3893, %v3892
  %v4212 = vpack.c.bf16 %v3895, %v3894
  %v4213 = vpack.c.bf16 %v3897, %v3896
  %v4214 = vpack.c.bf16 %v3899, %v3898
  %v4215 = vpack.c.bf16 %v3901, %v3900
  %v4216 = vpack.c.bf16 %v3903, %v3902
  %v4217 = vpack.c.bf16 %v3905, %v3904
  %v4218 = vpack.c.bf16 %v3907, %v3906
  %v4219 = vpack.c.bf16 %v3909, %v3908
  %v4220 = vpack.c.bf16 %v3911, %v3910
  %v4221 = vpack.c.bf16 %v3913, %v3912
  %v4222 = vpack.c.bf16 %v3915, %v3914
  %v4223 = vpack.c.bf16 %v3917, %v3916
  %v4224 = vpack.c.bf16 %v3919, %v3918
  %v4225 = vpack.c.bf16 %v3921, %v3920
  %v4226 = vpack.c.bf16 %v3923, %v3922
  %v4227 = vpack.c.bf16 %v3925, %v3924
  %v4228 = vpack.c.bf16 %v3927, %v3926
  %v4229 = vpack.c.bf16 %v3929, %v3928
  %v4230 = vpack.c.bf16 %v3931, %v3930
  %v4231 = vpack.c.bf16 %v3933, %v3932
  %v4232 = vpack.c.bf16 %v3935, %v3934
  %v4233 = vpack.c.bf16 %v3937, %v3936
  %v4234 = vpack.c.bf16 %v3939, %v3938
  %v4235 = vpack.c.bf16 %v3941, %v3940
  %v4236 = vpack.c.bf16 %v3943, %v3942
  %v4237 = vpack.c.bf16 %v3945, %v3944
  %v4238 = vpack.c.bf16 %v3947, %v3946
  %v4239 = vpack.c.bf16 %v3949, %v3948
  %v4240 = vpack.c.bf16 %v3951, %v3950
  %v4241 = vpack.c.bf16 %v3953, %v3952
  %v4242 = vpack.c.bf16 %v3955, %v3954
  %v4243 = vpack.c.bf16 %v3957, %v3956
  %v4244 = vpack.c.bf16 %v3959, %v3958
  %v4245 = vpack.c.bf16 %v3961, %v3960
  %v4246 = vpack.c.bf16 %v3963, %v3962
  %v4247 = vpack.c.bf16 %v3965, %v3964
  %v4248 = vpack.c.bf16 %v3967, %v3966
  %v4249 = vpack.c.bf16 %v3969, %v3968
  %v4250 = vpack.c.bf16 %v3971, %v3970
  %v4251 = vpack.c.bf16 %v3973, %v3972
  %v4252 = vpack.c.bf16 %v3975, %v3974
  %v4253 = vpack.c.bf16 %v3977, %v3976
  %v4254 = vpack.c.bf16 %v3979, %v3978
  %v4255 = vpack.c.bf16 %v3981, %v3980
  %v4256 = vpack.c.bf16 %v3983, %v3982
  %v4257 = vpack.c.bf16 %v3985, %v3984
  %v4258 = vpack.c.bf16 %v3987, %v3986
  %v4259 = vpack.c.bf16 %v3989, %v3988
  %v4260 = vpack.c.bf16 %v3991, %v3990
  %v4261 = vpack.c.bf16 %v3993, %v3992
  %v4262 = vpack.c.bf16 %v3995, %v3994
  %v4263 = vpack.c.bf16 %v3997, %v3996
  %v4264 = vpack.c.bf16 %v3999, %v3998
  %v4265 = vpack.c.bf16 %v4001, %v4000
  %v4266 = vpack.c.bf16 %v4003, %v4002
  %v4267 = vpack.c.bf16 %v4005, %v4004
  %v4268 = vpack.c.bf16 %v4007, %v4006
  %v4269 = vpack.c.bf16 %v4009, %v4008
  %v4270 = vpack.c.bf16 %v4011, %v4010
  %v4271 = vpack.c.bf16 %v4013, %v4012
  %v4272 = vpack.c.bf16 %v4015, %v4014
  %v4273 = vpack.c.bf16 %v4017, %v4016
  %v4274 = vpack.c.bf16 %v4019, %v4018
  %v4275 = vpack.c.bf16 %v4021, %v4020
  %v4276 = vpack.c.bf16 %v4023, %v4022
  %v4277 = vpack.c.bf16 %v4025, %v4024
  %v4278 = vpack.c.bf16 %v4027, %v4026
  %v4279 = vpack.c.bf16 %v4029, %v4028
  %v4280 = vpack.c.bf16 %v4031, %v4030
  %v4281 = vpack.c.bf16 %v4033, %v4032
  %v4282 = vpack.c.bf16 %v4035, %v4034
  %v4283 = vpack.c.bf16 %v4037, %v4036
  %v4284 = vpack.c.bf16 %v4039, %v4038
  %v4285 = vpack.c.bf16 %v4041, %v4040
  %v4286 = vpack.c.bf16 %v4043, %v4042
  %v4287 = vpack.c.bf16 %v4045, %v4044
  %v4288 = vpack.c.bf16 %v4047, %v4046
  %v4289 = vpack.c.bf16 %v4049, %v4048
  %v4290 = vpack.c.bf16 %v4051, %v4050
  %v4291 = vpack.c.bf16 %v4053, %v4052
  %v4292 = vpack.c.bf16 %v4055, %v4054
  %v4293 = vpack.c.bf16 %v4057, %v4056
  %v4294 = vpack.c.bf16 %v4059, %v4058
  %v4295 = vpack.c.bf16 %v4061, %v4060
  %v4296 = vpack.c.bf16 %v4063, %v4062
  %v4297 = vpack.c.bf16 %v4065, %v4064
  %v4298 = vpack.c.bf16 %v4067, %v4066
  %v4299 = vpack.c.bf16 %v4069, %v4068
  %v4300 = vpack.c.bf16 %v4071, %v4070
  %v4301 = vpack.c.bf16 %v4073, %v4072
  %v4302 = vpack.c.bf16 %v4075, %v4074
  %v4303 = vpack.c.bf16 %v4077, %v4076
  %v4304 = vpack.c.bf16 %v4079, %v4078
  %v4305 = vpack.c.bf16 %v4081, %v4080
  %v4306 = vpack.c.bf16 %v4083, %v4082
  %v4307 = vpack.c.bf16 %v4085, %v4084
  %v4308 = vpack.c.bf16 %v4087, %v4086
  %v4309 = vpack.c.bf16 %v4089, %v4088
  %v4310 = vpack.c.bf16 %v4091, %v4090
  %v4311 = vpack.c.bf16 %v4093, %v4092
  %v4312 = vpack.c.bf16 %v4095, %v4094
  %v4313 = vpack.c.bf16 %v4097, %v4096
  %v4314 = vpack.c.bf16 %v4099, %v4098
  %v4315 = vpack.c.bf16 %v4101, %v4100
  %v4316 = vpack.c.bf16 %v4103, %v4102
  %v4317 = vpack.c.bf16 %v4105, %v4104
  %v4318 = vpack.c.bf16 %v4107, %v4106
  %v4319 = vpack.c.bf16 %v4109, %v4108
  %v4320 = vpack.c.bf16 %v4111, %v4110
  %v4321 = vpack.c.bf16 %v4113, %v4112
  %v4322 = vpack.c.bf16 %v4115, %v4114
  %v4323 = vpack.c.bf16 %v4117, %v4116
  %v4324 = vpack.c.bf16 %v4119, %v4118
  %v4325 = vpack.c.bf16 %v4121, %v4120
  %v4326 = vpack.c.bf16 %v4123, %v4122
  %v4327 = vpack.c.bf16 %v4125, %v4124
  %v4328 = vpack.c.bf16 %v4127, %v4126
  %v4329 = vpack.c.bf16 %v4129, %v4128
  %vm4330 = vcmask 261120
  %4331 = vst.msk [vmem:[#allocation2] sm:$0xff] %vm4330, %v4130
  %4332 = vst.msk [vmem:[#allocation2 + $0x8] sm:$0xff] %vm4330, %v4131
  %4333 = vst.msk [vmem:[#allocation2 + $0x10] sm:$0xff] %vm4330, %v4132
  %4334 = vst.msk [vmem:[#allocation2 + $0x18] sm:$0xff] %vm4330, %v4133
  %4335 = vst.msk [vmem:[#allocation2 + $0x20] sm:$0xff] %vm4330, %v4134
  %4336 = vst.msk [vmem:[#allocation2 + $0x28] sm:$0xff] %vm4330, %v4135
  %4337 = vst.msk [vmem:[#allocation2 + $0x30] sm:$0xff] %vm4330, %v4136
  %4338 = vst.msk [vmem:[#allocation2 + $0x38] sm:$0xff] %vm4330, %v4137
  %4339 = vst.msk [vmem:[#allocation2 + $0x40] sm:$0xff] %vm4330, %v4138
  %4340 = vst.msk [vmem:[#allocation2 + $0x48] sm:$0xff] %vm4330, %v4139
  %4341 = vst.msk [vmem:[#allocation2 + $0x50] sm:$0xff] %vm4330, %v4140
  %4342 = vst.msk [vmem:[#allocation2 + $0x58] sm:$0xff] %vm4330, %v4141
  %4343 = vst.msk [vmem:[#allocation2 + $0x60] sm:$0xff] %vm4330, %v4142
  %4344 = vst.msk [vmem:[#allocation2 + $0x68] sm:$0xff] %vm4330, %v4143
  %4345 = vst.msk [vmem:[#allocation2 + $0x70] sm:$0xff] %vm4330, %v4144
  %4346 = vst.msk [vmem:[#allocation2 + $0x78] sm:$0xff] %vm4330, %v4145
  %4347 = vst.msk [vmem:[#allocation2 + $0x80] sm:$0xff] %vm4330, %v4146
  %4348 = vst.msk [vmem:[#allocation2 + $0x88] sm:$0xff] %vm4330, %v4147
  %4349 = vst.msk [vmem:[#allocation2 + $0x90] sm:$0xff] %vm4330, %v4148
  %4350 = vst.msk [vmem:[#allocation2 + $0x98] sm:$0xff] %vm4330, %v4149
  %4351 = vst.msk [vmem:[#allocation2 + $0xa0] sm:$0xff] %vm4330, %v4150
  %4352 = vst.msk [vmem:[#allocation2 + $0xa8] sm:$0xff] %vm4330, %v4151
  %4353 = vst.msk [vmem:[#allocation2 + $0xb0] sm:$0xff] %vm4330, %v4152
  %4354 = vst.msk [vmem:[#allocation2 + $0xb8] sm:$0xff] %vm4330, %v4153
  %4355 = vst.msk [vmem:[#allocation2 + $0xc0] sm:$0xff] %vm4330, %v4154
  %4356 = vst.msk [vmem:[#allocation2 + $0xc8] sm:$0xff] %vm4330, %v4155
  %4357 = vst.msk [vmem:[#allocation2 + $0xd0] sm:$0xff] %vm4330, %v4156
  %4358 = vst.msk [vmem:[#allocation2 + $0xd8] sm:$0xff] %vm4330, %v4157
  %4359 = vst.msk [vmem:[#allocation2 + $0xe0] sm:$0xff] %vm4330, %v4158
  %4360 = vst.msk [vmem:[#allocation2 + $0xe8] sm:$0xff] %vm4330, %v4159
  %4361 = vst.msk [vmem:[#allocation2 + $0xf0] sm:$0xff] %vm4330, %v4160
  %4362 = vst.msk [vmem:[#allocation2 + $0xf8] sm:$0xff] %vm4330, %v4161
  %4363 = vst.msk [vmem:[#allocation2 + $0x100] sm:$0xff] %vm4330, %v4162
  %4364 = vst.msk [vmem:[#allocation2 + $0x108] sm:$0xff] %vm4330, %v4163
  %4365 = vst.msk [vmem:[#allocation2 + $0x110] sm:$0xff] %vm4330, %v4164
  %4366 = vst.msk [vmem:[#allocation2 + $0x118] sm:$0xff] %vm4330, %v4165
  %4367 = vst.msk [vmem:[#allocation2 + $0x120] sm:$0xff] %vm4330, %v4166
  %4368 = vst.msk [vmem:[#allocation2 + $0x128] sm:$0xff] %vm4330, %v4167
  %4369 = vst.msk [vmem:[#allocation2 + $0x130] sm:$0xff] %vm4330, %v4168
  %4370 = vst.msk [vmem:[#allocation2 + $0x138] sm:$0xff] %vm4330, %v4169
  %4371 = vst.msk [vmem:[#allocation2 + $0x140] sm:$0xff] %vm4330, %v4170
  %4372 = vst.msk [vmem:[#allocation2 + $0x148] sm:$0xff] %vm4330, %v4171
  %4373 = vst.msk [vmem:[#allocation2 + $0x150] sm:$0xff] %vm4330, %v4172
  %4374 = vst.msk [vmem:[#allocation2 + $0x158] sm:$0xff] %vm4330, %v4173
  %4375 = vst.msk [vmem:[#allocation2 + $0x160] sm:$0xff] %vm4330, %v4174
  %4376 = vst.msk [vmem:[#allocation2 + $0x168] sm:$0xff] %vm4330, %v4175
  %4377 = vst.msk [vmem:[#allocation2 + $0x170] sm:$0xff] %vm4330, %v4176
  %4378 = vst.msk [vmem:[#allocation2 + $0x178] sm:$0xff] %vm4330, %v4177
  %4379 = vst.msk [vmem:[#allocation2 + $0x180] sm:$0xff] %vm4330, %v4178
  %4380 = vst.msk [vmem:[#allocation2 + $0x188] sm:$0xff] %vm4330, %v4179
  %4381 = vst.msk [vmem:[#allocation2 + $0x190] sm:$0xff] %vm4330, %v4180
  %4382 = vst.msk [vmem:[#allocation2 + $0x198] sm:$0xff] %vm4330, %v4181
  %4383 = vst.msk [vmem:[#allocation2 + $0x1a0] sm:$0xff] %vm4330, %v4182
  %4384 = vst.msk [vmem:[#allocation2 + $0x1a8] sm:$0xff] %vm4330, %v4183
  %4385 = vst.msk [vmem:[#allocation2 + $0x1b0] sm:$0xff] %vm4330, %v4184
  %4386 = vst.msk [vmem:[#allocation2 + $0x1b8] sm:$0xff] %vm4330, %v4185
  %4387 = vst.msk [vmem:[#allocation2 + $0x1c0] sm:$0xff] %vm4330, %v4186
  %4388 = vst.msk [vmem:[#allocation2 + $0x1c8] sm:$0xff] %vm4330, %v4187
  %4389 = vst.msk [vmem:[#allocation2 + $0x1d0] sm:$0xff] %vm4330, %v4188
  %4390 = vst.msk [vmem:[#allocation2 + $0x1d8] sm:$0xff] %vm4330, %v4189
  %4391 = vst.msk [vmem:[#allocation2 + $0x1e0] sm:$0xff] %vm4330, %v4190
  %4392 = vst.msk [vmem:[#allocation2 + $0x1e8] sm:$0xff] %vm4330, %v4191
  %4393 = vst.msk [vmem:[#allocation2 + $0x1f0] sm:$0xff] %vm4330, %v4192
  %4394 = vst.msk [vmem:[#allocation2 + $0x1f8] sm:$0xff] %vm4330, %v4193
  %4395 = vst.msk [vmem:[#allocation2 + $0x200] sm:$0xff] %vm4330, %v4194
  %4396 = vst.msk [vmem:[#allocation2 + $0x208] sm:$0xff] %vm4330, %v4195
  %4397 = vst.msk [vmem:[#allocation2 + $0x210] sm:$0xff] %vm4330, %v4196
  %4398 = vst.msk [vmem:[#allocation2 + $0x218] sm:$0xff] %vm4330, %v4197
  %4399 = vst.msk [vmem:[#allocation2 + $0x220] sm:$0xff] %vm4330, %v4198
  %4400 = vst.msk [vmem:[#allocation2 + $0x228] sm:$0xff] %vm4330, %v4199
  %4401 = vst.msk [vmem:[#allocation2 + $0x230] sm:$0xff] %vm4330, %v4200
  %4402 = vst.msk [vmem:[#allocation2 + $0x238] sm:$0xff] %vm4330, %v4201
  %4403 = vst.msk [vmem:[#allocation2 + $0x240] sm:$0xff] %vm4330, %v4202
  %4404 = vst.msk [vmem:[#allocation2 + $0x248] sm:$0xff] %vm4330, %v4203
  %4405 = vst.msk [vmem:[#allocation2 + $0x250] sm:$0xff] %vm4330, %v4204
  %4406 = vst.msk [vmem:[#allocation2 + $0x258] sm:$0xff] %vm4330, %v4205
  %4407 = vst.msk [vmem:[#allocation2 + $0x260] sm:$0xff] %vm4330, %v4206
  %4408 = vst.msk [vmem:[#allocation2 + $0x268] sm:$0xff] %vm4330, %v4207
  %4409 = vst.msk [vmem:[#allocation2 + $0x270] sm:$0xff] %vm4330, %v4208
  %4410 = vst.msk [vmem:[#allocation2 + $0x278] sm:$0xff] %vm4330, %v4209
  %4411 = vst.msk [vmem:[#allocation2 + $0x280] sm:$0xff] %vm4330, %v4210
  %4412 = vst.msk [vmem:[#allocation2 + $0x288] sm:$0xff] %vm4330, %v4211
  %4413 = vst.msk [vmem:[#allocation2 + $0x290] sm:$0xff] %vm4330, %v4212
  %4414 = vst.msk [vmem:[#allocation2 + $0x298] sm:$0xff] %vm4330, %v4213
  %4415 = vst.msk [vmem:[#allocation2 + $0x2a0] sm:$0xff] %vm4330, %v4214
  %4416 = vst.msk [vmem:[#allocation2 + $0x2a8] sm:$0xff] %vm4330, %v4215
  %4417 = vst.msk [vmem:[#allocation2 + $0x2b0] sm:$0xff] %vm4330, %v4216
  %4418 = vst.msk [vmem:[#allocation2 + $0x2b8] sm:$0xff] %vm4330, %v4217
  %4419 = vst.msk [vmem:[#allocation2 + $0x2c0] sm:$0xff] %vm4330, %v4218
  %4420 = vst.msk [vmem:[#allocation2 + $0x2c8] sm:$0xff] %vm4330, %v4219
  %4421 = vst.msk [vmem:[#allocation2 + $0x2d0] sm:$0xff] %vm4330, %v4220
  %4422 = vst.msk [vmem:[#allocation2 + $0x2d8] sm:$0xff] %vm4330, %v4221
  %4423 = vst.msk [vmem:[#allocation2 + $0x2e0] sm:$0xff] %vm4330, %v4222
  %4424 = vst.msk [vmem:[#allocation2 + $0x2e8] sm:$0xff] %vm4330, %v4223
  %4425 = vst.msk [vmem:[#allocation2 + $0x2f0] sm:$0xff] %vm4330, %v4224
  %4426 = vst.msk [vmem:[#allocation2 + $0x2f8] sm:$0xff] %vm4330, %v4225
  %4427 = vst.msk [vmem:[#allocation2 + $0x300] sm:$0xff] %vm4330, %v4226
  %4428 = vst.msk [vmem:[#allocation2 + $0x308] sm:$0xff] %vm4330, %v4227
  %4429 = vst.msk [vmem:[#allocation2 + $0x310] sm:$0xff] %vm4330, %v4228
  %4430 = vst.msk [vmem:[#allocation2 + $0x318] sm:$0xff] %vm4330, %v4229
  %4431 = vst.msk [vmem:[#allocation2 + $0x320] sm:$0xff] %vm4330, %v4230
  %4432 = vst.msk [vmem:[#allocation2 + $0x328] sm:$0xff] %vm4330, %v4231
  %4433 = vst.msk [vmem:[#allocation2 + $0x330] sm:$0xff] %vm4330, %v4232
  %4434 = vst.msk [vmem:[#allocation2 + $0x338] sm:$0xff] %vm4330, %v4233
  %4435 = vst.msk [vmem:[#allocation2 + $0x340] sm:$0xff] %vm4330, %v4234
  %4436 = vst.msk [vmem:[#allocation2 + $0x348] sm:$0xff] %vm4330, %v4235
  %4437 = vst.msk [vmem:[#allocation2 + $0x350] sm:$0xff] %vm4330, %v4236
  %4438 = vst.msk [vmem:[#allocation2 + $0x358] sm:$0xff] %vm4330, %v4237
  %4439 = vst.msk [vmem:[#allocation2 + $0x360] sm:$0xff] %vm4330, %v4238
  %4440 = vst.msk [vmem:[#allocation2 + $0x368] sm:$0xff] %vm4330, %v4239
  %4441 = vst.msk [vmem:[#allocation2 + $0x370] sm:$0xff] %vm4330, %v4240
  %4442 = vst.msk [vmem:[#allocation2 + $0x378] sm:$0xff] %vm4330, %v4241
  %4443 = vst.msk [vmem:[#allocation2 + $0x380] sm:$0xff] %vm4330, %v4242
  %4444 = vst.msk [vmem:[#allocation2 + $0x388] sm:$0xff] %vm4330, %v4243
  %4445 = vst.msk [vmem:[#allocation2 + $0x390] sm:$0xff] %vm4330, %v4244
  %4446 = vst.msk [vmem:[#allocation2 + $0x398] sm:$0xff] %vm4330, %v4245
  %4447 = vst.msk [vmem:[#allocation2 + $0x3a0] sm:$0xff] %vm4330, %v4246
  %4448 = vst.msk [vmem:[#allocation2 + $0x3a8] sm:$0xff] %vm4330, %v4247
  %4449 = vst.msk [vmem:[#allocation2 + $0x3b0] sm:$0xff] %vm4330, %v4248
  %4450 = vst.msk [vmem:[#allocation2 + $0x3b8] sm:$0xff] %vm4330, %v4249
  %4451 = vst.msk [vmem:[#allocation2 + $0x3c0] sm:$0xff] %vm4330, %v4250
  %4452 = vst.msk [vmem:[#allocation2 + $0x3c8] sm:$0xff] %vm4330, %v4251
  %4453 = vst.msk [vmem:[#allocation2 + $0x3d0] sm:$0xff] %vm4330, %v4252
  %4454 = vst.msk [vmem:[#allocation2 + $0x3d8] sm:$0xff] %vm4330, %v4253
  %4455 = vst.msk [vmem:[#allocation2 + $0x3e0] sm:$0xff] %vm4330, %v4254
  %4456 = vst.msk [vmem:[#allocation2 + $0x3e8] sm:$0xff] %vm4330, %v4255
  %4457 = vst.msk [vmem:[#allocation2 + $0x3f0] sm:$0xff] %vm4330, %v4256
  %4458 = vst.msk [vmem:[#allocation2 + $0x3f8] sm:$0xff] %vm4330, %v4257
  %4459 = vst.msk [vmem:[#allocation2 + $0x400] sm:$0xff] %vm4330, %v4258
  %4460 = vst.msk [vmem:[#allocation2 + $0x408] sm:$0xff] %vm4330, %v4259
  %4461 = vst.msk [vmem:[#allocation2 + $0x410] sm:$0xff] %vm4330, %v4260
  %4462 = vst.msk [vmem:[#allocation2 + $0x418] sm:$0xff] %vm4330, %v4261
  %4463 = vst.msk [vmem:[#allocation2 + $0x420] sm:$0xff] %vm4330, %v4262
  %4464 = vst.msk [vmem:[#allocation2 + $0x428] sm:$0xff] %vm4330, %v4263
  %4465 = vst.msk [vmem:[#allocation2 + $0x430] sm:$0xff] %vm4330, %v4264
  %4466 = vst.msk [vmem:[#allocation2 + $0x438] sm:$0xff] %vm4330, %v4265
  %4467 = vst.msk [vmem:[#allocation2 + $0x440] sm:$0xff] %vm4330, %v4266
  %4468 = vst.msk [vmem:[#allocation2 + $0x448] sm:$0xff] %vm4330, %v4267
  %4469 = vst.msk [vmem:[#allocation2 + $0x450] sm:$0xff] %vm4330, %v4268
  %4470 = vst.msk [vmem:[#allocation2 + $0x458] sm:$0xff] %vm4330, %v4269
  %4471 = vst.msk [vmem:[#allocation2 + $0x460] sm:$0xff] %vm4330, %v4270
  %4472 = vst.msk [vmem:[#allocation2 + $0x468] sm:$0xff] %vm4330, %v4271
  %4473 = vst.msk [vmem:[#allocation2 + $0x470] sm:$0xff] %vm4330, %v4272
  %4474 = vst.msk [vmem:[#allocation2 + $0x478] sm:$0xff] %vm4330, %v4273
  %4475 = vst.msk [vmem:[#allocation2 + $0x480] sm:$0xff] %vm4330, %v4274
  %4476 = vst.msk [vmem:[#allocation2 + $0x488] sm:$0xff] %vm4330, %v4275
  %4477 = vst.msk [vmem:[#allocation2 + $0x490] sm:$0xff] %vm4330, %v4276
  %4478 = vst.msk [vmem:[#allocation2 + $0x498] sm:$0xff] %vm4330, %v4277
  %4479 = vst.msk [vmem:[#allocation2 + $0x4a0] sm:$0xff] %vm4330, %v4278
  %4480 = vst.msk [vmem:[#allocation2 + $0x4a8] sm:$0xff] %vm4330, %v4279
  %4481 = vst.msk [vmem:[#allocation2 + $0x4b0] sm:$0xff] %vm4330, %v4280
  %4482 = vst.msk [vmem:[#allocation2 + $0x4b8] sm:$0xff] %vm4330, %v4281
  %4483 = vst.msk [vmem:[#allocation2 + $0x4c0] sm:$0xff] %vm4330, %v4282
  %4484 = vst.msk [vmem:[#allocation2 + $0x4c8] sm:$0xff] %vm4330, %v4283
  %4485 = vst.msk [vmem:[#allocation2 + $0x4d0] sm:$0xff] %vm4330, %v4284
  %4486 = vst.msk [vmem:[#allocation2 + $0x4d8] sm:$0xff] %vm4330, %v4285
  %4487 = vst.msk [vmem:[#allocation2 + $0x4e0] sm:$0xff] %vm4330, %v4286
  %4488 = vst.msk [vmem:[#allocation2 + $0x4e8] sm:$0xff] %vm4330, %v4287
  %4489 = vst.msk [vmem:[#allocation2 + $0x4f0] sm:$0xff] %vm4330, %v4288
  %4490 = vst.msk [vmem:[#allocation2 + $0x4f8] sm:$0xff] %vm4330, %v4289
  %4491 = vst.msk [vmem:[#allocation2 + $0x500] sm:$0xff] %vm4330, %v4290
  %4492 = vst.msk [vmem:[#allocation2 + $0x508] sm:$0xff] %vm4330, %v4291
  %4493 = vst.msk [vmem:[#allocation2 + $0x510] sm:$0xff] %vm4330, %v4292
  %4494 = vst.msk [vmem:[#allocation2 + $0x518] sm:$0xff] %vm4330, %v4293
  %4495 = vst.msk [vmem:[#allocation2 + $0x520] sm:$0xff] %vm4330, %v4294
  %4496 = vst.msk [vmem:[#allocation2 + $0x528] sm:$0xff] %vm4330, %v4295
  %4497 = vst.msk [vmem:[#allocation2 + $0x530] sm:$0xff] %vm4330, %v4296
  %4498 = vst.msk [vmem:[#allocation2 + $0x538] sm:$0xff] %vm4330, %v4297
  %4499 = vst.msk [vmem:[#allocation2 + $0x540] sm:$0xff] %vm4330, %v4298
  %4500 = vst.msk [vmem:[#allocation2 + $0x548] sm:$0xff] %vm4330, %v4299
  %4501 = vst.msk [vmem:[#allocation2 + $0x550] sm:$0xff] %vm4330, %v4300
  %4502 = vst.msk [vmem:[#allocation2 + $0x558] sm:$0xff] %vm4330, %v4301
  %4503 = vst.msk [vmem:[#allocation2 + $0x560] sm:$0xff] %vm4330, %v4302
  %4504 = vst.msk [vmem:[#allocation2 + $0x568] sm:$0xff] %vm4330, %v4303
  %4505 = vst.msk [vmem:[#allocation2 + $0x570] sm:$0xff] %vm4330, %v4304
  %4506 = vst.msk [vmem:[#allocation2 + $0x578] sm:$0xff] %vm4330, %v4305
  %4507 = vst.msk [vmem:[#allocation2 + $0x580] sm:$0xff] %vm4330, %v4306
  %4508 = vst.msk [vmem:[#allocation2 + $0x588] sm:$0xff] %vm4330, %v4307
  %4509 = vst.msk [vmem:[#allocation2 + $0x590] sm:$0xff] %vm4330, %v4308
  %4510 = vst.msk [vmem:[#allocation2 + $0x598] sm:$0xff] %vm4330, %v4309
  %4511 = vst.msk [vmem:[#allocation2 + $0x5a0] sm:$0xff] %vm4330, %v4310
  %4512 = vst.msk [vmem:[#allocation2 + $0x5a8] sm:$0xff] %vm4330, %v4311
  %4513 = vst.msk [vmem:[#allocation2 + $0x5b0] sm:$0xff] %vm4330, %v4312
  %4514 = vst.msk [vmem:[#allocation2 + $0x5b8] sm:$0xff] %vm4330, %v4313
  %4515 = vst.msk [vmem:[#allocation2 + $0x5c0] sm:$0xff] %vm4330, %v4314
  %4516 = vst.msk [vmem:[#allocation2 + $0x5c8] sm:$0xff] %vm4330, %v4315
  %4517 = vst.msk [vmem:[#allocation2 + $0x5d0] sm:$0xff] %vm4330, %v4316
  %4518 = vst.msk [vmem:[#allocation2 + $0x5d8] sm:$0xff] %vm4330, %v4317
  %4519 = vst.msk [vmem:[#allocation2 + $0x5e0] sm:$0xff] %vm4330, %v4318
  %4520 = vst.msk [vmem:[#allocation2 + $0x5e8] sm:$0xff] %vm4330, %v4319
  %4521 = vst.msk [vmem:[#allocation2 + $0x5f0] sm:$0xff] %vm4330, %v4320
  %4522 = vst.msk [vmem:[#allocation2 + $0x5f8] sm:$0xff] %vm4330, %v4321
  %4523 = vst.msk [vmem:[#allocation2 + $0x600] sm:$0xff] %vm4330, %v4322
  %4524 = vst.msk [vmem:[#allocation2 + $0x608] sm:$0xff] %vm4330, %v4323
  %4525 = vst.msk [vmem:[#allocation2 + $0x610] sm:$0xff] %vm4330, %v4324
  %4526 = vst.msk [vmem:[#allocation2 + $0x618] sm:$0xff] %vm4330, %v4325
  %4527 = vst.msk [vmem:[#allocation2 + $0x620] sm:$0xff] %vm4330, %v4326
  %4528 = vst.msk [vmem:[#allocation2 + $0x628] sm:$0xff] %vm4330, %v4327
  %4529 = vst.msk [vmem:[#allocation2 + $0x630] sm:$0xff] %vm4330, %v4328
  %4530 = vst.msk [vmem:[#allocation2 + $0x638] sm:$0xff] %vm4330, %v4329
  %v4531 = vld [vmem:[#allocation2] sm:$0xff]
  %v4532 = vld [vmem:[#allocation2 + $0x8] sm:$0xff]
  %v4533 = vld [vmem:[#allocation2 + $0x10] sm:$0xff]
  %v4534 = vld [vmem:[#allocation2 + $0x18] sm:$0xff]
  %v4535 = vld [vmem:[#allocation2 + $0x20] sm:$0xff]
  %v4536 = vld [vmem:[#allocation2 + $0x28] sm:$0xff]
  %v4537 = vld [vmem:[#allocation2 + $0x30] sm:$0xff]
  %v4538 = vld [vmem:[#allocation2 + $0x38] sm:$0xff]
  %v4539 = vld [vmem:[%s3] sm:$0xf]
  %v4540 = vld [vmem:[%s3 + $0x4] sm:$0xf]
  %v4541 = vld [vmem:[%s3 + $0x8] sm:$0xf]
  %v4542 = vld [vmem:[%s3 + $0xc] sm:$0xf]
  %v4543 = vld [vmem:[#allocation2 + $0x40] sm:$0xff]
  %v4544 = vld [vmem:[#allocation2 + $0x48] sm:$0xff]
  %v4545 = vld [vmem:[#allocation2 + $0x50] sm:$0xff]
  %v4546 = vld [vmem:[#allocation2 + $0x58] sm:$0xff]
  %v4547 = vld [vmem:[#allocation2 + $0x60] sm:$0xff]
  %v4548 = vld [vmem:[#allocation2 + $0x68] sm:$0xff]
  %v4549 = vld [vmem:[#allocation2 + $0x70] sm:$0xff]
  %v4550 = vld [vmem:[#allocation2 + $0x78] sm:$0xff]
  %v4551 = vld [vmem:[%s3 + $0x10] sm:$0xf]
  %v4552 = vld [vmem:[%s3 + $0x14] sm:$0xf]
  %v4553 = vld [vmem:[%s3 + $0x18] sm:$0xf]
  %v4554 = vld [vmem:[%s3 + $0x1c] sm:$0xf]
  %v4559 = vunpack.c.l.b16 %v4551
  %v4560 = vunpack.c.l.b16 %v4552
  %v4561 = vunpack.c.l.b16 %v4553
  %v4562 = vunpack.c.l.b16 %v4554
  %v4563 = vpack.c.b16 %v4560, %v4559
  %v4564 = vpack.c.b16 %v4562, %v4561
  %v4568 = vsel %vm4330, %v4543, 0
  %v4571 = vsel %vm4330, %v4544, 0
  %v4574 = vsel %vm4330, %v4545, 0
  %v4577 = vsel %vm4330, %v4546, 0
  %v4580 = vsel %vm4330, %v4547, 0
  %v4583 = vsel %vm4330, %v4548, 0
  %v4586 = vsel %vm4330, %v4549, 0
  %v4589 = vsel %vm4330, %v4550, 0
  %4591 = vmatprep.subr.bf16.mxu0 0
  %4592 = vmatpush1.bf16.msra.mxu0 %v4563
  %4593 = vmatprep.subr.bf16.mxu0 0
  %4594 = vmatpush1.bf16.msra.mxu0 %v4564
  %4595 = vmatprep.subr.bf16.mxu0 0
  %4596 = vmatpush1.bf16.msra.mxu0 0
  %4597 = vmatprep.subr.bf16.mxu0 0
  %4598 = vmatpush1.bf16.msra.mxu0 0
  %4599 = vmatprep.subr.bf16.mxu0 0
  %4600 = vmatpush1.bf16.msra.mxu0 0
  %4601 = vmatprep.subr.bf16.mxu0 0
  %4602 = vmatpush1.bf16.msra.mxu0 0
  %4603 = vmatprep.subr.bf16.mxu0 0
  %4604 = vmatpush1.bf16.msra.mxu0 0
  %4605 = vmatprep.subr.bf16.mxu0 0
  %4606 = vmatpush1.bf16.msra.mxu0 0
  %4607 = vmatprep.subr.bf16.mxu0 0
  %4608 = vmatpush1.bf16.msra.mxu0 0
  %4609 = vmatprep.subr.bf16.mxu0 0
  %4610 = vmatpush1.bf16.msra.mxu0 0
  %4611 = vmatprep.subr.bf16.mxu0 0
  %4612 = vmatpush1.bf16.msra.mxu0 0
  %4613 = vmatprep.subr.bf16.mxu0 0
  %4614 = vmatpush1.bf16.msra.mxu0 0
  %4615 = vmatprep.subr.bf16.mxu0 0
  %4616 = vmatpush1.bf16.msra.mxu0 0
  %4617 = vmatprep.subr.bf16.mxu0 0
  %4618 = vmatpush1.bf16.msra.mxu0 0
  %4619 = vmatprep.subr.bf16.mxu0 0
  %4620 = vmatpush1.bf16.msra.mxu0 0
  %4621 = vmatprep.subr.bf16.mxu0 0
  %4622 = vmatpush1.bf16.msra.mxu0 0
  %4623 = vmatprep.mubr.bf16.mxu0 0
  %4624 = vmatmul.mubr.bf16.gmra.mrb[0].mxu0 %v4568
  %v4625 = vpop.f32.mrb[0].mxu0
  %v4626 = vadd.f32 0.0, %v4625
  %v4627 = vpop.f32.mrb[0].mxu0
  %v4628 = vpop.f32.mrb[0].mxu0
  %v4629 = vadd.f32 0.0, %v4628
  %v4630 = vpop.f32.mrb[0].mxu0
  %4631 = vmatprep.mubr.bf16.mxu0 0
  %4632 = vmatmul.mubr.bf16.gmra.mrb[0].mxu0 %v4571
  %v4633 = vpop.f32.mrb[0].mxu0
  %v4634 = vadd.f32 0.0, %v4633
  %v4635 = vpop.f32.mrb[0].mxu0
  %v4636 = vpop.f32.mrb[0].mxu0
  %v4637 = vadd.f32 0.0, %v4636
  %v4638 = vpop.f32.mrb[0].mxu0
  %4639 = vmatprep.mubr.bf16.mxu0 0
  %4640 = vmatmul.mubr.bf16.gmra.mrb[0].mxu0 %v4574
  %v4641 = vpop.f32.mrb[0].mxu0
  %v4642 = vadd.f32 0.0, %v4641
  %v4643 = vpop.f32.mrb[0].mxu0
  %v4644 = vpop.f32.mrb[0].mxu0
  %v4645 = vadd.f32 0.0, %v4644
  %v4646 = vpop.f32.mrb[0].mxu0
  %4647 = vmatprep.mubr.bf16.mxu0 0
  %4648 = vmatmul.mubr.bf16.gmra.mrb[0].mxu0 %v4577
  %v4649 = vpop.f32.mrb[0].mxu0
  %v4650 = vadd.f32 0.0, %v4649
  %v4651 = vpop.f32.mrb[0].mxu0
  %v4652 = vpop.f32.mrb[0].mxu0
  %v4653 = vadd.f32 0.0, %v4652
  %v4654 = vpop.f32.mrb[0].mxu0
  %4655 = vmatprep.mubr.bf16.mxu0 0
  %4656 = vmatmul.mubr.bf16.gmra.mrb[0].mxu0 %v4580
  %v4657 = vpop.f32.mrb[0].mxu0
  %v4658 = vadd.f32 0.0, %v4657
  %v4659 = vpop.f32.mrb[0].mxu0
  %v4660 = vpop.f32.mrb[0].mxu0
  %v4661 = vadd.f32 0.0, %v4660
  %v4662 = vpop.f32.mrb[0].mxu0
  %4663 = vmatprep.mubr.bf16.mxu0 0
  %4664 = vmatmul.mubr.bf16.gmra.mrb[0].mxu0 %v4583
  %v4665 = vpop.f32.mrb[0].mxu0
  %v4666 = vadd.f32 0.0, %v4665
  %v4667 = vpop.f32.mrb[0].mxu0
  %v4668 = vpop.f32.mrb[0].mxu0
  %v4669 = vadd.f32 0.0, %v4668
  %v4670 = vpop.f32.mrb[0].mxu0
  %4671 = vmatprep.mubr.bf16.mxu0 0
  %4672 = vmatmul.mubr.bf16.gmra.mrb[0].mxu0 %v4586
  %v4673 = vpop.f32.mrb[0].mxu0
  %v4674 = vadd.f32 0.0, %v4673
  %v4675 = vpop.f32.mrb[0].mxu0
  %v4676 = vpop.f32.mrb[0].mxu0
  %v4677 = vadd.f32 0.0, %v4676
  %v4678 = vpop.f32.mrb[0].mxu0
  %4679 = vmatprep.mubr.bf16.mxu0 0
  %4680 = vmatmul.mubr.bf16.gmra.mrb[0].mxu0 %v4589
  %v4681 = vpop.f32.mrb[0].mxu0
  %v4682 = vadd.f32 0.0, %v4681
  %v4683 = vpop.f32.mrb[0].mxu0
  %v4684 = vpop.f32.mrb[0].mxu0
  %v4685 = vadd.f32 0.0, %v4684
  %v4686 = vpop.f32.mrb[0].mxu0
  %4687 = vdwg.mxu0
  %v4692 = vunpack.c.l.b16 %v4539
  %v4693 = vunpack.c.l.b16 %v4540
  %v4694 = vunpack.c.l.b16 %v4541
  %v4695 = vunpack.c.l.b16 %v4542
  %v4696 = vpack.c.b16 %v4693, %v4692
  %v4697 = vpack.c.b16 %v4695, %v4694
  %v4701 = vsel %vm4330, %v4531, 0
  %v4704 = vsel %vm4330, %v4532, 0
  %v4707 = vsel %vm4330, %v4533, 0
  %v4710 = vsel %vm4330, %v4534, 0
  %v4713 = vsel %vm4330, %v4535, 0
  %v4716 = vsel %vm4330, %v4536, 0
  %v4719 = vsel %vm4330, %v4537, 0
  %v4722 = vsel %vm4330, %v4538, 0
  %4724 = vmatprep.subr.bf16.mxu0 0
  %4725 = vmatpush1.bf16.msra.mxu0 %v4696
  %4726 = vmatprep.subr.bf16.mxu0 0
  %4727 = vmatpush1.bf16.msra.mxu0 %v4697
  %4728 = vmatprep.subr.bf16.mxu0 0
  %4729 = vmatpush1.bf16.msra.mxu0 0
  %4730 = vmatprep.subr.bf16.mxu0 0
  %4731 = vmatpush1.bf16.msra.mxu0 0
  %4732 = vmatprep.subr.bf16.mxu0 0
  %4733 = vmatpush1.bf16.msra.mxu0 0
  %4734 = vmatprep.subr.bf16.mxu0 0
  %4735 = vmatpush1.bf16.msra.mxu0 0
  %4736 = vmatprep.subr.bf16.mxu0 0
  %4737 = vmatpush1.bf16.msra.mxu0 0
  %4738 = vmatprep.subr.bf16.mxu0 0
  %4739 = vmatpush1.bf16.msra.mxu0 0
  %4740 = vmatprep.subr.bf16.mxu0 0
  %4741 = vmatpush1.bf16.msra.mxu0 0
  %4742 = vmatprep.subr.bf16.mxu0 0
  %4743 = vmatpush1.bf16.msra.mxu0 0
  %4744 = vmatprep.subr.bf16.mxu0 0
  %4745 = vmatpush1.bf16.msra.mxu0 0
  %4746 = vmatprep.subr.bf16.mxu0 0
  %4747 = vmatpush1.bf16.msra.mxu0 0
  %4748 = vmatprep.subr.bf16.mxu0 0
  %4749 = vmatpush1.bf16.msra.mxu0 0
  %4750 = vmatprep.subr.bf16.mxu0 0
  %4751 = vmatpush1.bf16.msra.mxu0 0
  %4752 = vmatprep.subr.bf16.mxu0 0
  %4753 = vmatpush1.bf16.msra.mxu0 0
  %4754 = vmatprep.subr.bf16.mxu0 0
  %4755 = vmatpush1.bf16.msra.mxu0 0
  %4756 = vmatprep.mubr.bf16.mxu0 0
  %4757 = vmatmul.mubr.bf16.gmra.mrb[0].mxu0 %v4701
  %v4758 = vpop.f32.mrb[0].mxu0
  %v4759 = vadd.f32 %v4626, %v4758
  %v4760 = vpop.f32.mrb[0].mxu0
  %v4761 = vpop.f32.mrb[0].mxu0
  %v4762 = vadd.f32 %v4629, %v4761
  %v4763 = vpop.f32.mrb[0].mxu0
  %4764 = vmatprep.mubr.bf16.mxu0 0
  %4765 = vmatmul.mubr.bf16.gmra.mrb[0].mxu0 %v4704
  %v4766 = vpop.f32.mrb[0].mxu0
  %v4767 = vadd.f32 %v4634, %v4766
  %v4768 = vpop.f32.mrb[0].mxu0
  %v4769 = vpop.f32.mrb[0].mxu0
  %v4770 = vadd.f32 %v4637, %v4769
  %v4771 = vpop.f32.mrb[0].mxu0
  %4772 = vmatprep.mubr.bf16.mxu0 0
  %4773 = vmatmul.mubr.bf16.gmra.mrb[0].mxu0 %v4707
  %v4774 = vpop.f32.mrb[0].mxu0
  %v4775 = vadd.f32 %v4642, %v4774
  %v4776 = vpop.f32.mrb[0].mxu0
  %v4777 = vpop.f32.mrb[0].mxu0
  %v4778 = vadd.f32 %v4645, %v4777
  %v4779 = vpop.f32.mrb[0].mxu0
  %4780 = vmatprep.mubr.bf16.mxu0 0
  %4781 = vmatmul.mubr.bf16.gmra.mrb[0].mxu0 %v4710
  %v4782 = vpop.f32.mrb[0].mxu0
  %v4783 = vadd.f32 %v4650, %v4782
  %v4784 = vpop.f32.mrb[0].mxu0
  %v4785 = vpop.f32.mrb[0].mxu0
  %v4786 = vadd.f32 %v4653, %v4785
  %v4787 = vpop.f32.mrb[0].mxu0
  %4788 = vmatprep.mubr.bf16.mxu0 0
  %4789 = vmatmul.mubr.bf16.gmra.mrb[0].mxu0 %v4713
  %v4790 = vpop.f32.mrb[0].mxu0
  %v4791 = vadd.f32 %v4658, %v4790
  %v4792 = vpop.f32.mrb[0].mxu0
  %v4793 = vpop.f32.mrb[0].mxu0
  %v4794 = vadd.f32 %v4661, %v4793
  %v4795 = vpop.f32.mrb[0].mxu0
  %4796 = vmatprep.mubr.bf16.mxu0 0
  %4797 = vmatmul.mubr.bf16.gmra.mrb[0].mxu0 %v4716
  %v4798 = vpop.f32.mrb[0].mxu0
  %v4799 = vadd.f32 %v4666, %v4798
  %v4800 = vpop.f32.mrb[0].mxu0
  %v4801 = vpop.f32.mrb[0].mxu0
  %v4802 = vadd.f32 %v4669, %v4801
  %v4803 = vpop.f32.mrb[0].mxu0
  %4804 = vmatprep.mubr.bf16.mxu0 0
  %4805 = vmatmul.mubr.bf16.gmra.mrb[0].mxu0 %v4719
  %v4806 = vpop.f32.mrb[0].mxu0
  %v4807 = vadd.f32 %v4674, %v4806
  %v4808 = vpop.f32.mrb[0].mxu0
  %v4809 = vpop.f32.mrb[0].mxu0
  %v4810 = vadd.f32 %v4677, %v4809
  %v4811 = vpop.f32.mrb[0].mxu0
  %4812 = vmatprep.mubr.bf16.mxu0 0
  %4813 = vmatmul.mubr.bf16.gmra.mrb[0].mxu0 %v4722
  %v4814 = vpop.f32.mrb[0].mxu0
  %v4815 = vadd.f32 %v4682, %v4814
  %v4816 = vpop.f32.mrb[0].mxu0
  %v4817 = vpop.f32.mrb[0].mxu0
  %v4818 = vadd.f32 %v4685, %v4817
  %v4819 = vpop.f32.mrb[0].mxu0
  %4820 = vdwg.mxu0
  %v4821 = vld [vmem:[#allocation2 + $0x80] sm:$0xff]
  %v4822 = vld [vmem:[#allocation2 + $0x88] sm:$0xff]
  %v4823 = vld [vmem:[#allocation2 + $0x90] sm:$0xff]
  %v4824 = vld [vmem:[#allocation2 + $0x98] sm:$0xff]
  %v4825 = vld [vmem:[#allocation2 + $0xa0] sm:$0xff]
  %v4826 = vld [vmem:[#allocation2 + $0xa8] sm:$0xff]
  %v4827 = vld [vmem:[#allocation2 + $0xb0] sm:$0xff]
  %v4828 = vld [vmem:[#allocation2 + $0xb8] sm:$0xff]
  %v4829 = vld [vmem:[%s3 + $0x20] sm:$0xf]
  %v4830 = vld [vmem:[%s3 + $0x24] sm:$0xf]
  %v4831 = vld [vmem:[%s3 + $0x28] sm:$0xf]
  %v4832 = vld [vmem:[%s3 + $0x2c] sm:$0xf]
  %v4837 = vunpack.c.l.b16 %v4829
  %v4838 = vunpack.c.l.b16 %v4830
  %v4839 = vunpack.c.l.b16 %v4831
  %v4840 = vunpack.c.l.b16 %v4832
  %v4841 = vpack.c.b16 %v4838, %v4837
  %v4842 = vpack.c.b16 %v4840, %v4839
  %v4846 = vsel %vm4330, %v4821, 0
  %v4849 = vsel %vm4330, %v4822, 0
  %v4852 = vsel %vm4330, %v4823, 0
  %v4855 = vsel %vm4330, %v4824, 0
  %v4858 = vsel %vm4330, %v4825, 0
  %v4861 = vsel %vm4330, %v4826, 0
  %v4864 = vsel %vm4330, %v4827, 0
  %v4867 = vsel %vm4330, %v4828, 0
  %4869 = vmatprep.subr.bf16.mxu0 0
  %4870 = vmatpush1.bf16.msra.mxu0 %v4841
  %4871 = vmatprep.subr.bf16.mxu0 0
  %4872 = vmatpush1.bf16.msra.mxu0 %v4842
  %4873 = vmatprep.subr.bf16.mxu0 0
  %4874 = vmatpush1.bf16.msra.mxu0 0
  %4875 = vmatprep.subr.bf16.mxu0 0
  %4876 = vmatpush1.bf16.msra.mxu0 0
  %4877 = vmatprep.subr.bf16.mxu0 0
  %4878 = vmatpush1.bf16.msra.mxu0 0
  %4879 = vmatprep.subr.bf16.mxu0 0
  %4880 = vmatpush1.bf16.msra.mxu0 0
  %4881 = vmatprep.subr.bf16.mxu0 0
  %4882 = vmatpush1.bf16.msra.mxu0 0
  %4883 = vmatprep.subr.bf16.mxu0 0
  %4884 = vmatpush1.bf16.msra.mxu0 0
  %4885 = vmatprep.subr.bf16.mxu0 0
  %4886 = vmatpush1.bf16.msra.mxu0 0
  %4887 = vmatprep.subr.bf16.mxu0 0
  %4888 = vmatpush1.bf16.msra.mxu0 0
  %4889 = vmatprep.subr.bf16.mxu0 0
  %4890 = vmatpush1.bf16.msra.mxu0 0
  %4891 = vmatprep.subr.bf16.mxu0 0
  %4892 = vmatpush1.bf16.msra.mxu0 0
  %4893 = vmatprep.subr.bf16.mxu0 0
  %4894 = vmatpush1.bf16.msra.mxu0 0
  %4895 = vmatprep.subr.bf16.mxu0 0
  %4896 = vmatpush1.bf16.msra.mxu0 0
  %4897 = vmatprep.subr.bf16.mxu0 0
  %4898 = vmatpush1.bf16.msra.mxu0 0
  %4899 = vmatprep.subr.bf16.mxu0 0
  %4900 = vmatpush1.bf16.msra.mxu0 0
  %4901 = vmatprep.mubr.bf16.mxu0 0
  %4902 = vmatmul.mubr.bf16.gmra.mrb[0].mxu0 %v4846
  %v4903 = vpop.f32.mrb[0].mxu0
  %v4904 = vadd.f32 0.0, %v4903
  %v4905 = vpop.f32.mrb[0].mxu0
  %v4906 = vpop.f32.mrb[0].mxu0
  %v4907 = vadd.f32 0.0, %v4906
  %v4908 = vpop.f32.mrb[0].mxu0
  %4909 = vmatprep.mubr.bf16.mxu0 0
  %4910 = vmatmul.mubr.bf16.gmra.mrb[0].mxu0 %v4849
  %v4911 = vpop.f32.mrb[0].mxu0
  %v4912 = vadd.f32 0.0, %v4911
  %v4913 = vpop.f32.mrb[0].mxu0
  %v4914 = vpop.f32.mrb[0].mxu0
  %v4915 = vadd.f32 0.0, %v4914
  %v4916 = vpop.f32.mrb[0].mxu0
  %4917 = vmatprep.mubr.bf16.mxu0 0
  %4918 = vmatmul.mubr.bf16.gmra.mrb[0].mxu0 %v4852
  %v4919 = vpop.f32.mrb[0].mxu0
  %v4920 = vadd.f32 0.0, %v4919
  %v4921 = vpop.f32.mrb[0].mxu0
  %v4922 = vpop.f32.mrb[0].mxu0
  %v4923 = vadd.f32 0.0, %v4922
  %v4924 = vpop.f32.mrb[0].mxu0
  %4925 = vmatprep.mubr.bf16.mxu0 0
  %4926 = vmatmul.mubr.bf16.gmra.mrb[0].mxu0 %v4855
  %v4927 = vpop.f32.mrb[0].mxu0
  %v4928 = vadd.f32 0.0, %v4927
  %v4929 = vpop.f32.mrb[0].mxu0
  %v4930 = vpop.f32.mrb[0].mxu0
  %v4931 = vadd.f32 0.0, %v4930
  %v4932 = vpop.f32.mrb[0].mxu0
  %4933 = vmatprep.mubr.bf16.mxu0 0
  %4934 = vmatmul.mubr.bf16.gmra.mrb[0].mxu0 %v4858
  %v4935 = vpop.f32.mrb[0].mxu0
  %v4936 = vadd.f32 0.0, %v4935
  %v4937 = vpop.f32.mrb[0].mxu0
  %v4938 = vpop.f32.mrb[0].mxu0
  %v4939 = vadd.f32 0.0, %v4938
  %v4940 = vpop.f32.mrb[0].mxu0
  %4941 = vmatprep.mubr.bf16.mxu0 0
  %4942 = vmatmul.mubr.bf16.gmra.mrb[0].mxu0 %v4861
  %v4943 = vpop.f32.mrb[0].mxu0
  %v4944 = vadd.f32 0.0, %v4943
  %v4945 = vpop.f32.mrb[0].mxu0
  %v4946 = vpop.f32.mrb[0].mxu0
  %v4947 = vadd.f32 0.0, %v4946
  %v4948 = vpop.f32.mrb[0].mxu0
  %4949 = vmatprep.mubr.bf16.mxu0 0
  %4950 = vmatmul.mubr.bf16.gmra.mrb[0].mxu0 %v4864
  %v4951 = vpop.f32.mrb[0].mxu0
  %v4952 = vadd.f32 0.0, %v4951
  %v4953 = vpop.f32.mrb[0].mxu0
  %v4954 = vpop.f32.mrb[0].mxu0
  %v4955 = vadd.f32 0.0, %v4954
  %v4956 = vpop.f32.mrb[0].mxu0
  %4957 = vmatprep.mubr.bf16.mxu0 0
  %4958 = vmatmul.mubr.bf16.gmra.mrb[0].mxu0 %v4867
  %v4959 = vpop.f32.mrb[0].mxu0
  %v4960 = vadd.f32 0.0, %v4959
  %v4961 = vpop.f32.mrb[0].mxu0
  %v4962 = vpop.f32.mrb[0].mxu0
  %v4963 = vadd.f32 0.0, %v4962
  %v4964 = vpop.f32.mrb[0].mxu0
  %4965 = vdwg.mxu0
  %v4966 = vadd.f32 %v4759, %v4904
  %v4967 = vadd.f32 %v4762, %v4907
  %v4968 = vadd.f32 %v4767, %v4912
  %v4969 = vadd.f32 %v4770, %v4915
  %v4970 = vadd.f32 %v4775, %v4920
  %v4971 = vadd.f32 %v4778, %v4923
  %v4972 = vadd.f32 %v4783, %v4928
  %v4973 = vadd.f32 %v4786, %v4931
  %v4974 = vadd.f32 %v4791, %v4936
  %v4975 = vadd.f32 %v4794, %v4939
  %v4976 = vadd.f32 %v4799, %v4944
  %v4977 = vadd.f32 %v4802, %v4947
  %v4978 = vadd.f32 %v4807, %v4952
  %v4979 = vadd.f32 %v4810, %v4955
  %v4980 = vadd.f32 %v4815, %v4960
  %v4981 = vadd.f32 %v4818, %v4963
  %v4982 = vld [vmem:[#allocation2 + $0xc0] sm:$0xff]
  %v4983 = vld [vmem:[#allocation2 + $0xc8] sm:$0xff]
  %v4984 = vld [vmem:[#allocation2 + $0xd0] sm:$0xff]
  %v4985 = vld [vmem:[#allocation2 + $0xd8] sm:$0xff]
  %v4986 = vld [vmem:[#allocation2 + $0xe0] sm:$0xff]
  %v4987 = vld [vmem:[#allocation2 + $0xe8] sm:$0xff]
  %v4988 = vld [vmem:[#allocation2 + $0xf0] sm:$0xff]
  %v4989 = vld [vmem:[#allocation2 + $0xf8] sm:$0xff]
  %v4990 = vld [vmem:[%s3 + $0x30] sm:$0xf]
  %v4991 = vld [vmem:[%s3 + $0x34] sm:$0xf]
  %v4992 = vld [vmem:[%s3 + $0x38] sm:$0xf]
  %v4993 = vld [vmem:[%s3 + $0x3c] sm:$0xf]
  %v4998 = vunpack.c.l.b16 %v4990
  %v4999 = vunpack.c.l.b16 %v4991
  %v5000 = vunpack.c.l.b16 %v4992
  %v5001 = vunpack.c.l.b16 %v4993
  %v5002 = vpack.c.b16 %v4999, %v4998
  %v5003 = vpack.c.b16 %v5001, %v5000
  %v5007 = vsel %vm4330, %v4982, 0
  %v5010 = vsel %vm4330, %v4983, 0
  %v5013 = vsel %vm4330, %v4984, 0
  %v5016 = vsel %vm4330, %v4985, 0
  %v5019 = vsel %vm4330, %v4986, 0
  %v5022 = vsel %vm4330, %v4987, 0
  %v5025 = vsel %vm4330, %v4988, 0
  %v5028 = vsel %vm4330, %v4989, 0
  %5030 = vmatprep.subr.bf16.mxu0 0
  %5031 = vmatpush1.bf16.msra.mxu0 %v5002
  %5032 = vmatprep.subr.bf16.mxu0 0
  %5033 = vmatpush1.bf16.msra.mxu0 %v5003
  %5034 = vmatprep.subr.bf16.mxu0 0
  %5035 = vmatpush1.bf16.msra.mxu0 0
  %5036 = vmatprep.subr.bf16.mxu0 0
  %5037 = vmatpush1.bf16.msra.mxu0 0
  %5038 = vmatprep.subr.bf16.mxu0 0
  %5039 = vmatpush1.bf16.msra.mxu0 0
  %5040 = vmatprep.subr.bf16.mxu0 0
  %5041 = vmatpush1.bf16.msra.mxu0 0
  %5042 = vmatprep.subr.bf16.mxu0 0
  %5043 = vmatpush1.bf16.msra.mxu0 0
  %5044 = vmatprep.subr.bf16.mxu0 0
  %5045 = vmatpush1.bf16.msra.mxu0 0
  %5046 = vmatprep.subr.bf16.mxu0 0
  %5047 = vmatpush1.bf16.msra.mxu0 0
  %5048 = vmatprep.subr.bf16.mxu0 0
  %5049 = vmatpush1.bf16.msra.mxu0 0
  %5050 = vmatprep.subr.bf16.mxu0 0
  %5051 = vmatpush1.bf16.msra.mxu0 0
  %5052 = vmatprep.subr.bf16.mxu0 0
  %5053 = vmatpush1.bf16.msra.mxu0 0
  %5054 = vmatprep.subr.bf16.mxu0 0
  %5055 = vmatpush1.bf16.msra.mxu0 0
  %5056 = vmatprep.subr.bf16.mxu0 0
  %5057 = vmatpush1.bf16.msra.mxu0 0
  %5058 = vmatprep.subr.bf16.mxu0 0
  %5059 = vmatpush1.bf16.msra.mxu0 0
  %5060 = vmatprep.subr.bf16.mxu0 0
  %5061 = vmatpush1.bf16.msra.mxu0 0
  %5062 = vmatprep.mubr.bf16.mxu0 0
  %5063 = vmatmul.mubr.bf16.gmra.mrb[0].mxu0 %v5007
  %v5064 = vpop.f32.mrb[0].mxu0
  %v5065 = vadd.f32 0.0, %v5064
  %v5066 = vpop.f32.mrb[0].mxu0
  %v5067 = vpop.f32.mrb[0].mxu0
  %v5068 = vadd.f32 0.0, %v5067
  %v5069 = vpop.f32.mrb[0].mxu0
  %5070 = vmatprep.mubr.bf16.mxu0 0
  %5071 = vmatmul.mubr.bf16.gmra.mrb[0].mxu0 %v5010
  %v5072 = vpop.f32.mrb[0].mxu0
  %v5073 = vadd.f32 0.0, %v5072
  %v5074 = vpop.f32.mrb[0].mxu0
  %v5075 = vpop.f32.mrb[0].mxu0
  %v5076 = vadd.f32 0.0, %v5075
  %v5077 = vpop.f32.mrb[0].mxu0
  %5078 = vmatprep.mubr.bf16.mxu0 0
  %5079 = vmatmul.mubr.bf16.gmra.mrb[0].mxu0 %v5013
  %v5080 = vpop.f32.mrb[0].mxu0
  %v5081 = vadd.f32 0.0, %v5080
  %v5082 = vpop.f32.mrb[0].mxu0
  %v5083 = vpop.f32.mrb[0].mxu0
  %v5084 = vadd.f32 0.0, %v5083
  %v5085 = vpop.f32.mrb[0].mxu0
  %5086 = vmatprep.mubr.bf16.mxu0 0
  %5087 = vmatmul.mubr.bf16.gmra.mrb[0].mxu0 %v5016
  %v5088 = vpop.f32.mrb[0].mxu0
  %v5089 = vadd.f32 0.0, %v5088
  %v5090 = vpop.f32.mrb[0].mxu0
  %v5091 = vpop.f32.mrb[0].mxu0
  %v5092 = vadd.f32 0.0, %v5091
  %v5093 = vpop.f32.mrb[0].mxu0
  %5094 = vmatprep.mubr.bf16.mxu0 0
  %5095 = vmatmul.mubr.bf16.gmra.mrb[0].mxu0 %v5019
  %v5096 = vpop.f32.mrb[0].mxu0
  %v5097 = vadd.f32 0.0, %v5096
  %v5098 = vpop.f32.mrb[0].mxu0
  %v5099 = vpop.f32.mrb[0].mxu0
  %v5100 = vadd.f32 0.0, %v5099
  %v5101 = vpop.f32.mrb[0].mxu0
  %5102 = vmatprep.mubr.bf16.mxu0 0
  %5103 = vmatmul.mubr.bf16.gmra.mrb[0].mxu0 %v5022
  %v5104 = vpop.f32.mrb[0].mxu0
  %v5105 = vadd.f32 0.0, %v5104
  %v5106 = vpop.f32.mrb[0].mxu0
  %v5107 = vpop.f32.mrb[0].mxu0
  %v5108 = vadd.f32 0.0, %v5107
  %v5109 = vpop.f32.mrb[0].mxu0
  %5110 = vmatprep.mubr.bf16.mxu0 0
  %5111 = vmatmul.mubr.bf16.gmra.mrb[0].mxu0 %v5025
  %v5112 = vpop.f32.mrb[0].mxu0
  %v5113 = vadd.f32 0.0, %v5112
  %v5114 = vpop.f32.mrb[0].mxu0
  %v5115 = vpop.f32.mrb[0].mxu0
  %v5116 = vadd.f32 0.0, %v5115
  %v5117 = vpop.f32.mrb[0].mxu0
  %5118 = vmatprep.mubr.bf16.mxu0 0
  %5119 = vmatmul.mubr.bf16.gmra.mrb[0].mxu0 %v5028
  %v5120 = vpop.f32.mrb[0].mxu0
  %v5121 = vadd.f32 0.0, %v5120
  %v5122 = vpop.f32.mrb[0].mxu0
  %v5123 = vpop.f32.mrb[0].mxu0
  %v5124 = vadd.f32 0.0, %v5123
  %v5125 = vpop.f32.mrb[0].mxu0
  %5126 = vdwg.mxu0
  %v5127 = vadd.f32 %v4966, %v5065
  %v5128 = vadd.f32 %v4967, %v5068
  %v5129 = vadd.f32 %v4968, %v5073
  %v5130 = vadd.f32 %v4969, %v5076
  %v5131 = vadd.f32 %v4970, %v5081
  %v5132 = vadd.f32 %v4971, %v5084
  %v5133 = vadd.f32 %v4972, %v5089
  %v5134 = vadd.f32 %v4973, %v5092
  %v5135 = vadd.f32 %v4974, %v5097
  %v5136 = vadd.f32 %v4975, %v5100
  %v5137 = vadd.f32 %v4976, %v5105
  %v5138 = vadd.f32 %v4977, %v5108
  %v5139 = vadd.f32 %v4978, %v5113
  %v5140 = vadd.f32 %v4979, %v5116
  %v5141 = vadd.f32 %v4980, %v5121
  %v5142 = vadd.f32 %v4981, %v5124
  %v5143 = vld [vmem:[#allocation2 + $0x100] sm:$0xff]
  %v5144 = vld [vmem:[#allocation2 + $0x108] sm:$0xff]
  %v5145 = vld [vmem:[#allocation2 + $0x110] sm:$0xff]
  %v5146 = vld [vmem:[#allocation2 + $0x118] sm:$0xff]
  %v5147 = vld [vmem:[#allocation2 + $0x120] sm:$0xff]
  %v5148 = vld [vmem:[#allocation2 + $0x128] sm:$0xff]
  %v5149 = vld [vmem:[#allocation2 + $0x130] sm:$0xff]
  %v5150 = vld [vmem:[#allocation2 + $0x138] sm:$0xff]
  %v5151 = vld [vmem:[%s3 + $0x40] sm:$0xf]
  %v5152 = vld [vmem:[%s3 + $0x44] sm:$0xf]
  %v5153 = vld [vmem:[%s3 + $0x48] sm:$0xf]
  %v5154 = vld [vmem:[%s3 + $0x4c] sm:$0xf]
  %v5159 = vunpack.c.l.b16 %v5151
  %v5160 = vunpack.c.l.b16 %v5152
  %v5161 = vunpack.c.l.b16 %v5153
  %v5162 = vunpack.c.l.b16 %v5154
  %v5163 = vpack.c.b16 %v5160, %v5159
  %v5164 = vpack.c.b16 %v5162, %v5161
  %v5168 = vsel %vm4330, %v5143, 0
  %v5171 = vsel %vm4330, %v5144, 0
  %v5174 = vsel %vm4330, %v5145, 0
  %v5177 = vsel %vm4330, %v5146, 0
  %v5180 = vsel %vm4330, %v5147, 0
  %v5183 = vsel %vm4330, %v5148, 0
  %v5186 = vsel %vm4330, %v5149, 0
  %v5189 = vsel %vm4330, %v5150, 0
  %5191 = vmatprep.subr.bf16.mxu0 0
  %5192 = vmatpush1.bf16.msra.mxu0 %v5163
  %5193 = vmatprep.subr.bf16.mxu0 0
  %5194 = vmatpush1.bf16.msra.mxu0 %v5164
  %5195 = vmatprep.subr.bf16.mxu0 0
  %5196 = vmatpush1.bf16.msra.mxu0 0
  %5197 = vmatprep.subr.bf16.mxu0 0
  %5198 = vmatpush1.bf16.msra.mxu0 0
  %5199 = vmatprep.subr.bf16.mxu0 0
  %5200 = vmatpush1.bf16.msra.mxu0 0
  %5201 = vmatprep.subr.bf16.mxu0 0
  %5202 = vmatpush1.bf16.msra.mxu0 0
  %5203 = vmatprep.subr.bf16.mxu0 0
  %5204 = vmatpush1.bf16.msra.mxu0 0
  %5205 = vmatprep.subr.bf16.mxu0 0
  %5206 = vmatpush1.bf16.msra.mxu0 0
  %5207 = vmatprep.subr.bf16.mxu0 0
  %5208 = vmatpush1.bf16.msra.mxu0 0
  %5209 = vmatprep.subr.bf16.mxu0 0
  %5210 = vmatpush1.bf16.msra.mxu0 0
  %5211 = vmatprep.subr.bf16.mxu0 0
  %5212 = vmatpush1.bf16.msra.mxu0 0
  %5213 = vmatprep.subr.bf16.mxu0 0
  %5214 = vmatpush1.bf16.msra.mxu0 0
  %5215 = vmatprep.subr.bf16.mxu0 0
  %5216 = vmatpush1.bf16.msra.mxu0 0
  %5217 = vmatprep.subr.bf16.mxu0 0
  %5218 = vmatpush1.bf16.msra.mxu0 0
  %5219 = vmatprep.subr.bf16.mxu0 0
  %5220 = vmatpush1.bf16.msra.mxu0 0
  %5221 = vmatprep.subr.bf16.mxu0 0
  %5222 = vmatpush1.bf16.msra.mxu0 0
  %5223 = vmatprep.mubr.bf16.mxu0 0
  %5224 = vmatmul.mubr.bf16.gmra.mrb[0].mxu0 %v5168
  %v5225 = vpop.f32.mrb[0].mxu0
  %v5226 = vadd.f32 0.0, %v5225
  %v5227 = vpop.f32.mrb[0].mxu0
  %v5228 = vpop.f32.mrb[0].mxu0
  %v5229 = vadd.f32 0.0, %v5228
  %v5230 = vpop.f32.mrb[0].mxu0
  %5231 = vmatprep.mubr.bf16.mxu0 0
  %5232 = vmatmul.mubr.bf16.gmra.mrb[0].mxu0 %v5171
  %v5233 = vpop.f32.mrb[0].mxu0
  %v5234 = vadd.f32 0.0, %v5233
  %v5235 = vpop.f32.mrb[0].mxu0
  %v5236 = vpop.f32.mrb[0].mxu0
  %v5237 = vadd.f32 0.0, %v5236
  %v5238 = vpop.f32.mrb[0].mxu0
  %5239 = vmatprep.mubr.bf16.mxu0 0
  %5240 = vmatmul.mubr.bf16.gmra.mrb[0].mxu0 %v5174
  %v5241 = vpop.f32.mrb[0].mxu0
  %v5242 = vadd.f32 0.0, %v5241
  %v5243 = vpop.f32.mrb[0].mxu0
  %v5244 = vpop.f32.mrb[0].mxu0
  %v5245 = vadd.f32 0.0, %v5244
  %v5246 = vpop.f32.mrb[0].mxu0
  %5247 = vmatprep.mubr.bf16.mxu0 0
  %5248 = vmatmul.mubr.bf16.gmra.mrb[0].mxu0 %v5177
  %v5249 = vpop.f32.mrb[0].mxu0
  %v5250 = vadd.f32 0.0, %v5249
  %v5251 = vpop.f32.mrb[0].mxu0
  %v5252 = vpop.f32.mrb[0].mxu0
  %v5253 = vadd.f32 0.0, %v5252
  %v5254 = vpop.f32.mrb[0].mxu0
  %5255 = vmatprep.mubr.bf16.mxu0 0
  %5256 = vmatmul.mubr.bf16.gmra.mrb[0].mxu0 %v5180
  %v5257 = vpop.f32.mrb[0].mxu0
  %v5258 = vadd.f32 0.0, %v5257
  %v5259 = vpop.f32.mrb[0].mxu0
  %v5260 = vpop.f32.mrb[0].mxu0
  %v5261 = vadd.f32 0.0, %v5260
  %v5262 = vpop.f32.mrb[0].mxu0
  %5263 = vmatprep.mubr.bf16.mxu0 0
  %5264 = vmatmul.mubr.bf16.gmra.mrb[0].mxu0 %v5183
  %v5265 = vpop.f32.mrb[0].mxu0
  %v5266 = vadd.f32 0.0, %v5265
  %v5267 = vpop.f32.mrb[0].mxu0
  %v5268 = vpop.f32.mrb[0].mxu0
  %v5269 = vadd.f32 0.0, %v5268
  %v5270 = vpop.f32.mrb[0].mxu0
  %5271 = vmatprep.mubr.bf16.mxu0 0
  %5272 = vmatmul.mubr.bf16.gmra.mrb[0].mxu0 %v5186
  %v5273 = vpop.f32.mrb[0].mxu0
  %v5274 = vadd.f32 0.0, %v5273
  %v5275 = vpop.f32.mrb[0].mxu0
  %v5276 = vpop.f32.mrb[0].mxu0
  %v5277 = vadd.f32 0.0, %v5276
  %v5278 = vpop.f32.mrb[0].mxu0
  %5279 = vmatprep.mubr.bf16.mxu0 0
  %5280 = vmatmul.mubr.bf16.gmra.mrb[0].mxu0 %v5189
  %v5281 = vpop.f32.mrb[0].mxu0
  %v5282 = vadd.f32 0.0, %v5281
  %v5283 = vpop.f32.mrb[0].mxu0
  %v5284 = vpop.f32.mrb[0].mxu0
  %v5285 = vadd.f32 0.0, %v5284
  %v5286 = vpop.f32.mrb[0].mxu0
  %5287 = vdwg.mxu0
  %v5288 = vadd.f32 %v5127, %v5226
  %v5289 = vadd.f32 %v5128, %v5229
  %v5290 = vadd.f32 %v5129, %v5234
  %v5291 = vadd.f32 %v5130, %v5237
  %v5292 = vadd.f32 %v5131, %v5242
  %v5293 = vadd.f32 %v5132, %v5245
  %v5294 = vadd.f32 %v5133, %v5250
  %v5295 = vadd.f32 %v5134, %v5253
  %v5296 = vadd.f32 %v5135, %v5258
  %v5297 = vadd.f32 %v5136, %v5261
  %v5298 = vadd.f32 %v5137, %v5266
  %v5299 = vadd.f32 %v5138, %v5269
  %v5300 = vadd.f32 %v5139, %v5274
  %v5301 = vadd.f32 %v5140, %v5277
  %v5302 = vadd.f32 %v5141, %v5282
  %v5303 = vadd.f32 %v5142, %v5285
  %v5304 = vld [vmem:[#allocation2 + $0x140] sm:$0xff]
  %v5305 = vld [vmem:[#allocation2 + $0x148] sm:$0xff]
  %v5306 = vld [vmem:[#allocation2 + $0x150] sm:$0xff]
  %v5307 = vld [vmem:[#allocation2 + $0x158] sm:$0xff]
  %v5308 = vld [vmem:[#allocation2 + $0x160] sm:$0xff]
  %v5309 = vld [vmem:[#allocation2 + $0x168] sm:$0xff]
  %v5310 = vld [vmem:[#allocation2 + $0x170] sm:$0xff]
  %v5311 = vld [vmem:[#allocation2 + $0x178] sm:$0xff]
  %v5312 = vld [vmem:[%s3 + $0x50] sm:$0xf]
  %v5313 = vld [vmem:[%s3 + $0x54] sm:$0xf]
  %v5314 = vld [vmem:[%s3 + $0x58] sm:$0xf]
  %v5315 = vld [vmem:[%s3 + $0x5c] sm:$0xf]
  %v5320 = vunpack.c.l.b16 %v5312
  %v5321 = vunpack.c.l.b16 %v5313
  %v5322 = vunpack.c.l.b16 %v5314
  %v5323 = vunpack.c.l.b16 %v5315
  %v5324 = vpack.c.b16 %v5321, %v5320
  %v5325 = vpack.c.b16 %v5323, %v5322
  %v5329 = vsel %vm4330, %v5304, 0
  %v5332 = vsel %vm4330, %v5305, 0
  %v5335 = vsel %vm4330, %v5306, 0
  %v5338 = vsel %vm4330, %v5307, 0
  %v5341 = vsel %vm4330, %v5308, 0
  %v5344 = vsel %vm4330, %v5309, 0
  %v5347 = vsel %vm4330, %v5310, 0
  %v5350 = vsel %vm4330, %v5311, 0
  %5352 = vmatprep.subr.bf16.mxu0 0
  %5353 = vmatpush1.bf16.msra.mxu0 %v5324
  %5354 = vmatprep.subr.bf16.mxu0 0
  %5355 = vmatpush1.bf16.msra.mxu0 %v5325
  %5356 = vmatprep.subr.bf16.mxu0 0
  %5357 = vmatpush1.bf16.msra.mxu0 0
  %5358 = vmatprep.subr.bf16.mxu0 0
  %5359 = vmatpush1.bf16.msra.mxu0 0
  %5360 = vmatprep.subr.bf16.mxu0 0
  %5361 = vmatpush1.bf16.msra.mxu0 0
  %5362 = vmatprep.subr.bf16.mxu0 0
  %5363 = vmatpush1.bf16.msra.mxu0 0
  %5364 = vmatprep.subr.bf16.mxu0 0
  %5365 = vmatpush1.bf16.msra.mxu0 0
  %5366 = vmatprep.subr.bf16.mxu0 0
  %5367 = vmatpush1.bf16.msra.mxu0 0
  %5368 = vmatprep.subr.bf16.mxu0 0
  %5369 = vmatpush1.bf16.msra.mxu0 0
  %5370 = vmatprep.subr.bf16.mxu0 0
  %5371 = vmatpush1.bf16.msra.mxu0 0
  %5372 = vmatprep.subr.bf16.mxu0 0
  %5373 = vmatpush1.bf16.msra.mxu0 0
  %5374 = vmatprep.subr.bf16.mxu0 0
  %5375 = vmatpush1.bf16.msra.mxu0 0
  %5376 = vmatprep.subr.bf16.mxu0 0
  %5377 = vmatpush1.bf16.msra.mxu0 0
  %5378 = vmatprep.subr.bf16.mxu0 0
  %5379 = vmatpush1.bf16.msra.mxu0 0
  %5380 = vmatprep.subr.bf16.mxu0 0
  %5381 = vmatpush1.bf16.msra.mxu0 0
  %5382 = vmatprep.subr.bf16.mxu0 0
  %5383 = vmatpush1.bf16.msra.mxu0 0
  %5384 = vmatprep.mubr.bf16.mxu0 0
  %5385 = vmatmul.mubr.bf16.gmra.mrb[0].mxu0 %v5329
  %v5386 = vpop.f32.mrb[0].mxu0
  %v5387 = vadd.f32 0.0, %v5386
  %v5388 = vpop.f32.mrb[0].mxu0
  %v5389 = vpop.f32.mrb[0].mxu0
  %v5390 = vadd.f32 0.0, %v5389
  %v5391 = vpop.f32.mrb[0].mxu0
  %5392 = vmatprep.mubr.bf16.mxu0 0
  %5393 = vmatmul.mubr.bf16.gmra.mrb[0].mxu0 %v5332
  %v5394 = vpop.f32.mrb[0].mxu0
  %v5395 = vadd.f32 0.0, %v5394
  %v5396 = vpop.f32.mrb[0].mxu0
  %v5397 = vpop.f32.mrb[0].mxu0
  %v5398 = vadd.f32 0.0, %v5397
  %v5399 = vpop.f32.mrb[0].mxu0
  %5400 = vmatprep.mubr.bf16.mxu0 0
  %5401 = vmatmul.mubr.bf16.gmra.mrb[0].mxu0 %v5335
  %v5402 = vpop.f32.mrb[0].mxu0
  %v5403 = vadd.f32 0.0, %v5402
  %v5404 = vpop.f32.mrb[0].mxu0
  %v5405 = vpop.f32.mrb[0].mxu0
  %v5406 = vadd.f32 0.0, %v5405
  %v5407 = vpop.f32.mrb[0].mxu0
  %5408 = vmatprep.mubr.bf16.mxu0 0
  %5409 = vmatmul.mubr.bf16.gmra.mrb[0].mxu0 %v5338
  %v5410 = vpop.f32.mrb[0].mxu0
  %v5411 = vadd.f32 0.0, %v5410
  %v5412 = vpop.f32.mrb[0].mxu0
  %v5413 = vpop.f32.mrb[0].mxu0
  %v5414 = vadd.f32 0.0, %v5413
  %v5415 = vpop.f32.mrb[0].mxu0
  %5416 = vmatprep.mubr.bf16.mxu0 0
  %5417 = vmatmul.mubr.bf16.gmra.mrb[0].mxu0 %v5341
  %v5418 = vpop.f32.mrb[0].mxu0
  %v5419 = vadd.f32 0.0, %v5418
  %v5420 = vpop.f32.mrb[0].mxu0
  %v5421 = vpop.f32.mrb[0].mxu0
  %v5422 = vadd.f32 0.0, %v5421
  %v5423 = vpop.f32.mrb[0].mxu0
  %5424 = vmatprep.mubr.bf16.mxu0 0
  %5425 = vmatmul.mubr.bf16.gmra.mrb[0].mxu0 %v5344
  %v5426 = vpop.f32.mrb[0].mxu0
  %v5427 = vadd.f32 0.0, %v5426
  %v5428 = vpop.f32.mrb[0].mxu0
  %v5429 = vpop.f32.mrb[0].mxu0
  %v5430 = vadd.f32 0.0, %v5429
  %v5431 = vpop.f32.mrb[0].mxu0
  %5432 = vmatprep.mubr.bf16.mxu0 0
  %5433 = vmatmul.mubr.bf16.gmra.mrb[0].mxu0 %v5347
  %v5434 = vpop.f32.mrb[0].mxu0
  %v5435 = vadd.f32 0.0, %v5434
  %v5436 = vpop.f32.mrb[0].mxu0
  %v5437 = vpop.f32.mrb[0].mxu0
  %v5438 = vadd.f32 0.0, %v5437
  %v5439 = vpop.f32.mrb[0].mxu0
  %5440 = vmatprep.mubr.bf16.mxu0 0
  %5441 = vmatmul.mubr.bf16.gmra.mrb[0].mxu0 %v5350
  %v5442 = vpop.f32.mrb[0].mxu0
  %v5443 = vadd.f32 0.0, %v5442
  %v5444 = vpop.f32.mrb[0].mxu0
  %v5445 = vpop.f32.mrb[0].mxu0
  %v5446 = vadd.f32 0.0, %v5445
  %v5447 = vpop.f32.mrb[0].mxu0
  %5448 = vdwg.mxu0
  %v5449 = vadd.f32 %v5288, %v5387
  %v5450 = vadd.f32 %v5289, %v5390
  %v5451 = vadd.f32 %v5290, %v5395
  %v5452 = vadd.f32 %v5291, %v5398
  %v5453 = vadd.f32 %v5292, %v5403
  %v5454 = vadd.f32 %v5293, %v5406
  %v5455 = vadd.f32 %v5294, %v5411
  %v5456 = vadd.f32 %v5295, %v5414
  %v5457 = vadd.f32 %v5296, %v5419
  %v5458 = vadd.f32 %v5297, %v5422
  %v5459 = vadd.f32 %v5298, %v5427
  %v5460 = vadd.f32 %v5299, %v5430
  %v5461 = vadd.f32 %v5300, %v5435
  %v5462 = vadd.f32 %v5301, %v5438
  %v5463 = vadd.f32 %v5302, %v5443
  %v5464 = vadd.f32 %v5303, %v5446
  %v5465 = vld [vmem:[#allocation2 + $0x180] sm:$0xff]
  %v5466 = vld [vmem:[#allocation2 + $0x188] sm:$0xff]
  %v5467 = vld [vmem:[#allocation2 + $0x190] sm:$0xff]
  %v5468 = vld [vmem:[#allocation2 + $0x198] sm:$0xff]
  %v5469 = vld [vmem:[#allocation2 + $0x1a0] sm:$0xff]
  %v5470 = vld [vmem:[#allocation2 + $0x1a8] sm:$0xff]
  %v5471 = vld [vmem:[#allocation2 + $0x1b0] sm:$0xff]
  %v5472 = vld [vmem:[#allocation2 + $0x1b8] sm:$0xff]
  %v5473 = vld [vmem:[%s3 + $0x60] sm:$0xf]
  %v5474 = vld [vmem:[%s3 + $0x64] sm:$0xf]
  %v5475 = vld [vmem:[%s3 + $0x68] sm:$0xf]
  %v5476 = vld [vmem:[%s3 + $0x6c] sm:$0xf]
  %v5481 = vunpack.c.l.b16 %v5473
  %v5482 = vunpack.c.l.b16 %v5474
  %v5483 = vunpack.c.l.b16 %v5475
  %v5484 = vunpack.c.l.b16 %v5476
  %v5485 = vpack.c.b16 %v5482, %v5481
  %v5486 = vpack.c.b16 %v5484, %v5483
  %v5490 = vsel %vm4330, %v5465, 0
  %v5493 = vsel %vm4330, %v5466, 0
  %v5496 = vsel %vm4330, %v5467, 0
  %v5499 = vsel %vm4330, %v5468, 0
  %v5502 = vsel %vm4330, %v5469, 0
  %v5505 = vsel %vm4330, %v5470, 0
  %v5508 = vsel %vm4330, %v5471, 0
  %v5511 = vsel %vm4330, %v5472, 0
  %5513 = vmatprep.subr.bf16.mxu0 0
  %5514 = vmatpush1.bf16.msra.mxu0 %v5485
  %5515 = vmatprep.subr.bf16.mxu0 0
  %5516 = vmatpush1.bf16.msra.mxu0 %v5486
  %5517 = vmatprep.subr.bf16.mxu0 0
  %5518 = vmatpush1.bf16.msra.mxu0 0
  %5519 = vmatprep.subr.bf16.mxu0 0
  %5520 = vmatpush1.bf16.msra.mxu0 0
  %5521 = vmatprep.subr.bf16.mxu0 0
  %5522 = vmatpush1.bf16.msra.mxu0 0
  %5523 = vmatprep.subr.bf16.mxu0 0
  %5524 = vmatpush1.bf16.msra.mxu0 0
  %5525 = vmatprep.subr.bf16.mxu0 0
  %5526 = vmatpush1.bf16.msra.mxu0 0
  %5527 = vmatprep.subr.bf16.mxu0 0
  %5528 = vmatpush1.bf16.msra.mxu0 0
  %5529 = vmatprep.subr.bf16.mxu0 0
  %5530 = vmatpush1.bf16.msra.mxu0 0
  %5531 = vmatprep.subr.bf16.mxu0 0
  %5532 = vmatpush1.bf16.msra.mxu0 0
  %5533 = vmatprep.subr.bf16.mxu0 0
  %5534 = vmatpush1.bf16.msra.mxu0 0
  %5535 = vmatprep.subr.bf16.mxu0 0
  %5536 = vmatpush1.bf16.msra.mxu0 0
  %5537 = vmatprep.subr.bf16.mxu0 0
  %5538 = vmatpush1.bf16.msra.mxu0 0
  %5539 = vmatprep.subr.bf16.mxu0 0
  %5540 = vmatpush1.bf16.msra.mxu0 0
  %5541 = vmatprep.subr.bf16.mxu0 0
  %5542 = vmatpush1.bf16.msra.mxu0 0
  %5543 = vmatprep.subr.bf16.mxu0 0
  %5544 = vmatpush1.bf16.msra.mxu0 0
  %5545 = vmatprep.mubr.bf16.mxu0 0
  %5546 = vmatmul.mubr.bf16.gmra.mrb[0].mxu0 %v5490
  %v5547 = vpop.f32.mrb[0].mxu0
  %v5548 = vadd.f32 0.0, %v5547
  %v5549 = vpop.f32.mrb[0].mxu0
  %v5550 = vpop.f32.mrb[0].mxu0
  %v5551 = vadd.f32 0.0, %v5550
  %v5552 = vpop.f32.mrb[0].mxu0
  %5553 = vmatprep.mubr.bf16.mxu0 0
  %5554 = vmatmul.mubr.bf16.gmra.mrb[0].mxu0 %v5493
  %v5555 = vpop.f32.mrb[0].mxu0
  %v5556 = vadd.f32 0.0, %v5555
  %v5557 = vpop.f32.mrb[0].mxu0
  %v5558 = vpop.f32.mrb[0].mxu0
  %v5559 = vadd.f32 0.0, %v5558
  %v5560 = vpop.f32.mrb[0].mxu0
  %5561 = vmatprep.mubr.bf16.mxu0 0
  %5562 = vmatmul.mubr.bf16.gmra.mrb[0].mxu0 %v5496
  %v5563 = vpop.f32.mrb[0].mxu0
  %v5564 = vadd.f32 0.0, %v5563
  %v5565 = vpop.f32.mrb[0].mxu0
  %v5566 = vpop.f32.mrb[0].mxu0
  %v5567 = vadd.f32 0.0, %v5566
  %v5568 = vpop.f32.mrb[0].mxu0
  %5569 = vmatprep.mubr.bf16.mxu0 0
  %5570 = vmatmul.mubr.bf16.gmra.mrb[0].mxu0 %v5499
  %v5571 = vpop.f32.mrb[0].mxu0
  %v5572 = vadd.f32 0.0, %v5571
  %v5573 = vpop.f32.mrb[0].mxu0
  %v5574 = vpop.f32.mrb[0].mxu0
  %v5575 = vadd.f32 0.0, %v5574
  %v5576 = vpop.f32.mrb[0].mxu0
  %5577 = vmatprep.mubr.bf16.mxu0 0
  %5578 = vmatmul.mubr.bf16.gmra.mrb[0].mxu0 %v5502
  %v5579 = vpop.f32.mrb[0].mxu0
  %v5580 = vadd.f32 0.0, %v5579
  %v5581 = vpop.f32.mrb[0].mxu0
  %v5582 = vpop.f32.mrb[0].mxu0
  %v5583 = vadd.f32 0.0, %v5582
  %v5584 = vpop.f32.mrb[0].mxu0
  %5585 = vmatprep.mubr.bf16.mxu0 0
  %5586 = vmatmul.mubr.bf16.gmra.mrb[0].mxu0 %v5505
  %v5587 = vpop.f32.mrb[0].mxu0
  %v5588 = vadd.f32 0.0, %v5587
  %v5589 = vpop.f32.mrb[0].mxu0
  %v5590 = vpop.f32.mrb[0].mxu0
  %v5591 = vadd.f32 0.0, %v5590
  %v5592 = vpop.f32.mrb[0].mxu0
  %5593 = vmatprep.mubr.bf16.mxu0 0
  %5594 = vmatmul.mubr.bf16.gmra.mrb[0].mxu0 %v5508
  %v5595 = vpop.f32.mrb[0].mxu0
  %v5596 = vadd.f32 0.0, %v5595
  %v5597 = vpop.f32.mrb[0].mxu0
  %v5598 = vpop.f32.mrb[0].mxu0
  %v5599 = vadd.f32 0.0, %v5598
  %v5600 = vpop.f32.mrb[0].mxu0
  %5601 = vmatprep.mubr.bf16.mxu0 0
  %5602 = vmatmul.mubr.bf16.gmra.mrb[0].mxu0 %v5511
  %v5603 = vpop.f32.mrb[0].mxu0
  %v5604 = vadd.f32 0.0, %v5603
  %v5605 = vpop.f32.mrb[0].mxu0
  %v5606 = vpop.f32.mrb[0].mxu0
  %v5607 = vadd.f32 0.0, %v5606
  %v5608 = vpop.f32.mrb[0].mxu0
  %5609 = vdwg.mxu0
  %v5610 = vadd.f32 %v5449, %v5548
  %v5611 = vadd.f32 %v5450, %v5551
  %v5612 = vadd.f32 %v5451, %v5556
  %v5613 = vadd.f32 %v5452, %v5559
  %v5614 = vadd.f32 %v5453, %v5564
  %v5615 = vadd.f32 %v5454, %v5567
  %v5616 = vadd.f32 %v5455, %v5572
  %v5617 = vadd.f32 %v5456, %v5575
  %v5618 = vadd.f32 %v5457, %v5580
  %v5619 = vadd.f32 %v5458, %v5583
  %v5620 = vadd.f32 %v5459, %v5588
  %v5621 = vadd.f32 %v5460, %v5591
  %v5622 = vadd.f32 %v5461, %v5596
  %v5623 = vadd.f32 %v5462, %v5599
  %v5624 = vadd.f32 %v5463, %v5604
  %v5625 = vadd.f32 %v5464, %v5607
  %v5626 = vld [vmem:[#allocation2 + $0x1c0] sm:$0xff]
  %v5627 = vld [vmem:[#allocation2 + $0x1c8] sm:$0xff]
  %v5628 = vld [vmem:[#allocation2 + $0x1d0] sm:$0xff]
  %v5629 = vld [vmem:[#allocation2 + $0x1d8] sm:$0xff]
  %v5630 = vld [vmem:[#allocation2 + $0x1e0] sm:$0xff]
  %v5631 = vld [vmem:[#allocation2 + $0x1e8] sm:$0xff]
  %v5632 = vld [vmem:[#allocation2 + $0x1f0] sm:$0xff]
  %v5633 = vld [vmem:[#allocation2 + $0x1f8] sm:$0xff]
  %v5634 = vld [vmem:[%s3 + $0x70] sm:$0xf]
  %v5635 = vld [vmem:[%s3 + $0x74] sm:$0xf]
  %v5636 = vld [vmem:[%s3 + $0x78] sm:$0xf]
  %v5637 = vld [vmem:[%s3 + $0x7c] sm:$0xf]
  %v5642 = vunpack.c.l.b16 %v5634
  %v5643 = vunpack.c.l.b16 %v5635
  %v5644 = vunpack.c.l.b16 %v5636
  %v5645 = vunpack.c.l.b16 %v5637
  %v5646 = vpack.c.b16 %v5643, %v5642
  %v5647 = vpack.c.b16 %v5645, %v5644
  %v5651 = vsel %vm4330, %v5626, 0
  %v5654 = vsel %vm4330, %v5627, 0
  %v5657 = vsel %vm4330, %v5628, 0
  %v5660 = vsel %vm4330, %v5629, 0
  %v5663 = vsel %vm4330, %v5630, 0
  %v5666 = vsel %vm4330, %v5631, 0
  %v5669 = vsel %vm4330, %v5632, 0
  %v5672 = vsel %vm4330, %v5633, 0
  %5674 = vmatprep.subr.bf16.mxu0 0
  %5675 = vmatpush1.bf16.msra.mxu0 %v5646
  %5676 = vmatprep.subr.bf16.mxu0 0
  %5677 = vmatpush1.bf16.msra.mxu0 %v5647
  %5678 = vmatprep.subr.bf16.mxu0 0
  %5679 = vmatpush1.bf16.msra.mxu0 0
  %5680 = vmatprep.subr.bf16.mxu0 0
  %5681 = vmatpush1.bf16.msra.mxu0 0
  %5682 = vmatprep.subr.bf16.mxu0 0
  %5683 = vmatpush1.bf16.msra.mxu0 0
  %5684 = vmatprep.subr.bf16.mxu0 0
  %5685 = vmatpush1.bf16.msra.mxu0 0
  %5686 = vmatprep.subr.bf16.mxu0 0
  %5687 = vmatpush1.bf16.msra.mxu0 0
  %5688 = vmatprep.subr.bf16.mxu0 0
  %5689 = vmatpush1.bf16.msra.mxu0 0
  %5690 = vmatprep.subr.bf16.mxu0 0
  %5691 = vmatpush1.bf16.msra.mxu0 0
  %5692 = vmatprep.subr.bf16.mxu0 0
  %5693 = vmatpush1.bf16.msra.mxu0 0
  %5694 = vmatprep.subr.bf16.mxu0 0
  %5695 = vmatpush1.bf16.msra.mxu0 0
  %5696 = vmatprep.subr.bf16.mxu0 0
  %5697 = vmatpush1.bf16.msra.mxu0 0
  %5698 = vmatprep.subr.bf16.mxu0 0
  %5699 = vmatpush1.bf16.msra.mxu0 0
  %5700 = vmatprep.subr.bf16.mxu0 0
  %5701 = vmatpush1.bf16.msra.mxu0 0
  %5702 = vmatprep.subr.bf16.mxu0 0
  %5703 = vmatpush1.bf16.msra.mxu0 0
  %5704 = vmatprep.subr.bf16.mxu0 0
  %5705 = vmatpush1.bf16.msra.mxu0 0
  %5706 = vmatprep.mubr.bf16.mxu0 0
  %5707 = vmatmul.mubr.bf16.gmra.mrb[0].mxu0 %v5651
  %v5708 = vpop.f32.mrb[0].mxu0
  %v5709 = vadd.f32 0.0, %v5708
  %v5710 = vpop.f32.mrb[0].mxu0
  %v5711 = vpop.f32.mrb[0].mxu0
  %v5712 = vadd.f32 0.0, %v5711
  %v5713 = vpop.f32.mrb[0].mxu0
  %5714 = vmatprep.mubr.bf16.mxu0 0
  %5715 = vmatmul.mubr.bf16.gmra.mrb[0].mxu0 %v5654
  %v5716 = vpop.f32.mrb[0].mxu0
  %v5717 = vadd.f32 0.0, %v5716
  %v5718 = vpop.f32.mrb[0].mxu0
  %v5719 = vpop.f32.mrb[0].mxu0
  %v5720 = vadd.f32 0.0, %v5719
  %v5721 = vpop.f32.mrb[0].mxu0
  %5722 = vmatprep.mubr.bf16.mxu0 0
  %5723 = vmatmul.mubr.bf16.gmra.mrb[0].mxu0 %v5657
  %v5724 = vpop.f32.mrb[0].mxu0
  %v5725 = vadd.f32 0.0, %v5724
  %v5726 = vpop.f32.mrb[0].mxu0
  %v5727 = vpop.f32.mrb[0].mxu0
  %v5728 = vadd.f32 0.0, %v5727
  %v5729 = vpop.f32.mrb[0].mxu0
  %5730 = vmatprep.mubr.bf16.mxu0 0
  %5731 = vmatmul.mubr.bf16.gmra.mrb[0].mxu0 %v5660
  %v5732 = vpop.f32.mrb[0].mxu0
  %v5733 = vadd.f32 0.0, %v5732
  %v5734 = vpop.f32.mrb[0].mxu0
  %v5735 = vpop.f32.mrb[0].mxu0
  %v5736 = vadd.f32 0.0, %v5735
  %v5737 = vpop.f32.mrb[0].mxu0
  %5738 = vmatprep.mubr.bf16.mxu0 0
  %5739 = vmatmul.mubr.bf16.gmra.mrb[0].mxu0 %v5663
  %v5740 = vpop.f32.mrb[0].mxu0
  %v5741 = vadd.f32 0.0, %v5740
  %v5742 = vpop.f32.mrb[0].mxu0
  %v5743 = vpop.f32.mrb[0].mxu0
  %v5744 = vadd.f32 0.0, %v5743
  %v5745 = vpop.f32.mrb[0].mxu0
  %5746 = vmatprep.mubr.bf16.mxu0 0
  %5747 = vmatmul.mubr.bf16.gmra.mrb[0].mxu0 %v5666
  %v5748 = vpop.f32.mrb[0].mxu0
  %v5749 = vadd.f32 0.0, %v5748
  %v5750 = vpop.f32.mrb[0].mxu0
  %v5751 = vpop.f32.mrb[0].mxu0
  %v5752 = vadd.f32 0.0, %v5751
  %v5753 = vpop.f32.mrb[0].mxu0
  %5754 = vmatprep.mubr.bf16.mxu0 0
  %5755 = vmatmul.mubr.bf16.gmra.mrb[0].mxu0 %v5669
  %v5756 = vpop.f32.mrb[0].mxu0
  %v5757 = vadd.f32 0.0, %v5756
  %v5758 = vpop.f32.mrb[0].mxu0
  %v5759 = vpop.f32.mrb[0].mxu0
  %v5760 = vadd.f32 0.0, %v5759
  %v5761 = vpop.f32.mrb[0].mxu0
  %5762 = vmatprep.mubr.bf16.mxu0 0
  %5763 = vmatmul.mubr.bf16.gmra.mrb[0].mxu0 %v5672
  %v5764 = vpop.f32.mrb[0].mxu0
  %v5765 = vadd.f32 0.0, %v5764
  %v5766 = vpop.f32.mrb[0].mxu0
  %v5767 = vpop.f32.mrb[0].mxu0
  %v5768 = vadd.f32 0.0, %v5767
  %v5769 = vpop.f32.mrb[0].mxu0
  %5770 = vdwg.mxu0
  %v5771 = vadd.f32 %v5610, %v5709
  %v5772 = vadd.f32 %v5611, %v5712
  %v5773 = vadd.f32 %v5612, %v5717
  %v5774 = vadd.f32 %v5613, %v5720
  %v5775 = vadd.f32 %v5614, %v5725
  %v5776 = vadd.f32 %v5615, %v5728
  %v5777 = vadd.f32 %v5616, %v5733
  %v5778 = vadd.f32 %v5617, %v5736
  %v5779 = vadd.f32 %v5618, %v5741
  %v5780 = vadd.f32 %v5619, %v5744
  %v5781 = vadd.f32 %v5620, %v5749
  %v5782 = vadd.f32 %v5621, %v5752
  %v5783 = vadd.f32 %v5622, %v5757
  %v5784 = vadd.f32 %v5623, %v5760
  %v5785 = vadd.f32 %v5624, %v5765
  %v5786 = vadd.f32 %v5625, %v5768
  %v5787 = vld [vmem:[#allocation2 + $0x200] sm:$0xff]
  %v5788 = vld [vmem:[#allocation2 + $0x208] sm:$0xff]
  %v5789 = vld [vmem:[#allocation2 + $0x210] sm:$0xff]
  %v5790 = vld [vmem:[#allocation2 + $0x218] sm:$0xff]
  %v5791 = vld [vmem:[#allocation2 + $0x220] sm:$0xff]
  %v5792 = vld [vmem:[#allocation2 + $0x228] sm:$0xff]
  %v5793 = vld [vmem:[#allocation2 + $0x230] sm:$0xff]
  %v5794 = vld [vmem:[#allocation2 + $0x238] sm:$0xff]
  %v5795 = vld [vmem:[%s3 + $0x80] sm:$0xf]
  %v5796 = vld [vmem:[%s3 + $0x84] sm:$0xf]
  %v5797 = vld [vmem:[%s3 + $0x88] sm:$0xf]
  %v5798 = vld [vmem:[%s3 + $0x8c] sm:$0xf]
  %v5803 = vunpack.c.l.b16 %v5795
  %v5804 = vunpack.c.l.b16 %v5796
  %v5805 = vunpack.c.l.b16 %v5797
  %v5806 = vunpack.c.l.b16 %v5798
  %v5807 = vpack.c.b16 %v5804, %v5803
  %v5808 = vpack.c.b16 %v5806, %v5805
  %v5812 = vsel %vm4330, %v5787, 0
  %v5815 = vsel %vm4330, %v5788, 0
  %v5818 = vsel %vm4330, %v5789, 0
  %v5821 = vsel %vm4330, %v5790, 0
  %v5824 = vsel %vm4330, %v5791, 0
  %v5827 = vsel %vm4330, %v5792, 0
  %v5830 = vsel %vm4330, %v5793, 0
  %v5833 = vsel %vm4330, %v5794, 0
  %5835 = vmatprep.subr.bf16.mxu0 0
  %5836 = vmatpush1.bf16.msra.mxu0 %v5807
  %5837 = vmatprep.subr.bf16.mxu0 0
  %5838 = vmatpush1.bf16.msra.mxu0 %v5808
  %5839 = vmatprep.subr.bf16.mxu0 0
  %5840 = vmatpush1.bf16.msra.mxu0 0
  %5841 = vmatprep.subr.bf16.mxu0 0
  %5842 = vmatpush1.bf16.msra.mxu0 0
  %5843 = vmatprep.subr.bf16.mxu0 0
  %5844 = vmatpush1.bf16.msra.mxu0 0
  %5845 = vmatprep.subr.bf16.mxu0 0
  %5846 = vmatpush1.bf16.msra.mxu0 0
  %5847 = vmatprep.subr.bf16.mxu0 0
  %5848 = vmatpush1.bf16.msra.mxu0 0
  %5849 = vmatprep.subr.bf16.mxu0 0
  %5850 = vmatpush1.bf16.msra.mxu0 0
  %5851 = vmatprep.subr.bf16.mxu0 0
  %5852 = vmatpush1.bf16.msra.mxu0 0
  %5853 = vmatprep.subr.bf16.mxu0 0
  %5854 = vmatpush1.bf16.msra.mxu0 0
  %5855 = vmatprep.subr.bf16.mxu0 0
  %5856 = vmatpush1.bf16.msra.mxu0 0
  %5857 = vmatprep.subr.bf16.mxu0 0
  %5858 = vmatpush1.bf16.msra.mxu0 0
  %5859 = vmatprep.subr.bf16.mxu0 0
  %5860 = vmatpush1.bf16.msra.mxu0 0
  %5861 = vmatprep.subr.bf16.mxu0 0
  %5862 = vmatpush1.bf16.msra.mxu0 0
  %5863 = vmatprep.subr.bf16.mxu0 0
  %5864 = vmatpush1.bf16.msra.mxu0 0
  %5865 = vmatprep.subr.bf16.mxu0 0
  %5866 = vmatpush1.bf16.msra.mxu0 0
  %5867 = vmatprep.mubr.bf16.mxu0 0
  %5868 = vmatmul.mubr.bf16.gmra.mrb[0].mxu0 %v5812
  %v5869 = vpop.f32.mrb[0].mxu0
  %v5870 = vadd.f32 0.0, %v5869
  %v5871 = vpop.f32.mrb[0].mxu0
  %v5872 = vpop.f32.mrb[0].mxu0
  %v5873 = vadd.f32 0.0, %v5872
  %v5874 = vpop.f32.mrb[0].mxu0
  %5875 = vmatprep.mubr.bf16.mxu0 0
  %5876 = vmatmul.mubr.bf16.gmra.mrb[0].mxu0 %v5815
  %v5877 = vpop.f32.mrb[0].mxu0
  %v5878 = vadd.f32 0.0, %v5877
  %v5879 = vpop.f32.mrb[0].mxu0
  %v5880 = vpop.f32.mrb[0].mxu0
  %v5881 = vadd.f32 0.0, %v5880
  %v5882 = vpop.f32.mrb[0].mxu0
  %5883 = vmatprep.mubr.bf16.mxu0 0
  %5884 = vmatmul.mubr.bf16.gmra.mrb[0].mxu0 %v5818
  %v5885 = vpop.f32.mrb[0].mxu0
  %v5886 = vadd.f32 0.0, %v5885
  %v5887 = vpop.f32.mrb[0].mxu0
  %v5888 = vpop.f32.mrb[0].mxu0
  %v5889 = vadd.f32 0.0, %v5888
  %v5890 = vpop.f32.mrb[0].mxu0
  %5891 = vmatprep.mubr.bf16.mxu0 0
  %5892 = vmatmul.mubr.bf16.gmra.mrb[0].mxu0 %v5821
  %v5893 = vpop.f32.mrb[0].mxu0
  %v5894 = vadd.f32 0.0, %v5893
  %v5895 = vpop.f32.mrb[0].mxu0
  %v5896 = vpop.f32.mrb[0].mxu0
  %v5897 = vadd.f32 0.0, %v5896
  %v5898 = vpop.f32.mrb[0].mxu0
  %5899 = vmatprep.mubr.bf16.mxu0 0
  %5900 = vmatmul.mubr.bf16.gmra.mrb[0].mxu0 %v5824
  %v5901 = vpop.f32.mrb[0].mxu0
  %v5902 = vadd.f32 0.0, %v5901
  %v5903 = vpop.f32.mrb[0].mxu0
  %v5904 = vpop.f32.mrb[0].mxu0
  %v5905 = vadd.f32 0.0, %v5904
  %v5906 = vpop.f32.mrb[0].mxu0
  %5907 = vmatprep.mubr.bf16.mxu0 0
  %5908 = vmatmul.mubr.bf16.gmra.mrb[0].mxu0 %v5827
  %v5909 = vpop.f32.mrb[0].mxu0
  %v5910 = vadd.f32 0.0, %v5909
  %v5911 = vpop.f32.mrb[0].mxu0
  %v5912 = vpop.f32.mrb[0].mxu0
  %v5913 = vadd.f32 0.0, %v5912
  %v5914 = vpop.f32.mrb[0].mxu0
  %5915 = vmatprep.mubr.bf16.mxu0 0
  %5916 = vmatmul.mubr.bf16.gmra.mrb[0].mxu0 %v5830
  %v5917 = vpop.f32.mrb[0].mxu0
  %v5918 = vadd.f32 0.0, %v5917
  %v5919 = vpop.f32.mrb[0].mxu0
  %v5920 = vpop.f32.mrb[0].mxu0
  %v5921 = vadd.f32 0.0, %v5920
  %v5922 = vpop.f32.mrb[0].mxu0
  %5923 = vmatprep.mubr.bf16.mxu0 0
  %5924 = vmatmul.mubr.bf16.gmra.mrb[0].mxu0 %v5833
  %v5925 = vpop.f32.mrb[0].mxu0
  %v5926 = vadd.f32 0.0, %v5925
  %v5927 = vpop.f32.mrb[0].mxu0
  %v5928 = vpop.f32.mrb[0].mxu0
  %v5929 = vadd.f32 0.0, %v5928
  %v5930 = vpop.f32.mrb[0].mxu0
  %5931 = vdwg.mxu0
  %v5932 = vadd.f32 %v5771, %v5870
  %v5933 = vadd.f32 %v5772, %v5873
  %v5934 = vadd.f32 %v5773, %v5878
  %v5935 = vadd.f32 %v5774, %v5881
  %v5936 = vadd.f32 %v5775, %v5886
  %v5937 = vadd.f32 %v5776, %v5889
  %v5938 = vadd.f32 %v5777, %v5894
  %v5939 = vadd.f32 %v5778, %v5897
  %v5940 = vadd.f32 %v5779, %v5902
  %v5941 = vadd.f32 %v5780, %v5905
  %v5942 = vadd.f32 %v5781, %v5910
  %v5943 = vadd.f32 %v5782, %v5913
  %v5944 = vadd.f32 %v5783, %v5918
  %v5945 = vadd.f32 %v5784, %v5921
  %v5946 = vadd.f32 %v5785, %v5926
  %v5947 = vadd.f32 %v5786, %v5929
  %v5948 = vld [vmem:[#allocation2 + $0x240] sm:$0xff]
  %v5949 = vld [vmem:[#allocation2 + $0x248] sm:$0xff]
  %v5950 = vld [vmem:[#allocation2 + $0x250] sm:$0xff]
  %v5951 = vld [vmem:[#allocation2 + $0x258] sm:$0xff]
  %v5952 = vld [vmem:[#allocation2 + $0x260] sm:$0xff]
  %v5953 = vld [vmem:[#allocation2 + $0x268] sm:$0xff]
  %v5954 = vld [vmem:[#allocation2 + $0x270] sm:$0xff]
  %v5955 = vld [vmem:[#allocation2 + $0x278] sm:$0xff]
  %v5956 = vld [vmem:[%s3 + $0x90] sm:$0xf]
  %v5957 = vld [vmem:[%s3 + $0x94] sm:$0xf]
  %v5958 = vld [vmem:[%s3 + $0x98] sm:$0xf]
  %v5959 = vld [vmem:[%s3 + $0x9c] sm:$0xf]
  %v5964 = vunpack.c.l.b16 %v5956
  %v5965 = vunpack.c.l.b16 %v5957
  %v5966 = vunpack.c.l.b16 %v5958
  %v5967 = vunpack.c.l.b16 %v5959
  %v5968 = vpack.c.b16 %v5965, %v5964
  %v5969 = vpack.c.b16 %v5967, %v5966
  %v5973 = vsel %vm4330, %v5948, 0
  %v5976 = vsel %vm4330, %v5949, 0
  %v5979 = vsel %vm4330, %v5950, 0
  %v5982 = vsel %vm4330, %v5951, 0
  %v5985 = vsel %vm4330, %v5952, 0
  %v5988 = vsel %vm4330, %v5953, 0
  %v5991 = vsel %vm4330, %v5954, 0
  %v5994 = vsel %vm4330, %v5955, 0
  %5996 = vmatprep.subr.bf16.mxu0 0
  %5997 = vmatpush1.bf16.msra.mxu0 %v5968
  %5998 = vmatprep.subr.bf16.mxu0 0
  %5999 = vmatpush1.bf16.msra.mxu0 %v5969
  %6000 = vmatprep.subr.bf16.mxu0 0
  %6001 = vmatpush1.bf16.msra.mxu0 0
  %6002 = vmatprep.subr.bf16.mxu0 0
  %6003 = vmatpush1.bf16.msra.mxu0 0
  %6004 = vmatprep.subr.bf16.mxu0 0
  %6005 = vmatpush1.bf16.msra.mxu0 0
  %6006 = vmatprep.subr.bf16.mxu0 0
  %6007 = vmatpush1.bf16.msra.mxu0 0
  %6008 = vmatprep.subr.bf16.mxu0 0
  %6009 = vmatpush1.bf16.msra.mxu0 0
  %6010 = vmatprep.subr.bf16.mxu0 0
  %6011 = vmatpush1.bf16.msra.mxu0 0
  %6012 = vmatprep.subr.bf16.mxu0 0
  %6013 = vmatpush1.bf16.msra.mxu0 0
  %6014 = vmatprep.subr.bf16.mxu0 0
  %6015 = vmatpush1.bf16.msra.mxu0 0
  %6016 = vmatprep.subr.bf16.mxu0 0
  %6017 = vmatpush1.bf16.msra.mxu0 0
  %6018 = vmatprep.subr.bf16.mxu0 0
  %6019 = vmatpush1.bf16.msra.mxu0 0
  %6020 = vmatprep.subr.bf16.mxu0 0
  %6021 = vmatpush1.bf16.msra.mxu0 0
  %6022 = vmatprep.subr.bf16.mxu0 0
  %6023 = vmatpush1.bf16.msra.mxu0 0
  %6024 = vmatprep.subr.bf16.mxu0 0
  %6025 = vmatpush1.bf16.msra.mxu0 0
  %6026 = vmatprep.subr.bf16.mxu0 0
  %6027 = vmatpush1.bf16.msra.mxu0 0
  %6028 = vmatprep.mubr.bf16.mxu0 0
  %6029 = vmatmul.mubr.bf16.gmra.mrb[0].mxu0 %v5973
  %v6030 = vpop.f32.mrb[0].mxu0
  %v6031 = vadd.f32 0.0, %v6030
  %v6032 = vpop.f32.mrb[0].mxu0
  %v6033 = vpop.f32.mrb[0].mxu0
  %v6034 = vadd.f32 0.0, %v6033
  %v6035 = vpop.f32.mrb[0].mxu0
  %6036 = vmatprep.mubr.bf16.mxu0 0
  %6037 = vmatmul.mubr.bf16.gmra.mrb[0].mxu0 %v5976
  %v6038 = vpop.f32.mrb[0].mxu0
  %v6039 = vadd.f32 0.0, %v6038
  %v6040 = vpop.f32.mrb[0].mxu0
  %v6041 = vpop.f32.mrb[0].mxu0
  %v6042 = vadd.f32 0.0, %v6041
  %v6043 = vpop.f32.mrb[0].mxu0
  %6044 = vmatprep.mubr.bf16.mxu0 0
  %6045 = vmatmul.mubr.bf16.gmra.mrb[0].mxu0 %v5979
  %v6046 = vpop.f32.mrb[0].mxu0
  %v6047 = vadd.f32 0.0, %v6046
  %v6048 = vpop.f32.mrb[0].mxu0
  %v6049 = vpop.f32.mrb[0].mxu0
  %v6050 = vadd.f32 0.0, %v6049
  %v6051 = vpop.f32.mrb[0].mxu0
  %6052 = vmatprep.mubr.bf16.mxu0 0
  %6053 = vmatmul.mubr.bf16.gmra.mrb[0].mxu0 %v5982
  %v6054 = vpop.f32.mrb[0].mxu0
  %v6055 = vadd.f32 0.0, %v6054
  %v6056 = vpop.f32.mrb[0].mxu0
  %v6057 = vpop.f32.mrb[0].mxu0
  %v6058 = vadd.f32 0.0, %v6057
  %v6059 = vpop.f32.mrb[0].mxu0
  %6060 = vmatprep.mubr.bf16.mxu0 0
  %6061 = vmatmul.mubr.bf16.gmra.mrb[0].mxu0 %v5985
  %v6062 = vpop.f32.mrb[0].mxu0
  %v6063 = vadd.f32 0.0, %v6062
  %v6064 = vpop.f32.mrb[0].mxu0
  %v6065 = vpop.f32.mrb[0].mxu0
  %v6066 = vadd.f32 0.0, %v6065
  %v6067 = vpop.f32.mrb[0].mxu0
  %6068 = vmatprep.mubr.bf16.mxu0 0
  %6069 = vmatmul.mubr.bf16.gmra.mrb[0].mxu0 %v5988
  %v6070 = vpop.f32.mrb[0].mxu0
  %v6071 = vadd.f32 0.0, %v6070
  %v6072 = vpop.f32.mrb[0].mxu0
  %v6073 = vpop.f32.mrb[0].mxu0
  %v6074 = vadd.f32 0.0, %v6073
  %v6075 = vpop.f32.mrb[0].mxu0
  %6076 = vmatprep.mubr.bf16.mxu0 0
  %6077 = vmatmul.mubr.bf16.gmra.mrb[0].mxu0 %v5991
  %v6078 = vpop.f32.mrb[0].mxu0
  %v6079 = vadd.f32 0.0, %v6078
  %v6080 = vpop.f32.mrb[0].mxu0
  %v6081 = vpop.f32.mrb[0].mxu0
  %v6082 = vadd.f32 0.0, %v6081
  %v6083 = vpop.f32.mrb[0].mxu0
  %6084 = vmatprep.mubr.bf16.mxu0 0
  %6085 = vmatmul.mubr.bf16.gmra.mrb[0].mxu0 %v5994
  %v6086 = vpop.f32.mrb[0].mxu0
  %v6087 = vadd.f32 0.0, %v6086
  %v6088 = vpop.f32.mrb[0].mxu0
  %v6089 = vpop.f32.mrb[0].mxu0
  %v6090 = vadd.f32 0.0, %v6089
  %v6091 = vpop.f32.mrb[0].mxu0
  %6092 = vdwg.mxu0
  %v6093 = vadd.f32 %v5932, %v6031
  %v6094 = vadd.f32 %v5933, %v6034
  %v6095 = vadd.f32 %v5934, %v6039
  %v6096 = vadd.f32 %v5935, %v6042
  %v6097 = vadd.f32 %v5936, %v6047
  %v6098 = vadd.f32 %v5937, %v6050
  %v6099 = vadd.f32 %v5938, %v6055
  %v6100 = vadd.f32 %v5939, %v6058
  %v6101 = vadd.f32 %v5940, %v6063
  %v6102 = vadd.f32 %v5941, %v6066
  %v6103 = vadd.f32 %v5942, %v6071
  %v6104 = vadd.f32 %v5943, %v6074
  %v6105 = vadd.f32 %v5944, %v6079
  %v6106 = vadd.f32 %v5945, %v6082
  %v6107 = vadd.f32 %v5946, %v6087
  %v6108 = vadd.f32 %v5947, %v6090
  %v6109 = vld [vmem:[#allocation2 + $0x280] sm:$0xff]
  %v6110 = vld [vmem:[#allocation2 + $0x288] sm:$0xff]
  %v6111 = vld [vmem:[#allocation2 + $0x290] sm:$0xff]
  %v6112 = vld [vmem:[#allocation2 + $0x298] sm:$0xff]
  %v6113 = vld [vmem:[#allocation2 + $0x2a0] sm:$0xff]
  %v6114 = vld [vmem:[#allocation2 + $0x2a8] sm:$0xff]
  %v6115 = vld [vmem:[#allocation2 + $0x2b0] sm:$0xff]
  %v6116 = vld [vmem:[#allocation2 + $0x2b8] sm:$0xff]
  %v6117 = vld [vmem:[%s3 + $0xa0] sm:$0xf]
  %v6118 = vld [vmem:[%s3 + $0xa4] sm:$0xf]
  %v6119 = vld [vmem:[%s3 + $0xa8] sm:$0xf]
  %v6120 = vld [vmem:[%s3 + $0xac] sm:$0xf]
  %v6125 = vunpack.c.l.b16 %v6117
  %v6126 = vunpack.c.l.b16 %v6118
  %v6127 = vunpack.c.l.b16 %v6119
  %v6128 = vunpack.c.l.b16 %v6120
  %v6129 = vpack.c.b16 %v6126, %v6125
  %v6130 = vpack.c.b16 %v6128, %v6127
  %v6134 = vsel %vm4330, %v6109, 0
  %v6137 = vsel %vm4330, %v6110, 0
  %v6140 = vsel %vm4330, %v6111, 0
  %v6143 = vsel %vm4330, %v6112, 0
  %v6146 = vsel %vm4330, %v6113, 0
  %v6149 = vsel %vm4330, %v6114, 0
  %v6152 = vsel %vm4330, %v6115, 0
  %v6155 = vsel %vm4330, %v6116, 0
  %6157 = vmatprep.subr.bf16.mxu0 0
  %6158 = vmatpush1.bf16.msra.mxu0 %v6129
  %6159 = vmatprep.subr.bf16.mxu0 0
  %6160 = vmatpush1.bf16.msra.mxu0 %v6130
  %6161 = vmatprep.subr.bf16.mxu0 0
  %6162 = vmatpush1.bf16.msra.mxu0 0
  %6163 = vmatprep.subr.bf16.mxu0 0
  %6164 = vmatpush1.bf16.msra.mxu0 0
  %6165 = vmatprep.subr.bf16.mxu0 0
  %6166 = vmatpush1.bf16.msra.mxu0 0
  %6167 = vmatprep.subr.bf16.mxu0 0
  %6168 = vmatpush1.bf16.msra.mxu0 0
  %6169 = vmatprep.subr.bf16.mxu0 0
  %6170 = vmatpush1.bf16.msra.mxu0 0
  %6171 = vmatprep.subr.bf16.mxu0 0
  %6172 = vmatpush1.bf16.msra.mxu0 0
  %6173 = vmatprep.subr.bf16.mxu0 0
  %6174 = vmatpush1.bf16.msra.mxu0 0
  %6175 = vmatprep.subr.bf16.mxu0 0
  %6176 = vmatpush1.bf16.msra.mxu0 0
  %6177 = vmatprep.subr.bf16.mxu0 0
  %6178 = vmatpush1.bf16.msra.mxu0 0
  %6179 = vmatprep.subr.bf16.mxu0 0
  %6180 = vmatpush1.bf16.msra.mxu0 0
  %6181 = vmatprep.subr.bf16.mxu0 0
  %6182 = vmatpush1.bf16.msra.mxu0 0
  %6183 = vmatprep.subr.bf16.mxu0 0
  %6184 = vmatpush1.bf16.msra.mxu0 0
  %6185 = vmatprep.subr.bf16.mxu0 0
  %6186 = vmatpush1.bf16.msra.mxu0 0
  %6187 = vmatprep.subr.bf16.mxu0 0
  %6188 = vmatpush1.bf16.msra.mxu0 0
  %6189 = vmatprep.mubr.bf16.mxu0 0
  %6190 = vmatmul.mubr.bf16.gmra.mrb[0].mxu0 %v6134
  %v6191 = vpop.f32.mrb[0].mxu0
  %v6192 = vadd.f32 0.0, %v6191
  %v6193 = vpop.f32.mrb[0].mxu0
  %v6194 = vpop.f32.mrb[0].mxu0
  %v6195 = vadd.f32 0.0, %v6194
  %v6196 = vpop.f32.mrb[0].mxu0
  %6197 = vmatprep.mubr.bf16.mxu0 0
  %6198 = vmatmul.mubr.bf16.gmra.mrb[0].mxu0 %v6137
  %v6199 = vpop.f32.mrb[0].mxu0
  %v6200 = vadd.f32 0.0, %v6199
  %v6201 = vpop.f32.mrb[0].mxu0
  %v6202 = vpop.f32.mrb[0].mxu0
  %v6203 = vadd.f32 0.0, %v6202
  %v6204 = vpop.f32.mrb[0].mxu0
  %6205 = vmatprep.mubr.bf16.mxu0 0
  %6206 = vmatmul.mubr.bf16.gmra.mrb[0].mxu0 %v6140
  %v6207 = vpop.f32.mrb[0].mxu0
  %v6208 = vadd.f32 0.0, %v6207
  %v6209 = vpop.f32.mrb[0].mxu0
  %v6210 = vpop.f32.mrb[0].mxu0
  %v6211 = vadd.f32 0.0, %v6210
  %v6212 = vpop.f32.mrb[0].mxu0
  %6213 = vmatprep.mubr.bf16.mxu0 0
  %6214 = vmatmul.mubr.bf16.gmra.mrb[0].mxu0 %v6143
  %v6215 = vpop.f32.mrb[0].mxu0
  %v6216 = vadd.f32 0.0, %v6215
  %v6217 = vpop.f32.mrb[0].mxu0
  %v6218 = vpop.f32.mrb[0].mxu0
  %v6219 = vadd.f32 0.0, %v6218
  %v6220 = vpop.f32.mrb[0].mxu0
  %6221 = vmatprep.mubr.bf16.mxu0 0
  %6222 = vmatmul.mubr.bf16.gmra.mrb[0].mxu0 %v6146
  %v6223 = vpop.f32.mrb[0].mxu0
  %v6224 = vadd.f32 0.0, %v6223
  %v6225 = vpop.f32.mrb[0].mxu0
  %v6226 = vpop.f32.mrb[0].mxu0
  %v6227 = vadd.f32 0.0, %v6226
  %v6228 = vpop.f32.mrb[0].mxu0
  %6229 = vmatprep.mubr.bf16.mxu0 0
  %6230 = vmatmul.mubr.bf16.gmra.mrb[0].mxu0 %v6149
  %v6231 = vpop.f32.mrb[0].mxu0
  %v6232 = vadd.f32 0.0, %v6231
  %v6233 = vpop.f32.mrb[0].mxu0
  %v6234 = vpop.f32.mrb[0].mxu0
  %v6235 = vadd.f32 0.0, %v6234
  %v6236 = vpop.f32.mrb[0].mxu0
  %6237 = vmatprep.mubr.bf16.mxu0 0
  %6238 = vmatmul.mubr.bf16.gmra.mrb[0].mxu0 %v6152
  %v6239 = vpop.f32.mrb[0].mxu0
  %v6240 = vadd.f32 0.0, %v6239
  %v6241 = vpop.f32.mrb[0].mxu0
  %v6242 = vpop.f32.mrb[0].mxu0
  %v6243 = vadd.f32 0.0, %v6242
  %v6244 = vpop.f32.mrb[0].mxu0
  %6245 = vmatprep.mubr.bf16.mxu0 0
  %6246 = vmatmul.mubr.bf16.gmra.mrb[0].mxu0 %v6155
  %v6247 = vpop.f32.mrb[0].mxu0
  %v6248 = vadd.f32 0.0, %v6247
  %v6249 = vpop.f32.mrb[0].mxu0
  %v6250 = vpop.f32.mrb[0].mxu0
  %v6251 = vadd.f32 0.0, %v6250
  %v6252 = vpop.f32.mrb[0].mxu0
  %6253 = vdwg.mxu0
  %v6254 = vadd.f32 %v6093, %v6192
  %v6255 = vadd.f32 %v6094, %v6195
  %v6256 = vadd.f32 %v6095, %v6200
  %v6257 = vadd.f32 %v6096, %v6203
  %v6258 = vadd.f32 %v6097, %v6208
  %v6259 = vadd.f32 %v6098, %v6211
  %v6260 = vadd.f32 %v6099, %v6216
  %v6261 = vadd.f32 %v6100, %v6219
  %v6262 = vadd.f32 %v6101, %v6224
  %v6263 = vadd.f32 %v6102, %v6227
  %v6264 = vadd.f32 %v6103, %v6232
  %v6265 = vadd.f32 %v6104, %v6235
  %v6266 = vadd.f32 %v6105, %v6240
  %v6267 = vadd.f32 %v6106, %v6243
  %v6268 = vadd.f32 %v6107, %v6248
  %v6269 = vadd.f32 %v6108, %v6251
  %v6270 = vld [vmem:[#allocation2 + $0x2c0] sm:$0xff]
  %v6271 = vld [vmem:[#allocation2 + $0x2c8] sm:$0xff]
  %v6272 = vld [vmem:[#allocation2 + $0x2d0] sm:$0xff]
  %v6273 = vld [vmem:[#allocation2 + $0x2d8] sm:$0xff]
  %v6274 = vld [vmem:[#allocation2 + $0x2e0] sm:$0xff]
  %v6275 = vld [vmem:[#allocation2 + $0x2e8] sm:$0xff]
  %v6276 = vld [vmem:[#allocation2 + $0x2f0] sm:$0xff]
  %v6277 = vld [vmem:[#allocation2 + $0x2f8] sm:$0xff]
  %v6278 = vld [vmem:[%s3 + $0xb0] sm:$0xf]
  %v6279 = vld [vmem:[%s3 + $0xb4] sm:$0xf]
  %v6280 = vld [vmem:[%s3 + $0xb8] sm:$0xf]
  %v6281 = vld [vmem:[%s3 + $0xbc] sm:$0xf]
  %v6286 = vunpack.c.l.b16 %v6278
  %v6287 = vunpack.c.l.b16 %v6279
  %v6288 = vunpack.c.l.b16 %v6280
  %v6289 = vunpack.c.l.b16 %v6281
  %v6290 = vpack.c.b16 %v6287, %v6286
  %v6291 = vpack.c.b16 %v6289, %v6288
  %v6295 = vsel %vm4330, %v6270, 0
  %v6298 = vsel %vm4330, %v6271, 0
  %v6301 = vsel %vm4330, %v6272, 0
  %v6304 = vsel %vm4330, %v6273, 0
  %v6307 = vsel %vm4330, %v6274, 0
  %v6310 = vsel %vm4330, %v6275, 0
  %v6313 = vsel %vm4330, %v6276, 0
  %v6316 = vsel %vm4330, %v6277, 0
  %6318 = vmatprep.subr.bf16.mxu0 0
  %6319 = vmatpush1.bf16.msra.mxu0 %v6290
  %6320 = vmatprep.subr.bf16.mxu0 0
  %6321 = vmatpush1.bf16.msra.mxu0 %v6291
  %6322 = vmatprep.subr.bf16.mxu0 0
  %6323 = vmatpush1.bf16.msra.mxu0 0
  %6324 = vmatprep.subr.bf16.mxu0 0
  %6325 = vmatpush1.bf16.msra.mxu0 0
  %6326 = vmatprep.subr.bf16.mxu0 0
  %6327 = vmatpush1.bf16.msra.mxu0 0
  %6328 = vmatprep.subr.bf16.mxu0 0
  %6329 = vmatpush1.bf16.msra.mxu0 0
  %6330 = vmatprep.subr.bf16.mxu0 0
  %6331 = vmatpush1.bf16.msra.mxu0 0
  %6332 = vmatprep.subr.bf16.mxu0 0
  %6333 = vmatpush1.bf16.msra.mxu0 0
  %6334 = vmatprep.subr.bf16.mxu0 0
  %6335 = vmatpush1.bf16.msra.mxu0 0
  %6336 = vmatprep.subr.bf16.mxu0 0
  %6337 = vmatpush1.bf16.msra.mxu0 0
  %6338 = vmatprep.subr.bf16.mxu0 0
  %6339 = vmatpush1.bf16.msra.mxu0 0
  %6340 = vmatprep.subr.bf16.mxu0 0
  %6341 = vmatpush1.bf16.msra.mxu0 0
  %6342 = vmatprep.subr.bf16.mxu0 0
  %6343 = vmatpush1.bf16.msra.mxu0 0
  %6344 = vmatprep.subr.bf16.mxu0 0
  %6345 = vmatpush1.bf16.msra.mxu0 0
  %6346 = vmatprep.subr.bf16.mxu0 0
  %6347 = vmatpush1.bf16.msra.mxu0 0
  %6348 = vmatprep.subr.bf16.mxu0 0
  %6349 = vmatpush1.bf16.msra.mxu0 0
  %6350 = vmatprep.mubr.bf16.mxu0 0
  %6351 = vmatmul.mubr.bf16.gmra.mrb[0].mxu0 %v6295
  %v6352 = vpop.f32.mrb[0].mxu0
  %v6353 = vadd.f32 0.0, %v6352
  %v6354 = vpop.f32.mrb[0].mxu0
  %v6355 = vpop.f32.mrb[0].mxu0
  %v6356 = vadd.f32 0.0, %v6355
  %v6357 = vpop.f32.mrb[0].mxu0
  %6358 = vmatprep.mubr.bf16.mxu0 0
  %6359 = vmatmul.mubr.bf16.gmra.mrb[0].mxu0 %v6298
  %v6360 = vpop.f32.mrb[0].mxu0
  %v6361 = vadd.f32 0.0, %v6360
  %v6362 = vpop.f32.mrb[0].mxu0
  %v6363 = vpop.f32.mrb[0].mxu0
  %v6364 = vadd.f32 0.0, %v6363
  %v6365 = vpop.f32.mrb[0].mxu0
  %6366 = vmatprep.mubr.bf16.mxu0 0
  %6367 = vmatmul.mubr.bf16.gmra.mrb[0].mxu0 %v6301
  %v6368 = vpop.f32.mrb[0].mxu0
  %v6369 = vadd.f32 0.0, %v6368
  %v6370 = vpop.f32.mrb[0].mxu0
  %v6371 = vpop.f32.mrb[0].mxu0
  %v6372 = vadd.f32 0.0, %v6371
  %v6373 = vpop.f32.mrb[0].mxu0
  %6374 = vmatprep.mubr.bf16.mxu0 0
  %6375 = vmatmul.mubr.bf16.gmra.mrb[0].mxu0 %v6304
  %v6376 = vpop.f32.mrb[0].mxu0
  %v6377 = vadd.f32 0.0, %v6376
  %v6378 = vpop.f32.mrb[0].mxu0
  %v6379 = vpop.f32.mrb[0].mxu0
  %v6380 = vadd.f32 0.0, %v6379
  %v6381 = vpop.f32.mrb[0].mxu0
  %6382 = vmatprep.mubr.bf16.mxu0 0
  %6383 = vmatmul.mubr.bf16.gmra.mrb[0].mxu0 %v6307
  %v6384 = vpop.f32.mrb[0].mxu0
  %v6385 = vadd.f32 0.0, %v6384
  %v6386 = vpop.f32.mrb[0].mxu0
  %v6387 = vpop.f32.mrb[0].mxu0
  %v6388 = vadd.f32 0.0, %v6387
  %v6389 = vpop.f32.mrb[0].mxu0
  %6390 = vmatprep.mubr.bf16.mxu0 0
  %6391 = vmatmul.mubr.bf16.gmra.mrb[0].mxu0 %v6310
  %v6392 = vpop.f32.mrb[0].mxu0
  %v6393 = vadd.f32 0.0, %v6392
  %v6394 = vpop.f32.mrb[0].mxu0
  %v6395 = vpop.f32.mrb[0].mxu0
  %v6396 = vadd.f32 0.0, %v6395
  %v6397 = vpop.f32.mrb[0].mxu0
  %6398 = vmatprep.mubr.bf16.mxu0 0
  %6399 = vmatmul.mubr.bf16.gmra.mrb[0].mxu0 %v6313
  %v6400 = vpop.f32.mrb[0].mxu0
  %v6401 = vadd.f32 0.0, %v6400
  %v6402 = vpop.f32.mrb[0].mxu0
  %v6403 = vpop.f32.mrb[0].mxu0
  %v6404 = vadd.f32 0.0, %v6403
  %v6405 = vpop.f32.mrb[0].mxu0
  %6406 = vmatprep.mubr.bf16.mxu0 0
  %6407 = vmatmul.mubr.bf16.gmra.mrb[0].mxu0 %v6316
  %v6408 = vpop.f32.mrb[0].mxu0
  %v6409 = vadd.f32 0.0, %v6408
  %v6410 = vpop.f32.mrb[0].mxu0
  %v6411 = vpop.f32.mrb[0].mxu0
  %v6412 = vadd.f32 0.0, %v6411
  %v6413 = vpop.f32.mrb[0].mxu0
  %6414 = vdwg.mxu0
  %v6415 = vadd.f32 %v6254, %v6353
  %v6416 = vadd.f32 %v6255, %v6356
  %v6417 = vadd.f32 %v6256, %v6361
  %v6418 = vadd.f32 %v6257, %v6364
  %v6419 = vadd.f32 %v6258, %v6369
  %v6420 = vadd.f32 %v6259, %v6372
  %v6421 = vadd.f32 %v6260, %v6377
  %v6422 = vadd.f32 %v6261, %v6380
  %v6423 = vadd.f32 %v6262, %v6385
  %v6424 = vadd.f32 %v6263, %v6388
  %v6425 = vadd.f32 %v6264, %v6393
  %v6426 = vadd.f32 %v6265, %v6396
  %v6427 = vadd.f32 %v6266, %v6401
  %v6428 = vadd.f32 %v6267, %v6404
  %v6429 = vadd.f32 %v6268, %v6409
  %v6430 = vadd.f32 %v6269, %v6412
  %v6431 = vld [vmem:[#allocation2 + $0x300] sm:$0xff]
  %v6432 = vld [vmem:[#allocation2 + $0x308] sm:$0xff]
  %v6433 = vld [vmem:[#allocation2 + $0x310] sm:$0xff]
  %v6434 = vld [vmem:[#allocation2 + $0x318] sm:$0xff]
  %v6435 = vld [vmem:[#allocation2 + $0x320] sm:$0xff]
  %v6436 = vld [vmem:[#allocation2 + $0x328] sm:$0xff]
  %v6437 = vld [vmem:[#allocation2 + $0x330] sm:$0xff]
  %v6438 = vld [vmem:[#allocation2 + $0x338] sm:$0xff]
  %v6439 = vld [vmem:[%s3 + $0xc0] sm:$0xf]
  %v6440 = vld [vmem:[%s3 + $0xc4] sm:$0xf]
  %v6441 = vld [vmem:[%s3 + $0xc8] sm:$0xf]
  %v6442 = vld [vmem:[%s3 + $0xcc] sm:$0xf]
  %v6447 = vunpack.c.l.b16 %v6439
  %v6448 = vunpack.c.l.b16 %v6440
  %v6449 = vunpack.c.l.b16 %v6441
  %v6450 = vunpack.c.l.b16 %v6442
  %v6451 = vpack.c.b16 %v6448, %v6447
  %v6452 = vpack.c.b16 %v6450, %v6449
  %v6456 = vsel %vm4330, %v6431, 0
  %v6459 = vsel %vm4330, %v6432, 0
  %v6462 = vsel %vm4330, %v6433, 0
  %v6465 = vsel %vm4330, %v6434, 0
  %v6468 = vsel %vm4330, %v6435, 0
  %v6471 = vsel %vm4330, %v6436, 0
  %v6474 = vsel %vm4330, %v6437, 0
  %v6477 = vsel %vm4330, %v6438, 0
  %6479 = vmatprep.subr.bf16.mxu0 0
  %6480 = vmatpush1.bf16.msra.mxu0 %v6451
  %6481 = vmatprep.subr.bf16.mxu0 0
  %6482 = vmatpush1.bf16.msra.mxu0 %v6452
  %6483 = vmatprep.subr.bf16.mxu0 0
  %6484 = vmatpush1.bf16.msra.mxu0 0
  %6485 = vmatprep.subr.bf16.mxu0 0
  %6486 = vmatpush1.bf16.msra.mxu0 0
  %6487 = vmatprep.subr.bf16.mxu0 0
  %6488 = vmatpush1.bf16.msra.mxu0 0
  %6489 = vmatprep.subr.bf16.mxu0 0
  %6490 = vmatpush1.bf16.msra.mxu0 0
  %6491 = vmatprep.subr.bf16.mxu0 0
  %6492 = vmatpush1.bf16.msra.mxu0 0
  %6493 = vmatprep.subr.bf16.mxu0 0
  %6494 = vmatpush1.bf16.msra.mxu0 0
  %6495 = vmatprep.subr.bf16.mxu0 0
  %6496 = vmatpush1.bf16.msra.mxu0 0
  %6497 = vmatprep.subr.bf16.mxu0 0
  %6498 = vmatpush1.bf16.msra.mxu0 0
  %6499 = vmatprep.subr.bf16.mxu0 0
  %6500 = vmatpush1.bf16.msra.mxu0 0
  %6501 = vmatprep.subr.bf16.mxu0 0
  %6502 = vmatpush1.bf16.msra.mxu0 0
  %6503 = vmatprep.subr.bf16.mxu0 0
  %6504 = vmatpush1.bf16.msra.mxu0 0
  %6505 = vmatprep.subr.bf16.mxu0 0
  %6506 = vmatpush1.bf16.msra.mxu0 0
  %6507 = vmatprep.subr.bf16.mxu0 0
  %6508 = vmatpush1.bf16.msra.mxu0 0
  %6509 = vmatprep.subr.bf16.mxu0 0
  %6510 = vmatpush1.bf16.msra.mxu0 0
  %6511 = vmatprep.mubr.bf16.mxu0 0
  %6512 = vmatmul.mubr.bf16.gmra.mrb[0].mxu0 %v6456
  %v6513 = vpop.f32.mrb[0].mxu0
  %v6514 = vadd.f32 0.0, %v6513
  %v6515 = vpop.f32.mrb[0].mxu0
  %v6516 = vpop.f32.mrb[0].mxu0
  %v6517 = vadd.f32 0.0, %v6516
  %v6518 = vpop.f32.mrb[0].mxu0
  %6519 = vmatprep.mubr.bf16.mxu0 0
  %6520 = vmatmul.mubr.bf16.gmra.mrb[0].mxu0 %v6459
  %v6521 = vpop.f32.mrb[0].mxu0
  %v6522 = vadd.f32 0.0, %v6521
  %v6523 = vpop.f32.mrb[0].mxu0
  %v6524 = vpop.f32.mrb[0].mxu0
  %v6525 = vadd.f32 0.0, %v6524
  %v6526 = vpop.f32.mrb[0].mxu0
  %6527 = vmatprep.mubr.bf16.mxu0 0
  %6528 = vmatmul.mubr.bf16.gmra.mrb[0].mxu0 %v6462
  %v6529 = vpop.f32.mrb[0].mxu0
  %v6530 = vadd.f32 0.0, %v6529
  %v6531 = vpop.f32.mrb[0].mxu0
  %v6532 = vpop.f32.mrb[0].mxu0
  %v6533 = vadd.f32 0.0, %v6532
  %v6534 = vpop.f32.mrb[0].mxu0
  %6535 = vmatprep.mubr.bf16.mxu0 0
  %6536 = vmatmul.mubr.bf16.gmra.mrb[0].mxu0 %v6465
  %v6537 = vpop.f32.mrb[0].mxu0
  %v6538 = vadd.f32 0.0, %v6537
  %v6539 = vpop.f32.mrb[0].mxu0
  %v6540 = vpop.f32.mrb[0].mxu0
  %v6541 = vadd.f32 0.0, %v6540
  %v6542 = vpop.f32.mrb[0].mxu0
  %6543 = vmatprep.mubr.bf16.mxu0 0
  %6544 = vmatmul.mubr.bf16.gmra.mrb[0].mxu0 %v6468
  %v6545 = vpop.f32.mrb[0].mxu0
  %v6546 = vadd.f32 0.0, %v6545
  %v6547 = vpop.f32.mrb[0].mxu0
  %v6548 = vpop.f32.mrb[0].mxu0
  %v6549 = vadd.f32 0.0, %v6548
  %v6550 = vpop.f32.mrb[0].mxu0
  %6551 = vmatprep.mubr.bf16.mxu0 0
  %6552 = vmatmul.mubr.bf16.gmra.mrb[0].mxu0 %v6471
  %v6553 = vpop.f32.mrb[0].mxu0
  %v6554 = vadd.f32 0.0, %v6553
  %v6555 = vpop.f32.mrb[0].mxu0
  %v6556 = vpop.f32.mrb[0].mxu0
  %v6557 = vadd.f32 0.0, %v6556
  %v6558 = vpop.f32.mrb[0].mxu0
  %6559 = vmatprep.mubr.bf16.mxu0 0
  %6560 = vmatmul.mubr.bf16.gmra.mrb[0].mxu0 %v6474
  %v6561 = vpop.f32.mrb[0].mxu0
  %v6562 = vadd.f32 0.0, %v6561
  %v6563 = vpop.f32.mrb[0].mxu0
  %v6564 = vpop.f32.mrb[0].mxu0
  %v6565 = vadd.f32 0.0, %v6564
  %v6566 = vpop.f32.mrb[0].mxu0
  %6567 = vmatprep.mubr.bf16.mxu0 0
  %6568 = vmatmul.mubr.bf16.gmra.mrb[0].mxu0 %v6477
  %v6569 = vpop.f32.mrb[0].mxu0
  %v6570 = vadd.f32 0.0, %v6569
  %v6571 = vpop.f32.mrb[0].mxu0
  %v6572 = vpop.f32.mrb[0].mxu0
  %v6573 = vadd.f32 0.0, %v6572
  %v6574 = vpop.f32.mrb[0].mxu0
  %6575 = vdwg.mxu0
  %v6576 = vadd.f32 %v6415, %v6514
  %v6577 = vadd.f32 %v6416, %v6517
  %v6578 = vadd.f32 %v6417, %v6522
  %v6579 = vadd.f32 %v6418, %v6525
  %v6580 = vadd.f32 %v6419, %v6530
  %v6581 = vadd.f32 %v6420, %v6533
  %v6582 = vadd.f32 %v6421, %v6538
  %v6583 = vadd.f32 %v6422, %v6541
  %v6584 = vadd.f32 %v6423, %v6546
  %v6585 = vadd.f32 %v6424, %v6549
  %v6586 = vadd.f32 %v6425, %v6554
  %v6587 = vadd.f32 %v6426, %v6557
  %v6588 = vadd.f32 %v6427, %v6562
  %v6589 = vadd.f32 %v6428, %v6565
  %v6590 = vadd.f32 %v6429, %v6570
  %v6591 = vadd.f32 %v6430, %v6573
  %v6592 = vld [vmem:[#allocation2 + $0x340] sm:$0xff]
  %v6593 = vld [vmem:[#allocation2 + $0x348] sm:$0xff]
  %v6594 = vld [vmem:[#allocation2 + $0x350] sm:$0xff]
  %v6595 = vld [vmem:[#allocation2 + $0x358] sm:$0xff]
  %v6596 = vld [vmem:[#allocation2 + $0x360] sm:$0xff]
  %v6597 = vld [vmem:[#allocation2 + $0x368] sm:$0xff]
  %v6598 = vld [vmem:[#allocation2 + $0x370] sm:$0xff]
  %v6599 = vld [vmem:[#allocation2 + $0x378] sm:$0xff]
  %v6600 = vld [vmem:[%s3 + $0xd0] sm:$0xf]
  %v6601 = vld [vmem:[%s3 + $0xd4] sm:$0xf]
  %v6602 = vld [vmem:[%s3 + $0xd8] sm:$0xf]
  %v6603 = vld [vmem:[%s3 + $0xdc] sm:$0xf]
  %v6608 = vunpack.c.l.b16 %v6600
  %v6609 = vunpack.c.l.b16 %v6601
  %v6610 = vunpack.c.l.b16 %v6602
  %v6611 = vunpack.c.l.b16 %v6603
  %v6612 = vpack.c.b16 %v6609, %v6608
  %v6613 = vpack.c.b16 %v6611, %v6610
  %v6617 = vsel %vm4330, %v6592, 0
  %v6620 = vsel %vm4330, %v6593, 0
  %v6623 = vsel %vm4330, %v6594, 0
  %v6626 = vsel %vm4330, %v6595, 0
  %v6629 = vsel %vm4330, %v6596, 0
  %v6632 = vsel %vm4330, %v6597, 0
  %v6635 = vsel %vm4330, %v6598, 0
  %v6638 = vsel %vm4330, %v6599, 0
  %6640 = vmatprep.subr.bf16.mxu0 0
  %6641 = vmatpush1.bf16.msra.mxu0 %v6612
  %6642 = vmatprep.subr.bf16.mxu0 0
  %6643 = vmatpush1.bf16.msra.mxu0 %v6613
  %6644 = vmatprep.subr.bf16.mxu0 0
  %6645 = vmatpush1.bf16.msra.mxu0 0
  %6646 = vmatprep.subr.bf16.mxu0 0
  %6647 = vmatpush1.bf16.msra.mxu0 0
  %6648 = vmatprep.subr.bf16.mxu0 0
  %6649 = vmatpush1.bf16.msra.mxu0 0
  %6650 = vmatprep.subr.bf16.mxu0 0
  %6651 = vmatpush1.bf16.msra.mxu0 0
  %6652 = vmatprep.subr.bf16.mxu0 0
  %6653 = vmatpush1.bf16.msra.mxu0 0
  %6654 = vmatprep.subr.bf16.mxu0 0
  %6655 = vmatpush1.bf16.msra.mxu0 0
  %6656 = vmatprep.subr.bf16.mxu0 0
  %6657 = vmatpush1.bf16.msra.mxu0 0
  %6658 = vmatprep.subr.bf16.mxu0 0
  %6659 = vmatpush1.bf16.msra.mxu0 0
  %6660 = vmatprep.subr.bf16.mxu0 0
  %6661 = vmatpush1.bf16.msra.mxu0 0
  %6662 = vmatprep.subr.bf16.mxu0 0
  %6663 = vmatpush1.bf16.msra.mxu0 0
  %6664 = vmatprep.subr.bf16.mxu0 0
  %6665 = vmatpush1.bf16.msra.mxu0 0
  %6666 = vmatprep.subr.bf16.mxu0 0
  %6667 = vmatpush1.bf16.msra.mxu0 0
  %6668 = vmatprep.subr.bf16.mxu0 0
  %6669 = vmatpush1.bf16.msra.mxu0 0
  %6670 = vmatprep.subr.bf16.mxu0 0
  %6671 = vmatpush1.bf16.msra.mxu0 0
  %6672 = vmatprep.mubr.bf16.mxu0 0
  %6673 = vmatmul.mubr.bf16.gmra.mrb[0].mxu0 %v6617
  %v6674 = vpop.f32.mrb[0].mxu0
  %v6675 = vadd.f32 0.0, %v6674
  %v6676 = vpop.f32.mrb[0].mxu0
  %v6677 = vpop.f32.mrb[0].mxu0
  %v6678 = vadd.f32 0.0, %v6677
  %v6679 = vpop.f32.mrb[0].mxu0
  %6680 = vmatprep.mubr.bf16.mxu0 0
  %6681 = vmatmul.mubr.bf16.gmra.mrb[0].mxu0 %v6620
  %v6682 = vpop.f32.mrb[0].mxu0
  %v6683 = vadd.f32 0.0, %v6682
  %v6684 = vpop.f32.mrb[0].mxu0
  %v6685 = vpop.f32.mrb[0].mxu0
  %v6686 = vadd.f32 0.0, %v6685
  %v6687 = vpop.f32.mrb[0].mxu0
  %6688 = vmatprep.mubr.bf16.mxu0 0
  %6689 = vmatmul.mubr.bf16.gmra.mrb[0].mxu0 %v6623
  %v6690 = vpop.f32.mrb[0].mxu0
  %v6691 = vadd.f32 0.0, %v6690
  %v6692 = vpop.f32.mrb[0].mxu0
  %v6693 = vpop.f32.mrb[0].mxu0
  %v6694 = vadd.f32 0.0, %v6693
  %v6695 = vpop.f32.mrb[0].mxu0
  %6696 = vmatprep.mubr.bf16.mxu0 0
  %6697 = vmatmul.mubr.bf16.gmra.mrb[0].mxu0 %v6626
  %v6698 = vpop.f32.mrb[0].mxu0
  %v6699 = vadd.f32 0.0, %v6698
  %v6700 = vpop.f32.mrb[0].mxu0
  %v6701 = vpop.f32.mrb[0].mxu0
  %v6702 = vadd.f32 0.0, %v6701
  %v6703 = vpop.f32.mrb[0].mxu0
  %6704 = vmatprep.mubr.bf16.mxu0 0
  %6705 = vmatmul.mubr.bf16.gmra.mrb[0].mxu0 %v6629
  %v6706 = vpop.f32.mrb[0].mxu0
  %v6707 = vadd.f32 0.0, %v6706
  %v6708 = vpop.f32.mrb[0].mxu0
  %v6709 = vpop.f32.mrb[0].mxu0
  %v6710 = vadd.f32 0.0, %v6709
  %v6711 = vpop.f32.mrb[0].mxu0
  %6712 = vmatprep.mubr.bf16.mxu0 0
  %6713 = vmatmul.mubr.bf16.gmra.mrb[0].mxu0 %v6632
  %v6714 = vpop.f32.mrb[0].mxu0
  %v6715 = vadd.f32 0.0, %v6714
  %v6716 = vpop.f32.mrb[0].mxu0
  %v6717 = vpop.f32.mrb[0].mxu0
  %v6718 = vadd.f32 0.0, %v6717
  %v6719 = vpop.f32.mrb[0].mxu0
  %6720 = vmatprep.mubr.bf16.mxu0 0
  %6721 = vmatmul.mubr.bf16.gmra.mrb[0].mxu0 %v6635
  %v6722 = vpop.f32.mrb[0].mxu0
  %v6723 = vadd.f32 0.0, %v6722
  %v6724 = vpop.f32.mrb[0].mxu0
  %v6725 = vpop.f32.mrb[0].mxu0
  %v6726 = vadd.f32 0.0, %v6725
  %v6727 = vpop.f32.mrb[0].mxu0
  %6728 = vmatprep.mubr.bf16.mxu0 0
  %6729 = vmatmul.mubr.bf16.gmra.mrb[0].mxu0 %v6638
  %v6730 = vpop.f32.mrb[0].mxu0
  %v6731 = vadd.f32 0.0, %v6730
  %v6732 = vpop.f32.mrb[0].mxu0
  %v6733 = vpop.f32.mrb[0].mxu0
  %v6734 = vadd.f32 0.0, %v6733
  %v6735 = vpop.f32.mrb[0].mxu0
  %6736 = vdwg.mxu0
  %v6737 = vadd.f32 %v6576, %v6675
  %v6738 = vadd.f32 %v6577, %v6678
  %v6739 = vadd.f32 %v6578, %v6683
  %v6740 = vadd.f32 %v6579, %v6686
  %v6741 = vadd.f32 %v6580, %v6691
  %v6742 = vadd.f32 %v6581, %v6694
  %v6743 = vadd.f32 %v6582, %v6699
  %v6744 = vadd.f32 %v6583, %v6702
  %v6745 = vadd.f32 %v6584, %v6707
  %v6746 = vadd.f32 %v6585, %v6710
  %v6747 = vadd.f32 %v6586, %v6715
  %v6748 = vadd.f32 %v6587, %v6718
  %v6749 = vadd.f32 %v6588, %v6723
  %v6750 = vadd.f32 %v6589, %v6726
  %v6751 = vadd.f32 %v6590, %v6731
  %v6752 = vadd.f32 %v6591, %v6734
  %v6753 = vld [vmem:[#allocation2 + $0x380] sm:$0xff]
  %v6754 = vld [vmem:[#allocation2 + $0x388] sm:$0xff]
  %v6755 = vld [vmem:[#allocation2 + $0x390] sm:$0xff]
  %v6756 = vld [vmem:[#allocation2 + $0x398] sm:$0xff]
  %v6757 = vld [vmem:[#allocation2 + $0x3a0] sm:$0xff]
  %v6758 = vld [vmem:[#allocation2 + $0x3a8] sm:$0xff]
  %v6759 = vld [vmem:[#allocation2 + $0x3b0] sm:$0xff]
  %v6760 = vld [vmem:[#allocation2 + $0x3b8] sm:$0xff]
  %v6761 = vld [vmem:[%s3 + $0xe0] sm:$0xf]
  %v6762 = vld [vmem:[%s3 + $0xe4] sm:$0xf]
  %v6763 = vld [vmem:[%s3 + $0xe8] sm:$0xf]
  %v6764 = vld [vmem:[%s3 + $0xec] sm:$0xf]
  %v6769 = vunpack.c.l.b16 %v6761
  %v6770 = vunpack.c.l.b16 %v6762
  %v6771 = vunpack.c.l.b16 %v6763
  %v6772 = vunpack.c.l.b16 %v6764
  %v6773 = vpack.c.b16 %v6770, %v6769
  %v6774 = vpack.c.b16 %v6772, %v6771
  %v6778 = vsel %vm4330, %v6753, 0
  %v6781 = vsel %vm4330, %v6754, 0
  %v6784 = vsel %vm4330, %v6755, 0
  %v6787 = vsel %vm4330, %v6756, 0
  %v6790 = vsel %vm4330, %v6757, 0
  %v6793 = vsel %vm4330, %v6758, 0
  %v6796 = vsel %vm4330, %v6759, 0
  %v6799 = vsel %vm4330, %v6760, 0
  %6801 = vmatprep.subr.bf16.mxu0 0
  %6802 = vmatpush1.bf16.msra.mxu0 %v6773
  %6803 = vmatprep.subr.bf16.mxu0 0
  %6804 = vmatpush1.bf16.msra.mxu0 %v6774
  %6805 = vmatprep.subr.bf16.mxu0 0
  %6806 = vmatpush1.bf16.msra.mxu0 0
  %6807 = vmatprep.subr.bf16.mxu0 0
  %6808 = vmatpush1.bf16.msra.mxu0 0
  %6809 = vmatprep.subr.bf16.mxu0 0
  %6810 = vmatpush1.bf16.msra.mxu0 0
  %6811 = vmatprep.subr.bf16.mxu0 0
  %6812 = vmatpush1.bf16.msra.mxu0 0
  %6813 = vmatprep.subr.bf16.mxu0 0
  %6814 = vmatpush1.bf16.msra.mxu0 0
  %6815 = vmatprep.subr.bf16.mxu0 0
  %6816 = vmatpush1.bf16.msra.mxu0 0
  %6817 = vmatprep.subr.bf16.mxu0 0
  %6818 = vmatpush1.bf16.msra.mxu0 0
  %6819 = vmatprep.subr.bf16.mxu0 0
  %6820 = vmatpush1.bf16.msra.mxu0 0
  %6821 = vmatprep.subr.bf16.mxu0 0
  %6822 = vmatpush1.bf16.msra.mxu0 0
  %6823 = vmatprep.subr.bf16.mxu0 0
  %6824 = vmatpush1.bf16.msra.mxu0 0
  %6825 = vmatprep.subr.bf16.mxu0 0
  %6826 = vmatpush1.bf16.msra.mxu0 0
  %6827 = vmatprep.subr.bf16.mxu0 0
  %6828 = vmatpush1.bf16.msra.mxu0 0
  %6829 = vmatprep.subr.bf16.mxu0 0
  %6830 = vmatpush1.bf16.msra.mxu0 0
  %6831 = vmatprep.subr.bf16.mxu0 0
  %6832 = vmatpush1.bf16.msra.mxu0 0
  %6833 = vmatprep.mubr.bf16.mxu0 0
  %6834 = vmatmul.mubr.bf16.gmra.mrb[0].mxu0 %v6778
  %v6835 = vpop.f32.mrb[0].mxu0
  %v6836 = vadd.f32 0.0, %v6835
  %v6837 = vpop.f32.mrb[0].mxu0
  %v6838 = vpop.f32.mrb[0].mxu0
  %v6839 = vadd.f32 0.0, %v6838
  %v6840 = vpop.f32.mrb[0].mxu0
  %6841 = vmatprep.mubr.bf16.mxu0 0
  %6842 = vmatmul.mubr.bf16.gmra.mrb[0].mxu0 %v6781
  %v6843 = vpop.f32.mrb[0].mxu0
  %v6844 = vadd.f32 0.0, %v6843
  %v6845 = vpop.f32.mrb[0].mxu0
  %v6846 = vpop.f32.mrb[0].mxu0
  %v6847 = vadd.f32 0.0, %v6846
  %v6848 = vpop.f32.mrb[0].mxu0
  %6849 = vmatprep.mubr.bf16.mxu0 0
  %6850 = vmatmul.mubr.bf16.gmra.mrb[0].mxu0 %v6784
  %v6851 = vpop.f32.mrb[0].mxu0
  %v6852 = vadd.f32 0.0, %v6851
  %v6853 = vpop.f32.mrb[0].mxu0
  %v6854 = vpop.f32.mrb[0].mxu0
  %v6855 = vadd.f32 0.0, %v6854
  %v6856 = vpop.f32.mrb[0].mxu0
  %6857 = vmatprep.mubr.bf16.mxu0 0
  %6858 = vmatmul.mubr.bf16.gmra.mrb[0].mxu0 %v6787
  %v6859 = vpop.f32.mrb[0].mxu0
  %v6860 = vadd.f32 0.0, %v6859
  %v6861 = vpop.f32.mrb[0].mxu0
  %v6862 = vpop.f32.mrb[0].mxu0
  %v6863 = vadd.f32 0.0, %v6862
  %v6864 = vpop.f32.mrb[0].mxu0
  %6865 = vmatprep.mubr.bf16.mxu0 0
  %6866 = vmatmul.mubr.bf16.gmra.mrb[0].mxu0 %v6790
  %v6867 = vpop.f32.mrb[0].mxu0
  %v6868 = vadd.f32 0.0, %v6867
  %v6869 = vpop.f32.mrb[0].mxu0
  %v6870 = vpop.f32.mrb[0].mxu0
  %v6871 = vadd.f32 0.0, %v6870
  %v6872 = vpop.f32.mrb[0].mxu0
  %6873 = vmatprep.mubr.bf16.mxu0 0
  %6874 = vmatmul.mubr.bf16.gmra.mrb[0].mxu0 %v6793
  %v6875 = vpop.f32.mrb[0].mxu0
  %v6876 = vadd.f32 0.0, %v6875
  %v6877 = vpop.f32.mrb[0].mxu0
  %v6878 = vpop.f32.mrb[0].mxu0
  %v6879 = vadd.f32 0.0, %v6878
  %v6880 = vpop.f32.mrb[0].mxu0
  %6881 = vmatprep.mubr.bf16.mxu0 0
  %6882 = vmatmul.mubr.bf16.gmra.mrb[0].mxu0 %v6796
  %v6883 = vpop.f32.mrb[0].mxu0
  %v6884 = vadd.f32 0.0, %v6883
  %v6885 = vpop.f32.mrb[0].mxu0
  %v6886 = vpop.f32.mrb[0].mxu0
  %v6887 = vadd.f32 0.0, %v6886
  %v6888 = vpop.f32.mrb[0].mxu0
  %6889 = vmatprep.mubr.bf16.mxu0 0
  %6890 = vmatmul.mubr.bf16.gmra.mrb[0].mxu0 %v6799
  %v6891 = vpop.f32.mrb[0].mxu0
  %v6892 = vadd.f32 0.0, %v6891
  %v6893 = vpop.f32.mrb[0].mxu0
  %v6894 = vpop.f32.mrb[0].mxu0
  %v6895 = vadd.f32 0.0, %v6894
  %v6896 = vpop.f32.mrb[0].mxu0
  %6897 = vdwg.mxu0
  %v6898 = vadd.f32 %v6737, %v6836
  %v6899 = vadd.f32 %v6738, %v6839
  %v6900 = vadd.f32 %v6739, %v6844
  %v6901 = vadd.f32 %v6740, %v6847
  %v6902 = vadd.f32 %v6741, %v6852
  %v6903 = vadd.f32 %v6742, %v6855
  %v6904 = vadd.f32 %v6743, %v6860
  %v6905 = vadd.f32 %v6744, %v6863
  %v6906 = vadd.f32 %v6745, %v6868
  %v6907 = vadd.f32 %v6746, %v6871
  %v6908 = vadd.f32 %v6747, %v6876
  %v6909 = vadd.f32 %v6748, %v6879
  %v6910 = vadd.f32 %v6749, %v6884
  %v6911 = vadd.f32 %v6750, %v6887
  %v6912 = vadd.f32 %v6751, %v6892
  %v6913 = vadd.f32 %v6752, %v6895
  %v6914 = vld [vmem:[#allocation2 + $0x3c0] sm:$0xff]
  %v6915 = vld [vmem:[#allocation2 + $0x3c8] sm:$0xff]
  %v6916 = vld [vmem:[#allocation2 + $0x3d0] sm:$0xff]
  %v6917 = vld [vmem:[#allocation2 + $0x3d8] sm:$0xff]
  %v6918 = vld [vmem:[#allocation2 + $0x3e0] sm:$0xff]
  %v6919 = vld [vmem:[#allocation2 + $0x3e8] sm:$0xff]
  %v6920 = vld [vmem:[#allocation2 + $0x3f0] sm:$0xff]
  %v6921 = vld [vmem:[#allocation2 + $0x3f8] sm:$0xff]
  %v6922 = vld [vmem:[%s3 + $0xf0] sm:$0xf]
  %v6923 = vld [vmem:[%s3 + $0xf4] sm:$0xf]
  %v6924 = vld [vmem:[%s3 + $0xf8] sm:$0xf]
  %v6925 = vld [vmem:[%s3 + $0xfc] sm:$0xf]
  %v6930 = vunpack.c.l.b16 %v6922
  %v6931 = vunpack.c.l.b16 %v6923
  %v6932 = vunpack.c.l.b16 %v6924
  %v6933 = vunpack.c.l.b16 %v6925
  %v6934 = vpack.c.b16 %v6931, %v6930
  %v6935 = vpack.c.b16 %v6933, %v6932
  %v6939 = vsel %vm4330, %v6914, 0
  %v6942 = vsel %vm4330, %v6915, 0
  %v6945 = vsel %vm4330, %v6916, 0
  %v6948 = vsel %vm4330, %v6917, 0
  %v6951 = vsel %vm4330, %v6918, 0
  %v6954 = vsel %vm4330, %v6919, 0
  %v6957 = vsel %vm4330, %v6920, 0
  %v6960 = vsel %vm4330, %v6921, 0
  %6962 = vmatprep.subr.bf16.mxu0 0
  %6963 = vmatpush1.bf16.msra.mxu0 %v6934
  %6964 = vmatprep.subr.bf16.mxu0 0
  %6965 = vmatpush1.bf16.msra.mxu0 %v6935
  %6966 = vmatprep.subr.bf16.mxu0 0
  %6967 = vmatpush1.bf16.msra.mxu0 0
  %6968 = vmatprep.subr.bf16.mxu0 0
  %6969 = vmatpush1.bf16.msra.mxu0 0
  %6970 = vmatprep.subr.bf16.mxu0 0
  %6971 = vmatpush1.bf16.msra.mxu0 0
  %6972 = vmatprep.subr.bf16.mxu0 0
  %6973 = vmatpush1.bf16.msra.mxu0 0
  %6974 = vmatprep.subr.bf16.mxu0 0
  %6975 = vmatpush1.bf16.msra.mxu0 0
  %6976 = vmatprep.subr.bf16.mxu0 0
  %6977 = vmatpush1.bf16.msra.mxu0 0
  %6978 = vmatprep.subr.bf16.mxu0 0
  %6979 = vmatpush1.bf16.msra.mxu0 0
  %6980 = vmatprep.subr.bf16.mxu0 0
  %6981 = vmatpush1.bf16.msra.mxu0 0
  %6982 = vmatprep.subr.bf16.mxu0 0
  %6983 = vmatpush1.bf16.msra.mxu0 0
  %6984 = vmatprep.subr.bf16.mxu0 0
  %6985 = vmatpush1.bf16.msra.mxu0 0
  %6986 = vmatprep.subr.bf16.mxu0 0
  %6987 = vmatpush1.bf16.msra.mxu0 0
  %6988 = vmatprep.subr.bf16.mxu0 0
  %6989 = vmatpush1.bf16.msra.mxu0 0
  %6990 = vmatprep.subr.bf16.mxu0 0
  %6991 = vmatpush1.bf16.msra.mxu0 0
  %6992 = vmatprep.subr.bf16.mxu0 0
  %6993 = vmatpush1.bf16.msra.mxu0 0
  %6994 = vmatprep.mubr.bf16.mxu0 0
  %6995 = vmatmul.mubr.bf16.gmra.mrb[0].mxu0 %v6939
  %v6996 = vpop.f32.mrb[0].mxu0
  %v6997 = vadd.f32 0.0, %v6996
  %v6998 = vpop.f32.mrb[0].mxu0
  %v6999 = vpop.f32.mrb[0].mxu0
  %v7000 = vadd.f32 0.0, %v6999
  %v7001 = vpop.f32.mrb[0].mxu0
  %7002 = vmatprep.mubr.bf16.mxu0 0
  %7003 = vmatmul.mubr.bf16.gmra.mrb[0].mxu0 %v6942
  %v7004 = vpop.f32.mrb[0].mxu0
  %v7005 = vadd.f32 0.0, %v7004
  %v7006 = vpop.f32.mrb[0].mxu0
  %v7007 = vpop.f32.mrb[0].mxu0
  %v7008 = vadd.f32 0.0, %v7007
  %v7009 = vpop.f32.mrb[0].mxu0
  %7010 = vmatprep.mubr.bf16.mxu0 0
  %7011 = vmatmul.mubr.bf16.gmra.mrb[0].mxu0 %v6945
  %v7012 = vpop.f32.mrb[0].mxu0
  %v7013 = vadd.f32 0.0, %v7012
  %v7014 = vpop.f32.mrb[0].mxu0
  %v7015 = vpop.f32.mrb[0].mxu0
  %v7016 = vadd.f32 0.0, %v7015
  %v7017 = vpop.f32.mrb[0].mxu0
  %7018 = vmatprep.mubr.bf16.mxu0 0
  %7019 = vmatmul.mubr.bf16.gmra.mrb[0].mxu0 %v6948
  %v7020 = vpop.f32.mrb[0].mxu0
  %v7021 = vadd.f32 0.0, %v7020
  %v7022 = vpop.f32.mrb[0].mxu0
  %v7023 = vpop.f32.mrb[0].mxu0
  %v7024 = vadd.f32 0.0, %v7023
  %v7025 = vpop.f32.mrb[0].mxu0
  %7026 = vmatprep.mubr.bf16.mxu0 0
  %7027 = vmatmul.mubr.bf16.gmra.mrb[0].mxu0 %v6951
  %v7028 = vpop.f32.mrb[0].mxu0
  %v7029 = vadd.f32 0.0, %v7028
  %v7030 = vpop.f32.mrb[0].mxu0
  %v7031 = vpop.f32.mrb[0].mxu0
  %v7032 = vadd.f32 0.0, %v7031
  %v7033 = vpop.f32.mrb[0].mxu0
  %7034 = vmatprep.mubr.bf16.mxu0 0
  %7035 = vmatmul.mubr.bf16.gmra.mrb[0].mxu0 %v6954
  %v7036 = vpop.f32.mrb[0].mxu0
  %v7037 = vadd.f32 0.0, %v7036
  %v7038 = vpop.f32.mrb[0].mxu0
  %v7039 = vpop.f32.mrb[0].mxu0
  %v7040 = vadd.f32 0.0, %v7039
  %v7041 = vpop.f32.mrb[0].mxu0
  %7042 = vmatprep.mubr.bf16.mxu0 0
  %7043 = vmatmul.mubr.bf16.gmra.mrb[0].mxu0 %v6957
  %v7044 = vpop.f32.mrb[0].mxu0
  %v7045 = vadd.f32 0.0, %v7044
  %v7046 = vpop.f32.mrb[0].mxu0
  %v7047 = vpop.f32.mrb[0].mxu0
  %v7048 = vadd.f32 0.0, %v7047
  %v7049 = vpop.f32.mrb[0].mxu0
  %7050 = vmatprep.mubr.bf16.mxu0 0
  %7051 = vmatmul.mubr.bf16.gmra.mrb[0].mxu0 %v6960
  %v7052 = vpop.f32.mrb[0].mxu0
  %v7053 = vadd.f32 0.0, %v7052
  %v7054 = vpop.f32.mrb[0].mxu0
  %v7055 = vpop.f32.mrb[0].mxu0
  %v7056 = vadd.f32 0.0, %v7055
  %v7057 = vpop.f32.mrb[0].mxu0
  %7058 = vdwg.mxu0
  %v7059 = vadd.f32 %v6898, %v6997
  %v7060 = vadd.f32 %v6899, %v7000
  %v7061 = vadd.f32 %v6900, %v7005
  %v7062 = vadd.f32 %v6901, %v7008
  %v7063 = vadd.f32 %v6902, %v7013
  %v7064 = vadd.f32 %v6903, %v7016
  %v7065 = vadd.f32 %v6904, %v7021
  %v7066 = vadd.f32 %v6905, %v7024
  %v7067 = vadd.f32 %v6906, %v7029
  %v7068 = vadd.f32 %v6907, %v7032
  %v7069 = vadd.f32 %v6908, %v7037
  %v7070 = vadd.f32 %v6909, %v7040
  %v7071 = vadd.f32 %v6910, %v7045
  %v7072 = vadd.f32 %v6911, %v7048
  %v7073 = vadd.f32 %v6912, %v7053
  %v7074 = vadd.f32 %v6913, %v7056
  %v7075 = vld [vmem:[#allocation2 + $0x400] sm:$0xff]
  %v7076 = vld [vmem:[#allocation2 + $0x408] sm:$0xff]
  %v7077 = vld [vmem:[#allocation2 + $0x410] sm:$0xff]
  %v7078 = vld [vmem:[#allocation2 + $0x418] sm:$0xff]
  %v7079 = vld [vmem:[#allocation2 + $0x420] sm:$0xff]
  %v7080 = vld [vmem:[#allocation2 + $0x428] sm:$0xff]
  %v7081 = vld [vmem:[#allocation2 + $0x430] sm:$0xff]
  %v7082 = vld [vmem:[#allocation2 + $0x438] sm:$0xff]
  %v7083 = vld [vmem:[%s3 + $0x100] sm:$0xf]
  %v7084 = vld [vmem:[%s3 + $0x104] sm:$0xf]
  %v7085 = vld [vmem:[%s3 + $0x108] sm:$0xf]
  %v7086 = vld [vmem:[%s3 + $0x10c] sm:$0xf]
  %v7091 = vunpack.c.l.b16 %v7083
  %v7092 = vunpack.c.l.b16 %v7084
  %v7093 = vunpack.c.l.b16 %v7085
  %v7094 = vunpack.c.l.b16 %v7086
  %v7095 = vpack.c.b16 %v7092, %v7091
  %v7096 = vpack.c.b16 %v7094, %v7093
  %v7100 = vsel %vm4330, %v7075, 0
  %v7103 = vsel %vm4330, %v7076, 0
  %v7106 = vsel %vm4330, %v7077, 0
  %v7109 = vsel %vm4330, %v7078, 0
  %v7112 = vsel %vm4330, %v7079, 0
  %v7115 = vsel %vm4330, %v7080, 0
  %v7118 = vsel %vm4330, %v7081, 0
  %v7121 = vsel %vm4330, %v7082, 0
  %7123 = vmatprep.subr.bf16.mxu0 0
  %7124 = vmatpush1.bf16.msra.mxu0 %v7095
  %7125 = vmatprep.subr.bf16.mxu0 0
  %7126 = vmatpush1.bf16.msra.mxu0 %v7096
  %7127 = vmatprep.subr.bf16.mxu0 0
  %7128 = vmatpush1.bf16.msra.mxu0 0
  %7129 = vmatprep.subr.bf16.mxu0 0
  %7130 = vmatpush1.bf16.msra.mxu0 0
  %7131 = vmatprep.subr.bf16.mxu0 0
  %7132 = vmatpush1.bf16.msra.mxu0 0
  %7133 = vmatprep.subr.bf16.mxu0 0
  %7134 = vmatpush1.bf16.msra.mxu0 0
  %7135 = vmatprep.subr.bf16.mxu0 0
  %7136 = vmatpush1.bf16.msra.mxu0 0
  %7137 = vmatprep.subr.bf16.mxu0 0
  %7138 = vmatpush1.bf16.msra.mxu0 0
  %7139 = vmatprep.subr.bf16.mxu0 0
  %7140 = vmatpush1.bf16.msra.mxu0 0
  %7141 = vmatprep.subr.bf16.mxu0 0
  %7142 = vmatpush1.bf16.msra.mxu0 0
  %7143 = vmatprep.subr.bf16.mxu0 0
  %7144 = vmatpush1.bf16.msra.mxu0 0
  %7145 = vmatprep.subr.bf16.mxu0 0
  %7146 = vmatpush1.bf16.msra.mxu0 0
  %7147 = vmatprep.subr.bf16.mxu0 0
  %7148 = vmatpush1.bf16.msra.mxu0 0
  %7149 = vmatprep.subr.bf16.mxu0 0
  %7150 = vmatpush1.bf16.msra.mxu0 0
  %7151 = vmatprep.subr.bf16.mxu0 0
  %7152 = vmatpush1.bf16.msra.mxu0 0
  %7153 = vmatprep.subr.bf16.mxu0 0
  %7154 = vmatpush1.bf16.msra.mxu0 0
  %7155 = vmatprep.mubr.bf16.mxu0 0
  %7156 = vmatmul.mubr.bf16.gmra.mrb[0].mxu0 %v7100
  %v7157 = vpop.f32.mrb[0].mxu0
  %v7158 = vadd.f32 0.0, %v7157
  %v7159 = vpop.f32.mrb[0].mxu0
  %v7160 = vpop.f32.mrb[0].mxu0
  %v7161 = vadd.f32 0.0, %v7160
  %v7162 = vpop.f32.mrb[0].mxu0
  %7163 = vmatprep.mubr.bf16.mxu0 0
  %7164 = vmatmul.mubr.bf16.gmra.mrb[0].mxu0 %v7103
  %v7165 = vpop.f32.mrb[0].mxu0
  %v7166 = vadd.f32 0.0, %v7165
  %v7167 = vpop.f32.mrb[0].mxu0
  %v7168 = vpop.f32.mrb[0].mxu0
  %v7169 = vadd.f32 0.0, %v7168
  %v7170 = vpop.f32.mrb[0].mxu0
  %7171 = vmatprep.mubr.bf16.mxu0 0
  %7172 = vmatmul.mubr.bf16.gmra.mrb[0].mxu0 %v7106
  %v7173 = vpop.f32.mrb[0].mxu0
  %v7174 = vadd.f32 0.0, %v7173
  %v7175 = vpop.f32.mrb[0].mxu0
  %v7176 = vpop.f32.mrb[0].mxu0
  %v7177 = vadd.f32 0.0, %v7176
  %v7178 = vpop.f32.mrb[0].mxu0
  %7179 = vmatprep.mubr.bf16.mxu0 0
  %7180 = vmatmul.mubr.bf16.gmra.mrb[0].mxu0 %v7109
  %v7181 = vpop.f32.mrb[0].mxu0
  %v7182 = vadd.f32 0.0, %v7181
  %v7183 = vpop.f32.mrb[0].mxu0
  %v7184 = vpop.f32.mrb[0].mxu0
  %v7185 = vadd.f32 0.0, %v7184
  %v7186 = vpop.f32.mrb[0].mxu0
  %7187 = vmatprep.mubr.bf16.mxu0 0
  %7188 = vmatmul.mubr.bf16.gmra.mrb[0].mxu0 %v7112
  %v7189 = vpop.f32.mrb[0].mxu0
  %v7190 = vadd.f32 0.0, %v7189
  %v7191 = vpop.f32.mrb[0].mxu0
  %v7192 = vpop.f32.mrb[0].mxu0
  %v7193 = vadd.f32 0.0, %v7192
  %v7194 = vpop.f32.mrb[0].mxu0
  %7195 = vmatprep.mubr.bf16.mxu0 0
  %7196 = vmatmul.mubr.bf16.gmra.mrb[0].mxu0 %v7115
  %v7197 = vpop.f32.mrb[0].mxu0
  %v7198 = vadd.f32 0.0, %v7197
  %v7199 = vpop.f32.mrb[0].mxu0
  %v7200 = vpop.f32.mrb[0].mxu0
  %v7201 = vadd.f32 0.0, %v7200
  %v7202 = vpop.f32.mrb[0].mxu0
  %7203 = vmatprep.mubr.bf16.mxu0 0
  %7204 = vmatmul.mubr.bf16.gmra.mrb[0].mxu0 %v7118
  %v7205 = vpop.f32.mrb[0].mxu0
  %v7206 = vadd.f32 0.0, %v7205
  %v7207 = vpop.f32.mrb[0].mxu0
  %v7208 = vpop.f32.mrb[0].mxu0
  %v7209 = vadd.f32 0.0, %v7208
  %v7210 = vpop.f32.mrb[0].mxu0
  %7211 = vmatprep.mubr.bf16.mxu0 0
  %7212 = vmatmul.mubr.bf16.gmra.mrb[0].mxu0 %v7121
  %v7213 = vpop.f32.mrb[0].mxu0
  %v7214 = vadd.f32 0.0, %v7213
  %v7215 = vpop.f32.mrb[0].mxu0
  %v7216 = vpop.f32.mrb[0].mxu0
  %v7217 = vadd.f32 0.0, %v7216
  %v7218 = vpop.f32.mrb[0].mxu0
  %7219 = vdwg.mxu0
  %v7220 = vadd.f32 %v7059, %v7158
  %v7221 = vadd.f32 %v7060, %v7161
  %v7222 = vadd.f32 %v7061, %v7166
  %v7223 = vadd.f32 %v7062, %v7169
  %v7224 = vadd.f32 %v7063, %v7174
  %v7225 = vadd.f32 %v7064, %v7177
  %v7226 = vadd.f32 %v7065, %v7182
  %v7227 = vadd.f32 %v7066, %v7185
  %v7228 = vadd.f32 %v7067, %v7190
  %v7229 = vadd.f32 %v7068, %v7193
  %v7230 = vadd.f32 %v7069, %v7198
  %v7231 = vadd.f32 %v7070, %v7201
  %v7232 = vadd.f32 %v7071, %v7206
  %v7233 = vadd.f32 %v7072, %v7209
  %v7234 = vadd.f32 %v7073, %v7214
  %v7235 = vadd.f32 %v7074, %v7217
  %v7236 = vld [vmem:[#allocation2 + $0x440] sm:$0xff]
  %v7237 = vld [vmem:[#allocation2 + $0x448] sm:$0xff]
  %v7238 = vld [vmem:[#allocation2 + $0x450] sm:$0xff]
  %v7239 = vld [vmem:[#allocation2 + $0x458] sm:$0xff]
  %v7240 = vld [vmem:[#allocation2 + $0x460] sm:$0xff]
  %v7241 = vld [vmem:[#allocation2 + $0x468] sm:$0xff]
  %v7242 = vld [vmem:[#allocation2 + $0x470] sm:$0xff]
  %v7243 = vld [vmem:[#allocation2 + $0x478] sm:$0xff]
  %v7244 = vld [vmem:[%s3 + $0x110] sm:$0xf]
  %v7245 = vld [vmem:[%s3 + $0x114] sm:$0xf]
  %v7246 = vld [vmem:[%s3 + $0x118] sm:$0xf]
  %v7247 = vld [vmem:[%s3 + $0x11c] sm:$0xf]
  %v7252 = vunpack.c.l.b16 %v7244
  %v7253 = vunpack.c.l.b16 %v7245
  %v7254 = vunpack.c.l.b16 %v7246
  %v7255 = vunpack.c.l.b16 %v7247
  %v7256 = vpack.c.b16 %v7253, %v7252
  %v7257 = vpack.c.b16 %v7255, %v7254
  %v7261 = vsel %vm4330, %v7236, 0
  %v7264 = vsel %vm4330, %v7237, 0
  %v7267 = vsel %vm4330, %v7238, 0
  %v7270 = vsel %vm4330, %v7239, 0
  %v7273 = vsel %vm4330, %v7240, 0
  %v7276 = vsel %vm4330, %v7241, 0
  %v7279 = vsel %vm4330, %v7242, 0
  %v7282 = vsel %vm4330, %v7243, 0
  %7284 = vmatprep.subr.bf16.mxu0 0
  %7285 = vmatpush1.bf16.msra.mxu0 %v7256
  %7286 = vmatprep.subr.bf16.mxu0 0
  %7287 = vmatpush1.bf16.msra.mxu0 %v7257
  %7288 = vmatprep.subr.bf16.mxu0 0
  %7289 = vmatpush1.bf16.msra.mxu0 0
  %7290 = vmatprep.subr.bf16.mxu0 0
  %7291 = vmatpush1.bf16.msra.mxu0 0
  %7292 = vmatprep.subr.bf16.mxu0 0
  %7293 = vmatpush1.bf16.msra.mxu0 0
  %7294 = vmatprep.subr.bf16.mxu0 0
  %7295 = vmatpush1.bf16.msra.mxu0 0
  %7296 = vmatprep.subr.bf16.mxu0 0
  %7297 = vmatpush1.bf16.msra.mxu0 0
  %7298 = vmatprep.subr.bf16.mxu0 0
  %7299 = vmatpush1.bf16.msra.mxu0 0
  %7300 = vmatprep.subr.bf16.mxu0 0
  %7301 = vmatpush1.bf16.msra.mxu0 0
  %7302 = vmatprep.subr.bf16.mxu0 0
  %7303 = vmatpush1.bf16.msra.mxu0 0
  %7304 = vmatprep.subr.bf16.mxu0 0
  %7305 = vmatpush1.bf16.msra.mxu0 0
  %7306 = vmatprep.subr.bf16.mxu0 0
  %7307 = vmatpush1.bf16.msra.mxu0 0
  %7308 = vmatprep.subr.bf16.mxu0 0
  %7309 = vmatpush1.bf16.msra.mxu0 0
  %7310 = vmatprep.subr.bf16.mxu0 0
  %7311 = vmatpush1.bf16.msra.mxu0 0
  %7312 = vmatprep.subr.bf16.mxu0 0
  %7313 = vmatpush1.bf16.msra.mxu0 0
  %7314 = vmatprep.subr.bf16.mxu0 0
  %7315 = vmatpush1.bf16.msra.mxu0 0
  %7316 = vmatprep.mubr.bf16.mxu0 0
  %7317 = vmatmul.mubr.bf16.gmra.mrb[0].mxu0 %v7261
  %v7318 = vpop.f32.mrb[0].mxu0
  %v7319 = vadd.f32 0.0, %v7318
  %v7320 = vpop.f32.mrb[0].mxu0
  %v7321 = vpop.f32.mrb[0].mxu0
  %v7322 = vadd.f32 0.0, %v7321
  %v7323 = vpop.f32.mrb[0].mxu0
  %7324 = vmatprep.mubr.bf16.mxu0 0
  %7325 = vmatmul.mubr.bf16.gmra.mrb[0].mxu0 %v7264
  %v7326 = vpop.f32.mrb[0].mxu0
  %v7327 = vadd.f32 0.0, %v7326
  %v7328 = vpop.f32.mrb[0].mxu0
  %v7329 = vpop.f32.mrb[0].mxu0
  %v7330 = vadd.f32 0.0, %v7329
  %v7331 = vpop.f32.mrb[0].mxu0
  %7332 = vmatprep.mubr.bf16.mxu0 0
  %7333 = vmatmul.mubr.bf16.gmra.mrb[0].mxu0 %v7267
  %v7334 = vpop.f32.mrb[0].mxu0
  %v7335 = vadd.f32 0.0, %v7334
  %v7336 = vpop.f32.mrb[0].mxu0
  %v7337 = vpop.f32.mrb[0].mxu0
  %v7338 = vadd.f32 0.0, %v7337
  %v7339 = vpop.f32.mrb[0].mxu0
  %7340 = vmatprep.mubr.bf16.mxu0 0
  %7341 = vmatmul.mubr.bf16.gmra.mrb[0].mxu0 %v7270
  %v7342 = vpop.f32.mrb[0].mxu0
  %v7343 = vadd.f32 0.0, %v7342
  %v7344 = vpop.f32.mrb[0].mxu0
  %v7345 = vpop.f32.mrb[0].mxu0
  %v7346 = vadd.f32 0.0, %v7345
  %v7347 = vpop.f32.mrb[0].mxu0
  %7348 = vmatprep.mubr.bf16.mxu0 0
  %7349 = vmatmul.mubr.bf16.gmra.mrb[0].mxu0 %v7273
  %v7350 = vpop.f32.mrb[0].mxu0
  %v7351 = vadd.f32 0.0, %v7350
  %v7352 = vpop.f32.mrb[0].mxu0
  %v7353 = vpop.f32.mrb[0].mxu0
  %v7354 = vadd.f32 0.0, %v7353
  %v7355 = vpop.f32.mrb[0].mxu0
  %7356 = vmatprep.mubr.bf16.mxu0 0
  %7357 = vmatmul.mubr.bf16.gmra.mrb[0].mxu0 %v7276
  %v7358 = vpop.f32.mrb[0].mxu0
  %v7359 = vadd.f32 0.0, %v7358
  %v7360 = vpop.f32.mrb[0].mxu0
  %v7361 = vpop.f32.mrb[0].mxu0
  %v7362 = vadd.f32 0.0, %v7361
  %v7363 = vpop.f32.mrb[0].mxu0
  %7364 = vmatprep.mubr.bf16.mxu0 0
  %7365 = vmatmul.mubr.bf16.gmra.mrb[0].mxu0 %v7279
  %v7366 = vpop.f32.mrb[0].mxu0
  %v7367 = vadd.f32 0.0, %v7366
  %v7368 = vpop.f32.mrb[0].mxu0
  %v7369 = vpop.f32.mrb[0].mxu0
  %v7370 = vadd.f32 0.0, %v7369
  %v7371 = vpop.f32.mrb[0].mxu0
  %7372 = vmatprep.mubr.bf16.mxu0 0
  %7373 = vmatmul.mubr.bf16.gmra.mrb[0].mxu0 %v7282
  %v7374 = vpop.f32.mrb[0].mxu0
  %v7375 = vadd.f32 0.0, %v7374
  %v7376 = vpop.f32.mrb[0].mxu0
  %v7377 = vpop.f32.mrb[0].mxu0
  %v7378 = vadd.f32 0.0, %v7377
  %v7379 = vpop.f32.mrb[0].mxu0
  %7380 = vdwg.mxu0
  %v7381 = vadd.f32 %v7220, %v7319
  %v7382 = vadd.f32 %v7221, %v7322
  %v7383 = vadd.f32 %v7222, %v7327
  %v7384 = vadd.f32 %v7223, %v7330
  %v7385 = vadd.f32 %v7224, %v7335
  %v7386 = vadd.f32 %v7225, %v7338
  %v7387 = vadd.f32 %v7226, %v7343
  %v7388 = vadd.f32 %v7227, %v7346
  %v7389 = vadd.f32 %v7228, %v7351
  %v7390 = vadd.f32 %v7229, %v7354
  %v7391 = vadd.f32 %v7230, %v7359
  %v7392 = vadd.f32 %v7231, %v7362
  %v7393 = vadd.f32 %v7232, %v7367
  %v7394 = vadd.f32 %v7233, %v7370
  %v7395 = vadd.f32 %v7234, %v7375
  %v7396 = vadd.f32 %v7235, %v7378
  %v7397 = vld [vmem:[#allocation2 + $0x480] sm:$0xff]
  %v7398 = vld [vmem:[#allocation2 + $0x488] sm:$0xff]
  %v7399 = vld [vmem:[#allocation2 + $0x490] sm:$0xff]
  %v7400 = vld [vmem:[#allocation2 + $0x498] sm:$0xff]
  %v7401 = vld [vmem:[#allocation2 + $0x4a0] sm:$0xff]
  %v7402 = vld [vmem:[#allocation2 + $0x4a8] sm:$0xff]
  %v7403 = vld [vmem:[#allocation2 + $0x4b0] sm:$0xff]
  %v7404 = vld [vmem:[#allocation2 + $0x4b8] sm:$0xff]
  %v7405 = vld [vmem:[%s3 + $0x120] sm:$0xf]
  %v7406 = vld [vmem:[%s3 + $0x124] sm:$0xf]
  %v7407 = vld [vmem:[%s3 + $0x128] sm:$0xf]
  %v7408 = vld [vmem:[%s3 + $0x12c] sm:$0xf]
  %v7413 = vunpack.c.l.b16 %v7405
  %v7414 = vunpack.c.l.b16 %v7406
  %v7415 = vunpack.c.l.b16 %v7407
  %v7416 = vunpack.c.l.b16 %v7408
  %v7417 = vpack.c.b16 %v7414, %v7413
  %v7418 = vpack.c.b16 %v7416, %v7415
  %v7422 = vsel %vm4330, %v7397, 0
  %v7425 = vsel %vm4330, %v7398, 0
  %v7428 = vsel %vm4330, %v7399, 0
  %v7431 = vsel %vm4330, %v7400, 0
  %v7434 = vsel %vm4330, %v7401, 0
  %v7437 = vsel %vm4330, %v7402, 0
  %v7440 = vsel %vm4330, %v7403, 0
  %v7443 = vsel %vm4330, %v7404, 0
  %7445 = vmatprep.subr.bf16.mxu0 0
  %7446 = vmatpush1.bf16.msra.mxu0 %v7417
  %7447 = vmatprep.subr.bf16.mxu0 0
  %7448 = vmatpush1.bf16.msra.mxu0 %v7418
  %7449 = vmatprep.subr.bf16.mxu0 0
  %7450 = vmatpush1.bf16.msra.mxu0 0
  %7451 = vmatprep.subr.bf16.mxu0 0
  %7452 = vmatpush1.bf16.msra.mxu0 0
  %7453 = vmatprep.subr.bf16.mxu0 0
  %7454 = vmatpush1.bf16.msra.mxu0 0
  %7455 = vmatprep.subr.bf16.mxu0 0
  %7456 = vmatpush1.bf16.msra.mxu0 0
  %7457 = vmatprep.subr.bf16.mxu0 0
  %7458 = vmatpush1.bf16.msra.mxu0 0
  %7459 = vmatprep.subr.bf16.mxu0 0
  %7460 = vmatpush1.bf16.msra.mxu0 0
  %7461 = vmatprep.subr.bf16.mxu0 0
  %7462 = vmatpush1.bf16.msra.mxu0 0
  %7463 = vmatprep.subr.bf16.mxu0 0
  %7464 = vmatpush1.bf16.msra.mxu0 0
  %7465 = vmatprep.subr.bf16.mxu0 0
  %7466 = vmatpush1.bf16.msra.mxu0 0
  %7467 = vmatprep.subr.bf16.mxu0 0
  %7468 = vmatpush1.bf16.msra.mxu0 0
  %7469 = vmatprep.subr.bf16.mxu0 0
  %7470 = vmatpush1.bf16.msra.mxu0 0
  %7471 = vmatprep.subr.bf16.mxu0 0
  %7472 = vmatpush1.bf16.msra.mxu0 0
  %7473 = vmatprep.subr.bf16.mxu0 0
  %7474 = vmatpush1.bf16.msra.mxu0 0
  %7475 = vmatprep.subr.bf16.mxu0 0
  %7476 = vmatpush1.bf16.msra.mxu0 0
  %7477 = vmatprep.mubr.bf16.mxu0 0
  %7478 = vmatmul.mubr.bf16.gmra.mrb[0].mxu0 %v7422
  %v7479 = vpop.f32.mrb[0].mxu0
  %v7480 = vadd.f32 0.0, %v7479
  %v7481 = vpop.f32.mrb[0].mxu0
  %v7482 = vpop.f32.mrb[0].mxu0
  %v7483 = vadd.f32 0.0, %v7482
  %v7484 = vpop.f32.mrb[0].mxu0
  %7485 = vmatprep.mubr.bf16.mxu0 0
  %7486 = vmatmul.mubr.bf16.gmra.mrb[0].mxu0 %v7425
  %v7487 = vpop.f32.mrb[0].mxu0
  %v7488 = vadd.f32 0.0, %v7487
  %v7489 = vpop.f32.mrb[0].mxu0
  %v7490 = vpop.f32.mrb[0].mxu0
  %v7491 = vadd.f32 0.0, %v7490
  %v7492 = vpop.f32.mrb[0].mxu0
  %7493 = vmatprep.mubr.bf16.mxu0 0
  %7494 = vmatmul.mubr.bf16.gmra.mrb[0].mxu0 %v7428
  %v7495 = vpop.f32.mrb[0].mxu0
  %v7496 = vadd.f32 0.0, %v7495
  %v7497 = vpop.f32.mrb[0].mxu0
  %v7498 = vpop.f32.mrb[0].mxu0
  %v7499 = vadd.f32 0.0, %v7498
  %v7500 = vpop.f32.mrb[0].mxu0
  %7501 = vmatprep.mubr.bf16.mxu0 0
  %7502 = vmatmul.mubr.bf16.gmra.mrb[0].mxu0 %v7431
  %v7503 = vpop.f32.mrb[0].mxu0
  %v7504 = vadd.f32 0.0, %v7503
  %v7505 = vpop.f32.mrb[0].mxu0
  %v7506 = vpop.f32.mrb[0].mxu0
  %v7507 = vadd.f32 0.0, %v7506
  %v7508 = vpop.f32.mrb[0].mxu0
  %7509 = vmatprep.mubr.bf16.mxu0 0
  %7510 = vmatmul.mubr.bf16.gmra.mrb[0].mxu0 %v7434
  %v7511 = vpop.f32.mrb[0].mxu0
  %v7512 = vadd.f32 0.0, %v7511
  %v7513 = vpop.f32.mrb[0].mxu0
  %v7514 = vpop.f32.mrb[0].mxu0
  %v7515 = vadd.f32 0.0, %v7514
  %v7516 = vpop.f32.mrb[0].mxu0
  %7517 = vmatprep.mubr.bf16.mxu0 0
  %7518 = vmatmul.mubr.bf16.gmra.mrb[0].mxu0 %v7437
  %v7519 = vpop.f32.mrb[0].mxu0
  %v7520 = vadd.f32 0.0, %v7519
  %v7521 = vpop.f32.mrb[0].mxu0
  %v7522 = vpop.f32.mrb[0].mxu0
  %v7523 = vadd.f32 0.0, %v7522
  %v7524 = vpop.f32.mrb[0].mxu0
  %7525 = vmatprep.mubr.bf16.mxu0 0
  %7526 = vmatmul.mubr.bf16.gmra.mrb[0].mxu0 %v7440
  %v7527 = vpop.f32.mrb[0].mxu0
  %v7528 = vadd.f32 0.0, %v7527
  %v7529 = vpop.f32.mrb[0].mxu0
  %v7530 = vpop.f32.mrb[0].mxu0
  %v7531 = vadd.f32 0.0, %v7530
  %v7532 = vpop.f32.mrb[0].mxu0
  %7533 = vmatprep.mubr.bf16.mxu0 0
  %7534 = vmatmul.mubr.bf16.gmra.mrb[0].mxu0 %v7443
  %v7535 = vpop.f32.mrb[0].mxu0
  %v7536 = vadd.f32 0.0, %v7535
  %v7537 = vpop.f32.mrb[0].mxu0
  %v7538 = vpop.f32.mrb[0].mxu0
  %v7539 = vadd.f32 0.0, %v7538
  %v7540 = vpop.f32.mrb[0].mxu0
  %7541 = vdwg.mxu0
  %v7542 = vadd.f32 %v7381, %v7480
  %v7543 = vadd.f32 %v7382, %v7483
  %v7544 = vadd.f32 %v7383, %v7488
  %v7545 = vadd.f32 %v7384, %v7491
  %v7546 = vadd.f32 %v7385, %v7496
  %v7547 = vadd.f32 %v7386, %v7499
  %v7548 = vadd.f32 %v7387, %v7504
  %v7549 = vadd.f32 %v7388, %v7507
  %v7550 = vadd.f32 %v7389, %v7512
  %v7551 = vadd.f32 %v7390, %v7515
  %v7552 = vadd.f32 %v7391, %v7520
  %v7553 = vadd.f32 %v7392, %v7523
  %v7554 = vadd.f32 %v7393, %v7528
  %v7555 = vadd.f32 %v7394, %v7531
  %v7556 = vadd.f32 %v7395, %v7536
  %v7557 = vadd.f32 %v7396, %v7539
  %v7558 = vld [vmem:[#allocation2 + $0x4c0] sm:$0xff]
  %v7559 = vld [vmem:[#allocation2 + $0x4c8] sm:$0xff]
  %v7560 = vld [vmem:[#allocation2 + $0x4d0] sm:$0xff]
  %v7561 = vld [vmem:[#allocation2 + $0x4d8] sm:$0xff]
  %v7562 = vld [vmem:[#allocation2 + $0x4e0] sm:$0xff]
  %v7563 = vld [vmem:[#allocation2 + $0x4e8] sm:$0xff]
  %v7564 = vld [vmem:[#allocation2 + $0x4f0] sm:$0xff]
  %v7565 = vld [vmem:[#allocation2 + $0x4f8] sm:$0xff]
  %v7566 = vld [vmem:[%s3 + $0x130] sm:$0xf]
  %v7567 = vld [vmem:[%s3 + $0x134] sm:$0xf]
  %v7568 = vld [vmem:[%s3 + $0x138] sm:$0xf]
  %v7569 = vld [vmem:[%s3 + $0x13c] sm:$0xf]
  %v7574 = vunpack.c.l.b16 %v7566
  %v7575 = vunpack.c.l.b16 %v7567
  %v7576 = vunpack.c.l.b16 %v7568
  %v7577 = vunpack.c.l.b16 %v7569
  %v7578 = vpack.c.b16 %v7575, %v7574
  %v7579 = vpack.c.b16 %v7577, %v7576
  %v7583 = vsel %vm4330, %v7558, 0
  %v7586 = vsel %vm4330, %v7559, 0
  %v7589 = vsel %vm4330, %v7560, 0
  %v7592 = vsel %vm4330, %v7561, 0
  %v7595 = vsel %vm4330, %v7562, 0
  %v7598 = vsel %vm4330, %v7563, 0
  %v7601 = vsel %vm4330, %v7564, 0
  %v7604 = vsel %vm4330, %v7565, 0
  %7606 = vmatprep.subr.bf16.mxu0 0
  %7607 = vmatpush1.bf16.msra.mxu0 %v7578
  %7608 = vmatprep.subr.bf16.mxu0 0
  %7609 = vmatpush1.bf16.msra.mxu0 %v7579
  %7610 = vmatprep.subr.bf16.mxu0 0
  %7611 = vmatpush1.bf16.msra.mxu0 0
  %7612 = vmatprep.subr.bf16.mxu0 0
  %7613 = vmatpush1.bf16.msra.mxu0 0
  %7614 = vmatprep.subr.bf16.mxu0 0
  %7615 = vmatpush1.bf16.msra.mxu0 0
  %7616 = vmatprep.subr.bf16.mxu0 0
  %7617 = vmatpush1.bf16.msra.mxu0 0
  %7618 = vmatprep.subr.bf16.mxu0 0
  %7619 = vmatpush1.bf16.msra.mxu0 0
  %7620 = vmatprep.subr.bf16.mxu0 0
  %7621 = vmatpush1.bf16.msra.mxu0 0
  %7622 = vmatprep.subr.bf16.mxu0 0
  %7623 = vmatpush1.bf16.msra.mxu0 0
  %7624 = vmatprep.subr.bf16.mxu0 0
  %7625 = vmatpush1.bf16.msra.mxu0 0
  %7626 = vmatprep.subr.bf16.mxu0 0
  %7627 = vmatpush1.bf16.msra.mxu0 0
  %7628 = vmatprep.subr.bf16.mxu0 0
  %7629 = vmatpush1.bf16.msra.mxu0 0
  %7630 = vmatprep.subr.bf16.mxu0 0
  %7631 = vmatpush1.bf16.msra.mxu0 0
  %7632 = vmatprep.subr.bf16.mxu0 0
  %7633 = vmatpush1.bf16.msra.mxu0 0
  %7634 = vmatprep.subr.bf16.mxu0 0
  %7635 = vmatpush1.bf16.msra.mxu0 0
  %7636 = vmatprep.subr.bf16.mxu0 0
  %7637 = vmatpush1.bf16.msra.mxu0 0
  %7638 = vmatprep.mubr.bf16.mxu0 0
  %7639 = vmatmul.mubr.bf16.gmra.mrb[0].mxu0 %v7583
  %v7640 = vpop.f32.mrb[0].mxu0
  %v7641 = vadd.f32 0.0, %v7640
  %v7642 = vpop.f32.mrb[0].mxu0
  %v7643 = vpop.f32.mrb[0].mxu0
  %v7644 = vadd.f32 0.0, %v7643
  %v7645 = vpop.f32.mrb[0].mxu0
  %7646 = vmatprep.mubr.bf16.mxu0 0
  %7647 = vmatmul.mubr.bf16.gmra.mrb[0].mxu0 %v7586
  %v7648 = vpop.f32.mrb[0].mxu0
  %v7649 = vadd.f32 0.0, %v7648
  %v7650 = vpop.f32.mrb[0].mxu0
  %v7651 = vpop.f32.mrb[0].mxu0
  %v7652 = vadd.f32 0.0, %v7651
  %v7653 = vpop.f32.mrb[0].mxu0
  %7654 = vmatprep.mubr.bf16.mxu0 0
  %7655 = vmatmul.mubr.bf16.gmra.mrb[0].mxu0 %v7589
  %v7656 = vpop.f32.mrb[0].mxu0
  %v7657 = vadd.f32 0.0, %v7656
  %v7658 = vpop.f32.mrb[0].mxu0
  %v7659 = vpop.f32.mrb[0].mxu0
  %v7660 = vadd.f32 0.0, %v7659
  %v7661 = vpop.f32.mrb[0].mxu0
  %7662 = vmatprep.mubr.bf16.mxu0 0
  %7663 = vmatmul.mubr.bf16.gmra.mrb[0].mxu0 %v7592
  %v7664 = vpop.f32.mrb[0].mxu0
  %v7665 = vadd.f32 0.0, %v7664
  %v7666 = vpop.f32.mrb[0].mxu0
  %v7667 = vpop.f32.mrb[0].mxu0
  %v7668 = vadd.f32 0.0, %v7667
  %v7669 = vpop.f32.mrb[0].mxu0
  %7670 = vmatprep.mubr.bf16.mxu0 0
  %7671 = vmatmul.mubr.bf16.gmra.mrb[0].mxu0 %v7595
  %v7672 = vpop.f32.mrb[0].mxu0
  %v7673 = vadd.f32 0.0, %v7672
  %v7674 = vpop.f32.mrb[0].mxu0
  %v7675 = vpop.f32.mrb[0].mxu0
  %v7676 = vadd.f32 0.0, %v7675
  %v7677 = vpop.f32.mrb[0].mxu0
  %7678 = vmatprep.mubr.bf16.mxu0 0
  %7679 = vmatmul.mubr.bf16.gmra.mrb[0].mxu0 %v7598
  %v7680 = vpop.f32.mrb[0].mxu0
  %v7681 = vadd.f32 0.0, %v7680
  %v7682 = vpop.f32.mrb[0].mxu0
  %v7683 = vpop.f32.mrb[0].mxu0
  %v7684 = vadd.f32 0.0, %v7683
  %v7685 = vpop.f32.mrb[0].mxu0
  %7686 = vmatprep.mubr.bf16.mxu0 0
  %7687 = vmatmul.mubr.bf16.gmra.mrb[0].mxu0 %v7601
  %v7688 = vpop.f32.mrb[0].mxu0
  %v7689 = vadd.f32 0.0, %v7688
  %v7690 = vpop.f32.mrb[0].mxu0
  %v7691 = vpop.f32.mrb[0].mxu0
  %v7692 = vadd.f32 0.0, %v7691
  %v7693 = vpop.f32.mrb[0].mxu0
  %7694 = vmatprep.mubr.bf16.mxu0 0
  %7695 = vmatmul.mubr.bf16.gmra.mrb[0].mxu0 %v7604
  %v7696 = vpop.f32.mrb[0].mxu0
  %v7697 = vadd.f32 0.0, %v7696
  %v7698 = vpop.f32.mrb[0].mxu0
  %v7699 = vpop.f32.mrb[0].mxu0
  %v7700 = vadd.f32 0.0, %v7699
  %v7701 = vpop.f32.mrb[0].mxu0
  %7702 = vdwg.mxu0
  %v7703 = vadd.f32 %v7542, %v7641
  %v7704 = vadd.f32 %v7543, %v7644
  %v7705 = vadd.f32 %v7544, %v7649
  %v7706 = vadd.f32 %v7545, %v7652
  %v7707 = vadd.f32 %v7546, %v7657
  %v7708 = vadd.f32 %v7547, %v7660
  %v7709 = vadd.f32 %v7548, %v7665
  %v7710 = vadd.f32 %v7549, %v7668
  %v7711 = vadd.f32 %v7550, %v7673
  %v7712 = vadd.f32 %v7551, %v7676
  %v7713 = vadd.f32 %v7552, %v7681
  %v7714 = vadd.f32 %v7553, %v7684
  %v7715 = vadd.f32 %v7554, %v7689
  %v7716 = vadd.f32 %v7555, %v7692
  %v7717 = vadd.f32 %v7556, %v7697
  %v7718 = vadd.f32 %v7557, %v7700
  %v7719 = vld [vmem:[#allocation2 + $0x500] sm:$0xff]
  %v7720 = vld [vmem:[#allocation2 + $0x508] sm:$0xff]
  %v7721 = vld [vmem:[#allocation2 + $0x510] sm:$0xff]
  %v7722 = vld [vmem:[#allocation2 + $0x518] sm:$0xff]
  %v7723 = vld [vmem:[#allocation2 + $0x520] sm:$0xff]
  %v7724 = vld [vmem:[#allocation2 + $0x528] sm:$0xff]
  %v7725 = vld [vmem:[#allocation2 + $0x530] sm:$0xff]
  %v7726 = vld [vmem:[#allocation2 + $0x538] sm:$0xff]
  %v7727 = vld [vmem:[%s3 + $0x140] sm:$0xf]
  %v7728 = vld [vmem:[%s3 + $0x144] sm:$0xf]
  %v7729 = vld [vmem:[%s3 + $0x148] sm:$0xf]
  %v7730 = vld [vmem:[%s3 + $0x14c] sm:$0xf]
  %v7735 = vunpack.c.l.b16 %v7727
  %v7736 = vunpack.c.l.b16 %v7728
  %v7737 = vunpack.c.l.b16 %v7729
  %v7738 = vunpack.c.l.b16 %v7730
  %v7739 = vpack.c.b16 %v7736, %v7735
  %v7740 = vpack.c.b16 %v7738, %v7737
  %v7744 = vsel %vm4330, %v7719, 0
  %v7747 = vsel %vm4330, %v7720, 0
  %v7750 = vsel %vm4330, %v7721, 0
  %v7753 = vsel %vm4330, %v7722, 0
  %v7756 = vsel %vm4330, %v7723, 0
  %v7759 = vsel %vm4330, %v7724, 0
  %v7762 = vsel %vm4330, %v7725, 0
  %v7765 = vsel %vm4330, %v7726, 0
  %7767 = vmatprep.subr.bf16.mxu0 0
  %7768 = vmatpush1.bf16.msra.mxu0 %v7739
  %7769 = vmatprep.subr.bf16.mxu0 0
  %7770 = vmatpush1.bf16.msra.mxu0 %v7740
  %7771 = vmatprep.subr.bf16.mxu0 0
  %7772 = vmatpush1.bf16.msra.mxu0 0
  %7773 = vmatprep.subr.bf16.mxu0 0
  %7774 = vmatpush1.bf16.msra.mxu0 0
  %7775 = vmatprep.subr.bf16.mxu0 0
  %7776 = vmatpush1.bf16.msra.mxu0 0
  %7777 = vmatprep.subr.bf16.mxu0 0
  %7778 = vmatpush1.bf16.msra.mxu0 0
  %7779 = vmatprep.subr.bf16.mxu0 0
  %7780 = vmatpush1.bf16.msra.mxu0 0
  %7781 = vmatprep.subr.bf16.mxu0 0
  %7782 = vmatpush1.bf16.msra.mxu0 0
  %7783 = vmatprep.subr.bf16.mxu0 0
  %7784 = vmatpush1.bf16.msra.mxu0 0
  %7785 = vmatprep.subr.bf16.mxu0 0
  %7786 = vmatpush1.bf16.msra.mxu0 0
  %7787 = vmatprep.subr.bf16.mxu0 0
  %7788 = vmatpush1.bf16.msra.mxu0 0
  %7789 = vmatprep.subr.bf16.mxu0 0
  %7790 = vmatpush1.bf16.msra.mxu0 0
  %7791 = vmatprep.subr.bf16.mxu0 0
  %7792 = vmatpush1.bf16.msra.mxu0 0
  %7793 = vmatprep.subr.bf16.mxu0 0
  %7794 = vmatpush1.bf16.msra.mxu0 0
  %7795 = vmatprep.subr.bf16.mxu0 0
  %7796 = vmatpush1.bf16.msra.mxu0 0
  %7797 = vmatprep.subr.bf16.mxu0 0
  %7798 = vmatpush1.bf16.msra.mxu0 0
  %7799 = vmatprep.mubr.bf16.mxu0 0
  %7800 = vmatmul.mubr.bf16.gmra.mrb[0].mxu0 %v7744
  %v7801 = vpop.f32.mrb[0].mxu0
  %v7802 = vadd.f32 0.0, %v7801
  %v7803 = vpop.f32.mrb[0].mxu0
  %v7804 = vpop.f32.mrb[0].mxu0
  %v7805 = vadd.f32 0.0, %v7804
  %v7806 = vpop.f32.mrb[0].mxu0
  %7807 = vmatprep.mubr.bf16.mxu0 0
  %7808 = vmatmul.mubr.bf16.gmra.mrb[0].mxu0 %v7747
  %v7809 = vpop.f32.mrb[0].mxu0
  %v7810 = vadd.f32 0.0, %v7809
  %v7811 = vpop.f32.mrb[0].mxu0
  %v7812 = vpop.f32.mrb[0].mxu0
  %v7813 = vadd.f32 0.0, %v7812
  %v7814 = vpop.f32.mrb[0].mxu0
  %7815 = vmatprep.mubr.bf16.mxu0 0
  %7816 = vmatmul.mubr.bf16.gmra.mrb[0].mxu0 %v7750
  %v7817 = vpop.f32.mrb[0].mxu0
  %v7818 = vadd.f32 0.0, %v7817
  %v7819 = vpop.f32.mrb[0].mxu0
  %v7820 = vpop.f32.mrb[0].mxu0
  %v7821 = vadd.f32 0.0, %v7820
  %v7822 = vpop.f32.mrb[0].mxu0
  %7823 = vmatprep.mubr.bf16.mxu0 0
  %7824 = vmatmul.mubr.bf16.gmra.mrb[0].mxu0 %v7753
  %v7825 = vpop.f32.mrb[0].mxu0
  %v7826 = vadd.f32 0.0, %v7825
  %v7827 = vpop.f32.mrb[0].mxu0
  %v7828 = vpop.f32.mrb[0].mxu0
  %v7829 = vadd.f32 0.0, %v7828
  %v7830 = vpop.f32.mrb[0].mxu0
  %7831 = vmatprep.mubr.bf16.mxu0 0
  %7832 = vmatmul.mubr.bf16.gmra.mrb[0].mxu0 %v7756
  %v7833 = vpop.f32.mrb[0].mxu0
  %v7834 = vadd.f32 0.0, %v7833
  %v7835 = vpop.f32.mrb[0].mxu0
  %v7836 = vpop.f32.mrb[0].mxu0
  %v7837 = vadd.f32 0.0, %v7836
  %v7838 = vpop.f32.mrb[0].mxu0
  %7839 = vmatprep.mubr.bf16.mxu0 0
  %7840 = vmatmul.mubr.bf16.gmra.mrb[0].mxu0 %v7759
  %v7841 = vpop.f32.mrb[0].mxu0
  %v7842 = vadd.f32 0.0, %v7841
  %v7843 = vpop.f32.mrb[0].mxu0
  %v7844 = vpop.f32.mrb[0].mxu0
  %v7845 = vadd.f32 0.0, %v7844
  %v7846 = vpop.f32.mrb[0].mxu0
  %7847 = vmatprep.mubr.bf16.mxu0 0
  %7848 = vmatmul.mubr.bf16.gmra.mrb[0].mxu0 %v7762
  %v7849 = vpop.f32.mrb[0].mxu0
  %v7850 = vadd.f32 0.0, %v7849
  %v7851 = vpop.f32.mrb[0].mxu0
  %v7852 = vpop.f32.mrb[0].mxu0
  %v7853 = vadd.f32 0.0, %v7852
  %v7854 = vpop.f32.mrb[0].mxu0
  %7855 = vmatprep.mubr.bf16.mxu0 0
  %7856 = vmatmul.mubr.bf16.gmra.mrb[0].mxu0 %v7765
  %v7857 = vpop.f32.mrb[0].mxu0
  %v7858 = vadd.f32 0.0, %v7857
  %v7859 = vpop.f32.mrb[0].mxu0
  %v7860 = vpop.f32.mrb[0].mxu0
  %v7861 = vadd.f32 0.0, %v7860
  %v7862 = vpop.f32.mrb[0].mxu0
  %7863 = vdwg.mxu0
  %v7864 = vadd.f32 %v7703, %v7802
  %v7865 = vadd.f32 %v7704, %v7805
  %v7866 = vadd.f32 %v7705, %v7810
  %v7867 = vadd.f32 %v7706, %v7813
  %v7868 = vadd.f32 %v7707, %v7818
  %v7869 = vadd.f32 %v7708, %v7821
  %v7870 = vadd.f32 %v7709, %v7826
  %v7871 = vadd.f32 %v7710, %v7829
  %v7872 = vadd.f32 %v7711, %v7834
  %v7873 = vadd.f32 %v7712, %v7837
  %v7874 = vadd.f32 %v7713, %v7842
  %v7875 = vadd.f32 %v7714, %v7845
  %v7876 = vadd.f32 %v7715, %v7850
  %v7877 = vadd.f32 %v7716, %v7853
  %v7878 = vadd.f32 %v7717, %v7858
  %v7879 = vadd.f32 %v7718, %v7861
  %v7880 = vld [vmem:[#allocation2 + $0x540] sm:$0xff]
  %v7881 = vld [vmem:[#allocation2 + $0x548] sm:$0xff]
  %v7882 = vld [vmem:[#allocation2 + $0x550] sm:$0xff]
  %v7883 = vld [vmem:[#allocation2 + $0x558] sm:$0xff]
  %v7884 = vld [vmem:[#allocation2 + $0x560] sm:$0xff]
  %v7885 = vld [vmem:[#allocation2 + $0x568] sm:$0xff]
  %v7886 = vld [vmem:[#allocation2 + $0x570] sm:$0xff]
  %v7887 = vld [vmem:[#allocation2 + $0x578] sm:$0xff]
  %v7888 = vld [vmem:[%s3 + $0x150] sm:$0xf]
  %v7889 = vld [vmem:[%s3 + $0x154] sm:$0xf]
  %v7890 = vld [vmem:[%s3 + $0x158] sm:$0xf]
  %v7891 = vld [vmem:[%s3 + $0x15c] sm:$0xf]
  %v7896 = vunpack.c.l.b16 %v7888
  %v7897 = vunpack.c.l.b16 %v7889
  %v7898 = vunpack.c.l.b16 %v7890
  %v7899 = vunpack.c.l.b16 %v7891
  %v7900 = vpack.c.b16 %v7897, %v7896
  %v7901 = vpack.c.b16 %v7899, %v7898
  %v7905 = vsel %vm4330, %v7880, 0
  %v7908 = vsel %vm4330, %v7881, 0
  %v7911 = vsel %vm4330, %v7882, 0
  %v7914 = vsel %vm4330, %v7883, 0
  %v7917 = vsel %vm4330, %v7884, 0
  %v7920 = vsel %vm4330, %v7885, 0
  %v7923 = vsel %vm4330, %v7886, 0
  %v7926 = vsel %vm4330, %v7887, 0
  %7928 = vmatprep.subr.bf16.mxu0 0
  %7929 = vmatpush1.bf16.msra.mxu0 %v7900
  %7930 = vmatprep.subr.bf16.mxu0 0
  %7931 = vmatpush1.bf16.msra.mxu0 %v7901
  %7932 = vmatprep.subr.bf16.mxu0 0
  %7933 = vmatpush1.bf16.msra.mxu0 0
  %7934 = vmatprep.subr.bf16.mxu0 0
  %7935 = vmatpush1.bf16.msra.mxu0 0
  %7936 = vmatprep.subr.bf16.mxu0 0
  %7937 = vmatpush1.bf16.msra.mxu0 0
  %7938 = vmatprep.subr.bf16.mxu0 0
  %7939 = vmatpush1.bf16.msra.mxu0 0
  %7940 = vmatprep.subr.bf16.mxu0 0
  %7941 = vmatpush1.bf16.msra.mxu0 0
  %7942 = vmatprep.subr.bf16.mxu0 0
  %7943 = vmatpush1.bf16.msra.mxu0 0
  %7944 = vmatprep.subr.bf16.mxu0 0
  %7945 = vmatpush1.bf16.msra.mxu0 0
  %7946 = vmatprep.subr.bf16.mxu0 0
  %7947 = vmatpush1.bf16.msra.mxu0 0
  %7948 = vmatprep.subr.bf16.mxu0 0
  %7949 = vmatpush1.bf16.msra.mxu0 0
  %7950 = vmatprep.subr.bf16.mxu0 0
  %7951 = vmatpush1.bf16.msra.mxu0 0
  %7952 = vmatprep.subr.bf16.mxu0 0
  %7953 = vmatpush1.bf16.msra.mxu0 0
  %7954 = vmatprep.subr.bf16.mxu0 0
  %7955 = vmatpush1.bf16.msra.mxu0 0
  %7956 = vmatprep.subr.bf16.mxu0 0
  %7957 = vmatpush1.bf16.msra.mxu0 0
  %7958 = vmatprep.subr.bf16.mxu0 0
  %7959 = vmatpush1.bf16.msra.mxu0 0
  %7960 = vmatprep.mubr.bf16.mxu0 0
  %7961 = vmatmul.mubr.bf16.gmra.mrb[0].mxu0 %v7905
  %v7962 = vpop.f32.mrb[0].mxu0
  %v7963 = vadd.f32 0.0, %v7962
  %v7964 = vpop.f32.mrb[0].mxu0
  %v7965 = vpop.f32.mrb[0].mxu0
  %v7966 = vadd.f32 0.0, %v7965
  %v7967 = vpop.f32.mrb[0].mxu0
  %7968 = vmatprep.mubr.bf16.mxu0 0
  %7969 = vmatmul.mubr.bf16.gmra.mrb[0].mxu0 %v7908
  %v7970 = vpop.f32.mrb[0].mxu0
  %v7971 = vadd.f32 0.0, %v7970
  %v7972 = vpop.f32.mrb[0].mxu0
  %v7973 = vpop.f32.mrb[0].mxu0
  %v7974 = vadd.f32 0.0, %v7973
  %v7975 = vpop.f32.mrb[0].mxu0
  %7976 = vmatprep.mubr.bf16.mxu0 0
  %7977 = vmatmul.mubr.bf16.gmra.mrb[0].mxu0 %v7911
  %v7978 = vpop.f32.mrb[0].mxu0
  %v7979 = vadd.f32 0.0, %v7978
  %v7980 = vpop.f32.mrb[0].mxu0
  %v7981 = vpop.f32.mrb[0].mxu0
  %v7982 = vadd.f32 0.0, %v7981
  %v7983 = vpop.f32.mrb[0].mxu0
  %7984 = vmatprep.mubr.bf16.mxu0 0
  %7985 = vmatmul.mubr.bf16.gmra.mrb[0].mxu0 %v7914
  %v7986 = vpop.f32.mrb[0].mxu0
  %v7987 = vadd.f32 0.0, %v7986
  %v7988 = vpop.f32.mrb[0].mxu0
  %v7989 = vpop.f32.mrb[0].mxu0
  %v7990 = vadd.f32 0.0, %v7989
  %v7991 = vpop.f32.mrb[0].mxu0
  %7992 = vmatprep.mubr.bf16.mxu0 0
  %7993 = vmatmul.mubr.bf16.gmra.mrb[0].mxu0 %v7917
  %v7994 = vpop.f32.mrb[0].mxu0
  %v7995 = vadd.f32 0.0, %v7994
  %v7996 = vpop.f32.mrb[0].mxu0
  %v7997 = vpop.f32.mrb[0].mxu0
  %v7998 = vadd.f32 0.0, %v7997
  %v7999 = vpop.f32.mrb[0].mxu0
  %8000 = vmatprep.mubr.bf16.mxu0 0
  %8001 = vmatmul.mubr.bf16.gmra.mrb[0].mxu0 %v7920
  %v8002 = vpop.f32.mrb[0].mxu0
  %v8003 = vadd.f32 0.0, %v8002
  %v8004 = vpop.f32.mrb[0].mxu0
  %v8005 = vpop.f32.mrb[0].mxu0
  %v8006 = vadd.f32 0.0, %v8005
  %v8007 = vpop.f32.mrb[0].mxu0
  %8008 = vmatprep.mubr.bf16.mxu0 0
  %8009 = vmatmul.mubr.bf16.gmra.mrb[0].mxu0 %v7923
  %v8010 = vpop.f32.mrb[0].mxu0
  %v8011 = vadd.f32 0.0, %v8010
  %v8012 = vpop.f32.mrb[0].mxu0
  %v8013 = vpop.f32.mrb[0].mxu0
  %v8014 = vadd.f32 0.0, %v8013
  %v8015 = vpop.f32.mrb[0].mxu0
  %8016 = vmatprep.mubr.bf16.mxu0 0
  %8017 = vmatmul.mubr.bf16.gmra.mrb[0].mxu0 %v7926
  %v8018 = vpop.f32.mrb[0].mxu0
  %v8019 = vadd.f32 0.0, %v8018
  %v8020 = vpop.f32.mrb[0].mxu0
  %v8021 = vpop.f32.mrb[0].mxu0
  %v8022 = vadd.f32 0.0, %v8021
  %v8023 = vpop.f32.mrb[0].mxu0
  %8024 = vdwg.mxu0
  %v8025 = vadd.f32 %v7864, %v7963
  %v8026 = vadd.f32 %v7865, %v7966
  %v8027 = vadd.f32 %v7866, %v7971
  %v8028 = vadd.f32 %v7867, %v7974
  %v8029 = vadd.f32 %v7868, %v7979
  %v8030 = vadd.f32 %v7869, %v7982
  %v8031 = vadd.f32 %v7870, %v7987
  %v8032 = vadd.f32 %v7871, %v7990
  %v8033 = vadd.f32 %v7872, %v7995
  %v8034 = vadd.f32 %v7873, %v7998
  %v8035 = vadd.f32 %v7874, %v8003
  %v8036 = vadd.f32 %v7875, %v8006
  %v8037 = vadd.f32 %v7876, %v8011
  %v8038 = vadd.f32 %v7877, %v8014
  %v8039 = vadd.f32 %v7878, %v8019
  %v8040 = vadd.f32 %v7879, %v8022
  %v8041 = vld [vmem:[#allocation2 + $0x580] sm:$0xff]
  %v8042 = vld [vmem:[#allocation2 + $0x588] sm:$0xff]
  %v8043 = vld [vmem:[#allocation2 + $0x590] sm:$0xff]
  %v8044 = vld [vmem:[#allocation2 + $0x598] sm:$0xff]
  %v8045 = vld [vmem:[#allocation2 + $0x5a0] sm:$0xff]
  %v8046 = vld [vmem:[#allocation2 + $0x5a8] sm:$0xff]
  %v8047 = vld [vmem:[#allocation2 + $0x5b0] sm:$0xff]
  %v8048 = vld [vmem:[#allocation2 + $0x5b8] sm:$0xff]
  %v8049 = vld [vmem:[%s3 + $0x160] sm:$0xf]
  %v8050 = vld [vmem:[%s3 + $0x164] sm:$0xf]
  %v8051 = vld [vmem:[%s3 + $0x168] sm:$0xf]
  %v8052 = vld [vmem:[%s3 + $0x16c] sm:$0xf]
  %v8057 = vunpack.c.l.b16 %v8049
  %v8058 = vunpack.c.l.b16 %v8050
  %v8059 = vunpack.c.l.b16 %v8051
  %v8060 = vunpack.c.l.b16 %v8052
  %v8061 = vpack.c.b16 %v8058, %v8057
  %v8062 = vpack.c.b16 %v8060, %v8059
  %v8066 = vsel %vm4330, %v8041, 0
  %v8069 = vsel %vm4330, %v8042, 0
  %v8072 = vsel %vm4330, %v8043, 0
  %v8075 = vsel %vm4330, %v8044, 0
  %v8078 = vsel %vm4330, %v8045, 0
  %v8081 = vsel %vm4330, %v8046, 0
  %v8084 = vsel %vm4330, %v8047, 0
  %v8087 = vsel %vm4330, %v8048, 0
  %8089 = vmatprep.subr.bf16.mxu0 0
  %8090 = vmatpush1.bf16.msra.mxu0 %v8061
  %8091 = vmatprep.subr.bf16.mxu0 0
  %8092 = vmatpush1.bf16.msra.mxu0 %v8062
  %8093 = vmatprep.subr.bf16.mxu0 0
  %8094 = vmatpush1.bf16.msra.mxu0 0
  %8095 = vmatprep.subr.bf16.mxu0 0
  %8096 = vmatpush1.bf16.msra.mxu0 0
  %8097 = vmatprep.subr.bf16.mxu0 0
  %8098 = vmatpush1.bf16.msra.mxu0 0
  %8099 = vmatprep.subr.bf16.mxu0 0
  %8100 = vmatpush1.bf16.msra.mxu0 0
  %8101 = vmatprep.subr.bf16.mxu0 0
  %8102 = vmatpush1.bf16.msra.mxu0 0
  %8103 = vmatprep.subr.bf16.mxu0 0
  %8104 = vmatpush1.bf16.msra.mxu0 0
  %8105 = vmatprep.subr.bf16.mxu0 0
  %8106 = vmatpush1.bf16.msra.mxu0 0
  %8107 = vmatprep.subr.bf16.mxu0 0
  %8108 = vmatpush1.bf16.msra.mxu0 0
  %8109 = vmatprep.subr.bf16.mxu0 0
  %8110 = vmatpush1.bf16.msra.mxu0 0
  %8111 = vmatprep.subr.bf16.mxu0 0
  %8112 = vmatpush1.bf16.msra.mxu0 0
  %8113 = vmatprep.subr.bf16.mxu0 0
  %8114 = vmatpush1.bf16.msra.mxu0 0
  %8115 = vmatprep.subr.bf16.mxu0 0
  %8116 = vmatpush1.bf16.msra.mxu0 0
  %8117 = vmatprep.subr.bf16.mxu0 0
  %8118 = vmatpush1.bf16.msra.mxu0 0
  %8119 = vmatprep.subr.bf16.mxu0 0
  %8120 = vmatpush1.bf16.msra.mxu0 0
  %8121 = vmatprep.mubr.bf16.mxu0 0
  %8122 = vmatmul.mubr.bf16.gmra.mrb[0].mxu0 %v8066
  %v8123 = vpop.f32.mrb[0].mxu0
  %v8124 = vadd.f32 0.0, %v8123
  %v8125 = vpop.f32.mrb[0].mxu0
  %v8126 = vpop.f32.mrb[0].mxu0
  %v8127 = vadd.f32 0.0, %v8126
  %v8128 = vpop.f32.mrb[0].mxu0
  %8129 = vmatprep.mubr.bf16.mxu0 0
  %8130 = vmatmul.mubr.bf16.gmra.mrb[0].mxu0 %v8069
  %v8131 = vpop.f32.mrb[0].mxu0
  %v8132 = vadd.f32 0.0, %v8131
  %v8133 = vpop.f32.mrb[0].mxu0
  %v8134 = vpop.f32.mrb[0].mxu0
  %v8135 = vadd.f32 0.0, %v8134
  %v8136 = vpop.f32.mrb[0].mxu0
  %8137 = vmatprep.mubr.bf16.mxu0 0
  %8138 = vmatmul.mubr.bf16.gmra.mrb[0].mxu0 %v8072
  %v8139 = vpop.f32.mrb[0].mxu0
  %v8140 = vadd.f32 0.0, %v8139
  %v8141 = vpop.f32.mrb[0].mxu0
  %v8142 = vpop.f32.mrb[0].mxu0
  %v8143 = vadd.f32 0.0, %v8142
  %v8144 = vpop.f32.mrb[0].mxu0
  %8145 = vmatprep.mubr.bf16.mxu0 0
  %8146 = vmatmul.mubr.bf16.gmra.mrb[0].mxu0 %v8075
  %v8147 = vpop.f32.mrb[0].mxu0
  %v8148 = vadd.f32 0.0, %v8147
  %v8149 = vpop.f32.mrb[0].mxu0
  %v8150 = vpop.f32.mrb[0].mxu0
  %v8151 = vadd.f32 0.0, %v8150
  %v8152 = vpop.f32.mrb[0].mxu0
  %8153 = vmatprep.mubr.bf16.mxu0 0
  %8154 = vmatmul.mubr.bf16.gmra.mrb[0].mxu0 %v8078
  %v8155 = vpop.f32.mrb[0].mxu0
  %v8156 = vadd.f32 0.0, %v8155
  %v8157 = vpop.f32.mrb[0].mxu0
  %v8158 = vpop.f32.mrb[0].mxu0
  %v8159 = vadd.f32 0.0, %v8158
  %v8160 = vpop.f32.mrb[0].mxu0
  %8161 = vmatprep.mubr.bf16.mxu0 0
  %8162 = vmatmul.mubr.bf16.gmra.mrb[0].mxu0 %v8081
  %v8163 = vpop.f32.mrb[0].mxu0
  %v8164 = vadd.f32 0.0, %v8163
  %v8165 = vpop.f32.mrb[0].mxu0
  %v8166 = vpop.f32.mrb[0].mxu0
  %v8167 = vadd.f32 0.0, %v8166
  %v8168 = vpop.f32.mrb[0].mxu0
  %8169 = vmatprep.mubr.bf16.mxu0 0
  %8170 = vmatmul.mubr.bf16.gmra.mrb[0].mxu0 %v8084
  %v8171 = vpop.f32.mrb[0].mxu0
  %v8172 = vadd.f32 0.0, %v8171
  %v8173 = vpop.f32.mrb[0].mxu0
  %v8174 = vpop.f32.mrb[0].mxu0
  %v8175 = vadd.f32 0.0, %v8174
  %v8176 = vpop.f32.mrb[0].mxu0
  %8177 = vmatprep.mubr.bf16.mxu0 0
  %8178 = vmatmul.mubr.bf16.gmra.mrb[0].mxu0 %v8087
  %v8179 = vpop.f32.mrb[0].mxu0
  %v8180 = vadd.f32 0.0, %v8179
  %v8181 = vpop.f32.mrb[0].mxu0
  %v8182 = vpop.f32.mrb[0].mxu0
  %v8183 = vadd.f32 0.0, %v8182
  %v8184 = vpop.f32.mrb[0].mxu0
  %8185 = vdwg.mxu0
  %v8186 = vadd.f32 %v8025, %v8124
  %v8187 = vadd.f32 %v8026, %v8127
  %v8188 = vadd.f32 %v8027, %v8132
  %v8189 = vadd.f32 %v8028, %v8135
  %v8190 = vadd.f32 %v8029, %v8140
  %v8191 = vadd.f32 %v8030, %v8143
  %v8192 = vadd.f32 %v8031, %v8148
  %v8193 = vadd.f32 %v8032, %v8151
  %v8194 = vadd.f32 %v8033, %v8156
  %v8195 = vadd.f32 %v8034, %v8159
  %v8196 = vadd.f32 %v8035, %v8164
  %v8197 = vadd.f32 %v8036, %v8167
  %v8198 = vadd.f32 %v8037, %v8172
  %v8199 = vadd.f32 %v8038, %v8175
  %v8200 = vadd.f32 %v8039, %v8180
  %v8201 = vadd.f32 %v8040, %v8183
  %v8202 = vld [vmem:[#allocation2 + $0x5c0] sm:$0xff]
  %v8203 = vld [vmem:[#allocation2 + $0x5c8] sm:$0xff]
  %v8204 = vld [vmem:[#allocation2 + $0x5d0] sm:$0xff]
  %v8205 = vld [vmem:[#allocation2 + $0x5d8] sm:$0xff]
  %v8206 = vld [vmem:[#allocation2 + $0x5e0] sm:$0xff]
  %v8207 = vld [vmem:[#allocation2 + $0x5e8] sm:$0xff]
  %v8208 = vld [vmem:[#allocation2 + $0x5f0] sm:$0xff]
  %v8209 = vld [vmem:[#allocation2 + $0x5f8] sm:$0xff]
  %v8210 = vld [vmem:[%s3 + $0x170] sm:$0xf]
  %v8211 = vld [vmem:[%s3 + $0x174] sm:$0xf]
  %v8212 = vld [vmem:[%s3 + $0x178] sm:$0xf]
  %v8213 = vld [vmem:[%s3 + $0x17c] sm:$0xf]
  %v8218 = vunpack.c.l.b16 %v8210
  %v8219 = vunpack.c.l.b16 %v8211
  %v8220 = vunpack.c.l.b16 %v8212
  %v8221 = vunpack.c.l.b16 %v8213
  %v8222 = vpack.c.b16 %v8219, %v8218
  %v8223 = vpack.c.b16 %v8221, %v8220
  %v8227 = vsel %vm4330, %v8202, 0
  %v8230 = vsel %vm4330, %v8203, 0
  %v8233 = vsel %vm4330, %v8204, 0
  %v8236 = vsel %vm4330, %v8205, 0
  %v8239 = vsel %vm4330, %v8206, 0
  %v8242 = vsel %vm4330, %v8207, 0
  %v8245 = vsel %vm4330, %v8208, 0
  %v8248 = vsel %vm4330, %v8209, 0
  %8250 = vmatprep.subr.bf16.mxu0 0
  %8251 = vmatpush1.bf16.msra.mxu0 %v8222
  %8252 = vmatprep.subr.bf16.mxu0 0
  %8253 = vmatpush1.bf16.msra.mxu0 %v8223
  %8254 = vmatprep.subr.bf16.mxu0 0
  %8255 = vmatpush1.bf16.msra.mxu0 0
  %8256 = vmatprep.subr.bf16.mxu0 0
  %8257 = vmatpush1.bf16.msra.mxu0 0
  %8258 = vmatprep.subr.bf16.mxu0 0
  %8259 = vmatpush1.bf16.msra.mxu0 0
  %8260 = vmatprep.subr.bf16.mxu0 0
  %8261 = vmatpush1.bf16.msra.mxu0 0
  %8262 = vmatprep.subr.bf16.mxu0 0
  %8263 = vmatpush1.bf16.msra.mxu0 0
  %8264 = vmatprep.subr.bf16.mxu0 0
  %8265 = vmatpush1.bf16.msra.mxu0 0
  %8266 = vmatprep.subr.bf16.mxu0 0
  %8267 = vmatpush1.bf16.msra.mxu0 0
  %8268 = vmatprep.subr.bf16.mxu0 0
  %8269 = vmatpush1.bf16.msra.mxu0 0
  %8270 = vmatprep.subr.bf16.mxu0 0
  %8271 = vmatpush1.bf16.msra.mxu0 0
  %8272 = vmatprep.subr.bf16.mxu0 0
  %8273 = vmatpush1.bf16.msra.mxu0 0
  %8274 = vmatprep.subr.bf16.mxu0 0
  %8275 = vmatpush1.bf16.msra.mxu0 0
  %8276 = vmatprep.subr.bf16.mxu0 0
  %8277 = vmatpush1.bf16.msra.mxu0 0
  %8278 = vmatprep.subr.bf16.mxu0 0
  %8279 = vmatpush1.bf16.msra.mxu0 0
  %8280 = vmatprep.subr.bf16.mxu0 0
  %8281 = vmatpush1.bf16.msra.mxu0 0
  %8282 = vmatprep.mubr.bf16.mxu0 0
  %8283 = vmatmul.mubr.bf16.gmra.mrb[0].mxu0 %v8227
  %v8284 = vpop.f32.mrb[0].mxu0
  %v8285 = vadd.f32 0.0, %v8284
  %v8286 = vpop.f32.mrb[0].mxu0
  %v8287 = vpop.f32.mrb[0].mxu0
  %v8288 = vadd.f32 0.0, %v8287
  %v8289 = vpop.f32.mrb[0].mxu0
  %8290 = vmatprep.mubr.bf16.mxu0 0
  %8291 = vmatmul.mubr.bf16.gmra.mrb[0].mxu0 %v8230
  %v8292 = vpop.f32.mrb[0].mxu0
  %v8293 = vadd.f32 0.0, %v8292
  %v8294 = vpop.f32.mrb[0].mxu0
  %v8295 = vpop.f32.mrb[0].mxu0
  %v8296 = vadd.f32 0.0, %v8295
  %v8297 = vpop.f32.mrb[0].mxu0
  %8298 = vmatprep.mubr.bf16.mxu0 0
  %8299 = vmatmul.mubr.bf16.gmra.mrb[0].mxu0 %v8233
  %v8300 = vpop.f32.mrb[0].mxu0
  %v8301 = vadd.f32 0.0, %v8300
  %v8302 = vpop.f32.mrb[0].mxu0
  %v8303 = vpop.f32.mrb[0].mxu0
  %v8304 = vadd.f32 0.0, %v8303
  %v8305 = vpop.f32.mrb[0].mxu0
  %8306 = vmatprep.mubr.bf16.mxu0 0
  %8307 = vmatmul.mubr.bf16.gmra.mrb[0].mxu0 %v8236
  %v8308 = vpop.f32.mrb[0].mxu0
  %v8309 = vadd.f32 0.0, %v8308
  %v8310 = vpop.f32.mrb[0].mxu0
  %v8311 = vpop.f32.mrb[0].mxu0
  %v8312 = vadd.f32 0.0, %v8311
  %v8313 = vpop.f32.mrb[0].mxu0
  %8314 = vmatprep.mubr.bf16.mxu0 0
  %8315 = vmatmul.mubr.bf16.gmra.mrb[0].mxu0 %v8239
  %v8316 = vpop.f32.mrb[0].mxu0
  %v8317 = vadd.f32 0.0, %v8316
  %v8318 = vpop.f32.mrb[0].mxu0
  %v8319 = vpop.f32.mrb[0].mxu0
  %v8320 = vadd.f32 0.0, %v8319
  %v8321 = vpop.f32.mrb[0].mxu0
  %8322 = vmatprep.mubr.bf16.mxu0 0
  %8323 = vmatmul.mubr.bf16.gmra.mrb[0].mxu0 %v8242
  %v8324 = vpop.f32.mrb[0].mxu0
  %v8325 = vadd.f32 0.0, %v8324
  %v8326 = vpop.f32.mrb[0].mxu0
  %v8327 = vpop.f32.mrb[0].mxu0
  %v8328 = vadd.f32 0.0, %v8327
  %v8329 = vpop.f32.mrb[0].mxu0
  %8330 = vmatprep.mubr.bf16.mxu0 0
  %8331 = vmatmul.mubr.bf16.gmra.mrb[0].mxu0 %v8245
  %v8332 = vpop.f32.mrb[0].mxu0
  %v8333 = vadd.f32 0.0, %v8332
  %v8334 = vpop.f32.mrb[0].mxu0
  %v8335 = vpop.f32.mrb[0].mxu0
  %v8336 = vadd.f32 0.0, %v8335
  %v8337 = vpop.f32.mrb[0].mxu0
  %8338 = vmatprep.mubr.bf16.mxu0 0
  %8339 = vmatmul.mubr.bf16.gmra.mrb[0].mxu0 %v8248
  %v8340 = vpop.f32.mrb[0].mxu0
  %v8341 = vadd.f32 0.0, %v8340
  %v8342 = vpop.f32.mrb[0].mxu0
  %v8343 = vpop.f32.mrb[0].mxu0
  %v8344 = vadd.f32 0.0, %v8343
  %v8345 = vpop.f32.mrb[0].mxu0
  %8346 = vdwg.mxu0
  %v8347 = vadd.f32 %v8186, %v8285
  %v8348 = vadd.f32 %v8187, %v8288
  %v8349 = vadd.f32 %v8188, %v8293
  %v8350 = vadd.f32 %v8189, %v8296
  %v8351 = vadd.f32 %v8190, %v8301
  %v8352 = vadd.f32 %v8191, %v8304
  %v8353 = vadd.f32 %v8192, %v8309
  %v8354 = vadd.f32 %v8193, %v8312
  %v8355 = vadd.f32 %v8194, %v8317
  %v8356 = vadd.f32 %v8195, %v8320
  %v8357 = vadd.f32 %v8196, %v8325
  %v8358 = vadd.f32 %v8197, %v8328
  %v8359 = vadd.f32 %v8198, %v8333
  %v8360 = vadd.f32 %v8199, %v8336
  %v8361 = vadd.f32 %v8200, %v8341
  %v8362 = vadd.f32 %v8201, %v8344
  %v8363 = vld [vmem:[#allocation2 + $0x600] sm:$0xff]
  %v8364 = vld [vmem:[#allocation2 + $0x608] sm:$0xff]
  %v8365 = vld [vmem:[#allocation2 + $0x610] sm:$0xff]
  %v8366 = vld [vmem:[#allocation2 + $0x618] sm:$0xff]
  %v8367 = vld [vmem:[#allocation2 + $0x620] sm:$0xff]
  %v8368 = vld [vmem:[#allocation2 + $0x628] sm:$0xff]
  %v8369 = vld [vmem:[#allocation2 + $0x630] sm:$0xff]
  %v8370 = vld [vmem:[#allocation2 + $0x638] sm:$0xff]
  %v8371 = vld [vmem:[%s3 + $0x180] sm:$0xf]
  %v8372 = vld [vmem:[%s3 + $0x184] sm:$0xf]
  %v8373 = vld [vmem:[%s3 + $0x188] sm:$0xf]
  %v8374 = vld [vmem:[%s3 + $0x18c] sm:$0xf]
  %v8379 = vunpack.c.l.b16 %v8371
  %v8380 = vunpack.c.l.b16 %v8372
  %v8381 = vunpack.c.l.b16 %v8373
  %v8382 = vunpack.c.l.b16 %v8374
  %v8383 = vpack.c.b16 %v8380, %v8379
  %v8384 = vpack.c.b16 %v8382, %v8381
  %v8388 = vsel %vm4330, %v8363, 0
  %v8391 = vsel %vm4330, %v8364, 0
  %v8394 = vsel %vm4330, %v8365, 0
  %v8397 = vsel %vm4330, %v8366, 0
  %v8400 = vsel %vm4330, %v8367, 0
  %v8403 = vsel %vm4330, %v8368, 0
  %v8406 = vsel %vm4330, %v8369, 0
  %v8409 = vsel %vm4330, %v8370, 0
  %8411 = vmatprep.subr.bf16.mxu0 0
  %8412 = vmatpush1.bf16.msra.mxu0 %v8383
  %8413 = vmatprep.subr.bf16.mxu0 0
  %8414 = vmatpush1.bf16.msra.mxu0 %v8384
  %8415 = vmatprep.subr.bf16.mxu0 0
  %8416 = vmatpush1.bf16.msra.mxu0 0
  %8417 = vmatprep.subr.bf16.mxu0 0
  %8418 = vmatpush1.bf16.msra.mxu0 0
  %8419 = vmatprep.subr.bf16.mxu0 0
  %8420 = vmatpush1.bf16.msra.mxu0 0
  %8421 = vmatprep.subr.bf16.mxu0 0
  %8422 = vmatpush1.bf16.msra.mxu0 0
  %8423 = vmatprep.subr.bf16.mxu0 0
  %8424 = vmatpush1.bf16.msra.mxu0 0
  %8425 = vmatprep.subr.bf16.mxu0 0
  %8426 = vmatpush1.bf16.msra.mxu0 0
  %8427 = vmatprep.subr.bf16.mxu0 0
  %8428 = vmatpush1.bf16.msra.mxu0 0
  %8429 = vmatprep.subr.bf16.mxu0 0
  %8430 = vmatpush1.bf16.msra.mxu0 0
  %8431 = vmatprep.subr.bf16.mxu0 0
  %8432 = vmatpush1.bf16.msra.mxu0 0
  %8433 = vmatprep.subr.bf16.mxu0 0
  %8434 = vmatpush1.bf16.msra.mxu0 0
  %8435 = vmatprep.subr.bf16.mxu0 0
  %8436 = vmatpush1.bf16.msra.mxu0 0
  %8437 = vmatprep.subr.bf16.mxu0 0
  %8438 = vmatpush1.bf16.msra.mxu0 0
  %8439 = vmatprep.subr.bf16.mxu0 0
  %8440 = vmatpush1.bf16.msra.mxu0 0
  %8441 = vmatprep.subr.bf16.mxu0 0
  %8442 = vmatpush1.bf16.msra.mxu0 0
  %8443 = vmatprep.mubr.bf16.mxu0 0
  %8444 = vmatmul.mubr.bf16.gmra.mrb[0].mxu0 %v8388
  %v8445 = vpop.f32.mrb[0].mxu0
  %v8446 = vadd.f32 0.0, %v8445
  %v8447 = vpop.f32.mrb[0].mxu0
  %v8448 = vpop.f32.mrb[0].mxu0
  %v8449 = vadd.f32 0.0, %v8448
  %v8450 = vpop.f32.mrb[0].mxu0
  %8451 = vmatprep.mubr.bf16.mxu0 0
  %8452 = vmatmul.mubr.bf16.gmra.mrb[0].mxu0 %v8391
  %v8453 = vpop.f32.mrb[0].mxu0
  %v8454 = vadd.f32 0.0, %v8453
  %v8455 = vpop.f32.mrb[0].mxu0
  %v8456 = vpop.f32.mrb[0].mxu0
  %v8457 = vadd.f32 0.0, %v8456
  %v8458 = vpop.f32.mrb[0].mxu0
  %8459 = vmatprep.mubr.bf16.mxu0 0
  %8460 = vmatmul.mubr.bf16.gmra.mrb[0].mxu0 %v8394
  %v8461 = vpop.f32.mrb[0].mxu0
  %v8462 = vadd.f32 0.0, %v8461
  %v8463 = vpop.f32.mrb[0].mxu0
  %v8464 = vpop.f32.mrb[0].mxu0
  %v8465 = vadd.f32 0.0, %v8464
  %v8466 = vpop.f32.mrb[0].mxu0
  %8467 = vmatprep.mubr.bf16.mxu0 0
  %8468 = vmatmul.mubr.bf16.gmra.mrb[0].mxu0 %v8397
  %v8469 = vpop.f32.mrb[0].mxu0
  %v8470 = vadd.f32 0.0, %v8469
  %v8471 = vpop.f32.mrb[0].mxu0
  %v8472 = vpop.f32.mrb[0].mxu0
  %v8473 = vadd.f32 0.0, %v8472
  %v8474 = vpop.f32.mrb[0].mxu0
  %8475 = vmatprep.mubr.bf16.mxu0 0
  %8476 = vmatmul.mubr.bf16.gmra.mrb[0].mxu0 %v8400
  %v8477 = vpop.f32.mrb[0].mxu0
  %v8478 = vadd.f32 0.0, %v8477
  %v8479 = vpop.f32.mrb[0].mxu0
  %v8480 = vpop.f32.mrb[0].mxu0
  %v8481 = vadd.f32 0.0, %v8480
  %v8482 = vpop.f32.mrb[0].mxu0
  %8483 = vmatprep.mubr.bf16.mxu0 0
  %8484 = vmatmul.mubr.bf16.gmra.mrb[0].mxu0 %v8403
  %v8485 = vpop.f32.mrb[0].mxu0
  %v8486 = vadd.f32 0.0, %v8485
  %v8487 = vpop.f32.mrb[0].mxu0
  %v8488 = vpop.f32.mrb[0].mxu0
  %v8489 = vadd.f32 0.0, %v8488
  %v8490 = vpop.f32.mrb[0].mxu0
  %8491 = vmatprep.mubr.bf16.mxu0 0
  %8492 = vmatmul.mubr.bf16.gmra.mrb[0].mxu0 %v8406
  %v8493 = vpop.f32.mrb[0].mxu0
  %v8494 = vadd.f32 0.0, %v8493
  %v8495 = vpop.f32.mrb[0].mxu0
  %v8496 = vpop.f32.mrb[0].mxu0
  %v8497 = vadd.f32 0.0, %v8496
  %v8498 = vpop.f32.mrb[0].mxu0
  %8499 = vmatprep.mubr.bf16.mxu0 0
  %8500 = vmatmul.mubr.bf16.gmra.mrb[0].mxu0 %v8409
  %v8501 = vpop.f32.mrb[0].mxu0
  %v8502 = vadd.f32 0.0, %v8501
  %v8503 = vpop.f32.mrb[0].mxu0
  %v8504 = vpop.f32.mrb[0].mxu0
  %v8505 = vadd.f32 0.0, %v8504
  %v8506 = vpop.f32.mrb[0].mxu0
  %8507 = vdwg.mxu0
  %v8508 = vadd.f32 %v8347, %v8446
  %v8509 = vadd.f32 %v8348, %v8449
  %v8510 = vadd.f32 %v8349, %v8454
  %v8511 = vadd.f32 %v8350, %v8457
  %v8512 = vadd.f32 %v8351, %v8462
  %v8513 = vadd.f32 %v8352, %v8465
  %v8514 = vadd.f32 %v8353, %v8470
  %v8515 = vadd.f32 %v8354, %v8473
  %v8516 = vadd.f32 %v8355, %v8478
  %v8517 = vadd.f32 %v8356, %v8481
  %v8518 = vadd.f32 %v8357, %v8486
  %v8519 = vadd.f32 %v8358, %v8489
  %v8520 = vadd.f32 %v8359, %v8494
  %v8521 = vadd.f32 %v8360, %v8497
  %v8522 = vadd.f32 %v8361, %v8502
  %v8523 = vadd.f32 %v8362, %v8505
  %v8524 = vld [vmem:[%s4] sm:$0x1]
  %v8526 = vlaneseq
  %v8527 = vshrl.u32 %v8526, 7
  %v8528 = vsub.s32 0, %v8527
  %v8529 = vrot.slane %v8524, %v8528
  %v8531 = vadd.f32 %v8508, %v8529
  %v8532 = vadd.f32 %v8509, %v8529
  %v8533 = vadd.f32 %v8510, %v8529
  %v8534 = vadd.f32 %v8511, %v8529
  %v8535 = vadd.f32 %v8512, %v8529
  %v8536 = vadd.f32 %v8513, %v8529
  %v8537 = vadd.f32 %v8514, %v8529
  %v8538 = vadd.f32 %v8515, %v8529
  %v8539 = vadd.f32 %v8516, %v8529
  %v8540 = vadd.f32 %v8517, %v8529
  %v8541 = vadd.f32 %v8518, %v8529
  %v8542 = vadd.f32 %v8519, %v8529
  %v8543 = vadd.f32 %v8520, %v8529
  %v8544 = vadd.f32 %v8521, %v8529
  %v8545 = vadd.f32 %v8522, %v8529
  %v8546 = vadd.f32 %v8523, %v8529
  %v8547 = vmax.f32 %v8531, 0.0
  %v8548 = vmax.f32 %v8532, 0.0
  %v8549 = vmax.f32 %v8533, 0.0
  %v8550 = vmax.f32 %v8534, 0.0
  %v8551 = vmax.f32 %v8535, 0.0
  %v8552 = vmax.f32 %v8536, 0.0
  %v8553 = vmax.f32 %v8537, 0.0
  %v8554 = vmax.f32 %v8538, 0.0
  %v8555 = vmax.f32 %v8539, 0.0
  %v8556 = vmax.f32 %v8540, 0.0
  %v8557 = vmax.f32 %v8541, 0.0
  %v8558 = vmax.f32 %v8542, 0.0
  %v8559 = vmax.f32 %v8543, 0.0
  %v8560 = vmax.f32 %v8544, 0.0
  %v8561 = vmax.f32 %v8545, 0.0
  %v8562 = vmax.f32 %v8546, 0.0
  %v8563 = vpack.c.bf16 %v8547, %v8547
  %v8564 = vld [vmem:[%s5] sm:$0xf]
  %v8565 = vld [vmem:[%s5 + $0x4] sm:$0xf]
  %v8566 = vld [vmem:[%s5 + $0x8] sm:$0xf]
  %v8567 = vld [vmem:[%s5 + $0xc] sm:$0xf]
  %v8568 = vpack.c.bf16 %v8548, %v8548
  %v8569 = vld [vmem:[%s5 + $0x10] sm:$0xf]
  %v8570 = vld [vmem:[%s5 + $0x14] sm:$0xf]
  %v8571 = vld [vmem:[%s5 + $0x18] sm:$0xf]
  %v8572 = vld [vmem:[%s5 + $0x1c] sm:$0xf]
  %v8577 = vunpack.c.l.b16 %v8569
  %v8578 = vunpack.c.l.b16 %v8570
  %v8579 = vunpack.c.l.b16 %v8571
  %v8580 = vunpack.c.l.b16 %v8572
  %v8581 = vpack.c.b16 %v8578, %v8577
  %v8582 = vpack.c.b16 %v8580, %v8579
  %v8586 = vsel %vm4330, %v8568, 0
  %8588 = vmatprep.subr.bf16.mxu0 0
  %8589 = vmatpush1.bf16.msra.mxu0 %v8581
  %8590 = vmatprep.subr.bf16.mxu0 0
  %8591 = vmatpush1.bf16.msra.mxu0 %v8582
  %8592 = vmatprep.subr.bf16.mxu0 0
  %8593 = vmatpush1.bf16.msra.mxu0 0
  %8594 = vmatprep.subr.bf16.mxu0 0
  %8595 = vmatpush1.bf16.msra.mxu0 0
  %8596 = vmatprep.subr.bf16.mxu0 0
  %8597 = vmatpush1.bf16.msra.mxu0 0
  %8598 = vmatprep.subr.bf16.mxu0 0
  %8599 = vmatpush1.bf16.msra.mxu0 0
  %8600 = vmatprep.subr.bf16.mxu0 0
  %8601 = vmatpush1.bf16.msra.mxu0 0
  %8602 = vmatprep.subr.bf16.mxu0 0
  %8603 = vmatpush1.bf16.msra.mxu0 0
  %8604 = vmatprep.subr.bf16.mxu0 0
  %8605 = vmatpush1.bf16.msra.mxu0 0
  %8606 = vmatprep.subr.bf16.mxu0 0
  %8607 = vmatpush1.bf16.msra.mxu0 0
  %8608 = vmatprep.subr.bf16.mxu0 0
  %8609 = vmatpush1.bf16.msra.mxu0 0
  %8610 = vmatprep.subr.bf16.mxu0 0
  %8611 = vmatpush1.bf16.msra.mxu0 0
  %8612 = vmatprep.subr.bf16.mxu0 0
  %8613 = vmatpush1.bf16.msra.mxu0 0
  %8614 = vmatprep.subr.bf16.mxu0 0
  %8615 = vmatpush1.bf16.msra.mxu0 0
  %8616 = vmatprep.subr.bf16.mxu0 0
  %8617 = vmatpush1.bf16.msra.mxu0 0
  %8618 = vmatprep.subr.bf16.mxu0 0
  %8619 = vmatpush1.bf16.msra.mxu0 0
  %8620 = vmatprep.mubr.bf16.mxu0 0
  %8621 = vmatmul.mubr.bf16.gmra.mrb[0].mxu0 %v8586
  %v8622 = vpop.f32.mrb[0].mxu0
  %v8623 = vadd.f32 0.0, %v8622
  %v8624 = vpop.f32.mrb[0].mxu0
  %v8625 = vpop.f32.mrb[0].mxu0
  %v8626 = vpop.f32.mrb[0].mxu0
  %8627 = vdwg.mxu0
  %v8632 = vunpack.c.l.b16 %v8564
  %v8633 = vunpack.c.l.b16 %v8565
  %v8634 = vunpack.c.l.b16 %v8566
  %v8635 = vunpack.c.l.b16 %v8567
  %v8636 = vpack.c.b16 %v8633, %v8632
  %v8637 = vpack.c.b16 %v8635, %v8634
  %v8641 = vsel %vm4330, %v8563, 0
  %8643 = vmatprep.subr.bf16.mxu0 0
  %8644 = vmatpush1.bf16.msra.mxu0 %v8636
  %8645 = vmatprep.subr.bf16.mxu0 0
  %8646 = vmatpush1.bf16.msra.mxu0 %v8637
  %8647 = vmatprep.subr.bf16.mxu0 0
  %8648 = vmatpush1.bf16.msra.mxu0 0
  %8649 = vmatprep.subr.bf16.mxu0 0
  %8650 = vmatpush1.bf16.msra.mxu0 0
  %8651 = vmatprep.subr.bf16.mxu0 0
  %8652 = vmatpush1.bf16.msra.mxu0 0
  %8653 = vmatprep.subr.bf16.mxu0 0
  %8654 = vmatpush1.bf16.msra.mxu0 0
  %8655 = vmatprep.subr.bf16.mxu0 0
  %8656 = vmatpush1.bf16.msra.mxu0 0
  %8657 = vmatprep.subr.bf16.mxu0 0
  %8658 = vmatpush1.bf16.msra.mxu0 0
  %8659 = vmatprep.subr.bf16.mxu0 0
  %8660 = vmatpush1.bf16.msra.mxu0 0
  %8661 = vmatprep.subr.bf16.mxu0 0
  %8662 = vmatpush1.bf16.msra.mxu0 0
  %8663 = vmatprep.subr.bf16.mxu0 0
  %8664 = vmatpush1.bf16.msra.mxu0 0
  %8665 = vmatprep.subr.bf16.mxu0 0
  %8666 = vmatpush1.bf16.msra.mxu0 0
  %8667 = vmatprep.subr.bf16.mxu0 0
  %8668 = vmatpush1.bf16.msra.mxu0 0
  %8669 = vmatprep.subr.bf16.mxu0 0
  %8670 = vmatpush1.bf16.msra.mxu0 0
  %8671 = vmatprep.subr.bf16.mxu0 0
  %8672 = vmatpush1.bf16.msra.mxu0 0
  %8673 = vmatprep.subr.bf16.mxu0 0
  %8674 = vmatpush1.bf16.msra.mxu0 0
  %8675 = vmatprep.mubr.bf16.mxu0 0
  %8676 = vmatmul.mubr.bf16.gmra.mrb[0].mxu0 %v8641
  %v8677 = vpop.f32.mrb[0].mxu0
  %v8678 = vadd.f32 %v8623, %v8677
  %v8679 = vpop.f32.mrb[0].mxu0
  %v8680 = vpop.f32.mrb[0].mxu0
  %v8681 = vpop.f32.mrb[0].mxu0
  %8682 = vdwg.mxu0
  %v8683 = vpack.c.bf16 %v8549, %v8549
  %v8684 = vld [vmem:[%s5 + $0x20] sm:$0xf]
  %v8685 = vld [vmem:[%s5 + $0x24] sm:$0xf]
  %v8686 = vld [vmem:[%s5 + $0x28] sm:$0xf]
  %v8687 = vld [vmem:[%s5 + $0x2c] sm:$0xf]
  %v8692 = vunpack.c.l.b16 %v8684
  %v8693 = vunpack.c.l.b16 %v8685
  %v8694 = vunpack.c.l.b16 %v8686
  %v8695 = vunpack.c.l.b16 %v8687
  %v8696 = vpack.c.b16 %v8693, %v8692
  %v8697 = vpack.c.b16 %v8695, %v8694
  %v8701 = vsel %vm4330, %v8683, 0
  %8703 = vmatprep.subr.bf16.mxu0 0
  %8704 = vmatpush1.bf16.msra.mxu0 %v8696
  %8705 = vmatprep.subr.bf16.mxu0 0
  %8706 = vmatpush1.bf16.msra.mxu0 %v8697
  %8707 = vmatprep.subr.bf16.mxu0 0
  %8708 = vmatpush1.bf16.msra.mxu0 0
  %8709 = vmatprep.subr.bf16.mxu0 0
  %8710 = vmatpush1.bf16.msra.mxu0 0
  %8711 = vmatprep.subr.bf16.mxu0 0
  %8712 = vmatpush1.bf16.msra.mxu0 0
  %8713 = vmatprep.subr.bf16.mxu0 0
  %8714 = vmatpush1.bf16.msra.mxu0 0
  %8715 = vmatprep.subr.bf16.mxu0 0
  %8716 = vmatpush1.bf16.msra.mxu0 0
  %8717 = vmatprep.subr.bf16.mxu0 0
  %8718 = vmatpush1.bf16.msra.mxu0 0
  %8719 = vmatprep.subr.bf16.mxu0 0
  %8720 = vmatpush1.bf16.msra.mxu0 0
  %8721 = vmatprep.subr.bf16.mxu0 0
  %8722 = vmatpush1.bf16.msra.mxu0 0
  %8723 = vmatprep.subr.bf16.mxu0 0
  %8724 = vmatpush1.bf16.msra.mxu0 0
  %8725 = vmatprep.subr.bf16.mxu0 0
  %8726 = vmatpush1.bf16.msra.mxu0 0
  %8727 = vmatprep.subr.bf16.mxu0 0
  %8728 = vmatpush1.bf16.msra.mxu0 0
  %8729 = vmatprep.subr.bf16.mxu0 0
  %8730 = vmatpush1.bf16.msra.mxu0 0
  %8731 = vmatprep.subr.bf16.mxu0 0
  %8732 = vmatpush1.bf16.msra.mxu0 0
  %8733 = vmatprep.subr.bf16.mxu0 0
  %8734 = vmatpush1.bf16.msra.mxu0 0
  %8735 = vmatprep.mubr.bf16.mxu0 0
  %8736 = vmatmul.mubr.bf16.gmra.mrb[0].mxu0 %v8701
  %v8737 = vpop.f32.mrb[0].mxu0
  %v8738 = vadd.f32 0.0, %v8737
  %v8739 = vpop.f32.mrb[0].mxu0
  %v8740 = vpop.f32.mrb[0].mxu0
  %v8741 = vpop.f32.mrb[0].mxu0
  %8742 = vdwg.mxu0
  %v8743 = vadd.f32 %v8678, %v8738
  %v8744 = vpack.c.bf16 %v8550, %v8550
  %v8745 = vld [vmem:[%s5 + $0x30] sm:$0xf]
  %v8746 = vld [vmem:[%s5 + $0x34] sm:$0xf]
  %v8747 = vld [vmem:[%s5 + $0x38] sm:$0xf]
  %v8748 = vld [vmem:[%s5 + $0x3c] sm:$0xf]
  %v8753 = vunpack.c.l.b16 %v8745
  %v8754 = vunpack.c.l.b16 %v8746
  %v8755 = vunpack.c.l.b16 %v8747
  %v8756 = vunpack.c.l.b16 %v8748
  %v8757 = vpack.c.b16 %v8754, %v8753
  %v8758 = vpack.c.b16 %v8756, %v8755
  %v8762 = vsel %vm4330, %v8744, 0
  %8764 = vmatprep.subr.bf16.mxu0 0
  %8765 = vmatpush1.bf16.msra.mxu0 %v8757
  %8766 = vmatprep.subr.bf16.mxu0 0
  %8767 = vmatpush1.bf16.msra.mxu0 %v8758
  %8768 = vmatprep.subr.bf16.mxu0 0
  %8769 = vmatpush1.bf16.msra.mxu0 0
  %8770 = vmatprep.subr.bf16.mxu0 0
  %8771 = vmatpush1.bf16.msra.mxu0 0
  %8772 = vmatprep.subr.bf16.mxu0 0
  %8773 = vmatpush1.bf16.msra.mxu0 0
  %8774 = vmatprep.subr.bf16.mxu0 0
  %8775 = vmatpush1.bf16.msra.mxu0 0
  %8776 = vmatprep.subr.bf16.mxu0 0
  %8777 = vmatpush1.bf16.msra.mxu0 0
  %8778 = vmatprep.subr.bf16.mxu0 0
  %8779 = vmatpush1.bf16.msra.mxu0 0
  %8780 = vmatprep.subr.bf16.mxu0 0
  %8781 = vmatpush1.bf16.msra.mxu0 0
  %8782 = vmatprep.subr.bf16.mxu0 0
  %8783 = vmatpush1.bf16.msra.mxu0 0
  %8784 = vmatprep.subr.bf16.mxu0 0
  %8785 = vmatpush1.bf16.msra.mxu0 0
  %8786 = vmatprep.subr.bf16.mxu0 0
  %8787 = vmatpush1.bf16.msra.mxu0 0
  %8788 = vmatprep.subr.bf16.mxu0 0
  %8789 = vmatpush1.bf16.msra.mxu0 0
  %8790 = vmatprep.subr.bf16.mxu0 0
  %8791 = vmatpush1.bf16.msra.mxu0 0
  %8792 = vmatprep.subr.bf16.mxu0 0
  %8793 = vmatpush1.bf16.msra.mxu0 0
  %8794 = vmatprep.subr.bf16.mxu0 0
  %8795 = vmatpush1.bf16.msra.mxu0 0
  %8796 = vmatprep.mubr.bf16.mxu0 0
  %8797 = vmatmul.mubr.bf16.gmra.mrb[0].mxu0 %v8762
  %v8798 = vpop.f32.mrb[0].mxu0
  %v8799 = vadd.f32 0.0, %v8798
  %v8800 = vpop.f32.mrb[0].mxu0
  %v8801 = vpop.f32.mrb[0].mxu0
  %v8802 = vpop.f32.mrb[0].mxu0
  %8803 = vdwg.mxu0
  %v8804 = vadd.f32 %v8743, %v8799
  %v8805 = vpack.c.bf16 %v8551, %v8551
  %v8806 = vld [vmem:[%s5 + $0x40] sm:$0xf]
  %v8807 = vld [vmem:[%s5 + $0x44] sm:$0xf]
  %v8808 = vld [vmem:[%s5 + $0x48] sm:$0xf]
  %v8809 = vld [vmem:[%s5 + $0x4c] sm:$0xf]
  %v8814 = vunpack.c.l.b16 %v8806
  %v8815 = vunpack.c.l.b16 %v8807
  %v8816 = vunpack.c.l.b16 %v8808
  %v8817 = vunpack.c.l.b16 %v8809
  %v8818 = vpack.c.b16 %v8815, %v8814
  %v8819 = vpack.c.b16 %v8817, %v8816
  %v8823 = vsel %vm4330, %v8805, 0
  %8825 = vmatprep.subr.bf16.mxu0 0
  %8826 = vmatpush1.bf16.msra.mxu0 %v8818
  %8827 = vmatprep.subr.bf16.mxu0 0
  %8828 = vmatpush1.bf16.msra.mxu0 %v8819
  %8829 = vmatprep.subr.bf16.mxu0 0
  %8830 = vmatpush1.bf16.msra.mxu0 0
  %8831 = vmatprep.subr.bf16.mxu0 0
  %8832 = vmatpush1.bf16.msra.mxu0 0
  %8833 = vmatprep.subr.bf16.mxu0 0
  %8834 = vmatpush1.bf16.msra.mxu0 0
  %8835 = vmatprep.subr.bf16.mxu0 0
  %8836 = vmatpush1.bf16.msra.mxu0 0
  %8837 = vmatprep.subr.bf16.mxu0 0
  %8838 = vmatpush1.bf16.msra.mxu0 0
  %8839 = vmatprep.subr.bf16.mxu0 0
  %8840 = vmatpush1.bf16.msra.mxu0 0
  %8841 = vmatprep.subr.bf16.mxu0 0
  %8842 = vmatpush1.bf16.msra.mxu0 0
  %8843 = vmatprep.subr.bf16.mxu0 0
  %8844 = vmatpush1.bf16.msra.mxu0 0
  %8845 = vmatprep.subr.bf16.mxu0 0
  %8846 = vmatpush1.bf16.msra.mxu0 0
  %8847 = vmatprep.subr.bf16.mxu0 0
  %8848 = vmatpush1.bf16.msra.mxu0 0
  %8849 = vmatprep.subr.bf16.mxu0 0
  %8850 = vmatpush1.bf16.msra.mxu0 0
  %8851 = vmatprep.subr.bf16.mxu0 0
  %8852 = vmatpush1.bf16.msra.mxu0 0
  %8853 = vmatprep.subr.bf16.mxu0 0
  %8854 = vmatpush1.bf16.msra.mxu0 0
  %8855 = vmatprep.subr.bf16.mxu0 0
  %8856 = vmatpush1.bf16.msra.mxu0 0
  %8857 = vmatprep.mubr.bf16.mxu0 0
  %8858 = vmatmul.mubr.bf16.gmra.mrb[0].mxu0 %v8823
  %v8859 = vpop.f32.mrb[0].mxu0
  %v8860 = vadd.f32 0.0, %v8859
  %v8861 = vpop.f32.mrb[0].mxu0
  %v8862 = vpop.f32.mrb[0].mxu0
  %v8863 = vpop.f32.mrb[0].mxu0
  %8864 = vdwg.mxu0
  %v8865 = vadd.f32 %v8804, %v8860
  %v8866 = vpack.c.bf16 %v8552, %v8552
  %v8867 = vld [vmem:[%s5 + $0x50] sm:$0xf]
  %v8868 = vld [vmem:[%s5 + $0x54] sm:$0xf]
  %v8869 = vld [vmem:[%s5 + $0x58] sm:$0xf]
  %v8870 = vld [vmem:[%s5 + $0x5c] sm:$0xf]
  %v8875 = vunpack.c.l.b16 %v8867
  %v8876 = vunpack.c.l.b16 %v8868
  %v8877 = vunpack.c.l.b16 %v8869
  %v8878 = vunpack.c.l.b16 %v8870
  %v8879 = vpack.c.b16 %v8876, %v8875
  %v8880 = vpack.c.b16 %v8878, %v8877
  %v8884 = vsel %vm4330, %v8866, 0
  %8886 = vmatprep.subr.bf16.mxu0 0
  %8887 = vmatpush1.bf16.msra.mxu0 %v8879
  %8888 = vmatprep.subr.bf16.mxu0 0
  %8889 = vmatpush1.bf16.msra.mxu0 %v8880
  %8890 = vmatprep.subr.bf16.mxu0 0
  %8891 = vmatpush1.bf16.msra.mxu0 0
  %8892 = vmatprep.subr.bf16.mxu0 0
  %8893 = vmatpush1.bf16.msra.mxu0 0
  %8894 = vmatprep.subr.bf16.mxu0 0
  %8895 = vmatpush1.bf16.msra.mxu0 0
  %8896 = vmatprep.subr.bf16.mxu0 0
  %8897 = vmatpush1.bf16.msra.mxu0 0
  %8898 = vmatprep.subr.bf16.mxu0 0
  %8899 = vmatpush1.bf16.msra.mxu0 0
  %8900 = vmatprep.subr.bf16.mxu0 0
  %8901 = vmatpush1.bf16.msra.mxu0 0
  %8902 = vmatprep.subr.bf16.mxu0 0
  %8903 = vmatpush1.bf16.msra.mxu0 0
  %8904 = vmatprep.subr.bf16.mxu0 0
  %8905 = vmatpush1.bf16.msra.mxu0 0
  %8906 = vmatprep.subr.bf16.mxu0 0
  %8907 = vmatpush1.bf16.msra.mxu0 0
  %8908 = vmatprep.subr.bf16.mxu0 0
  %8909 = vmatpush1.bf16.msra.mxu0 0
  %8910 = vmatprep.subr.bf16.mxu0 0
  %8911 = vmatpush1.bf16.msra.mxu0 0
  %8912 = vmatprep.subr.bf16.mxu0 0
  %8913 = vmatpush1.bf16.msra.mxu0 0
  %8914 = vmatprep.subr.bf16.mxu0 0
  %8915 = vmatpush1.bf16.msra.mxu0 0
  %8916 = vmatprep.subr.bf16.mxu0 0
  %8917 = vmatpush1.bf16.msra.mxu0 0
  %8918 = vmatprep.mubr.bf16.mxu0 0
  %8919 = vmatmul.mubr.bf16.gmra.mrb[0].mxu0 %v8884
  %v8920 = vpop.f32.mrb[0].mxu0
  %v8921 = vadd.f32 0.0, %v8920
  %v8922 = vpop.f32.mrb[0].mxu0
  %v8923 = vpop.f32.mrb[0].mxu0
  %v8924 = vpop.f32.mrb[0].mxu0
  %8925 = vdwg.mxu0
  %v8926 = vadd.f32 %v8865, %v8921
  %v8927 = vpack.c.bf16 %v8553, %v8553
  %v8928 = vld [vmem:[%s5 + $0x60] sm:$0xf]
  %v8929 = vld [vmem:[%s5 + $0x64] sm:$0xf]
  %v8930 = vld [vmem:[%s5 + $0x68] sm:$0xf]
  %v8931 = vld [vmem:[%s5 + $0x6c] sm:$0xf]
  %v8936 = vunpack.c.l.b16 %v8928
  %v8937 = vunpack.c.l.b16 %v8929
  %v8938 = vunpack.c.l.b16 %v8930
  %v8939 = vunpack.c.l.b16 %v8931
  %v8940 = vpack.c.b16 %v8937, %v8936
  %v8941 = vpack.c.b16 %v8939, %v8938
  %v8945 = vsel %vm4330, %v8927, 0
  %8947 = vmatprep.subr.bf16.mxu0 0
  %8948 = vmatpush1.bf16.msra.mxu0 %v8940
  %8949 = vmatprep.subr.bf16.mxu0 0
  %8950 = vmatpush1.bf16.msra.mxu0 %v8941
  %8951 = vmatprep.subr.bf16.mxu0 0
  %8952 = vmatpush1.bf16.msra.mxu0 0
  %8953 = vmatprep.subr.bf16.mxu0 0
  %8954 = vmatpush1.bf16.msra.mxu0 0
  %8955 = vmatprep.subr.bf16.mxu0 0
  %8956 = vmatpush1.bf16.msra.mxu0 0
  %8957 = vmatprep.subr.bf16.mxu0 0
  %8958 = vmatpush1.bf16.msra.mxu0 0
  %8959 = vmatprep.subr.bf16.mxu0 0
  %8960 = vmatpush1.bf16.msra.mxu0 0
  %8961 = vmatprep.subr.bf16.mxu0 0
  %8962 = vmatpush1.bf16.msra.mxu0 0
  %8963 = vmatprep.subr.bf16.mxu0 0
  %8964 = vmatpush1.bf16.msra.mxu0 0
  %8965 = vmatprep.subr.bf16.mxu0 0
  %8966 = vmatpush1.bf16.msra.mxu0 0
  %8967 = vmatprep.subr.bf16.mxu0 0
  %8968 = vmatpush1.bf16.msra.mxu0 0
  %8969 = vmatprep.subr.bf16.mxu0 0
  %8970 = vmatpush1.bf16.msra.mxu0 0
  %8971 = vmatprep.subr.bf16.mxu0 0
  %8972 = vmatpush1.bf16.msra.mxu0 0
  %8973 = vmatprep.subr.bf16.mxu0 0
  %8974 = vmatpush1.bf16.msra.mxu0 0
  %8975 = vmatprep.subr.bf16.mxu0 0
  %8976 = vmatpush1.bf16.msra.mxu0 0
  %8977 = vmatprep.subr.bf16.mxu0 0
  %8978 = vmatpush1.bf16.msra.mxu0 0
  %8979 = vmatprep.mubr.bf16.mxu0 0
  %8980 = vmatmul.mubr.bf16.gmra.mrb[0].mxu0 %v8945
  %v8981 = vpop.f32.mrb[0].mxu0
  %v8982 = vadd.f32 0.0, %v8981
  %v8983 = vpop.f32.mrb[0].mxu0
  %v8984 = vpop.f32.mrb[0].mxu0
  %v8985 = vpop.f32.mrb[0].mxu0
  %8986 = vdwg.mxu0
  %v8987 = vadd.f32 %v8926, %v8982
  %v8988 = vpack.c.bf16 %v8554, %v8554
  %v8989 = vld [vmem:[%s5 + $0x70] sm:$0xf]
  %v8990 = vld [vmem:[%s5 + $0x74] sm:$0xf]
  %v8991 = vld [vmem:[%s5 + $0x78] sm:$0xf]
  %v8992 = vld [vmem:[%s5 + $0x7c] sm:$0xf]
  %v8997 = vunpack.c.l.b16 %v8989
  %v8998 = vunpack.c.l.b16 %v8990
  %v8999 = vunpack.c.l.b16 %v8991
  %v9000 = vunpack.c.l.b16 %v8992
  %v9001 = vpack.c.b16 %v8998, %v8997
  %v9002 = vpack.c.b16 %v9000, %v8999
  %v9006 = vsel %vm4330, %v8988, 0
  %9008 = vmatprep.subr.bf16.mxu0 0
  %9009 = vmatpush1.bf16.msra.mxu0 %v9001
  %9010 = vmatprep.subr.bf16.mxu0 0
  %9011 = vmatpush1.bf16.msra.mxu0 %v9002
  %9012 = vmatprep.subr.bf16.mxu0 0
  %9013 = vmatpush1.bf16.msra.mxu0 0
  %9014 = vmatprep.subr.bf16.mxu0 0
  %9015 = vmatpush1.bf16.msra.mxu0 0
  %9016 = vmatprep.subr.bf16.mxu0 0
  %9017 = vmatpush1.bf16.msra.mxu0 0
  %9018 = vmatprep.subr.bf16.mxu0 0
  %9019 = vmatpush1.bf16.msra.mxu0 0
  %9020 = vmatprep.subr.bf16.mxu0 0
  %9021 = vmatpush1.bf16.msra.mxu0 0
  %9022 = vmatprep.subr.bf16.mxu0 0
  %9023 = vmatpush1.bf16.msra.mxu0 0
  %9024 = vmatprep.subr.bf16.mxu0 0
  %9025 = vmatpush1.bf16.msra.mxu0 0
  %9026 = vmatprep.subr.bf16.mxu0 0
  %9027 = vmatpush1.bf16.msra.mxu0 0
  %9028 = vmatprep.subr.bf16.mxu0 0
  %9029 = vmatpush1.bf16.msra.mxu0 0
  %9030 = vmatprep.subr.bf16.mxu0 0
  %9031 = vmatpush1.bf16.msra.mxu0 0
  %9032 = vmatprep.subr.bf16.mxu0 0
  %9033 = vmatpush1.bf16.msra.mxu0 0
  %9034 = vmatprep.subr.bf16.mxu0 0
  %9035 = vmatpush1.bf16.msra.mxu0 0
  %9036 = vmatprep.subr.bf16.mxu0 0
  %9037 = vmatpush1.bf16.msra.mxu0 0
  %9038 = vmatprep.subr.bf16.mxu0 0
  %9039 = vmatpush1.bf16.msra.mxu0 0
  %9040 = vmatprep.mubr.bf16.mxu0 0
  %9041 = vmatmul.mubr.bf16.gmra.mrb[0].mxu0 %v9006
  %v9042 = vpop.f32.mrb[0].mxu0
  %v9043 = vadd.f32 0.0, %v9042
  %v9044 = vpop.f32.mrb[0].mxu0
  %v9045 = vpop.f32.mrb[0].mxu0
  %v9046 = vpop.f32.mrb[0].mxu0
  %9047 = vdwg.mxu0
  %v9048 = vadd.f32 %v8987, %v9043
  %v9049 = vpack.c.bf16 %v8555, %v8555
  %v9050 = vld [vmem:[%s5 + $0x80] sm:$0xf]
  %v9051 = vld [vmem:[%s5 + $0x84] sm:$0xf]
  %v9052 = vld [vmem:[%s5 + $0x88] sm:$0xf]
  %v9053 = vld [vmem:[%s5 + $0x8c] sm:$0xf]
  %v9058 = vunpack.c.l.b16 %v9050
  %v9059 = vunpack.c.l.b16 %v9051
  %v9060 = vunpack.c.l.b16 %v9052
  %v9061 = vunpack.c.l.b16 %v9053
  %v9062 = vpack.c.b16 %v9059, %v9058
  %v9063 = vpack.c.b16 %v9061, %v9060
  %v9067 = vsel %vm4330, %v9049, 0
  %9069 = vmatprep.subr.bf16.mxu0 0
  %9070 = vmatpush1.bf16.msra.mxu0 %v9062
  %9071 = vmatprep.subr.bf16.mxu0 0
  %9072 = vmatpush1.bf16.msra.mxu0 %v9063
  %9073 = vmatprep.subr.bf16.mxu0 0
  %9074 = vmatpush1.bf16.msra.mxu0 0
  %9075 = vmatprep.subr.bf16.mxu0 0
  %9076 = vmatpush1.bf16.msra.mxu0 0
  %9077 = vmatprep.subr.bf16.mxu0 0
  %9078 = vmatpush1.bf16.msra.mxu0 0
  %9079 = vmatprep.subr.bf16.mxu0 0
  %9080 = vmatpush1.bf16.msra.mxu0 0
  %9081 = vmatprep.subr.bf16.mxu0 0
  %9082 = vmatpush1.bf16.msra.mxu0 0
  %9083 = vmatprep.subr.bf16.mxu0 0
  %9084 = vmatpush1.bf16.msra.mxu0 0
  %9085 = vmatprep.subr.bf16.mxu0 0
  %9086 = vmatpush1.bf16.msra.mxu0 0
  %9087 = vmatprep.subr.bf16.mxu0 0
  %9088 = vmatpush1.bf16.msra.mxu0 0
  %9089 = vmatprep.subr.bf16.mxu0 0
  %9090 = vmatpush1.bf16.msra.mxu0 0
  %9091 = vmatprep.subr.bf16.mxu0 0
  %9092 = vmatpush1.bf16.msra.mxu0 0
  %9093 = vmatprep.subr.bf16.mxu0 0
  %9094 = vmatpush1.bf16.msra.mxu0 0
  %9095 = vmatprep.subr.bf16.mxu0 0
  %9096 = vmatpush1.bf16.msra.mxu0 0
  %9097 = vmatprep.subr.bf16.mxu0 0
  %9098 = vmatpush1.bf16.msra.mxu0 0
  %9099 = vmatprep.subr.bf16.mxu0 0
  %9100 = vmatpush1.bf16.msra.mxu0 0
  %9101 = vmatprep.mubr.bf16.mxu0 0
  %9102 = vmatmul.mubr.bf16.gmra.mrb[0].mxu0 %v9067
  %v9103 = vpop.f32.mrb[0].mxu0
  %v9104 = vadd.f32 0.0, %v9103
  %v9105 = vpop.f32.mrb[0].mxu0
  %v9106 = vpop.f32.mrb[0].mxu0
  %v9107 = vpop.f32.mrb[0].mxu0
  %9108 = vdwg.mxu0
  %v9109 = vadd.f32 %v9048, %v9104
  %v9110 = vpack.c.bf16 %v8556, %v8556
  %v9111 = vld [vmem:[%s5 + $0x90] sm:$0xf]
  %v9112 = vld [vmem:[%s5 + $0x94] sm:$0xf]
  %v9113 = vld [vmem:[%s5 + $0x98] sm:$0xf]
  %v9114 = vld [vmem:[%s5 + $0x9c] sm:$0xf]
  %v9119 = vunpack.c.l.b16 %v9111
  %v9120 = vunpack.c.l.b16 %v9112
  %v9121 = vunpack.c.l.b16 %v9113
  %v9122 = vunpack.c.l.b16 %v9114
  %v9123 = vpack.c.b16 %v9120, %v9119
  %v9124 = vpack.c.b16 %v9122, %v9121
  %v9128 = vsel %vm4330, %v9110, 0
  %9130 = vmatprep.subr.bf16.mxu0 0
  %9131 = vmatpush1.bf16.msra.mxu0 %v9123
  %9132 = vmatprep.subr.bf16.mxu0 0
  %9133 = vmatpush1.bf16.msra.mxu0 %v9124
  %9134 = vmatprep.subr.bf16.mxu0 0
  %9135 = vmatpush1.bf16.msra.mxu0 0
  %9136 = vmatprep.subr.bf16.mxu0 0
  %9137 = vmatpush1.bf16.msra.mxu0 0
  %9138 = vmatprep.subr.bf16.mxu0 0
  %9139 = vmatpush1.bf16.msra.mxu0 0
  %9140 = vmatprep.subr.bf16.mxu0 0
  %9141 = vmatpush1.bf16.msra.mxu0 0
  %9142 = vmatprep.subr.bf16.mxu0 0
  %9143 = vmatpush1.bf16.msra.mxu0 0
  %9144 = vmatprep.subr.bf16.mxu0 0
  %9145 = vmatpush1.bf16.msra.mxu0 0
  %9146 = vmatprep.subr.bf16.mxu0 0
  %9147 = vmatpush1.bf16.msra.mxu0 0
  %9148 = vmatprep.subr.bf16.mxu0 0
  %9149 = vmatpush1.bf16.msra.mxu0 0
  %9150 = vmatprep.subr.bf16.mxu0 0
  %9151 = vmatpush1.bf16.msra.mxu0 0
  %9152 = vmatprep.subr.bf16.mxu0 0
  %9153 = vmatpush1.bf16.msra.mxu0 0
  %9154 = vmatprep.subr.bf16.mxu0 0
  %9155 = vmatpush1.bf16.msra.mxu0 0
  %9156 = vmatprep.subr.bf16.mxu0 0
  %9157 = vmatpush1.bf16.msra.mxu0 0
  %9158 = vmatprep.subr.bf16.mxu0 0
  %9159 = vmatpush1.bf16.msra.mxu0 0
  %9160 = vmatprep.subr.bf16.mxu0 0
  %9161 = vmatpush1.bf16.msra.mxu0 0
  %9162 = vmatprep.mubr.bf16.mxu0 0
  %9163 = vmatmul.mubr.bf16.gmra.mrb[0].mxu0 %v9128
  %v9164 = vpop.f32.mrb[0].mxu0
  %v9165 = vadd.f32 0.0, %v9164
  %v9166 = vpop.f32.mrb[0].mxu0
  %v9167 = vpop.f32.mrb[0].mxu0
  %v9168 = vpop.f32.mrb[0].mxu0
  %9169 = vdwg.mxu0
  %v9170 = vadd.f32 %v9109, %v9165
  %v9171 = vpack.c.bf16 %v8557, %v8557
  %v9172 = vld [vmem:[%s5 + $0xa0] sm:$0xf]
  %v9173 = vld [vmem:[%s5 + $0xa4] sm:$0xf]
  %v9174 = vld [vmem:[%s5 + $0xa8] sm:$0xf]
  %v9175 = vld [vmem:[%s5 + $0xac] sm:$0xf]
  %v9180 = vunpack.c.l.b16 %v9172
  %v9181 = vunpack.c.l.b16 %v9173
  %v9182 = vunpack.c.l.b16 %v9174
  %v9183 = vunpack.c.l.b16 %v9175
  %v9184 = vpack.c.b16 %v9181, %v9180
  %v9185 = vpack.c.b16 %v9183, %v9182
  %v9189 = vsel %vm4330, %v9171, 0
  %9191 = vmatprep.subr.bf16.mxu0 0
  %9192 = vmatpush1.bf16.msra.mxu0 %v9184
  %9193 = vmatprep.subr.bf16.mxu0 0
  %9194 = vmatpush1.bf16.msra.mxu0 %v9185
  %9195 = vmatprep.subr.bf16.mxu0 0
  %9196 = vmatpush1.bf16.msra.mxu0 0
  %9197 = vmatprep.subr.bf16.mxu0 0
  %9198 = vmatpush1.bf16.msra.mxu0 0
  %9199 = vmatprep.subr.bf16.mxu0 0
  %9200 = vmatpush1.bf16.msra.mxu0 0
  %9201 = vmatprep.subr.bf16.mxu0 0
  %9202 = vmatpush1.bf16.msra.mxu0 0
  %9203 = vmatprep.subr.bf16.mxu0 0
  %9204 = vmatpush1.bf16.msra.mxu0 0
  %9205 = vmatprep.subr.bf16.mxu0 0
  %9206 = vmatpush1.bf16.msra.mxu0 0
  %9207 = vmatprep.subr.bf16.mxu0 0
  %9208 = vmatpush1.bf16.msra.mxu0 0
  %9209 = vmatprep.subr.bf16.mxu0 0
  %9210 = vmatpush1.bf16.msra.mxu0 0
  %9211 = vmatprep.subr.bf16.mxu0 0
  %9212 = vmatpush1.bf16.msra.mxu0 0
  %9213 = vmatprep.subr.bf16.mxu0 0
  %9214 = vmatpush1.bf16.msra.mxu0 0
  %9215 = vmatprep.subr.bf16.mxu0 0
  %9216 = vmatpush1.bf16.msra.mxu0 0
  %9217 = vmatprep.subr.bf16.mxu0 0
  %9218 = vmatpush1.bf16.msra.mxu0 0
  %9219 = vmatprep.subr.bf16.mxu0 0
  %9220 = vmatpush1.bf16.msra.mxu0 0
  %9221 = vmatprep.subr.bf16.mxu0 0
  %9222 = vmatpush1.bf16.msra.mxu0 0
  %9223 = vmatprep.mubr.bf16.mxu0 0
  %9224 = vmatmul.mubr.bf16.gmra.mrb[0].mxu0 %v9189
  %v9225 = vpop.f32.mrb[0].mxu0
  %v9226 = vadd.f32 0.0, %v9225
  %v9227 = vpop.f32.mrb[0].mxu0
  %v9228 = vpop.f32.mrb[0].mxu0
  %v9229 = vpop.f32.mrb[0].mxu0
  %9230 = vdwg.mxu0
  %v9231 = vadd.f32 %v9170, %v9226
  %v9232 = vpack.c.bf16 %v8558, %v8558
  %v9233 = vld [vmem:[%s5 + $0xb0] sm:$0xf]
  %v9234 = vld [vmem:[%s5 + $0xb4] sm:$0xf]
  %v9235 = vld [vmem:[%s5 + $0xb8] sm:$0xf]
  %v9236 = vld [vmem:[%s5 + $0xbc] sm:$0xf]
  %v9241 = vunpack.c.l.b16 %v9233
  %v9242 = vunpack.c.l.b16 %v9234
  %v9243 = vunpack.c.l.b16 %v9235
  %v9244 = vunpack.c.l.b16 %v9236
  %v9245 = vpack.c.b16 %v9242, %v9241
  %v9246 = vpack.c.b16 %v9244, %v9243
  %v9250 = vsel %vm4330, %v9232, 0
  %9252 = vmatprep.subr.bf16.mxu0 0
  %9253 = vmatpush1.bf16.msra.mxu0 %v9245
  %9254 = vmatprep.subr.bf16.mxu0 0
  %9255 = vmatpush1.bf16.msra.mxu0 %v9246
  %9256 = vmatprep.subr.bf16.mxu0 0
  %9257 = vmatpush1.bf16.msra.mxu0 0
  %9258 = vmatprep.subr.bf16.mxu0 0
  %9259 = vmatpush1.bf16.msra.mxu0 0
  %9260 = vmatprep.subr.bf16.mxu0 0
  %9261 = vmatpush1.bf16.msra.mxu0 0
  %9262 = vmatprep.subr.bf16.mxu0 0
  %9263 = vmatpush1.bf16.msra.mxu0 0
  %9264 = vmatprep.subr.bf16.mxu0 0
  %9265 = vmatpush1.bf16.msra.mxu0 0
  %9266 = vmatprep.subr.bf16.mxu0 0
  %9267 = vmatpush1.bf16.msra.mxu0 0
  %9268 = vmatprep.subr.bf16.mxu0 0
  %9269 = vmatpush1.bf16.msra.mxu0 0
  %9270 = vmatprep.subr.bf16.mxu0 0
  %9271 = vmatpush1.bf16.msra.mxu0 0
  %9272 = vmatprep.subr.bf16.mxu0 0
  %9273 = vmatpush1.bf16.msra.mxu0 0
  %9274 = vmatprep.subr.bf16.mxu0 0
  %9275 = vmatpush1.bf16.msra.mxu0 0
  %9276 = vmatprep.subr.bf16.mxu0 0
  %9277 = vmatpush1.bf16.msra.mxu0 0
  %9278 = vmatprep.subr.bf16.mxu0 0
  %9279 = vmatpush1.bf16.msra.mxu0 0
  %9280 = vmatprep.subr.bf16.mxu0 0
  %9281 = vmatpush1.bf16.msra.mxu0 0
  %9282 = vmatprep.subr.bf16.mxu0 0
  %9283 = vmatpush1.bf16.msra.mxu0 0
  %9284 = vmatprep.mubr.bf16.mxu0 0
  %9285 = vmatmul.mubr.bf16.gmra.mrb[0].mxu0 %v9250
  %v9286 = vpop.f32.mrb[0].mxu0
  %v9287 = vadd.f32 0.0, %v9286
  %v9288 = vpop.f32.mrb[0].mxu0
  %v9289 = vpop.f32.mrb[0].mxu0
  %v9290 = vpop.f32.mrb[0].mxu0
  %9291 = vdwg.mxu0
  %v9292 = vadd.f32 %v9231, %v9287
  %v9293 = vpack.c.bf16 %v8559, %v8559
  %v9294 = vld [vmem:[%s5 + $0xc0] sm:$0xf]
  %v9295 = vld [vmem:[%s5 + $0xc4] sm:$0xf]
  %v9296 = vld [vmem:[%s5 + $0xc8] sm:$0xf]
  %v9297 = vld [vmem:[%s5 + $0xcc] sm:$0xf]
  %v9302 = vunpack.c.l.b16 %v9294
  %v9303 = vunpack.c.l.b16 %v9295
  %v9304 = vunpack.c.l.b16 %v9296
  %v9305 = vunpack.c.l.b16 %v9297
  %v9306 = vpack.c.b16 %v9303, %v9302
  %v9307 = vpack.c.b16 %v9305, %v9304
  %v9311 = vsel %vm4330, %v9293, 0
  %9313 = vmatprep.subr.bf16.mxu0 0
  %9314 = vmatpush1.bf16.msra.mxu0 %v9306
  %9315 = vmatprep.subr.bf16.mxu0 0
  %9316 = vmatpush1.bf16.msra.mxu0 %v9307
  %9317 = vmatprep.subr.bf16.mxu0 0
  %9318 = vmatpush1.bf16.msra.mxu0 0
  %9319 = vmatprep.subr.bf16.mxu0 0
  %9320 = vmatpush1.bf16.msra.mxu0 0
  %9321 = vmatprep.subr.bf16.mxu0 0
  %9322 = vmatpush1.bf16.msra.mxu0 0
  %9323 = vmatprep.subr.bf16.mxu0 0
  %9324 = vmatpush1.bf16.msra.mxu0 0
  %9325 = vmatprep.subr.bf16.mxu0 0
  %9326 = vmatpush1.bf16.msra.mxu0 0
  %9327 = vmatprep.subr.bf16.mxu0 0
  %9328 = vmatpush1.bf16.msra.mxu0 0
  %9329 = vmatprep.subr.bf16.mxu0 0
  %9330 = vmatpush1.bf16.msra.mxu0 0
  %9331 = vmatprep.subr.bf16.mxu0 0
  %9332 = vmatpush1.bf16.msra.mxu0 0
  %9333 = vmatprep.subr.bf16.mxu0 0
  %9334 = vmatpush1.bf16.msra.mxu0 0
  %9335 = vmatprep.subr.bf16.mxu0 0
  %9336 = vmatpush1.bf16.msra.mxu0 0
  %9337 = vmatprep.subr.bf16.mxu0 0
  %9338 = vmatpush1.bf16.msra.mxu0 0
  %9339 = vmatprep.subr.bf16.mxu0 0
  %9340 = vmatpush1.bf16.msra.mxu0 0
  %9341 = vmatprep.subr.bf16.mxu0 0
  %9342 = vmatpush1.bf16.msra.mxu0 0
  %9343 = vmatprep.subr.bf16.mxu0 0
  %9344 = vmatpush1.bf16.msra.mxu0 0
  %9345 = vmatprep.mubr.bf16.mxu0 0
  %9346 = vmatmul.mubr.bf16.gmra.mrb[0].mxu0 %v9311
  %v9347 = vpop.f32.mrb[0].mxu0
  %v9348 = vadd.f32 0.0, %v9347
  %v9349 = vpop.f32.mrb[0].mxu0
  %v9350 = vpop.f32.mrb[0].mxu0
  %v9351 = vpop.f32.mrb[0].mxu0
  %9352 = vdwg.mxu0
  %v9353 = vadd.f32 %v9292, %v9348
  %v9354 = vpack.c.bf16 %v8560, %v8560
  %v9355 = vld [vmem:[%s5 + $0xd0] sm:$0xf]
  %v9356 = vld [vmem:[%s5 + $0xd4] sm:$0xf]
  %v9357 = vld [vmem:[%s5 + $0xd8] sm:$0xf]
  %v9358 = vld [vmem:[%s5 + $0xdc] sm:$0xf]
  %v9363 = vunpack.c.l.b16 %v9355
  %v9364 = vunpack.c.l.b16 %v9356
  %v9365 = vunpack.c.l.b16 %v9357
  %v9366 = vunpack.c.l.b16 %v9358
  %v9367 = vpack.c.b16 %v9364, %v9363
  %v9368 = vpack.c.b16 %v9366, %v9365
  %v9372 = vsel %vm4330, %v9354, 0
  %9374 = vmatprep.subr.bf16.mxu0 0
  %9375 = vmatpush1.bf16.msra.mxu0 %v9367
  %9376 = vmatprep.subr.bf16.mxu0 0
  %9377 = vmatpush1.bf16.msra.mxu0 %v9368
  %9378 = vmatprep.subr.bf16.mxu0 0
  %9379 = vmatpush1.bf16.msra.mxu0 0
  %9380 = vmatprep.subr.bf16.mxu0 0
  %9381 = vmatpush1.bf16.msra.mxu0 0
  %9382 = vmatprep.subr.bf16.mxu0 0
  %9383 = vmatpush1.bf16.msra.mxu0 0
  %9384 = vmatprep.subr.bf16.mxu0 0
  %9385 = vmatpush1.bf16.msra.mxu0 0
  %9386 = vmatprep.subr.bf16.mxu0 0
  %9387 = vmatpush1.bf16.msra.mxu0 0
  %9388 = vmatprep.subr.bf16.mxu0 0
  %9389 = vmatpush1.bf16.msra.mxu0 0
  %9390 = vmatprep.subr.bf16.mxu0 0
  %9391 = vmatpush1.bf16.msra.mxu0 0
  %9392 = vmatprep.subr.bf16.mxu0 0
  %9393 = vmatpush1.bf16.msra.mxu0 0
  %9394 = vmatprep.subr.bf16.mxu0 0
  %9395 = vmatpush1.bf16.msra.mxu0 0
  %9396 = vmatprep.subr.bf16.mxu0 0
  %9397 = vmatpush1.bf16.msra.mxu0 0
  %9398 = vmatprep.subr.bf16.mxu0 0
  %9399 = vmatpush1.bf16.msra.mxu0 0
  %9400 = vmatprep.subr.bf16.mxu0 0
  %9401 = vmatpush1.bf16.msra.mxu0 0
  %9402 = vmatprep.subr.bf16.mxu0 0
  %9403 = vmatpush1.bf16.msra.mxu0 0
  %9404 = vmatprep.subr.bf16.mxu0 0
  %9405 = vmatpush1.bf16.msra.mxu0 0
  %9406 = vmatprep.mubr.bf16.mxu0 0
  %9407 = vmatmul.mubr.bf16.gmra.mrb[0].mxu0 %v9372
  %v9408 = vpop.f32.mrb[0].mxu0
  %v9409 = vadd.f32 0.0, %v9408
  %v9410 = vpop.f32.mrb[0].mxu0
  %v9411 = vpop.f32.mrb[0].mxu0
  %v9412 = vpop.f32.mrb[0].mxu0
  %9413 = vdwg.mxu0
  %v9414 = vadd.f32 %v9353, %v9409
  %v9415 = vpack.c.bf16 %v8561, %v8561
  %v9416 = vld [vmem:[%s5 + $0xe0] sm:$0xf]
  %v9417 = vld [vmem:[%s5 + $0xe4] sm:$0xf]
  %v9418 = vld [vmem:[%s5 + $0xe8] sm:$0xf]
  %v9419 = vld [vmem:[%s5 + $0xec] sm:$0xf]
  %v9424 = vunpack.c.l.b16 %v9416
  %v9425 = vunpack.c.l.b16 %v9417
  %v9426 = vunpack.c.l.b16 %v9418
  %v9427 = vunpack.c.l.b16 %v9419
  %v9428 = vpack.c.b16 %v9425, %v9424
  %v9429 = vpack.c.b16 %v9427, %v9426
  %v9433 = vsel %vm4330, %v9415, 0
  %9435 = vmatprep.subr.bf16.mxu0 0
  %9436 = vmatpush1.bf16.msra.mxu0 %v9428
  %9437 = vmatprep.subr.bf16.mxu0 0
  %9438 = vmatpush1.bf16.msra.mxu0 %v9429
  %9439 = vmatprep.subr.bf16.mxu0 0
  %9440 = vmatpush1.bf16.msra.mxu0 0
  %9441 = vmatprep.subr.bf16.mxu0 0
  %9442 = vmatpush1.bf16.msra.mxu0 0
  %9443 = vmatprep.subr.bf16.mxu0 0
  %9444 = vmatpush1.bf16.msra.mxu0 0
  %9445 = vmatprep.subr.bf16.mxu0 0
  %9446 = vmatpush1.bf16.msra.mxu0 0
  %9447 = vmatprep.subr.bf16.mxu0 0
  %9448 = vmatpush1.bf16.msra.mxu0 0
  %9449 = vmatprep.subr.bf16.mxu0 0
  %9450 = vmatpush1.bf16.msra.mxu0 0
  %9451 = vmatprep.subr.bf16.mxu0 0
  %9452 = vmatpush1.bf16.msra.mxu0 0
  %9453 = vmatprep.subr.bf16.mxu0 0
  %9454 = vmatpush1.bf16.msra.mxu0 0
  %9455 = vmatprep.subr.bf16.mxu0 0
  %9456 = vmatpush1.bf16.msra.mxu0 0
  %9457 = vmatprep.subr.bf16.mxu0 0
  %9458 = vmatpush1.bf16.msra.mxu0 0
  %9459 = vmatprep.subr.bf16.mxu0 0
  %9460 = vmatpush1.bf16.msra.mxu0 0
  %9461 = vmatprep.subr.bf16.mxu0 0
  %9462 = vmatpush1.bf16.msra.mxu0 0
  %9463 = vmatprep.subr.bf16.mxu0 0
  %9464 = vmatpush1.bf16.msra.mxu0 0
  %9465 = vmatprep.subr.bf16.mxu0 0
  %9466 = vmatpush1.bf16.msra.mxu0 0
  %9467 = vmatprep.mubr.bf16.mxu0 0
  %9468 = vmatmul.mubr.bf16.gmra.mrb[0].mxu0 %v9433
  %v9469 = vpop.f32.mrb[0].mxu0
  %v9470 = vadd.f32 0.0, %v9469
  %v9471 = vpop.f32.mrb[0].mxu0
  %v9472 = vpop.f32.mrb[0].mxu0
  %v9473 = vpop.f32.mrb[0].mxu0
  %9474 = vdwg.mxu0
  %v9475 = vadd.f32 %v9414, %v9470
  %v9476 = vpack.c.bf16 %v8562, %v8562
  %v9477 = vld [vmem:[%s5 + $0xf0] sm:$0xf]
  %v9478 = vld [vmem:[%s5 + $0xf4] sm:$0xf]
  %v9479 = vld [vmem:[%s5 + $0xf8] sm:$0xf]
  %v9480 = vld [vmem:[%s5 + $0xfc] sm:$0xf]
  %v9485 = vunpack.c.l.b16 %v9477
  %v9486 = vunpack.c.l.b16 %v9478
  %v9487 = vunpack.c.l.b16 %v9479
  %v9488 = vunpack.c.l.b16 %v9480
  %v9489 = vpack.c.b16 %v9486, %v9485
  %v9490 = vpack.c.b16 %v9488, %v9487
  %v9494 = vsel %vm4330, %v9476, 0
  %9496 = vmatprep.subr.bf16.mxu0 0
  %9497 = vmatpush1.bf16.msra.mxu0 %v9489
  %9498 = vmatprep.subr.bf16.mxu0 0
  %9499 = vmatpush1.bf16.msra.mxu0 %v9490
  %9500 = vmatprep.subr.bf16.mxu0 0
  %9501 = vmatpush1.bf16.msra.mxu0 0
  %9502 = vmatprep.subr.bf16.mxu0 0
  %9503 = vmatpush1.bf16.msra.mxu0 0
  %9504 = vmatprep.subr.bf16.mxu0 0
  %9505 = vmatpush1.bf16.msra.mxu0 0
  %9506 = vmatprep.subr.bf16.mxu0 0
  %9507 = vmatpush1.bf16.msra.mxu0 0
  %9508 = vmatprep.subr.bf16.mxu0 0
  %9509 = vmatpush1.bf16.msra.mxu0 0
  %9510 = vmatprep.subr.bf16.mxu0 0
  %9511 = vmatpush1.bf16.msra.mxu0 0
  %9512 = vmatprep.subr.bf16.mxu0 0
  %9513 = vmatpush1.bf16.msra.mxu0 0
  %9514 = vmatprep.subr.bf16.mxu0 0
  %9515 = vmatpush1.bf16.msra.mxu0 0
  %9516 = vmatprep.subr.bf16.mxu0 0
  %9517 = vmatpush1.bf16.msra.mxu0 0
  %9518 = vmatprep.subr.bf16.mxu0 0
  %9519 = vmatpush1.bf16.msra.mxu0 0
  %9520 = vmatprep.subr.bf16.mxu0 0
  %9521 = vmatpush1.bf16.msra.mxu0 0
  %9522 = vmatprep.subr.bf16.mxu0 0
  %9523 = vmatpush1.bf16.msra.mxu0 0
  %9524 = vmatprep.subr.bf16.mxu0 0
  %9525 = vmatpush1.bf16.msra.mxu0 0
  %9526 = vmatprep.subr.bf16.mxu0 0
  %9527 = vmatpush1.bf16.msra.mxu0 0
  %9528 = vmatprep.mubr.bf16.mxu0 0
  %9529 = vmatmul.mubr.bf16.gmra.mrb[0].mxu0 %v9494
  %v9530 = vpop.f32.mrb[0].mxu0
  %v9531 = vadd.f32 0.0, %v9530
  %v9532 = vpop.f32.mrb[0].mxu0
  %v9533 = vpop.f32.mrb[0].mxu0
  %v9534 = vpop.f32.mrb[0].mxu0
  %9535 = vdwg.mxu0
  %v9536 = vadd.f32 %v9475, %v9531
  %v9537 = vld [vmem:[%s6] sm:$0x1]
  %v9539 = vlaneseq
  %v9540 = vshrl.u32 %v9539, 7
  %v9541 = vsub.s32 0, %v9540
  %v9542 = vrot.slane %v9537, %v9541
  %v9544 = vadd.f32 %v9536, %v9542
  %v9545 = vmax.f32 %v9544, 0.0
  %v9546 = vpack.c.bf16 %v9545, %v9545
  %v9547 = vld [vmem:[%s7] sm:$0xf]
  %v9548 = vld [vmem:[%s7 + $0x4] sm:$0xf]
  %v9549 = vld [vmem:[%s7 + $0x8] sm:$0xf]
  %v9550 = vld [vmem:[%s7 + $0xc] sm:$0xf]
  %v9551 = vld [vmem:[%s8] sm:$0x1]
  %v9553 = vlaneseq
  %v9554 = vshrl.u32 %v9553, 7
  %v9555 = vsub.s32 0, %v9554
  %v9556 = vrot.slane %v9551, %v9555
  %v9562 = vunpack.c.l.b16 %v9547
  %v9563 = vunpack.c.l.b16 %v9548
  %v9564 = vunpack.c.l.b16 %v9549
  %v9565 = vunpack.c.l.b16 %v9550
  %v9566 = vpack.c.b16 %v9563, %v9562
  %v9567 = vpack.c.b16 %v9565, %v9564
  %v9571 = vsel %vm4330, %v9546, 0
  %9573 = vmatprep.subr.bf16.mxu0 0
  %9574 = vmatpush1.bf16.msra.mxu0 %v9566
  %9575 = vmatprep.subr.bf16.mxu0 0
  %9576 = vmatpush1.bf16.msra.mxu0 %v9567
  %9577 = vmatprep.subr.bf16.mxu0 0
  %9578 = vmatpush1.bf16.msra.mxu0 0
  %9579 = vmatprep.subr.bf16.mxu0 0
  %9580 = vmatpush1.bf16.msra.mxu0 0
  %9581 = vmatprep.subr.bf16.mxu0 0
  %9582 = vmatpush1.bf16.msra.mxu0 0
  %9583 = vmatprep.subr.bf16.mxu0 0
  %9584 = vmatpush1.bf16.msra.mxu0 0
  %9585 = vmatprep.subr.bf16.mxu0 0
  %9586 = vmatpush1.bf16.msra.mxu0 0
  %9587 = vmatprep.subr.bf16.mxu0 0
  %9588 = vmatpush1.bf16.msra.mxu0 0
  %9589 = vmatprep.subr.bf16.mxu0 0
  %9590 = vmatpush1.bf16.msra.mxu0 0
  %9591 = vmatprep.subr.bf16.mxu0 0
  %9592 = vmatpush1.bf16.msra.mxu0 0
  %9593 = vmatprep.subr.bf16.mxu0 0
  %9594 = vmatpush1.bf16.msra.mxu0 0
  %9595 = vmatprep.subr.bf16.mxu0 0
  %9596 = vmatpush1.bf16.msra.mxu0 0
  %9597 = vmatprep.subr.bf16.mxu0 0
  %9598 = vmatpush1.bf16.msra.mxu0 0
  %9599 = vmatprep.subr.bf16.mxu0 0
  %9600 = vmatpush1.bf16.msra.mxu0 0
  %9601 = vmatprep.subr.bf16.mxu0 0
  %9602 = vmatpush1.bf16.msra.mxu0 0
  %9603 = vmatprep.subr.bf16.mxu0 0
  %9604 = vmatpush1.bf16.msra.mxu0 0
  %9605 = vmatprep.mubr.bf16.mxu0 0
  %9606 = vmatmul.mubr.bf16.gmra.mrb[0].mxu0 %v9571
  %v9607 = vpop.f32.mrb[0].mxu0
  %v9608 = vadd.f32 %v9556, %v9607
  %v9609 = vpop.f32.mrb[0].mxu0
  %v9610 = vpop.f32.mrb[0].mxu0
  %v9611 = vpop.f32.mrb[0].mxu0
  %9612 = vdwg.mxu0
  %vm9613 = vcmask 23552
  %9614 = vst.msk [vmem:[%s9] sm:$0xff] %vm9613, %v9608
  // Predicated region
  $region38: #{catch_net_forward.1} parent=0 // pred_check
    _
  $region39: #{catch_net_forward.1} parent=0 // pred_check_branch
    %9616 = sbr.rel (0) target = $region41
  $region40: #{catch_net_forward.1} parent=0 // pred_region
    _
  $region41: #{catch_net_forward.1} parent=0 // pred_fallthru
    _
  // Predicated region
  $region42: #{catch_net_forward.1} parent=0 // pred_check
    _
  $region43: #{catch_net_forward.1} parent=0 // pred_check_branch
    %9618 = sbr.rel (0) target = $region45
  $region44: #{catch_net_forward.1} parent=0 // pred_region
    _
  $region45: #{catch_net_forward.1} parent=0 // pred_fallthru
    _

</llo_original>
